<compile_context>
chip_gen: v6e
topology: v6e:2x2x1
jax: 0.10.0
libtpu: 0.0.40
codegen_flags: <defaults>
</compile_context>

<pallas_src>
import functools

import numpy as np
import jax
import jax.numpy as jnp
from jax.experimental import pallas as pl
from jax.experimental.pallas import tpu as pltpu


# ----------------------------------------------------------------------------
# Fused, window-packed attention kernel
# ----------------------------------------------------------------------------
def _window_attention_kernel(x_ref, qkv_w_ref, qkv_b_ref, proj_w_ref,
                             proj_b_ref, bias_ref, o_ref, qkv_scr, acc_scr, *,
                             num_heads, seq_len, pack, n_bias_groups,
                             softmax_in_bf16):
    R, C = x_ref.shape                 # R = tile_windows * N rows
    H = num_heads
    D = C // H
    GN = pack * seq_len                # packed group width (G windows)
    n_groups = R // GN
    reps = n_groups // n_bias_groups

    # Fused qkv projection (scale already folded into the q columns).
    # Stage once as bf16 in VMEM scratch so the f32 intermediate dies here.
    x2d = x_ref[...].astype(jnp.bfloat16)
    qkv = jnp.dot(x2d, qkv_w_ref[...], preferred_element_type=jnp.float32)
    qkv_scr[...] = (qkv + qkv_b_ref[...]).astype(jnp.bfloat16)

    acc_scr[...] = jnp.zeros_like(acc_scr)     # projected-output accumulator

    # TODO(synk): switch to lax.fori_loop(..., unroll=k) for large head counts.
    for h in range(H):
        q = qkv_scr[:, h * D:(h + 1) * D]                  # (R, D) bf16
        k = qkv_scr[:, C + h * D:C + (h + 1) * D]
        v = qkv_scr[:, 2 * C + h * D:2 * C + (h + 1) * D]

        qg = q.reshape(n_groups, GN, D)
        kg = k.reshape(n_groups, GN, D)
        vg = v.reshape(n_groups, GN, D)

        # Packed scores: one (GN x GN) MXU tile per group instead of `pack`
        # tiny (N x N) ones.
        s = jax.lax.dot_general(qg, kg, (((2,), (2,)), ((0,), (0,))),
                                preferred_element_type=jnp.float32)

        # Single precomputed additive tensor: block-diag rel-pos bias +
        # shift mask + (-1e9) cross-window packing mask.
        bias_h = bias_ref[h]                               # (nbg, GN, GN)
        if n_bias_groups == 1 or n_bias_groups == n_groups:
            s = s + bias_h
        else:
            s = (s.reshape(reps, n_bias_groups, GN, GN) + bias_h[None]
                 ).reshape(n_groups, GN, GN)

        # Numerically-stable softmax; cross-window entries underflow to 0,
        # so the packed p @ v matches unpacked attention exactly.
        s = s - jnp.max(s, axis=-1, keepdims=True)
        if softmax_in_bf16:            # v6e/v7x: bf16 VPU/EUP path
            p = jnp.exp(s.astype(jnp.bfloat16))
            denom = jnp.sum(p, axis=-1, keepdims=True, dtype=jnp.float32)
            p = p * pl.reciprocal(denom, approx=True).astype(jnp.bfloat16)
        else:                          # v5e and older: keep f32
            p = jnp.exp(s)
            p = (p * pl.reciprocal(jnp.sum(p, axis=-1, keepdims=True),
                                   approx=True)).astype(jnp.bfloat16)

        o_h = jax.lax.dot_general(p, vg, (((2,), (1,)), ((0,), (0,))),
                                  preferred_element_type=jnp.float32)

        # Fold this head straight into its slice of the projection weight;
        # the (B_, H, N, D) layout never exists.
        acc_scr[...] += jnp.dot(o_h.reshape(R, D).astype(jnp.bfloat16),
                                proj_w_ref[h * D:(h + 1) * D, :],
                                preferred_element_type=jnp.float32)

    # TODO(synk): if a bundle dump shows the masked vst dominating, present
    # the output lane-dense as (B_, N*C) and reshape at the wrapper edge.
    o_ref[...] = (acc_scr[...] + proj_b_ref[...]).astype(o_ref.dtype)


# ----------------------------------------------------------------------------
# Static (wrapper-side) helpers
# ----------------------------------------------------------------------------
def _choose_tiling(B_, nW, pack_target, max_tile_windows):
    """Pick (tile_windows, pack) s.t. tile_w | B_, nW | tile_w (if masked),
    pack | tile_w, and (nW | pack or pack | nW) so the packed mask is static."""
    base = nW if nW is not None else 1
    cap = max(base, min(max_tile_windows, max(1, B_ // 2)))   # keep grid >= 2
    tile_w = base
    k_max = B_ // base
    for k in range(1, k_max + 1):
        if k_max % k == 0 and base * k <= cap:
            tile_w = base * k
    pack = 1
    for g in range(1, min(pack_target, tile_w) + 1):
        if tile_w % g:
            continue
        if nW is not None and (g % nW != 0 and nW % g != 0):
            continue
        pack = g
    return tile_w, pack


def _build_packed_bias(rel_bias, mask, pack, neg=-1e9):
    """(H, nbg, G*N, G*N): block-diag rel-pos bias + shift mask; -1e9 on the
    cross-window (off-diagonal) blocks of the packed score matrix."""
    H, N, _ = rel_bias.shape
    G = pack
    GN = G * N
    if mask is None:
        nbg = 1
        mgrp = jnp.zeros((1, G, N, N), jnp.float32)
    else:
        nW = mask.shape[0]
        if G % nW == 0:
            nbg = 1
            mgrp = jnp.tile(mask, (G // nW, 1, 1))[None]      # (1, G, N, N)
        else:
            assert nW % G == 0
            nbg = nW // G
            mgrp = mask.reshape(nbg, G, N, N)
    eye = jnp.eye(G, dtype=bool)[None, None, :, None, :, None]     # (1,1,G,1,G,1)
    diag = (rel_bias[None, :, None, :, None, :]                    # (1,H,1,N,1,N)
            + mgrp[:, None, :, :, None, :])                        # (nbg,1,G,N,1,N)
    full = jnp.where(eye, diag, jnp.float32(neg))                  # (nbg,H,G,N,G,N)
    return full.transpose(1, 0, 2, 3, 4, 5).reshape(H, nbg, GN, GN)


def windows_attention(x, params, num_heads, mask=None, *,
                      max_tile_windows=32, pack_windows=None,
                      softmax_in_bf16=None):
    """Pallas forward of Windows_Attention. x: (B_, N, C); mask: (nW, N, N)|None."""
    B_, N, C = x.shape
    H = num_heads
    assert C % H == 0
    D = C // H
    scale = float(D) ** -0.5

    nW = None
    if mask is not None:
        nW = int(mask.shape[0])
        # Standard window_partition order: window w uses shift-mask index w % nW.
        assert B_ % nW == 0, "B_ must be a multiple of nW (batch-major/window-minor)"

    # Device-aware defaults: pack to the native MXU tile; bf16 softmax only
    # where the VPU/EUP have a bf16 path (v6e / v7x).
    kind = ""
    try:
        kind = jax.devices()[0].device_kind.lower()
    except Exception:
        pass
    is_v6_plus = ("v6" in kind) or ("v7" in kind)
    if pack_windows is None:
        pack_windows = max(1, (256 if is_v6_plus else 128) // N)
    if softmax_in_bf16 is None:
        softmax_in_bf16 = is_v6_plus

    tile_w, G = _choose_tiling(B_, nW, pack_windows, max_tile_windows)
    grid = (B_ // tile_w,)
    GN = G * N
    tile_rows = tile_w * N

    # One-time static parameter transforms.
    qscale = jnp.concatenate([jnp.full((C,), scale, jnp.float32),
                              jnp.ones((2 * C,), jnp.float32)])
    qkv_w = (params["qkv_w"].astype(jnp.float32) * qscale[None, :]).astype(jnp.bfloat16)
    qkv_b = (params["qkv_b"].astype(jnp.float32) * qscale).reshape(1, 3 * C)
    proj_w = params["proj_w"].astype(jnp.bfloat16)
    proj_b = params["proj_b"].reshape(1, C).astype(jnp.float32)
    rel_bias = params["rel_bias"].astype(jnp.float32)
    packed_bias = _build_packed_bias(
        rel_bias, None if mask is None else mask.astype(jnp.float32), G)
    nbg = packed_bias.shape[1]
    if nbg > 1:
        assert (tile_w // G) % nbg == 0

    kernel = functools.partial(_window_attention_kernel,
                               num_heads=H, seq_len=N, pack=G,
                               n_bias_groups=nbg,
                               softmax_in_bf16=softmax_in_bf16)

    x2d = x.reshape(B_ * N, C)
    out2d = pl.pallas_call(
        kernel,
        grid=grid,
        in_specs=[
            pl.BlockSpec((tile_rows, C), lambda w: (w, 0)),          # x tile
            pl.BlockSpec((C, 3 * C), lambda w: (0, 0)),              # qkv_w
            pl.BlockSpec((1, 3 * C), lambda w: (0, 0)),              # qkv_b
            pl.BlockSpec((C, C), lambda w: (0, 0)),                  # proj_w
            pl.BlockSpec((1, C), lambda w: (0, 0)),                  # proj_b
            pl.BlockSpec((H, nbg, GN, GN), lambda w: (0, 0, 0, 0)),  # packed bias
        ],
        out_specs=pl.BlockSpec((tile_rows, C), lambda w: (w, 0)),
        out_shape=jax.ShapeDtypeStruct((B_ * N, C), x.dtype),
        scratch_shapes=[pltpu.VMEM((tile_rows, 3 * C), jnp.bfloat16),
                        pltpu.VMEM((tile_rows, C), jnp.float32)],
        compiler_params=pltpu.CompilerParams(
            dimension_semantics=("parallel",)),
    )(x2d, qkv_w, qkv_b, proj_w, proj_b, packed_bias)
    return out2d.reshape(B_, N, C)


# ----------------------------------------------------------------------------
# Static helpers (relative-position index / shifted-window mask) + reference
# ----------------------------------------------------------------------------
def relative_position_index(Wh, Ww):
    coords = np.stack(np.meshgrid(np.arange(Wh), np.arange(Ww), indexing="ij"))
    cf = coords.reshape(2, -1)
    rel = cf[:, :, None] - cf[:, None, :]
    rel = rel.transpose(1, 2, 0).astype(np.int64)
    rel[..., 0] += Wh - 1
    rel[..., 1] += Ww - 1
    rel[..., 0] *= 2 * Ww - 1
    return rel.sum(-1)                                           # (N, N)


def shifted_window_mask(H, W, ws, ss):
    img = np.zeros((H, W), np.float32)
    cnt = 0
    for hs in (slice(0, -ws), slice(-ws, -ss), slice(-ss, None)):
        for wsl in (slice(0, -ws), slice(-ws, -ss), slice(-ss, None)):
            img[hs, wsl] = cnt
            cnt += 1
    mw = (img.reshape(H // ws, ws, W // ws, ws)
             .transpose(0, 2, 1, 3).reshape(-1, ws * ws))
    am = mw[:, None, :] - mw[:, :, None]
    return np.where(am != 0, -100.0, 0.0).astype(np.float32)     # (nW, N, N)


def windows_attention_ref(x, params, num_heads, mask=None):
    """Pure-JAX f32 mirror of the PyTorch forward (for validation)."""
    B_, N, C = x.shape
    D = C // num_heads
    scale = float(D) ** -0.5
    qkv = (x @ params["qkv_w"] + params["qkv_b"]).reshape(B_, N, 3, num_heads, D)
    qkv = qkv.transpose(2, 0, 3, 1, 4)
    q, k, v = qkv[0] * scale, qkv[1], qkv[2]
    attn = jnp.einsum("bhqd,bhkd->bhqk", q, k)
    attn = attn + params["rel_bias"][None]
    if mask is not None:
        nW = mask.shape[0]
        attn = attn.reshape(B_ // nW, nW, num_heads, N, N) + mask[None, :, None]
        attn = attn.reshape(B_, num_heads, N, N)
    attn = jax.nn.softmax(attn, axis=-1)
    out = jnp.einsum("bhqk,bhkd->bhqd", attn, v)
    out = out.transpose(0, 2, 1, 3).reshape(B_, N, C)
    return out @ params["proj_w"] + params["proj_b"]


def init_params(key, dim, window_size, num_heads):
    Wh, Ww = window_size
    N = Wh * Ww
    k1, k2, k3, k4, k5 = jax.random.split(key, 5)
    table = 0.02 * jax.random.normal(
        k1, ((2 * Wh - 1) * (2 * Ww - 1), num_heads), jnp.float32)
    idx = relative_position_index(Wh, Ww).reshape(-1)
    rel_bias = table[idx].reshape(N, N, num_heads).transpose(2, 0, 1)  # (H,N,N)
    return dict(
        qkv_w=0.02 * jax.random.normal(k2, (dim, 3 * dim), jnp.float32),
        qkv_b=0.02 * jax.random.normal(k3, (3 * dim,), jnp.float32),
        proj_w=0.02 * jax.random.normal(k4, (dim, dim), jnp.float32),
        proj_b=0.02 * jax.random.normal(k5, (dim,), jnp.float32),
        rel_bias=rel_bias,
    )


def _rel_err(a, b):
    return float(jnp.linalg.norm(a - b) / (jnp.linalg.norm(b) + 1e-12))


# ----------------------------------------------------------------------------
if __name__ == "__main__":
    # Small Swin-like setting: dim=32, 4 heads (head_dim=8), 8x8 windows
    # (N=64) over a 16x16 feature map with shift 4 -> nW=4 mask windows,
    # batch of 4 images -> B_ = 16 windows total.
    dim, num_heads = 32, 4
    window_size = (8, 8)
    N = window_size[0] * window_size[1]
    feat_h = feat_w = 16
    shift = 4
    nW = (feat_h // window_size[0]) * (feat_w // window_size[1])   # 4
    batch = 4
    B_ = batch * nW                                                # 16

    key = jax.random.PRNGKey(0)
    kp, kx = jax.random.split(key)
    params = init_params(kp, dim, window_size, num_heads)
    x = jax.random.normal(kx, (B_, N, dim), jnp.float32)
    mask = jnp.asarray(shifted_window_mask(feat_h, feat_w, window_size[0], shift))

    # Run the fused Pallas kernel: masked (shifted-window) and unmasked paths.
    out_masked = windows_attention(x, params, num_heads, mask=mask)
    out_plain = windows_attention(x, params, num_heads, mask=None)
    out_masked, out_plain = jax.block_until_ready((out_masked, out_plain))

    assert out_masked.shape == (B_, N, dim)
    assert out_plain.shape == (B_, N, dim)
    assert bool(jnp.all(jnp.isfinite(out_masked)))
    assert bool(jnp.all(jnp.isfinite(out_plain)))

    # Validate against the pure-JAX f32 reference (bf16 MXU operands + approx
    # reciprocal + optional bf16 softmax => loose tolerance).
    ref_masked = windows_attention_ref(x, params, num_heads, mask=mask)
    ref_plain = windows_attention_ref(x, params, num_heads, mask=None)
    assert _rel_err(out_masked, ref_masked) < 5e-2
    assert _rel_err(out_plain, ref_plain) < 5e-2

    print("KERNEL_OK")
</pallas_src>

<mosaic_0001>
module attributes {stable_mosaic.version = 11 : i64} {
  func.func @_window_attention_kernel(%arg0: i32, %arg1: memref<512x32xf32, #tpu.memory_space<vmem>>, %arg2: memref<32x96xbf16, #tpu.memory_space<vmem>>, %arg3: memref<1x96xf32, #tpu.memory_space<vmem>>, %arg4: memref<32x32xbf16, #tpu.memory_space<vmem>>, %arg5: memref<1x32xf32, #tpu.memory_space<vmem>>, %arg6: memref<4x2x128x128xf32, #tpu.memory_space<vmem>>, %arg7: memref<512x32xf32, #tpu.memory_space<vmem>>, %arg8: memref<512x96xbf16, #tpu.memory_space<vmem>>, %arg9: memref<512x32xf32, #tpu.memory_space<vmem>>) attributes {dimension_semantics = [#tpu.dimension_semantics<parallel>], iteration_bounds = array<i64: 2>, scalar_prefetch = 0 : i64, scratch_operands = 2 : i64, tpu.core_type = #tpu.core_type<tc>, window_params = [{transform_indices = @transform_0, window_bounds = array<i64: 512, 32>}, {pipeline_mode = #tpu.pipeline_mode<synchronous>, transform_indices = @transform_1, window_bounds = array<i64: 32, 96>}, {pipeline_mode = #tpu.pipeline_mode<synchronous>, transform_indices = @transform_2, window_bounds = array<i64: 1, 96>}, {pipeline_mode = #tpu.pipeline_mode<synchronous>, transform_indices = @transform_3, window_bounds = array<i64: 32, 32>}, {pipeline_mode = #tpu.pipeline_mode<synchronous>, transform_indices = @transform_4, window_bounds = array<i64: 1, 32>}, {pipeline_mode = #tpu.pipeline_mode<synchronous>, transform_indices = @transform_5, window_bounds = array<i64: 4, 2, 128, 128>}, {transform_indices = @transform_6, window_bounds = array<i64: 512, 32>}]} {
    %c0 = arith.constant 0 : index
    %c0_0 = arith.constant 0 : index
    %0 = vector.load %arg1[%c0, %c0_0] : memref<512x32xf32, #tpu.memory_space<vmem>>, vector<512x32xf32>
    %1 = arith.truncf %0 : vector<512x32xf32> to vector<512x32xbf16>
    %c0_1 = arith.constant 0 : index
    %c0_2 = arith.constant 0 : index
    %2 = vector.load %arg2[%c0_1, %c0_2] : memref<32x96xbf16, #tpu.memory_space<vmem>>, vector<32x96xbf16>
    %cst = arith.constant dense<0.000000e+00> : vector<512x96xf32>
    %3 = tpu.matmul %1, %2, %cst {dimension_numbers = #tpu.dot_dimension_numbers<[1], [0], [0], [1], [0, 0, 1, 1], [], []>} : vector<512x32xbf16>, vector<32x96xbf16>, vector<512x96xf32> -> vector<512x96xf32>
    %c0_3 = arith.constant 0 : index
    %c0_4 = arith.constant 0 : index
    %4 = vector.load %arg3[%c0_3, %c0_4] : memref<1x96xf32, #tpu.memory_space<vmem>>, vector<1x96xf32>
    %5 = vector.broadcast %4 : vector<1x96xf32> to vector<512x96xf32>
    %6 = arith.addf %3, %5 : vector<512x96xf32>
    %7 = arith.truncf %6 : vector<512x96xf32> to vector<512x96xbf16>
    %c0_5 = arith.constant 0 : index
    %c0_6 = arith.constant 0 : index
    %8 = vector.load %arg8[%c0_5, %c0_6] : memref<512x96xbf16, #tpu.memory_space<vmem>>, vector<512x96xbf16>
    tpu.vector_store %arg8[%c0_5, %c0_6], %7 {strides = array<i32>} : memref<512x96xbf16, #tpu.memory_space<vmem>>, vector<512x96xbf16>,
    %cst_7 = arith.constant 0.000000e+00 : f32
    %9 = vector.broadcast %cst_7 : f32 to vector<512x32xf32>
    %c0_8 = arith.constant 0 : index
    %c0_9 = arith.constant 0 : index
    %10 = vector.load %arg9[%c0_8, %c0_9] : memref<512x32xf32, #tpu.memory_space<vmem>>, vector<512x32xf32>
    tpu.vector_store %arg9[%c0_8, %c0_9], %9 {strides = array<i32>} : memref<512x32xf32, #tpu.memory_space<vmem>>, vector<512x32xf32>,
    %c0_10 = arith.constant 0 : index
    %c0_11 = arith.constant 0 : index
    %11 = vector.load %arg8[%c0_10, %c0_11] : memref<512x96xbf16, #tpu.memory_space<vmem>>, vector<512x8xbf16>
    %c0_12 = arith.constant 0 : index
    %c32 = arith.constant 32 : index
    %12 = vector.load %arg8[%c0_12, %c32] : memref<512x96xbf16, #tpu.memory_space<vmem>>, vector<512x8xbf16>
    %c0_13 = arith.constant 0 : index
    %c64 = arith.constant 64 : index
    %13 = vector.load %arg8[%c0_13, %c64] : memref<512x96xbf16, #tpu.memory_space<vmem>>, vector<512x8xbf16>
    %14 = vector.shape_cast %11 : vector<512x8xbf16> to vector<4x128x8xbf16>
    %15 = vector.shape_cast %12 : vector<512x8xbf16> to vector<4x128x8xbf16>
    %16 = vector.shape_cast %13 : vector<512x8xbf16> to vector<4x128x8xbf16>
    %cst_14 = arith.constant dense<0.000000e+00> : vector<4x128x128xf32>
    %17 = tpu.matmul %14, %15, %cst_14 {dimension_numbers = #tpu.dot_dimension_numbers<[2], [2], [1], [1], [0, 0, 0, 1, 1, 1], [0], [0]>} : vector<4x128x8xbf16>, vector<4x128x8xbf16>, vector<4x128x128xf32> -> vector<4x128x128xf32>
    %c0_15 = arith.constant 0 : index
    %c0_16 = arith.constant 0 : index
    %c0_17 = arith.constant 0 : index
    %c0_18 = arith.constant 0 : index
    %18 = vector.load %arg6[%c0_15, %c0_16, %c0_17, %c0_18] : memref<4x2x128x128xf32, #tpu.memory_space<vmem>>, vector<1x2x128x128xf32>
    %19 = vector.shape_cast %18 : vector<1x2x128x128xf32> to vector<2x128x128xf32>
    %20 = vector.shape_cast %17 : vector<4x128x128xf32> to vector<2x2x128x128xf32>
    %21 = vector.shape_cast %19 : vector<2x128x128xf32> to vector<1x2x128x128xf32>
    %22 = vector.broadcast %21 : vector<1x2x128x128xf32> to vector<2x2x128x128xf32>
    %23 = arith.addf %20, %22 : vector<2x2x128x128xf32>
    %24 = vector.shape_cast %23 : vector<2x2x128x128xf32> to vector<4x128x128xf32>
    %cst_19 = arith.constant dense<0xFF800000> : vector<4x128xf32>
    %25 = vector.multi_reduction <maximumf>, %24, %cst_19 [2] : vector<4x128x128xf32> to vector<4x128xf32>
    %26 = vector.shape_cast %25 : vector<4x128xf32> to vector<4x128x1xf32>
    %27 = vector.broadcast %26 : vector<4x128x1xf32> to vector<4x128x128xf32>
    %28 = arith.subf %24, %27 : vector<4x128x128xf32>
    %29 = math.exp %28 : vector<4x128x128xf32>
    %cst_20 = arith.constant dense<0.000000e+00> : vector<4x128xf32>
    %30 = vector.multi_reduction <add>, %29, %cst_20 [2] : vector<4x128x128xf32> to vector<4x128xf32>
    %31 = vector.shape_cast %30 : vector<4x128xf32> to vector<4x128x1xf32>
    %32 = tpu.reciprocal %31 {approx = true} : vector<4x128x1xf32> -> vector<4x128x1xf32>
    %33 = vector.broadcast %32 : vector<4x128x1xf32> to vector<4x128x128xf32>
    %34 = arith.mulf %29, %33 : vector<4x128x128xf32>
    %35 = arith.truncf %34 : vector<4x128x128xf32> to vector<4x128x128xbf16>
    %cst_21 = arith.constant dense<0.000000e+00> : vector<4x128x8xf32>
    %36 = tpu.matmul %35, %16, %cst_21 {dimension_numbers = #tpu.dot_dimension_numbers<[2], [1], [1], [2], [0, 0, 0, 1, 1, 2], [0], [0]>} : vector<4x128x128xbf16>, vector<4x128x8xbf16>, vector<4x128x8xf32> -> vector<4x128x8xf32>
    %c0_22 = arith.constant 0 : index
    %c0_23 = arith.constant 0 : index
    %37 = vector.load %arg9[%c0_22, %c0_23] : memref<512x32xf32, #tpu.memory_space<vmem>>, vector<512x32xf32>
    %38 = vector.shape_cast %36 : vector<4x128x8xf32> to vector<512x8xf32>
    %39 = arith.truncf %38 : vector<512x8xf32> to vector<512x8xbf16>
    %c0_24 = arith.constant 0 : index
    %c0_25 = arith.constant 0 : index
    %40 = vector.load %arg4[%c0_24, %c0_25] : memref<32x32xbf16, #tpu.memory_space<vmem>>, vector<8x32xbf16>
    %cst_26 = arith.constant dense<0.000000e+00> : vector<512x32xf32>
    %41 = tpu.matmul %39, %40, %cst_26 {dimension_numbers = #tpu.dot_dimension_numbers<[1], [0], [0], [1], [0, 0, 1, 1], [], []>} : vector<512x8xbf16>, vector<8x32xbf16>, vector<512x32xf32> -> vector<512x32xf32>
    %42 = arith.addf %37, %41 : vector<512x32xf32>
    %c0_27 = arith.constant 0 : index
    %c0_28 = arith.constant 0 : index
    %43 = vector.load %arg9[%c0_27, %c0_28] : memref<512x32xf32, #tpu.memory_space<vmem>>, vector<512x32xf32>
    tpu.vector_store %arg9[%c0_27, %c0_28], %42 {strides = array<i32>} : memref<512x32xf32, #tpu.memory_space<vmem>>, vector<512x32xf32>,
    %c0_29 = arith.constant 0 : index
    %c8 = arith.constant 8 : index
    %44 = vector.load %arg8[%c0_29, %c8] : memref<512x96xbf16, #tpu.memory_space<vmem>>, vector<512x8xbf16>
    %c0_30 = arith.constant 0 : index
    %c40 = arith.constant 40 : index
    %45 = vector.load %arg8[%c0_30, %c40] : memref<512x96xbf16, #tpu.memory_space<vmem>>, vector<512x8xbf16>
    %c0_31 = arith.constant 0 : index
    %c72 = arith.constant 72 : index
    %46 = vector.load %arg8[%c0_31, %c72] : memref<512x96xbf16, #tpu.memory_space<vmem>>, vector<512x8xbf16>
    %47 = vector.shape_cast %44 : vector<512x8xbf16> to vector<4x128x8xbf16>
    %48 = vector.shape_cast %45 : vector<512x8xbf16> to vector<4x128x8xbf16>
    %49 = vector.shape_cast %46 : vector<512x8xbf16> to vector<4x128x8xbf16>
    %cst_32 = arith.constant dense<0.000000e+00> : vector<4x128x128xf32>
    %50 = tpu.matmul %47, %48, %cst_32 {dimension_numbers = #tpu.dot_dimension_numbers<[2], [2], [1], [1], [0, 0, 0, 1, 1, 1], [0], [0]>} : vector<4x128x8xbf16>, vector<4x128x8xbf16>, vector<4x128x128xf32> -> vector<4x128x128xf32>
    %c1 = arith.constant 1 : index
    %c0_33 = arith.constant 0 : index
    %c0_34 = arith.constant 0 : index
    %c0_35 = arith.constant 0 : index
    %51 = vector.load %arg6[%c1, %c0_33, %c0_34, %c0_35] : memref<4x2x128x128xf32, #tpu.memory_space<vmem>>, vector<1x2x128x128xf32>
    %52 = vector.shape_cast %51 : vector<1x2x128x128xf32> to vector<2x128x128xf32>
    %53 = vector.shape_cast %50 : vector<4x128x128xf32> to vector<2x2x128x128xf32>
    %54 = vector.shape_cast %52 : vector<2x128x128xf32> to vector<1x2x128x128xf32>
    %55 = vector.broadcast %54 : vector<1x2x128x128xf32> to vector<2x2x128x128xf32>
    %56 = arith.addf %53, %55 : vector<2x2x128x128xf32>
    %57 = vector.shape_cast %56 : vector<2x2x128x128xf32> to vector<4x128x128xf32>
    %cst_36 = arith.constant dense<0xFF800000> : vector<4x128xf32>
    %58 = vector.multi_reduction <maximumf>, %57, %cst_36 [2] : vector<4x128x128xf32> to vector<4x128xf32>
    %59 = vector.shape_cast %58 : vector<4x128xf32> to vector<4x128x1xf32>
    %60 = vector.broadcast %59 : vector<4x128x1xf32> to vector<4x128x128xf32>
    %61 = arith.subf %57, %60 : vector<4x128x128xf32>
    %62 = math.exp %61 : vector<4x128x128xf32>
    %cst_37 = arith.constant dense<0.000000e+00> : vector<4x128xf32>
    %63 = vector.multi_reduction <add>, %62, %cst_37 [2] : vector<4x128x128xf32> to vector<4x128xf32>
    %64 = vector.shape_cast %63 : vector<4x128xf32> to vector<4x128x1xf32>
    %65 = tpu.reciprocal %64 {approx = true} : vector<4x128x1xf32> -> vector<4x128x1xf32>
    %66 = vector.broadcast %65 : vector<4x128x1xf32> to vector<4x128x128xf32>
    %67 = arith.mulf %62, %66 : vector<4x128x128xf32>
    %68 = arith.truncf %67 : vector<4x128x128xf32> to vector<4x128x128xbf16>
    %cst_38 = arith.constant dense<0.000000e+00> : vector<4x128x8xf32>
    %69 = tpu.matmul %68, %49, %cst_38 {dimension_numbers = #tpu.dot_dimension_numbers<[2], [1], [1], [2], [0, 0, 0, 1, 1, 2], [0], [0]>} : vector<4x128x128xbf16>, vector<4x128x8xbf16>, vector<4x128x8xf32> -> vector<4x128x8xf32>
    %c0_39 = arith.constant 0 : index
    %c0_40 = arith.constant 0 : index
    %70 = vector.load %arg9[%c0_39, %c0_40] : memref<512x32xf32, #tpu.memory_space<vmem>>, vector<512x32xf32>
    %71 = vector.shape_cast %69 : vector<4x128x8xf32> to vector<512x8xf32>
    %72 = arith.truncf %71 : vector<512x8xf32> to vector<512x8xbf16>
    %c8_41 = arith.constant 8 : index
    %c0_42 = arith.constant 0 : index
    %73 = vector.load %arg4[%c8_41, %c0_42] : memref<32x32xbf16, #tpu.memory_space<vmem>>, vector<8x32xbf16>
    %cst_43 = arith.constant dense<0.000000e+00> : vector<512x32xf32>
    %74 = tpu.matmul %72, %73, %cst_43 {dimension_numbers = #tpu.dot_dimension_numbers<[1], [0], [0], [1], [0, 0, 1, 1], [], []>} : vector<512x8xbf16>, vector<8x32xbf16>, vector<512x32xf32> -> vector<512x32xf32>
    %75 = arith.addf %70, %74 : vector<512x32xf32>
    %c0_44 = arith.constant 0 : index
    %c0_45 = arith.constant 0 : index
    %76 = vector.load %arg9[%c0_44, %c0_45] : memref<512x32xf32, #tpu.memory_space<vmem>>, vector<512x32xf32>
    tpu.vector_store %arg9[%c0_44, %c0_45], %75 {strides = array<i32>} : memref<512x32xf32, #tpu.memory_space<vmem>>, vector<512x32xf32>,
    %c0_46 = arith.constant 0 : index
    %c16 = arith.constant 16 : index
    %77 = vector.load %arg8[%c0_46, %c16] : memref<512x96xbf16, #tpu.memory_space<vmem>>, vector<512x8xbf16>
    %c0_47 = arith.constant 0 : index
    %c48 = arith.constant 48 : index
    %78 = vector.load %arg8[%c0_47, %c48] : memref<512x96xbf16, #tpu.memory_space<vmem>>, vector<512x8xbf16>
    %c0_48 = arith.constant 0 : index
    %c80 = arith.constant 80 : index
    %79 = vector.load %arg8[%c0_48, %c80] : memref<512x96xbf16, #tpu.memory_space<vmem>>, vector<512x8xbf16>
    %80 = vector.shape_cast %77 : vector<512x8xbf16> to vector<4x128x8xbf16>
    %81 = vector.shape_cast %78 : vector<512x8xbf16> to vector<4x128x8xbf16>
    %82 = vector.shape_cast %79 : vector<512x8xbf16> to vector<4x128x8xbf16>
    %cst_49 = arith.constant dense<0.000000e+00> : vector<4x128x128xf32>
    %83 = tpu.matmul %80, %81, %cst_49 {dimension_numbers = #tpu.dot_dimension_numbers<[2], [2], [1], [1], [0, 0, 0, 1, 1, 1], [0], [0]>} : vector<4x128x8xbf16>, vector<4x128x8xbf16>, vector<4x128x128xf32> -> vector<4x128x128xf32>
    %c2 = arith.constant 2 : index
    %c0_50 = arith.constant 0 : index
    %c0_51 = arith.constant 0 : index
    %c0_52 = arith.constant 0 : index
    %84 = vector.load %arg6[%c2, %c0_50, %c0_51, %c0_52] : memref<4x2x128x128xf32, #tpu.memory_space<vmem>>, vector<1x2x128x128xf32>
    %85 = vector.shape_cast %84 : vector<1x2x128x128xf32> to vector<2x128x128xf32>
    %86 = vector.shape_cast %83 : vector<4x128x128xf32> to vector<2x2x128x128xf32>
    %87 = vector.shape_cast %85 : vector<2x128x128xf32> to vector<1x2x128x128xf32>
    %88 = vector.broadcast %87 : vector<1x2x128x128xf32> to vector<2x2x128x128xf32>
    %89 = arith.addf %86, %88 : vector<2x2x128x128xf32>
    %90 = vector.shape_cast %89 : vector<2x2x128x128xf32> to vector<4x128x128xf32>
    %cst_53 = arith.constant dense<0xFF800000> : vector<4x128xf32>
    %91 = vector.multi_reduction <maximumf>, %90, %cst_53 [2] : vector<4x128x128xf32> to vector<4x128xf32>
    %92 = vector.shape_cast %91 : vector<4x128xf32> to vector<4x128x1xf32>
    %93 = vector.broadcast %92 : vector<4x128x1xf32> to vector<4x128x128xf32>
    %94 = arith.subf %90, %93 : vector<4x128x128xf32>
    %95 = math.exp %94 : vector<4x128x128xf32>
    %cst_54 = arith.constant dense<0.000000e+00> : vector<4x128xf32>
    %96 = vector.multi_reduction <add>, %95, %cst_54 [2] : vector<4x128x128xf32> to vector<4x128xf32>
    %97 = vector.shape_cast %96 : vector<4x128xf32> to vector<4x128x1xf32>
    %98 = tpu.reciprocal %97 {approx = true} : vector<4x128x1xf32> -> vector<4x128x1xf32>
    %99 = vector.broadcast %98 : vector<4x128x1xf32> to vector<4x128x128xf32>
    %100 = arith.mulf %95, %99 : vector<4x128x128xf32>
    %101 = arith.truncf %100 : vector<4x128x128xf32> to vector<4x128x128xbf16>
    %cst_55 = arith.constant dense<0.000000e+00> : vector<4x128x8xf32>
    %102 = tpu.matmul %101, %82, %cst_55 {dimension_numbers = #tpu.dot_dimension_numbers<[2], [1], [1], [2], [0, 0, 0, 1, 1, 2], [0], [0]>} : vector<4x128x128xbf16>, vector<4x128x8xbf16>, vector<4x128x8xf32> -> vector<4x128x8xf32>
    %c0_56 = arith.constant 0 : index
    %c0_57 = arith.constant 0 : index
    %103 = vector.load %arg9[%c0_56, %c0_57] : memref<512x32xf32, #tpu.memory_space<vmem>>, vector<512x32xf32>
    %104 = vector.shape_cast %102 : vector<4x128x8xf32> to vector<512x8xf32>
    %105 = arith.truncf %104 : vector<512x8xf32> to vector<512x8xbf16>
    %c16_58 = arith.constant 16 : index
    %c0_59 = arith.constant 0 : index
    %106 = vector.load %arg4[%c16_58, %c0_59] : memref<32x32xbf16, #tpu.memory_space<vmem>>, vector<8x32xbf16>
    %cst_60 = arith.constant dense<0.000000e+00> : vector<512x32xf32>
    %107 = tpu.matmul %105, %106, %cst_60 {dimension_numbers = #tpu.dot_dimension_numbers<[1], [0], [0], [1], [0, 0, 1, 1], [], []>} : vector<512x8xbf16>, vector<8x32xbf16>, vector<512x32xf32> -> vector<512x32xf32>
    %108 = arith.addf %103, %107 : vector<512x32xf32>
    %c0_61 = arith.constant 0 : index
    %c0_62 = arith.constant 0 : index
    %109 = vector.load %arg9[%c0_61, %c0_62] : memref<512x32xf32, #tpu.memory_space<vmem>>, vector<512x32xf32>
    tpu.vector_store %arg9[%c0_61, %c0_62], %108 {strides = array<i32>} : memref<512x32xf32, #tpu.memory_space<vmem>>, vector<512x32xf32>,
    %c0_63 = arith.constant 0 : index
    %c24 = arith.constant 24 : index
    %110 = vector.load %arg8[%c0_63, %c24] : memref<512x96xbf16, #tpu.memory_space<vmem>>, vector<512x8xbf16>
    %c0_64 = arith.constant 0 : index
    %c56 = arith.constant 56 : index
    %111 = vector.load %arg8[%c0_64, %c56] : memref<512x96xbf16, #tpu.memory_space<vmem>>, vector<512x8xbf16>
    %c0_65 = arith.constant 0 : index
    %c88 = arith.constant 88 : index
    %112 = vector.load %arg8[%c0_65, %c88] : memref<512x96xbf16, #tpu.memory_space<vmem>>, vector<512x8xbf16>
    %113 = vector.shape_cast %110 : vector<512x8xbf16> to vector<4x128x8xbf16>
    %114 = vector.shape_cast %111 : vector<512x8xbf16> to vector<4x128x8xbf16>
    %115 = vector.shape_cast %112 : vector<512x8xbf16> to vector<4x128x8xbf16>
    %cst_66 = arith.constant dense<0.000000e+00> : vector<4x128x128xf32>
    %116 = tpu.matmul %113, %114, %cst_66 {dimension_numbers = #tpu.dot_dimension_numbers<[2], [2], [1], [1], [0, 0, 0, 1, 1, 1], [0], [0]>} : vector<4x128x8xbf16>, vector<4x128x8xbf16>, vector<4x128x128xf32> -> vector<4x128x128xf32>
    %c3 = arith.constant 3 : index
    %c0_67 = arith.constant 0 : index
    %c0_68 = arith.constant 0 : index
    %c0_69 = arith.constant 0 : index
    %117 = vector.load %arg6[%c3, %c0_67, %c0_68, %c0_69] : memref<4x2x128x128xf32, #tpu.memory_space<vmem>>, vector<1x2x128x128xf32>
    %118 = vector.shape_cast %117 : vector<1x2x128x128xf32> to vector<2x128x128xf32>
    %119 = vector.shape_cast %116 : vector<4x128x128xf32> to vector<2x2x128x128xf32>
    %120 = vector.shape_cast %118 : vector<2x128x128xf32> to vector<1x2x128x128xf32>
    %121 = vector.broadcast %120 : vector<1x2x128x128xf32> to vector<2x2x128x128xf32>
    %122 = arith.addf %119, %121 : vector<2x2x128x128xf32>
    %123 = vector.shape_cast %122 : vector<2x2x128x128xf32> to vector<4x128x128xf32>
    %cst_70 = arith.constant dense<0xFF800000> : vector<4x128xf32>
    %124 = vector.multi_reduction <maximumf>, %123, %cst_70 [2] : vector<4x128x128xf32> to vector<4x128xf32>
    %125 = vector.shape_cast %124 : vector<4x128xf32> to vector<4x128x1xf32>
    %126 = vector.broadcast %125 : vector<4x128x1xf32> to vector<4x128x128xf32>
    %127 = arith.subf %123, %126 : vector<4x128x128xf32>
    %128 = math.exp %127 : vector<4x128x128xf32>
    %cst_71 = arith.constant dense<0.000000e+00> : vector<4x128xf32>
    %129 = vector.multi_reduction <add>, %128, %cst_71 [2] : vector<4x128x128xf32> to vector<4x128xf32>
    %130 = vector.shape_cast %129 : vector<4x128xf32> to vector<4x128x1xf32>
    %131 = tpu.reciprocal %130 {approx = true} : vector<4x128x1xf32> -> vector<4x128x1xf32>
    %132 = vector.broadcast %131 : vector<4x128x1xf32> to vector<4x128x128xf32>
    %133 = arith.mulf %128, %132 : vector<4x128x128xf32>
    %134 = arith.truncf %133 : vector<4x128x128xf32> to vector<4x128x128xbf16>
    %cst_72 = arith.constant dense<0.000000e+00> : vector<4x128x8xf32>
    %135 = tpu.matmul %134, %115, %cst_72 {dimension_numbers = #tpu.dot_dimension_numbers<[2], [1], [1], [2], [0, 0, 0, 1, 1, 2], [0], [0]>} : vector<4x128x128xbf16>, vector<4x128x8xbf16>, vector<4x128x8xf32> -> vector<4x128x8xf32>
    %c0_73 = arith.constant 0 : index
    %c0_74 = arith.constant 0 : index
    %136 = vector.load %arg9[%c0_73, %c0_74] : memref<512x32xf32, #tpu.memory_space<vmem>>, vector<512x32xf32>
    %137 = vector.shape_cast %135 : vector<4x128x8xf32> to vector<512x8xf32>
    %138 = arith.truncf %137 : vector<512x8xf32> to vector<512x8xbf16>
    %c24_75 = arith.constant 24 : index
    %c0_76 = arith.constant 0 : index
    %139 = vector.load %arg4[%c24_75, %c0_76] : memref<32x32xbf16, #tpu.memory_space<vmem>>, vector<8x32xbf16>
    %cst_77 = arith.constant dense<0.000000e+00> : vector<512x32xf32>
    %140 = tpu.matmul %138, %139, %cst_77 {dimension_numbers = #tpu.dot_dimension_numbers<[1], [0], [0], [1], [0, 0, 1, 1], [], []>} : vector<512x8xbf16>, vector<8x32xbf16>, vector<512x32xf32> -> vector<512x32xf32>
    %141 = arith.addf %136, %140 : vector<512x32xf32>
    %c0_78 = arith.constant 0 : index
    %c0_79 = arith.constant 0 : index
    %142 = vector.load %arg9[%c0_78, %c0_79] : memref<512x32xf32, #tpu.memory_space<vmem>>, vector<512x32xf32>
    tpu.vector_store %arg9[%c0_78, %c0_79], %141 {strides = array<i32>} : memref<512x32xf32, #tpu.memory_space<vmem>>, vector<512x32xf32>,
    %c0_80 = arith.constant 0 : index
    %c0_81 = arith.constant 0 : index
    %143 = vector.load %arg9[%c0_80, %c0_81] : memref<512x32xf32, #tpu.memory_space<vmem>>, vector<512x32xf32>
    %c0_82 = arith.constant 0 : index
    %c0_83 = arith.constant 0 : index
    %144 = vector.load %arg5[%c0_82, %c0_83] : memref<1x32xf32, #tpu.memory_space<vmem>>, vector<1x32xf32>
    %145 = vector.broadcast %144 : vector<1x32xf32> to vector<512x32xf32>
    %146 = arith.addf %143, %145 : vector<512x32xf32>
    %c0_84 = arith.constant 0 : index
    %c0_85 = arith.constant 0 : index
    %147 = vector.load %arg7[%c0_84, %c0_85] : memref<512x32xf32, #tpu.memory_space<vmem>>, vector<512x32xf32>
    tpu.vector_store %arg7[%c0_84, %c0_85], %146 {strides = array<i32>} : memref<512x32xf32, #tpu.memory_space<vmem>>, vector<512x32xf32>,
    return
  }
  func.func @transform_0(%arg0: i32) -> (i32, i32) {
    %c0_i32 = arith.constant 0 : i32
    %c0_i32_0 = arith.constant 0 : i32
    return %arg0, %c0_i32 : i32, i32
  }
  func.func @transform_1(%arg0: i32) -> (i32, i32) {
    %c0_i32 = arith.constant 0 : i32
    %c0_i32_0 = arith.constant 0 : i32
    %c0_i32_1 = arith.constant 0 : i32
    return %c0_i32, %c0_i32_0 : i32, i32
  }
  func.func @transform_2(%arg0: i32) -> (i32, i32) {
    %c0_i32 = arith.constant 0 : i32
    %c0_i32_0 = arith.constant 0 : i32
    %c0_i32_1 = arith.constant 0 : i32
    return %c0_i32, %c0_i32_0 : i32, i32
  }
  func.func @transform_3(%arg0: i32) -> (i32, i32) {
    %c0_i32 = arith.constant 0 : i32
    %c0_i32_0 = arith.constant 0 : i32
    %c0_i32_1 = arith.constant 0 : i32
    return %c0_i32, %c0_i32_0 : i32, i32
  }
  func.func @transform_4(%arg0: i32) -> (i32, i32) {
    %c0_i32 = arith.constant 0 : i32
    %c0_i32_0 = arith.constant 0 : i32
    %c0_i32_1 = arith.constant 0 : i32
    return %c0_i32, %c0_i32_0 : i32, i32
  }
  func.func @transform_5(%arg0: i32) -> (i32, i32, i32, i32) {
    %c0_i32 = arith.constant 0 : i32
    %c0_i32_0 = arith.constant 0 : i32
    %c0_i32_1 = arith.constant 0 : i32
    %c0_i32_2 = arith.constant 0 : i32
    %c0_i32_3 = arith.constant 0 : i32
    return %c0_i32, %c0_i32_0, %c0_i32_1, %c0_i32_2 : i32, i32, i32, i32
  }
  func.func @transform_6(%arg0: i32) -> (i32, i32) {
    %c0_i32 = arith.constant 0 : i32
    %c0_i32_0 = arith.constant 0 : i32
    return %arg0, %c0_i32 : i32, i32
  }
}

</mosaic_0001>

<llo_original>
// kernel: tpu_custom_call.1
$region0: #{tpu_custom_call.1}
  #allocation0 [shape = 'u32[]', space=smem, size = 0x4, offset = 0x4, fixed_abs, tag = 'smem constant byte address 0x4 - core index']
  #allocation1 [shape = 'u32[144,128]{1,0:T(1,128)}', space=vmem, size = 0x12000, scoped, tag = 'internal scratch']
  #allocation2 [shape = 'bf16[512,96]{1,0:T(8,128)(2,1)}', space=vmem, size = 0x20000, scoped, tag = 'scratch operand']
  #allocation3 [shape = 'f32[512,32]{1,0:T(8,128)}', space=vmem, size = 0x40000, scoped, tag = 'scratch operand']
  %s0 = inlined_call_operand.vmem [shape: f32[1024,32], index: 0, kind: input, shape index: {}]
  %s1 = inlined_call_operand.vmem [shape: bf16[32,96], index: 1, kind: input, shape index: {}]
  %s2 = inlined_call_operand.vmem [shape: f32[1,96], index: 2, kind: input, shape index: {}]
  %s3 = inlined_call_operand.vmem [shape: bf16[32,32], index: 3, kind: input, shape index: {}]
  %s4 = inlined_call_operand.vmem [shape: f32[1,32], index: 4, kind: input, shape index: {}]
  %s5 = inlined_call_operand.vmem [shape: f32[4,2,128,128], index: 5, kind: input, shape index: {}]
  %s6 = inlined_call_operand.vmem [shape: f32[1024,32], index: 6, kind: output, shape index: {}]
  %s7 = sld [smem:[#allocation0]]
  $region57: #{tpu_custom_call.1} parent=0
    _
  %s9 = ssub.s32 1, %s7
  %s10 = scalar_select 0, %s9, %s7
  loop: start=0, step=1, limit=4
  $region2: #{tpu_custom_call.1} parent=0 // loop_pre_header
    _
  $region3: #{tpu_custom_call.1} parent=0 // loop_header
    %s12 = sphi 0, %s16
    %p13 = scmp.ge.s32.totalorder %s12, 4
    %s22 = sphi 0, %s24
    %s25 = sphi 0, %s22
    %s26 = sphi 0, %s25
    %s42 = sphi 0, %s26
    %s46 = sphi 0, %s46
    %s48 = sphi 0, %s46
    %s49 = sphi 0, %s48
    %s63 = sphi 0, %s49
    %s67 = sphi 0, %s67
    %s69 = sphi 0, %s67
    %s70 = sphi 0, %s69
    %s84 = sphi 0, %s70
    %s88 = sphi 0, %s88
    %s90 = sphi 0, %s88
    %s91 = sphi 0, %s90
    %s105 = sphi 0, %s91
    %s109 = sphi 0, %s109
    %s111 = sphi 0, %s109
    %s112 = sphi 0, %s111
    %s126 = sphi 0, %s112
    %s130 = sphi 0, %s130
    %s132 = sphi 0, %s130
    %s133 = sphi 0, %s132
    %s147 = sphi 0, %s133
    %s153 = sphi 0, %s155
    %s156 = sphi 0, %s153
    %s157 = sphi 0, %s156
    %s173 = sphi 0, %s157
  $region4: #{tpu_custom_call.1} parent=0 // loop_header_branch
    %15 = sbr.rel (%p13) target = $region8
  $region5: #{tpu_custom_call.1} parent=0 // loop_body
    %s17 = ssub.s32 %s12, 1
    %s18 = ssub.s32 %s12, 2
    %s19 = sadd.s32 %s12, 1
    %s20 = ssub.s32 %s12, %s19
    %p21 = scmp.eq.s32.totalorder %s20, 0
    %s23 = sadd.s32 %s22, 1
    %s24 = scalar_select %p21, %s22, %s23
    %p27 = pneg %p21
    %p28 = scmp.eq.s32.totalorder %s12, 1
    %p29 = por %p27, %p28
    %p30 = scmp.ne.s32.totalorder %s22, %s25
    %p31 = scmp.eq.s32.totalorder %s12, 0
    %p32 = por %p30, %p31
    %p33 = scmp.ne.s32.totalorder %s22, %s25
    %p34 = scmp.eq.s32.totalorder %s17, 1
    %p35 = por %p33, %p34
    %p36 = scmp.ne.s32.totalorder %s25, %s26
    %p37 = scmp.eq.s32.totalorder %s17, 0
    %p38 = por %p36, %p37
    %p39 = scmp.ne.s32.totalorder %s25, %s26
    %p40 = scmp.eq.s32.totalorder %s18, 1
    %p41 = por %p39, %p40
    %p43 = scmp.ne.s32.totalorder %s26, %s42
    %p44 = scmp.eq.s32.totalorder %s18, 0
    %p45 = por %p43, %p44
    %s47 = sadd.s32 %s46, 1
    %p50 = scmp.eq.s32.totalorder %s12, 1
    %p51 = scmp.ne.s32.totalorder %s46, %s48
    %p52 = scmp.eq.s32.totalorder %s12, 0
    %p53 = por %p51, %p52
    %p54 = scmp.ne.s32.totalorder %s46, %s48
    %p55 = scmp.eq.s32.totalorder %s17, 1
    %p56 = por %p54, %p55
    %p57 = scmp.ne.s32.totalorder %s48, %s49
    %p58 = scmp.eq.s32.totalorder %s17, 0
    %p59 = por %p57, %p58
    %p60 = scmp.ne.s32.totalorder %s48, %s49
    %p61 = scmp.eq.s32.totalorder %s18, 1
    %p62 = por %p60, %p61
    %p64 = scmp.ne.s32.totalorder %s49, %s63
    %p65 = scmp.eq.s32.totalorder %s18, 0
    %p66 = por %p64, %p65
    %s68 = sadd.s32 %s67, 1
    %p71 = scmp.eq.s32.totalorder %s12, 1
    %p72 = scmp.ne.s32.totalorder %s67, %s69
    %p73 = scmp.eq.s32.totalorder %s12, 0
    %p74 = por %p72, %p73
    %p75 = scmp.ne.s32.totalorder %s67, %s69
    %p76 = scmp.eq.s32.totalorder %s17, 1
    %p77 = por %p75, %p76
    %p78 = scmp.ne.s32.totalorder %s69, %s70
    %p79 = scmp.eq.s32.totalorder %s17, 0
    %p80 = por %p78, %p79
    %p81 = scmp.ne.s32.totalorder %s69, %s70
    %p82 = scmp.eq.s32.totalorder %s18, 1
    %p83 = por %p81, %p82
    %p85 = scmp.ne.s32.totalorder %s70, %s84
    %p86 = scmp.eq.s32.totalorder %s18, 0
    %p87 = por %p85, %p86
    %s89 = sadd.s32 %s88, 1
    %p92 = scmp.eq.s32.totalorder %s12, 1
    %p93 = scmp.ne.s32.totalorder %s88, %s90
    %p94 = scmp.eq.s32.totalorder %s12, 0
    %p95 = por %p93, %p94
    %p96 = scmp.ne.s32.totalorder %s88, %s90
    %p97 = scmp.eq.s32.totalorder %s17, 1
    %p98 = por %p96, %p97
    %p99 = scmp.ne.s32.totalorder %s90, %s91
    %p100 = scmp.eq.s32.totalorder %s17, 0
    %p101 = por %p99, %p100
    %p102 = scmp.ne.s32.totalorder %s90, %s91
    %p103 = scmp.eq.s32.totalorder %s18, 1
    %p104 = por %p102, %p103
    %p106 = scmp.ne.s32.totalorder %s91, %s105
    %p107 = scmp.eq.s32.totalorder %s18, 0
    %p108 = por %p106, %p107
    %s110 = sadd.s32 %s109, 1
    %p113 = scmp.eq.s32.totalorder %s12, 1
    %p114 = scmp.ne.s32.totalorder %s109, %s111
    %p115 = scmp.eq.s32.totalorder %s12, 0
    %p116 = por %p114, %p115
    %p117 = scmp.ne.s32.totalorder %s109, %s111
    %p118 = scmp.eq.s32.totalorder %s17, 1
    %p119 = por %p117, %p118
    %p120 = scmp.ne.s32.totalorder %s111, %s112
    %p121 = scmp.eq.s32.totalorder %s17, 0
    %p122 = por %p120, %p121
    %p123 = scmp.ne.s32.totalorder %s111, %s112
    %p124 = scmp.eq.s32.totalorder %s18, 1
    %p125 = por %p123, %p124
    %p127 = scmp.ne.s32.totalorder %s112, %s126
    %p128 = scmp.eq.s32.totalorder %s18, 0
    %p129 = por %p127, %p128
    %s131 = sadd.s32 %s130, 1
    %p134 = scmp.eq.s32.totalorder %s12, 1
    %p135 = scmp.ne.s32.totalorder %s130, %s132
    %p136 = scmp.eq.s32.totalorder %s12, 0
    %p137 = por %p135, %p136
    %p138 = scmp.ne.s32.totalorder %s130, %s132
    %p139 = scmp.eq.s32.totalorder %s17, 1
    %p140 = por %p138, %p139
    %p141 = scmp.ne.s32.totalorder %s132, %s133
    %p142 = scmp.eq.s32.totalorder %s17, 0
    %p143 = por %p141, %p142
    %p144 = scmp.ne.s32.totalorder %s132, %s133
    %p145 = scmp.eq.s32.totalorder %s18, 1
    %p146 = por %p144, %p145
    %p148 = scmp.ne.s32.totalorder %s133, %s147
    %p149 = scmp.eq.s32.totalorder %s18, 0
    %p150 = por %p148, %p149
    %s151 = ssub.s32 %s12, %s19
    %p152 = scmp.eq.s32.totalorder %s151, 0
    %s154 = sadd.s32 %s153, 1
    %s155 = scalar_select %p152, %s153, %s154
    %p158 = pneg %p152
    %p159 = scmp.eq.s32.totalorder %s12, 1
    %p160 = por %p158, %p159
    %p161 = scmp.ne.s32.totalorder %s153, %s156
    %p162 = scmp.eq.s32.totalorder %s12, 0
    %p163 = por %p161, %p162
    %p164 = scmp.ne.s32.totalorder %s153, %s156
    %p165 = scmp.eq.s32.totalorder %s17, 1
    %p166 = por %p164, %p165
    %p167 = scmp.ne.s32.totalorder %s156, %s157
    %p168 = scmp.eq.s32.totalorder %s17, 0
    %p169 = por %p167, %p168
    %p170 = scmp.ne.s32.totalorder %s156, %s157
    %p171 = scmp.eq.s32.totalorder %s18, 1
    %p172 = por %p170, %p171
    %p174 = scmp.ne.s32.totalorder %s157, %s173
    %p175 = scmp.eq.s32.totalorder %s18, 0
    %p176 = por %p174, %p175
    %p177 = scmp.le.s32.totalorder 1, %s12
    %p178 = scmp.lt.s32.totalorder %s12, 3
    %p179 = pnand %p177, %p178
    %p180 = pneg %p179
    // Predicated region
    $region9: #{tpu_custom_call.1} parent=5 // pred_check
      _
    $region10: #{tpu_custom_call.1} parent=5 // pred_check_branch
      %182 = sbr.rel (%p179) target = $region12
    $region11: #{tpu_custom_call.1} parent=5 // pred_region
      %s183 = ssub.s32 %s12, 1
      // Predicated region
      $region13: #{tpu_custom_call.1} parent=11 // pred_check
        %p184 = pneg %p59
      $region14: #{tpu_custom_call.1} parent=11 // pred_check_branch
        %186 = sbr.rel (%p184) target = $region16
      $region15: #{tpu_custom_call.1} parent=11 // pred_region
        _
      $region16: #{tpu_custom_call.1} parent=11 // pred_fallthru
        _
      // Predicated region
      $region17: #{tpu_custom_call.1} parent=11 // pred_check
        %p187 = pneg %p80
      $region18: #{tpu_custom_call.1} parent=11 // pred_check_branch
        %189 = sbr.rel (%p187) target = $region20
      $region19: #{tpu_custom_call.1} parent=11 // pred_region
        _
      $region20: #{tpu_custom_call.1} parent=11 // pred_fallthru
        _
      // Predicated region
      $region21: #{tpu_custom_call.1} parent=11 // pred_check
        %p190 = pneg %p101
      $region22: #{tpu_custom_call.1} parent=11 // pred_check_branch
        %192 = sbr.rel (%p190) target = $region24
      $region23: #{tpu_custom_call.1} parent=11 // pred_region
        _
      $region24: #{tpu_custom_call.1} parent=11 // pred_fallthru
        _
      // Predicated region
      $region25: #{tpu_custom_call.1} parent=11 // pred_check
        %p193 = pneg %p122
      $region26: #{tpu_custom_call.1} parent=11 // pred_check_branch
        %195 = sbr.rel (%p193) target = $region28
      $region27: #{tpu_custom_call.1} parent=11 // pred_region
        _
      $region28: #{tpu_custom_call.1} parent=11 // pred_fallthru
        _
      // Predicated region
      $region29: #{tpu_custom_call.1} parent=11 // pred_check
        %p196 = pneg %p143
      $region30: #{tpu_custom_call.1} parent=11 // pred_check_branch
        %198 = sbr.rel (%p196) target = $region32
      $region31: #{tpu_custom_call.1} parent=11 // pred_region
        _
      $region32: #{tpu_custom_call.1} parent=11 // pred_fallthru
        _
    $region12: #{tpu_custom_call.1} parent=5 // pred_fallthru
      _
    %p199 = scmp.lt.s32.totalorder %s12, 2
    // Predicated region
    $region33: #{tpu_custom_call.1} parent=5 // pred_check
      %p200 = pneg %p199
    $region34: #{tpu_custom_call.1} parent=5 // pred_check_branch
      %202 = sbr.rel (%p200) target = $region36
    $region35: #{tpu_custom_call.1} parent=5 // pred_region
      // Predicated region
      $region37: #{tpu_custom_call.1} parent=35 // pred_check
        %p203 = pneg %p32
      $region38: #{tpu_custom_call.1} parent=35 // pred_check_branch
        %205 = sbr.rel (%p203) target = $region40
      $region39: #{tpu_custom_call.1} parent=35 // pred_region
        %s206 = smul.u32 64, %s12
        %p207 = scmp.lt.s32.totalorder %s206, 127
        %s208 = scalar_select %p207, %s206, 127
        %s209 = smul.addr %s208, 8
        %s210 = scalar_lea.vmem %s0, %s209
        %s211 = smul.u32 64, %s12
      $region40: #{tpu_custom_call.1} parent=35 // pred_fallthru
        _
    $region36: #{tpu_custom_call.1} parent=5 // pred_fallthru
      _
    %p212 = scmp.le.s32.totalorder 1, %s12
    %p213 = scmp.lt.s32.totalorder %s12, 3
    %p214 = pnand %p212, %p213
    %p215 = pneg %p214
    // Predicated region
    $region41: #{tpu_custom_call.1} parent=5 // pred_check
      _
    $region42: #{tpu_custom_call.1} parent=5 // pred_check_branch
      %217 = sbr.rel (%p214) target = $region44
    $region43: #{tpu_custom_call.1} parent=5 // pred_region
      %s218 = ssub.s32 %s12, 1
      %s219 = smul.u32 64, %s17
      %p220 = scmp.lt.s32.totalorder %s219, 127
      %s221 = scalar_select %p220, %s219, 127
      %s222 = smul.addr %s221, 8
      %s223 = scalar_lea.vmem %s0, %s222
      %p224 = pneg %p38
      %p225 = pneg %p35
      %p226 = pneg %p59
      %p227 = pneg %p56
      %p228 = pneg %p80
      %p229 = pneg %p77
      %p230 = pneg %p101
      %p231 = pneg %p98
      %p232 = pneg %p122
      %p233 = pneg %p119
      %p234 = pneg %p143
      %p235 = pneg %p140
      %p236 = pneg %p169
      %p237 = pneg %p166
      %s238 = smul.u32 64, %s17
      %p239 = scmp.lt.s32.totalorder %s238, 127
      %s240 = scalar_select %p239, %s238, 127
      %s241 = smul.addr %s240, 8
      %s242 = scalar_lea.vmem %s6, %s241
      %s243 = smul.u32 64, %s17
      %p244 = scmp.lt.s32.totalorder %s243, 127
      %s245 = scalar_select %p244, %s243, 127
      %s246 = smul.addr %s245, 8
      %s247 = scalar_lea.vmem %s0, %s246
      %s248 = smul.u32 64, %s17
      %s249 = smul.u32 64, %s17
      %p250 = scmp.lt.s32.totalorder %s249, 127
      %s251 = scalar_select %p250, %s249, 127
      %s252 = smul.addr %s251, 8
      %s253 = scalar_lea.vmem %s6, %s252
      %s254 = smul.u32 64, %s17
      %v256 = vld [vmem:[%s247] sm:$0xff]
      %v257 = vld [vmem:[%s247 + $0x8] sm:$0xff]
      %v258 = vld [vmem:[%s247 + $0x10] sm:$0xff]
      %v259 = vld [vmem:[%s247 + $0x18] sm:$0xff]
      %v260 = vld [vmem:[%s247 + $0x20] sm:$0xff]
      %v261 = vld [vmem:[%s247 + $0x28] sm:$0xff]
      %v262 = vld [vmem:[%s247 + $0x30] sm:$0xff]
      %v263 = vld [vmem:[%s247 + $0x38] sm:$0xff]
      %v264 = vld [vmem:[%s247 + $0x40] sm:$0xff]
      %v265 = vld [vmem:[%s247 + $0x48] sm:$0xff]
      %v266 = vld [vmem:[%s247 + $0x50] sm:$0xff]
      %v267 = vld [vmem:[%s247 + $0x58] sm:$0xff]
      %v268 = vld [vmem:[%s247 + $0x60] sm:$0xff]
      %v269 = vld [vmem:[%s247 + $0x68] sm:$0xff]
      %v270 = vld [vmem:[%s247 + $0x70] sm:$0xff]
      %v271 = vld [vmem:[%s247 + $0x78] sm:$0xff]
      %v272 = vld [vmem:[%s247 + $0x80] sm:$0xff]
      %v273 = vld [vmem:[%s247 + $0x88] sm:$0xff]
      %v274 = vld [vmem:[%s247 + $0x90] sm:$0xff]
      %v275 = vld [vmem:[%s247 + $0x98] sm:$0xff]
      %v276 = vld [vmem:[%s247 + $0xa0] sm:$0xff]
      %v277 = vld [vmem:[%s247 + $0xa8] sm:$0xff]
      %v278 = vld [vmem:[%s247 + $0xb0] sm:$0xff]
      %v279 = vld [vmem:[%s247 + $0xb8] sm:$0xff]
      %v280 = vld [vmem:[%s247 + $0xc0] sm:$0xff]
      %v281 = vld [vmem:[%s247 + $0xc8] sm:$0xff]
      %v282 = vld [vmem:[%s247 + $0xd0] sm:$0xff]
      %v283 = vld [vmem:[%s247 + $0xd8] sm:$0xff]
      %v284 = vld [vmem:[%s247 + $0xe0] sm:$0xff]
      %v285 = vld [vmem:[%s247 + $0xe8] sm:$0xff]
      %v286 = vld [vmem:[%s247 + $0xf0] sm:$0xff]
      %v287 = vld [vmem:[%s247 + $0xf8] sm:$0xff]
      %v288 = vld [vmem:[%s247 + $0x100] sm:$0xff]
      %v289 = vld [vmem:[%s247 + $0x108] sm:$0xff]
      %v290 = vld [vmem:[%s247 + $0x110] sm:$0xff]
      %v291 = vld [vmem:[%s247 + $0x118] sm:$0xff]
      %v292 = vld [vmem:[%s247 + $0x120] sm:$0xff]
      %v293 = vld [vmem:[%s247 + $0x128] sm:$0xff]
      %v294 = vld [vmem:[%s247 + $0x130] sm:$0xff]
      %v295 = vld [vmem:[%s247 + $0x138] sm:$0xff]
      %v296 = vld [vmem:[%s247 + $0x140] sm:$0xff]
      %v297 = vld [vmem:[%s247 + $0x148] sm:$0xff]
      %v298 = vld [vmem:[%s247 + $0x150] sm:$0xff]
      %v299 = vld [vmem:[%s247 + $0x158] sm:$0xff]
      %v300 = vld [vmem:[%s247 + $0x160] sm:$0xff]
      %v301 = vld [vmem:[%s247 + $0x168] sm:$0xff]
      %v302 = vld [vmem:[%s247 + $0x170] sm:$0xff]
      %v303 = vld [vmem:[%s247 + $0x178] sm:$0xff]
      %v304 = vld [vmem:[%s247 + $0x180] sm:$0xff]
      %v305 = vld [vmem:[%s247 + $0x188] sm:$0xff]
      %v306 = vld [vmem:[%s247 + $0x190] sm:$0xff]
      %v307 = vld [vmem:[%s247 + $0x198] sm:$0xff]
      %v308 = vld [vmem:[%s247 + $0x1a0] sm:$0xff]
      %v309 = vld [vmem:[%s247 + $0x1a8] sm:$0xff]
      %v310 = vld [vmem:[%s247 + $0x1b0] sm:$0xff]
      %v311 = vld [vmem:[%s247 + $0x1b8] sm:$0xff]
      %v312 = vld [vmem:[%s247 + $0x1c0] sm:$0xff]
      %v313 = vld [vmem:[%s247 + $0x1c8] sm:$0xff]
      %v314 = vld [vmem:[%s247 + $0x1d0] sm:$0xff]
      %v315 = vld [vmem:[%s247 + $0x1d8] sm:$0xff]
      %v316 = vld [vmem:[%s247 + $0x1e0] sm:$0xff]
      %v317 = vld [vmem:[%s247 + $0x1e8] sm:$0xff]
      %v318 = vld [vmem:[%s247 + $0x1f0] sm:$0xff]
      %v319 = vld [vmem:[%s247 + $0x1f8] sm:$0xff]
      %v320 = vpack.c.bf16 %v257, %v256
      %v321 = vpack.c.bf16 %v259, %v258
      %v322 = vpack.c.bf16 %v261, %v260
      %v323 = vpack.c.bf16 %v263, %v262
      %v324 = vpack.c.bf16 %v265, %v264
      %v325 = vpack.c.bf16 %v267, %v266
      %v326 = vpack.c.bf16 %v269, %v268
      %v327 = vpack.c.bf16 %v271, %v270
      %v328 = vpack.c.bf16 %v273, %v272
      %v329 = vpack.c.bf16 %v275, %v274
      %v330 = vpack.c.bf16 %v277, %v276
      %v331 = vpack.c.bf16 %v279, %v278
      %v332 = vpack.c.bf16 %v281, %v280
      %v333 = vpack.c.bf16 %v283, %v282
      %v334 = vpack.c.bf16 %v285, %v284
      %v335 = vpack.c.bf16 %v287, %v286
      %v336 = vpack.c.bf16 %v289, %v288
      %v337 = vpack.c.bf16 %v291, %v290
      %v338 = vpack.c.bf16 %v293, %v292
      %v339 = vpack.c.bf16 %v295, %v294
      %v340 = vpack.c.bf16 %v297, %v296
      %v341 = vpack.c.bf16 %v299, %v298
      %v342 = vpack.c.bf16 %v301, %v300
      %v343 = vpack.c.bf16 %v303, %v302
      %v344 = vpack.c.bf16 %v305, %v304
      %v345 = vpack.c.bf16 %v307, %v306
      %v346 = vpack.c.bf16 %v309, %v308
      %v347 = vpack.c.bf16 %v311, %v310
      %v348 = vpack.c.bf16 %v313, %v312
      %v349 = vpack.c.bf16 %v315, %v314
      %v350 = vpack.c.bf16 %v317, %v316
      %v351 = vpack.c.bf16 %v319, %v318
      %v352 = vld [vmem:[%s1] sm:$0xf]
      %v353 = vld [vmem:[%s1 + $0x4] sm:$0xf]
      %v354 = vld [vmem:[%s1 + $0x8] sm:$0xf]
      %v355 = vld [vmem:[%s1 + $0xc] sm:$0xf]
      %v356 = vld [vmem:[%s2] sm:$0x1]
      %v358 = vlaneseq
      %v359 = vshrl.u32 %v358, 7
      %v360 = vsub.s32 0, %v359
      %v361 = vrot.slane %v356, %v360
      %v367 = vunpack.c.l.b16 %v352
      %v368 = vunpack.c.l.b16 %v353
      %v369 = vunpack.c.l.b16 %v354
      %v370 = vunpack.c.l.b16 %v355
      %v371 = vpack.c.b16 %v368, %v367
      %v372 = vpack.c.b16 %v370, %v369
      %vm375 = vcmask 261120
      %v377 = vsel %vm375, %v320, 0
      %v380 = vsel %vm375, %v321, 0
      %v383 = vsel %vm375, %v322, 0
      %v386 = vsel %vm375, %v323, 0
      %v389 = vsel %vm375, %v324, 0
      %v392 = vsel %vm375, %v325, 0
      %v395 = vsel %vm375, %v326, 0
      %v398 = vsel %vm375, %v327, 0
      %v401 = vsel %vm375, %v328, 0
      %v404 = vsel %vm375, %v329, 0
      %v407 = vsel %vm375, %v330, 0
      %v410 = vsel %vm375, %v331, 0
      %v413 = vsel %vm375, %v332, 0
      %v416 = vsel %vm375, %v333, 0
      %v419 = vsel %vm375, %v334, 0
      %v422 = vsel %vm375, %v335, 0
      %v425 = vsel %vm375, %v336, 0
      %v428 = vsel %vm375, %v337, 0
      %v431 = vsel %vm375, %v338, 0
      %v434 = vsel %vm375, %v339, 0
      %v437 = vsel %vm375, %v340, 0
      %v440 = vsel %vm375, %v341, 0
      %v443 = vsel %vm375, %v342, 0
      %v446 = vsel %vm375, %v343, 0
      %v449 = vsel %vm375, %v344, 0
      %v452 = vsel %vm375, %v345, 0
      %v455 = vsel %vm375, %v346, 0
      %v458 = vsel %vm375, %v347, 0
      %v461 = vsel %vm375, %v348, 0
      %v464 = vsel %vm375, %v349, 0
      %v467 = vsel %vm375, %v350, 0
      %v470 = vsel %vm375, %v351, 0
      %472 = vmatprep.subr.bf16.mxu0 0
      %473 = vmatpush1.bf16.msra.mxu0 0
      %474 = vmatprep.subr.bf16.mxu0 0
      %475 = vmatpush1.bf16.msra.mxu0 0
      %476 = vmatprep.subr.bf16.mxu0 0
      %477 = vmatpush1.bf16.msra.mxu0 0
      %478 = vmatprep.subr.bf16.mxu0 0
      %479 = vmatpush1.bf16.msra.mxu0 0
      %480 = vmatprep.subr.bf16.mxu0 0
      %481 = vmatpush1.bf16.msra.mxu0 0
      %482 = vmatprep.subr.bf16.mxu0 0
      %483 = vmatpush1.bf16.msra.mxu0 0
      %484 = vmatprep.subr.bf16.mxu0 0
      %485 = vmatpush1.bf16.msra.mxu0 %v372
      %486 = vmatprep.subr.bf16.mxu0 0
      %487 = vmatpush1.bf16.msra.mxu0 %v371
      %488 = vmatprep.subr.bf16.mxu0 0
      %489 = vmatpush2.bf16.msra.mxu0 0
      %490 = vmatprep.subr.bf16.mxu0 0
      %491 = vmatpush2.bf16.msra.mxu0 0
      %492 = vmatprep.subr.bf16.mxu0 0
      %493 = vmatpush2.bf16.msra.mxu0 0
      %494 = vmatprep.subr.bf16.mxu0 0
      %495 = vmatpush2.bf16.msra.mxu0 0
      %496 = vmatprep.subr.bf16.mxu0 0
      %497 = vmatpush2.bf16.msra.mxu0 0
      %498 = vmatprep.subr.bf16.mxu0 0
      %499 = vmatpush2.bf16.msra.mxu0 0
      %500 = vmatprep.subr.bf16.mxu0 0
      %501 = vmatpush2.bf16.msra.mxu0 0
      %502 = vmatprep.subr.bf16.mxu0 0
      %503 = vmatpush2.bf16.msra.mxu0 0
      %504 = vmatprep.mubr.bf16.mxu0 0
      %505 = vmatmul.mubr.bf16.gmra.mxu0 %v377
      %v506 = vpop.f32.mrf.mxu0
      %v507 = vadd.f32 %v361, %v506
      %v508 = vpop.f32.mrf.mxu0
      %v509 = vpop.f32.mrf.mxu0
      %v510 = vadd.f32 %v361, %v509
      %v511 = vpop.f32.mrf.mxu0
      %512 = vmatprep.mubr.bf16.mxu0 0
      %513 = vmatmul.mubr.bf16.gmra.mxu0 %v380
      %v514 = vpop.f32.mrf.mxu0
      %v515 = vadd.f32 %v361, %v514
      %v516 = vpop.f32.mrf.mxu0
      %v517 = vpop.f32.mrf.mxu0
      %v518 = vadd.f32 %v361, %v517
      %v519 = vpop.f32.mrf.mxu0
      %520 = vmatprep.mubr.bf16.mxu0 0
      %521 = vmatmul.mubr.bf16.gmra.mxu0 %v383
      %v522 = vpop.f32.mrf.mxu0
      %v523 = vadd.f32 %v361, %v522
      %v524 = vpop.f32.mrf.mxu0
      %v525 = vpop.f32.mrf.mxu0
      %v526 = vadd.f32 %v361, %v525
      %v527 = vpop.f32.mrf.mxu0
      %528 = vmatprep.mubr.bf16.mxu0 0
      %529 = vmatmul.mubr.bf16.gmra.mxu0 %v386
      %v530 = vpop.f32.mrf.mxu0
      %v531 = vadd.f32 %v361, %v530
      %v532 = vpop.f32.mrf.mxu0
      %v533 = vpop.f32.mrf.mxu0
      %v534 = vadd.f32 %v361, %v533
      %v535 = vpop.f32.mrf.mxu0
      %536 = vmatprep.mubr.bf16.mxu0 0
      %537 = vmatmul.mubr.bf16.gmra.mxu0 %v389
      %v538 = vpop.f32.mrf.mxu0
      %v539 = vadd.f32 %v361, %v538
      %v540 = vpop.f32.mrf.mxu0
      %v541 = vpop.f32.mrf.mxu0
      %v542 = vadd.f32 %v361, %v541
      %v543 = vpop.f32.mrf.mxu0
      %544 = vmatprep.mubr.bf16.mxu0 0
      %545 = vmatmul.mubr.bf16.gmra.mxu0 %v392
      %v546 = vpop.f32.mrf.mxu0
      %v547 = vadd.f32 %v361, %v546
      %v548 = vpop.f32.mrf.mxu0
      %v549 = vpop.f32.mrf.mxu0
      %v550 = vadd.f32 %v361, %v549
      %v551 = vpop.f32.mrf.mxu0
      %552 = vmatprep.mubr.bf16.mxu0 0
      %553 = vmatmul.mubr.bf16.gmra.mxu0 %v395
      %v554 = vpop.f32.mrf.mxu0
      %v555 = vadd.f32 %v361, %v554
      %v556 = vpop.f32.mrf.mxu0
      %v557 = vpop.f32.mrf.mxu0
      %v558 = vadd.f32 %v361, %v557
      %v559 = vpop.f32.mrf.mxu0
      %560 = vmatprep.mubr.bf16.mxu0 0
      %561 = vmatmul.mubr.bf16.gmra.mxu0 %v398
      %v562 = vpop.f32.mrf.mxu0
      %v563 = vadd.f32 %v361, %v562
      %v564 = vpop.f32.mrf.mxu0
      %v565 = vpop.f32.mrf.mxu0
      %v566 = vadd.f32 %v361, %v565
      %v567 = vpop.f32.mrf.mxu0
      %568 = vmatprep.mubr.bf16.mxu0 0
      %569 = vmatmul.mubr.bf16.gmra.mxu0 %v401
      %v570 = vpop.f32.mrf.mxu0
      %v571 = vadd.f32 %v361, %v570
      %v572 = vpop.f32.mrf.mxu0
      %v573 = vpop.f32.mrf.mxu0
      %v574 = vadd.f32 %v361, %v573
      %v575 = vpop.f32.mrf.mxu0
      %576 = vmatprep.mubr.bf16.mxu0 0
      %577 = vmatmul.mubr.bf16.gmra.mxu0 %v404
      %v578 = vpop.f32.mrf.mxu0
      %v579 = vadd.f32 %v361, %v578
      %v580 = vpop.f32.mrf.mxu0
      %v581 = vpop.f32.mrf.mxu0
      %v582 = vadd.f32 %v361, %v581
      %v583 = vpop.f32.mrf.mxu0
      %584 = vmatprep.mubr.bf16.mxu0 0
      %585 = vmatmul.mubr.bf16.gmra.mxu0 %v407
      %v586 = vpop.f32.mrf.mxu0
      %v587 = vadd.f32 %v361, %v586
      %v588 = vpop.f32.mrf.mxu0
      %v589 = vpop.f32.mrf.mxu0
      %v590 = vadd.f32 %v361, %v589
      %v591 = vpop.f32.mrf.mxu0
      %592 = vmatprep.mubr.bf16.mxu0 0
      %593 = vmatmul.mubr.bf16.gmra.mxu0 %v410
      %v594 = vpop.f32.mrf.mxu0
      %v595 = vadd.f32 %v361, %v594
      %v596 = vpop.f32.mrf.mxu0
      %v597 = vpop.f32.mrf.mxu0
      %v598 = vadd.f32 %v361, %v597
      %v599 = vpop.f32.mrf.mxu0
      %600 = vmatprep.mubr.bf16.mxu0 0
      %601 = vmatmul.mubr.bf16.gmra.mxu0 %v413
      %v602 = vpop.f32.mrf.mxu0
      %v603 = vadd.f32 %v361, %v602
      %v604 = vpop.f32.mrf.mxu0
      %v605 = vpop.f32.mrf.mxu0
      %v606 = vadd.f32 %v361, %v605
      %v607 = vpop.f32.mrf.mxu0
      %608 = vmatprep.mubr.bf16.mxu0 0
      %609 = vmatmul.mubr.bf16.gmra.mxu0 %v416
      %v610 = vpop.f32.mrf.mxu0
      %v611 = vadd.f32 %v361, %v610
      %v612 = vpop.f32.mrf.mxu0
      %v613 = vpop.f32.mrf.mxu0
      %v614 = vadd.f32 %v361, %v613
      %v615 = vpop.f32.mrf.mxu0
      %616 = vmatprep.mubr.bf16.mxu0 0
      %617 = vmatmul.mubr.bf16.gmra.mxu0 %v419
      %v618 = vpop.f32.mrf.mxu0
      %v619 = vadd.f32 %v361, %v618
      %v620 = vpop.f32.mrf.mxu0
      %v621 = vpop.f32.mrf.mxu0
      %v622 = vadd.f32 %v361, %v621
      %v623 = vpop.f32.mrf.mxu0
      %624 = vmatprep.mubr.bf16.mxu0 0
      %625 = vmatmul.mubr.bf16.gmra.mxu0 %v422
      %v626 = vpop.f32.mrf.mxu0
      %v627 = vadd.f32 %v361, %v626
      %v628 = vpop.f32.mrf.mxu0
      %v629 = vpop.f32.mrf.mxu0
      %v630 = vadd.f32 %v361, %v629
      %v631 = vpop.f32.mrf.mxu0
      %632 = vmatprep.mubr.bf16.mxu0 0
      %633 = vmatmul.mubr.bf16.gmra.mxu0 %v425
      %v634 = vpop.f32.mrf.mxu0
      %v635 = vadd.f32 %v361, %v634
      %v636 = vpop.f32.mrf.mxu0
      %v637 = vpop.f32.mrf.mxu0
      %v638 = vadd.f32 %v361, %v637
      %v639 = vpop.f32.mrf.mxu0
      %640 = vmatprep.mubr.bf16.mxu0 0
      %641 = vmatmul.mubr.bf16.gmra.mxu0 %v428
      %v642 = vpop.f32.mrf.mxu0
      %v643 = vadd.f32 %v361, %v642
      %v644 = vpop.f32.mrf.mxu0
      %v645 = vpop.f32.mrf.mxu0
      %v646 = vadd.f32 %v361, %v645
      %v647 = vpop.f32.mrf.mxu0
      %648 = vmatprep.mubr.bf16.mxu0 0
      %649 = vmatmul.mubr.bf16.gmra.mxu0 %v431
      %v650 = vpop.f32.mrf.mxu0
      %v651 = vadd.f32 %v361, %v650
      %v652 = vpop.f32.mrf.mxu0
      %v653 = vpop.f32.mrf.mxu0
      %v654 = vadd.f32 %v361, %v653
      %v655 = vpop.f32.mrf.mxu0
      %656 = vmatprep.mubr.bf16.mxu0 0
      %657 = vmatmul.mubr.bf16.gmra.mxu0 %v434
      %v658 = vpop.f32.mrf.mxu0
      %v659 = vadd.f32 %v361, %v658
      %v660 = vpop.f32.mrf.mxu0
      %v661 = vpop.f32.mrf.mxu0
      %v662 = vadd.f32 %v361, %v661
      %v663 = vpop.f32.mrf.mxu0
      %664 = vmatprep.mubr.bf16.mxu0 0
      %665 = vmatmul.mubr.bf16.gmra.mxu0 %v437
      %v666 = vpop.f32.mrf.mxu0
      %v667 = vadd.f32 %v361, %v666
      %v668 = vpop.f32.mrf.mxu0
      %v669 = vpop.f32.mrf.mxu0
      %v670 = vadd.f32 %v361, %v669
      %v671 = vpop.f32.mrf.mxu0
      %672 = vmatprep.mubr.bf16.mxu0 0
      %673 = vmatmul.mubr.bf16.gmra.mxu0 %v440
      %v674 = vpop.f32.mrf.mxu0
      %v675 = vadd.f32 %v361, %v674
      %v676 = vpop.f32.mrf.mxu0
      %v677 = vpop.f32.mrf.mxu0
      %v678 = vadd.f32 %v361, %v677
      %v679 = vpop.f32.mrf.mxu0
      %680 = vmatprep.mubr.bf16.mxu0 0
      %681 = vmatmul.mubr.bf16.gmra.mxu0 %v443
      %v682 = vpop.f32.mrf.mxu0
      %v683 = vadd.f32 %v361, %v682
      %v684 = vpop.f32.mrf.mxu0
      %v685 = vpop.f32.mrf.mxu0
      %v686 = vadd.f32 %v361, %v685
      %v687 = vpop.f32.mrf.mxu0
      %688 = vmatprep.mubr.bf16.mxu0 0
      %689 = vmatmul.mubr.bf16.gmra.mxu0 %v446
      %v690 = vpop.f32.mrf.mxu0
      %v691 = vadd.f32 %v361, %v690
      %v692 = vpop.f32.mrf.mxu0
      %v693 = vpop.f32.mrf.mxu0
      %v694 = vadd.f32 %v361, %v693
      %v695 = vpop.f32.mrf.mxu0
      %696 = vmatprep.mubr.bf16.mxu0 0
      %697 = vmatmul.mubr.bf16.gmra.mxu0 %v449
      %v698 = vpop.f32.mrf.mxu0
      %v699 = vadd.f32 %v361, %v698
      %v700 = vpop.f32.mrf.mxu0
      %v701 = vpop.f32.mrf.mxu0
      %v702 = vadd.f32 %v361, %v701
      %v703 = vpop.f32.mrf.mxu0
      %704 = vmatprep.mubr.bf16.mxu0 0
      %705 = vmatmul.mubr.bf16.gmra.mxu0 %v452
      %v706 = vpop.f32.mrf.mxu0
      %v707 = vadd.f32 %v361, %v706
      %v708 = vpop.f32.mrf.mxu0
      %v709 = vpop.f32.mrf.mxu0
      %v710 = vadd.f32 %v361, %v709
      %v711 = vpop.f32.mrf.mxu0
      %712 = vmatprep.mubr.bf16.mxu0 0
      %713 = vmatmul.mubr.bf16.gmra.mxu0 %v455
      %v714 = vpop.f32.mrf.mxu0
      %v715 = vadd.f32 %v361, %v714
      %v716 = vpop.f32.mrf.mxu0
      %v717 = vpop.f32.mrf.mxu0
      %v718 = vadd.f32 %v361, %v717
      %v719 = vpop.f32.mrf.mxu0
      %720 = vmatprep.mubr.bf16.mxu0 0
      %721 = vmatmul.mubr.bf16.gmra.mxu0 %v458
      %v722 = vpop.f32.mrf.mxu0
      %v723 = vadd.f32 %v361, %v722
      %v724 = vpop.f32.mrf.mxu0
      %v725 = vpop.f32.mrf.mxu0
      %v726 = vadd.f32 %v361, %v725
      %v727 = vpop.f32.mrf.mxu0
      %728 = vmatprep.mubr.bf16.mxu0 0
      %729 = vmatmul.mubr.bf16.gmra.mxu0 %v461
      %v730 = vpop.f32.mrf.mxu0
      %v731 = vadd.f32 %v361, %v730
      %v732 = vpop.f32.mrf.mxu0
      %v733 = vpop.f32.mrf.mxu0
      %v734 = vadd.f32 %v361, %v733
      %v735 = vpop.f32.mrf.mxu0
      %736 = vmatprep.mubr.bf16.mxu0 0
      %737 = vmatmul.mubr.bf16.gmra.mxu0 %v464
      %v738 = vpop.f32.mrf.mxu0
      %v739 = vadd.f32 %v361, %v738
      %v740 = vpop.f32.mrf.mxu0
      %v741 = vpop.f32.mrf.mxu0
      %v742 = vadd.f32 %v361, %v741
      %v743 = vpop.f32.mrf.mxu0
      %744 = vmatprep.mubr.bf16.mxu0 0
      %745 = vmatmul.mubr.bf16.gmra.mxu0 %v467
      %v746 = vpop.f32.mrf.mxu0
      %v747 = vadd.f32 %v361, %v746
      %v748 = vpop.f32.mrf.mxu0
      %v749 = vpop.f32.mrf.mxu0
      %v750 = vadd.f32 %v361, %v749
      %v751 = vpop.f32.mrf.mxu0
      %752 = vmatprep.mubr.bf16.mxu0 0
      %753 = vmatmul.mubr.bf16.gmra.mxu0 %v470
      %v754 = vpop.f32.mrf.mxu0
      %v755 = vadd.f32 %v361, %v754
      %v756 = vpop.f32.mrf.mxu0
      %v757 = vpop.f32.mrf.mxu0
      %v758 = vadd.f32 %v361, %v757
      %v759 = vpop.f32.mrf.mxu0
      %760 = vdwg.mxu0
      %v761 = vpack.c.bf16 %v510, %v507
      %v762 = vpack.c.bf16 %v518, %v515
      %v763 = vpack.c.bf16 %v526, %v523
      %v764 = vpack.c.bf16 %v534, %v531
      %v765 = vpack.c.bf16 %v542, %v539
      %v766 = vpack.c.bf16 %v550, %v547
      %v767 = vpack.c.bf16 %v558, %v555
      %v768 = vpack.c.bf16 %v566, %v563
      %v769 = vpack.c.bf16 %v574, %v571
      %v770 = vpack.c.bf16 %v582, %v579
      %v771 = vpack.c.bf16 %v590, %v587
      %v772 = vpack.c.bf16 %v598, %v595
      %v773 = vpack.c.bf16 %v606, %v603
      %v774 = vpack.c.bf16 %v614, %v611
      %v775 = vpack.c.bf16 %v622, %v619
      %v776 = vpack.c.bf16 %v630, %v627
      %v777 = vpack.c.bf16 %v638, %v635
      %v778 = vpack.c.bf16 %v646, %v643
      %v779 = vpack.c.bf16 %v654, %v651
      %v780 = vpack.c.bf16 %v662, %v659
      %v781 = vpack.c.bf16 %v670, %v667
      %v782 = vpack.c.bf16 %v678, %v675
      %v783 = vpack.c.bf16 %v686, %v683
      %v784 = vpack.c.bf16 %v694, %v691
      %v785 = vpack.c.bf16 %v702, %v699
      %v786 = vpack.c.bf16 %v710, %v707
      %v787 = vpack.c.bf16 %v718, %v715
      %v788 = vpack.c.bf16 %v726, %v723
      %v789 = vpack.c.bf16 %v734, %v731
      %v790 = vpack.c.bf16 %v742, %v739
      %v791 = vpack.c.bf16 %v750, %v747
      %v792 = vpack.c.bf16 %v758, %v755
      %v825 = vunpack.c.l.b16 %v761
      %v826 = vunpack.c.h.b16 %v761
      %v827 = vunpack.c.l.b16 %v762
      %v828 = vunpack.c.h.b16 %v762
      %v829 = vunpack.c.l.b16 %v763
      %v830 = vunpack.c.h.b16 %v763
      %v831 = vunpack.c.l.b16 %v764
      %v832 = vunpack.c.h.b16 %v764
      %v833 = vunpack.c.l.b16 %v765
      %v834 = vunpack.c.h.b16 %v765
      %v835 = vunpack.c.l.b16 %v766
      %v836 = vunpack.c.h.b16 %v766
      %v837 = vunpack.c.l.b16 %v767
      %v838 = vunpack.c.h.b16 %v767
      %v839 = vunpack.c.l.b16 %v768
      %v840 = vunpack.c.h.b16 %v768
      %v841 = vunpack.c.l.b16 %v769
      %v842 = vunpack.c.h.b16 %v769
      %v843 = vunpack.c.l.b16 %v770
      %v844 = vunpack.c.h.b16 %v770
      %v845 = vunpack.c.l.b16 %v771
      %v846 = vunpack.c.h.b16 %v771
      %v847 = vunpack.c.l.b16 %v772
      %v848 = vunpack.c.h.b16 %v772
      %v849 = vunpack.c.l.b16 %v773
      %v850 = vunpack.c.h.b16 %v773
      %v851 = vunpack.c.l.b16 %v774
      %v852 = vunpack.c.h.b16 %v774
      %v853 = vunpack.c.l.b16 %v775
      %v854 = vunpack.c.h.b16 %v775
      %v855 = vunpack.c.l.b16 %v776
      %v856 = vunpack.c.h.b16 %v776
      %v857 = vunpack.c.l.b16 %v777
      %v858 = vunpack.c.h.b16 %v777
      %v859 = vunpack.c.l.b16 %v778
      %v860 = vunpack.c.h.b16 %v778
      %v861 = vunpack.c.l.b16 %v779
      %v862 = vunpack.c.h.b16 %v779
      %v863 = vunpack.c.l.b16 %v780
      %v864 = vunpack.c.h.b16 %v780
      %v865 = vunpack.c.l.b16 %v781
      %v866 = vunpack.c.h.b16 %v781
      %v867 = vunpack.c.l.b16 %v782
      %v868 = vunpack.c.h.b16 %v782
      %v869 = vunpack.c.l.b16 %v783
      %v870 = vunpack.c.h.b16 %v783
      %v871 = vunpack.c.l.b16 %v784
      %v872 = vunpack.c.h.b16 %v784
      %v873 = vunpack.c.l.b16 %v785
      %v874 = vunpack.c.h.b16 %v785
      %v875 = vunpack.c.l.b16 %v786
      %v876 = vunpack.c.h.b16 %v786
      %v877 = vunpack.c.l.b16 %v787
      %v878 = vunpack.c.h.b16 %v787
      %v879 = vunpack.c.l.b16 %v788
      %v880 = vunpack.c.h.b16 %v788
      %v881 = vunpack.c.l.b16 %v789
      %v882 = vunpack.c.h.b16 %v789
      %v883 = vunpack.c.l.b16 %v790
      %v884 = vunpack.c.h.b16 %v790
      %v885 = vunpack.c.l.b16 %v791
      %v886 = vunpack.c.h.b16 %v791
      %v887 = vunpack.c.l.b16 %v792
      %v888 = vunpack.c.h.b16 %v792
      %v889 = vpack.c.b16 %v825, %v825
      %v890 = vpack.c.b16 %v826, %v826
      %v891 = vpack.c.b16 %v827, %v827
      %v892 = vpack.c.b16 %v828, %v828
      %v893 = vpack.c.b16 %v829, %v829
      %v894 = vpack.c.b16 %v830, %v830
      %v895 = vpack.c.b16 %v831, %v831
      %v896 = vpack.c.b16 %v832, %v832
      %v897 = vpack.c.b16 %v833, %v833
      %v898 = vpack.c.b16 %v834, %v834
      %v899 = vpack.c.b16 %v835, %v835
      %v900 = vpack.c.b16 %v836, %v836
      %v901 = vpack.c.b16 %v837, %v837
      %v902 = vpack.c.b16 %v838, %v838
      %v903 = vpack.c.b16 %v839, %v839
      %v904 = vpack.c.b16 %v840, %v840
      %v905 = vpack.c.b16 %v841, %v841
      %v906 = vpack.c.b16 %v842, %v842
      %v907 = vpack.c.b16 %v843, %v843
      %v908 = vpack.c.b16 %v844, %v844
      %v909 = vpack.c.b16 %v845, %v845
      %v910 = vpack.c.b16 %v846, %v846
      %v911 = vpack.c.b16 %v847, %v847
      %v912 = vpack.c.b16 %v848, %v848
      %v913 = vpack.c.b16 %v849, %v849
      %v914 = vpack.c.b16 %v850, %v850
      %v915 = vpack.c.b16 %v851, %v851
      %v916 = vpack.c.b16 %v852, %v852
      %v917 = vpack.c.b16 %v853, %v853
      %v918 = vpack.c.b16 %v854, %v854
      %v919 = vpack.c.b16 %v855, %v855
      %v920 = vpack.c.b16 %v856, %v856
      %v921 = vpack.c.b16 %v857, %v857
      %v922 = vpack.c.b16 %v858, %v858
      %v923 = vpack.c.b16 %v859, %v859
      %v924 = vpack.c.b16 %v860, %v860
      %v925 = vpack.c.b16 %v861, %v861
      %v926 = vpack.c.b16 %v862, %v862
      %v927 = vpack.c.b16 %v863, %v863
      %v928 = vpack.c.b16 %v864, %v864
      %v929 = vpack.c.b16 %v865, %v865
      %v930 = vpack.c.b16 %v866, %v866
      %v931 = vpack.c.b16 %v867, %v867
      %v932 = vpack.c.b16 %v868, %v868
      %v933 = vpack.c.b16 %v869, %v869
      %v934 = vpack.c.b16 %v870, %v870
      %v935 = vpack.c.b16 %v871, %v871
      %v936 = vpack.c.b16 %v872, %v872
      %v937 = vpack.c.b16 %v873, %v873
      %v938 = vpack.c.b16 %v874, %v874
      %v939 = vpack.c.b16 %v875, %v875
      %v940 = vpack.c.b16 %v876, %v876
      %v941 = vpack.c.b16 %v877, %v877
      %v942 = vpack.c.b16 %v878, %v878
      %v943 = vpack.c.b16 %v879, %v879
      %v944 = vpack.c.b16 %v880, %v880
      %v945 = vpack.c.b16 %v881, %v881
      %v946 = vpack.c.b16 %v882, %v882
      %v947 = vpack.c.b16 %v883, %v883
      %v948 = vpack.c.b16 %v884, %v884
      %v949 = vpack.c.b16 %v885, %v885
      %v950 = vpack.c.b16 %v886, %v886
      %v951 = vpack.c.b16 %v887, %v887
      %v952 = vpack.c.b16 %v888, %v888
      %vm1017 = vcmask 781312
      %1018 = vst.msk [vmem:[#allocation2] sm:$0xf] %vm1017, %v889
      %1019 = vst.msk [vmem:[#allocation2 + $0x4] sm:$0xf] %vm1017, %v890
      %1020 = vst.msk [vmem:[#allocation2 + $0x8] sm:$0xf] %vm1017, %v891
      %1021 = vst.msk [vmem:[#allocation2 + $0xc] sm:$0xf] %vm1017, %v892
      %1022 = vst.msk [vmem:[#allocation2 + $0x10] sm:$0xf] %vm1017, %v893
      %1023 = vst.msk [vmem:[#allocation2 + $0x14] sm:$0xf] %vm1017, %v894
      %1024 = vst.msk [vmem:[#allocation2 + $0x18] sm:$0xf] %vm1017, %v895
      %1025 = vst.msk [vmem:[#allocation2 + $0x1c] sm:$0xf] %vm1017, %v896
      %1026 = vst.msk [vmem:[#allocation2 + $0x20] sm:$0xf] %vm1017, %v897
      %1027 = vst.msk [vmem:[#allocation2 + $0x24] sm:$0xf] %vm1017, %v898
      %1028 = vst.msk [vmem:[#allocation2 + $0x28] sm:$0xf] %vm1017, %v899
      %1029 = vst.msk [vmem:[#allocation2 + $0x2c] sm:$0xf] %vm1017, %v900
      %1030 = vst.msk [vmem:[#allocation2 + $0x30] sm:$0xf] %vm1017, %v901
      %1031 = vst.msk [vmem:[#allocation2 + $0x34] sm:$0xf] %vm1017, %v902
      %1032 = vst.msk [vmem:[#allocation2 + $0x38] sm:$0xf] %vm1017, %v903
      %1033 = vst.msk [vmem:[#allocation2 + $0x3c] sm:$0xf] %vm1017, %v904
      %1034 = vst.msk [vmem:[#allocation2 + $0x40] sm:$0xf] %vm1017, %v905
      %1035 = vst.msk [vmem:[#allocation2 + $0x44] sm:$0xf] %vm1017, %v906
      %1036 = vst.msk [vmem:[#allocation2 + $0x48] sm:$0xf] %vm1017, %v907
      %1037 = vst.msk [vmem:[#allocation2 + $0x4c] sm:$0xf] %vm1017, %v908
      %1038 = vst.msk [vmem:[#allocation2 + $0x50] sm:$0xf] %vm1017, %v909
      %1039 = vst.msk [vmem:[#allocation2 + $0x54] sm:$0xf] %vm1017, %v910
      %1040 = vst.msk [vmem:[#allocation2 + $0x58] sm:$0xf] %vm1017, %v911
      %1041 = vst.msk [vmem:[#allocation2 + $0x5c] sm:$0xf] %vm1017, %v912
      %1042 = vst.msk [vmem:[#allocation2 + $0x60] sm:$0xf] %vm1017, %v913
      %1043 = vst.msk [vmem:[#allocation2 + $0x64] sm:$0xf] %vm1017, %v914
      %1044 = vst.msk [vmem:[#allocation2 + $0x68] sm:$0xf] %vm1017, %v915
      %1045 = vst.msk [vmem:[#allocation2 + $0x6c] sm:$0xf] %vm1017, %v916
      %1046 = vst.msk [vmem:[#allocation2 + $0x70] sm:$0xf] %vm1017, %v917
      %1047 = vst.msk [vmem:[#allocation2 + $0x74] sm:$0xf] %vm1017, %v918
      %1048 = vst.msk [vmem:[#allocation2 + $0x78] sm:$0xf] %vm1017, %v919
      %1049 = vst.msk [vmem:[#allocation2 + $0x7c] sm:$0xf] %vm1017, %v920
      %1050 = vst.msk [vmem:[#allocation2 + $0x80] sm:$0xf] %vm1017, %v921
      %1051 = vst.msk [vmem:[#allocation2 + $0x84] sm:$0xf] %vm1017, %v922
      %1052 = vst.msk [vmem:[#allocation2 + $0x88] sm:$0xf] %vm1017, %v923
      %1053 = vst.msk [vmem:[#allocation2 + $0x8c] sm:$0xf] %vm1017, %v924
      %1054 = vst.msk [vmem:[#allocation2 + $0x90] sm:$0xf] %vm1017, %v925
      %1055 = vst.msk [vmem:[#allocation2 + $0x94] sm:$0xf] %vm1017, %v926
      %1056 = vst.msk [vmem:[#allocation2 + $0x98] sm:$0xf] %vm1017, %v927
      %1057 = vst.msk [vmem:[#allocation2 + $0x9c] sm:$0xf] %vm1017, %v928
      %1058 = vst.msk [vmem:[#allocation2 + $0xa0] sm:$0xf] %vm1017, %v929
      %1059 = vst.msk [vmem:[#allocation2 + $0xa4] sm:$0xf] %vm1017, %v930
      %1060 = vst.msk [vmem:[#allocation2 + $0xa8] sm:$0xf] %vm1017, %v931
      %1061 = vst.msk [vmem:[#allocation2 + $0xac] sm:$0xf] %vm1017, %v932
      %1062 = vst.msk [vmem:[#allocation2 + $0xb0] sm:$0xf] %vm1017, %v933
      %1063 = vst.msk [vmem:[#allocation2 + $0xb4] sm:$0xf] %vm1017, %v934
      %1064 = vst.msk [vmem:[#allocation2 + $0xb8] sm:$0xf] %vm1017, %v935
      %1065 = vst.msk [vmem:[#allocation2 + $0xbc] sm:$0xf] %vm1017, %v936
      %1066 = vst.msk [vmem:[#allocation2 + $0xc0] sm:$0xf] %vm1017, %v937
      %1067 = vst.msk [vmem:[#allocation2 + $0xc4] sm:$0xf] %vm1017, %v938
      %1068 = vst.msk [vmem:[#allocation2 + $0xc8] sm:$0xf] %vm1017, %v939
      %1069 = vst.msk [vmem:[#allocation2 + $0xcc] sm:$0xf] %vm1017, %v940
      %1070 = vst.msk [vmem:[#allocation2 + $0xd0] sm:$0xf] %vm1017, %v941
      %1071 = vst.msk [vmem:[#allocation2 + $0xd4] sm:$0xf] %vm1017, %v942
      %1072 = vst.msk [vmem:[#allocation2 + $0xd8] sm:$0xf] %vm1017, %v943
      %1073 = vst.msk [vmem:[#allocation2 + $0xdc] sm:$0xf] %vm1017, %v944
      %1074 = vst.msk [vmem:[#allocation2 + $0xe0] sm:$0xf] %vm1017, %v945
      %1075 = vst.msk [vmem:[#allocation2 + $0xe4] sm:$0xf] %vm1017, %v946
      %1076 = vst.msk [vmem:[#allocation2 + $0xe8] sm:$0xf] %vm1017, %v947
      %1077 = vst.msk [vmem:[#allocation2 + $0xec] sm:$0xf] %vm1017, %v948
      %1078 = vst.msk [vmem:[#allocation2 + $0xf0] sm:$0xf] %vm1017, %v949
      %1079 = vst.msk [vmem:[#allocation2 + $0xf4] sm:$0xf] %vm1017, %v950
      %1080 = vst.msk [vmem:[#allocation2 + $0xf8] sm:$0xf] %vm1017, %v951
      %1081 = vst.msk [vmem:[#allocation2 + $0xfc] sm:$0xf] %vm1017, %v952
      %1082 = vst.msk [vmem:[#allocation3] sm:$0xff] %vm375, 0.0
      %1083 = vst.msk [vmem:[#allocation3 + $0x8] sm:$0xff] %vm375, 0.0
      %1084 = vst.msk [vmem:[#allocation3 + $0x10] sm:$0xff] %vm375, 0.0
      %1085 = vst.msk [vmem:[#allocation3 + $0x18] sm:$0xff] %vm375, 0.0
      %1086 = vst.msk [vmem:[#allocation3 + $0x20] sm:$0xff] %vm375, 0.0
      %1087 = vst.msk [vmem:[#allocation3 + $0x28] sm:$0xff] %vm375, 0.0
      %1088 = vst.msk [vmem:[#allocation3 + $0x30] sm:$0xff] %vm375, 0.0
      %1089 = vst.msk [vmem:[#allocation3 + $0x38] sm:$0xff] %vm375, 0.0
      %1090 = vst.msk [vmem:[#allocation3 + $0x40] sm:$0xff] %vm375, 0.0
      %1091 = vst.msk [vmem:[#allocation3 + $0x48] sm:$0xff] %vm375, 0.0
      %1092 = vst.msk [vmem:[#allocation3 + $0x50] sm:$0xff] %vm375, 0.0
      %1093 = vst.msk [vmem:[#allocation3 + $0x58] sm:$0xff] %vm375, 0.0
      %1094 = vst.msk [vmem:[#allocation3 + $0x60] sm:$0xff] %vm375, 0.0
      %1095 = vst.msk [vmem:[#allocation3 + $0x68] sm:$0xff] %vm375, 0.0
      %1096 = vst.msk [vmem:[#allocation3 + $0x70] sm:$0xff] %vm375, 0.0
      %1097 = vst.msk [vmem:[#allocation3 + $0x78] sm:$0xff] %vm375, 0.0
      %1098 = vst.msk [vmem:[#allocation3 + $0x80] sm:$0xff] %vm375, 0.0
      %1099 = vst.msk [vmem:[#allocation3 + $0x88] sm:$0xff] %vm375, 0.0
      %1100 = vst.msk [vmem:[#allocation3 + $0x90] sm:$0xff] %vm375, 0.0
      %1101 = vst.msk [vmem:[#allocation3 + $0x98] sm:$0xff] %vm375, 0.0
      %1102 = vst.msk [vmem:[#allocation3 + $0xa0] sm:$0xff] %vm375, 0.0
      %1103 = vst.msk [vmem:[#allocation3 + $0xa8] sm:$0xff] %vm375, 0.0
      %1104 = vst.msk [vmem:[#allocation3 + $0xb0] sm:$0xff] %vm375, 0.0
      %1105 = vst.msk [vmem:[#allocation3 + $0xb8] sm:$0xff] %vm375, 0.0
      %1106 = vst.msk [vmem:[#allocation3 + $0xc0] sm:$0xff] %vm375, 0.0
      %1107 = vst.msk [vmem:[#allocation3 + $0xc8] sm:$0xff] %vm375, 0.0
      %1108 = vst.msk [vmem:[#allocation3 + $0xd0] sm:$0xff] %vm375, 0.0
      %1109 = vst.msk [vmem:[#allocation3 + $0xd8] sm:$0xff] %vm375, 0.0
      %1110 = vst.msk [vmem:[#allocation3 + $0xe0] sm:$0xff] %vm375, 0.0
      %1111 = vst.msk [vmem:[#allocation3 + $0xe8] sm:$0xff] %vm375, 0.0
      %1112 = vst.msk [vmem:[#allocation3 + $0xf0] sm:$0xff] %vm375, 0.0
      %1113 = vst.msk [vmem:[#allocation3 + $0xf8] sm:$0xff] %vm375, 0.0
      %1114 = vst.msk [vmem:[#allocation3 + $0x100] sm:$0xff] %vm375, 0.0
      %1115 = vst.msk [vmem:[#allocation3 + $0x108] sm:$0xff] %vm375, 0.0
      %1116 = vst.msk [vmem:[#allocation3 + $0x110] sm:$0xff] %vm375, 0.0
      %1117 = vst.msk [vmem:[#allocation3 + $0x118] sm:$0xff] %vm375, 0.0
      %1118 = vst.msk [vmem:[#allocation3 + $0x120] sm:$0xff] %vm375, 0.0
      %1119 = vst.msk [vmem:[#allocation3 + $0x128] sm:$0xff] %vm375, 0.0
      %1120 = vst.msk [vmem:[#allocation3 + $0x130] sm:$0xff] %vm375, 0.0
      %1121 = vst.msk [vmem:[#allocation3 + $0x138] sm:$0xff] %vm375, 0.0
      %1122 = vst.msk [vmem:[#allocation3 + $0x140] sm:$0xff] %vm375, 0.0
      %1123 = vst.msk [vmem:[#allocation3 + $0x148] sm:$0xff] %vm375, 0.0
      %1124 = vst.msk [vmem:[#allocation3 + $0x150] sm:$0xff] %vm375, 0.0
      %1125 = vst.msk [vmem:[#allocation3 + $0x158] sm:$0xff] %vm375, 0.0
      %1126 = vst.msk [vmem:[#allocation3 + $0x160] sm:$0xff] %vm375, 0.0
      %1127 = vst.msk [vmem:[#allocation3 + $0x168] sm:$0xff] %vm375, 0.0
      %1128 = vst.msk [vmem:[#allocation3 + $0x170] sm:$0xff] %vm375, 0.0
      %1129 = vst.msk [vmem:[#allocation3 + $0x178] sm:$0xff] %vm375, 0.0
      %1130 = vst.msk [vmem:[#allocation3 + $0x180] sm:$0xff] %vm375, 0.0
      %1131 = vst.msk [vmem:[#allocation3 + $0x188] sm:$0xff] %vm375, 0.0
      %1132 = vst.msk [vmem:[#allocation3 + $0x190] sm:$0xff] %vm375, 0.0
      %1133 = vst.msk [vmem:[#allocation3 + $0x198] sm:$0xff] %vm375, 0.0
      %1134 = vst.msk [vmem:[#allocation3 + $0x1a0] sm:$0xff] %vm375, 0.0
      %1135 = vst.msk [vmem:[#allocation3 + $0x1a8] sm:$0xff] %vm375, 0.0
      %1136 = vst.msk [vmem:[#allocation3 + $0x1b0] sm:$0xff] %vm375, 0.0
      %1137 = vst.msk [vmem:[#allocation3 + $0x1b8] sm:$0xff] %vm375, 0.0
      %1138 = vst.msk [vmem:[#allocation3 + $0x1c0] sm:$0xff] %vm375, 0.0
      %1139 = vst.msk [vmem:[#allocation3 + $0x1c8] sm:$0xff] %vm375, 0.0
      %1140 = vst.msk [vmem:[#allocation3 + $0x1d0] sm:$0xff] %vm375, 0.0
      %1141 = vst.msk [vmem:[#allocation3 + $0x1d8] sm:$0xff] %vm375, 0.0
      %1142 = vst.msk [vmem:[#allocation3 + $0x1e0] sm:$0xff] %vm375, 0.0
      %1143 = vst.msk [vmem:[#allocation3 + $0x1e8] sm:$0xff] %vm375, 0.0
      %1144 = vst.msk [vmem:[#allocation3 + $0x1f0] sm:$0xff] %vm375, 0.0
      %1145 = vst.msk [vmem:[#allocation3 + $0x1f8] sm:$0xff] %vm375, 0.0
      %v1146 = vld [vmem:[#allocation2] sm:$0xf]
      %v1147 = vld [vmem:[#allocation2 + $0x4] sm:$0xf]
      %v1148 = vld [vmem:[#allocation2 + $0x8] sm:$0xf]
      %v1149 = vld [vmem:[#allocation2 + $0xc] sm:$0xf]
      %v1150 = vld [vmem:[#allocation2 + $0x10] sm:$0xf]
      %v1151 = vld [vmem:[#allocation2 + $0x14] sm:$0xf]
      %v1152 = vld [vmem:[#allocation2 + $0x18] sm:$0xf]
      %v1153 = vld [vmem:[#allocation2 + $0x1c] sm:$0xf]
      %v1154 = vld [vmem:[#allocation2 + $0x20] sm:$0xf]
      %v1155 = vld [vmem:[#allocation2 + $0x24] sm:$0xf]
      %v1156 = vld [vmem:[#allocation2 + $0x28] sm:$0xf]
      %v1157 = vld [vmem:[#allocation2 + $0x2c] sm:$0xf]
      %v1158 = vld [vmem:[#allocation2 + $0x30] sm:$0xf]
      %v1159 = vld [vmem:[#allocation2 + $0x34] sm:$0xf]
      %v1160 = vld [vmem:[#allocation2 + $0x38] sm:$0xf]
      %v1161 = vld [vmem:[#allocation2 + $0x3c] sm:$0xf]
      %v1162 = vld [vmem:[#allocation2 + $0x40] sm:$0xf]
      %v1163 = vld [vmem:[#allocation2 + $0x44] sm:$0xf]
      %v1164 = vld [vmem:[#allocation2 + $0x48] sm:$0xf]
      %v1165 = vld [vmem:[#allocation2 + $0x4c] sm:$0xf]
      %v1166 = vld [vmem:[#allocation2 + $0x50] sm:$0xf]
      %v1167 = vld [vmem:[#allocation2 + $0x54] sm:$0xf]
      %v1168 = vld [vmem:[#allocation2 + $0x58] sm:$0xf]
      %v1169 = vld [vmem:[#allocation2 + $0x5c] sm:$0xf]
      %v1170 = vld [vmem:[#allocation2 + $0x60] sm:$0xf]
      %v1171 = vld [vmem:[#allocation2 + $0x64] sm:$0xf]
      %v1172 = vld [vmem:[#allocation2 + $0x68] sm:$0xf]
      %v1173 = vld [vmem:[#allocation2 + $0x6c] sm:$0xf]
      %v1174 = vld [vmem:[#allocation2 + $0x70] sm:$0xf]
      %v1175 = vld [vmem:[#allocation2 + $0x74] sm:$0xf]
      %v1176 = vld [vmem:[#allocation2 + $0x78] sm:$0xf]
      %v1177 = vld [vmem:[#allocation2 + $0x7c] sm:$0xf]
      %v1178 = vld [vmem:[#allocation2 + $0x80] sm:$0xf]
      %v1179 = vld [vmem:[#allocation2 + $0x84] sm:$0xf]
      %v1180 = vld [vmem:[#allocation2 + $0x88] sm:$0xf]
      %v1181 = vld [vmem:[#allocation2 + $0x8c] sm:$0xf]
      %v1182 = vld [vmem:[#allocation2 + $0x90] sm:$0xf]
      %v1183 = vld [vmem:[#allocation2 + $0x94] sm:$0xf]
      %v1184 = vld [vmem:[#allocation2 + $0x98] sm:$0xf]
      %v1185 = vld [vmem:[#allocation2 + $0x9c] sm:$0xf]
      %v1186 = vld [vmem:[#allocation2 + $0xa0] sm:$0xf]
      %v1187 = vld [vmem:[#allocation2 + $0xa4] sm:$0xf]
      %v1188 = vld [vmem:[#allocation2 + $0xa8] sm:$0xf]
      %v1189 = vld [vmem:[#allocation2 + $0xac] sm:$0xf]
      %v1190 = vld [vmem:[#allocation2 + $0xb0] sm:$0xf]
      %v1191 = vld [vmem:[#allocation2 + $0xb4] sm:$0xf]
      %v1192 = vld [vmem:[#allocation2 + $0xb8] sm:$0xf]
      %v1193 = vld [vmem:[#allocation2 + $0xbc] sm:$0xf]
      %v1194 = vld [vmem:[#allocation2 + $0xc0] sm:$0xf]
      %v1195 = vld [vmem:[#allocation2 + $0xc4] sm:$0xf]
      %v1196 = vld [vmem:[#allocation2 + $0xc8] sm:$0xf]
      %v1197 = vld [vmem:[#allocation2 + $0xcc] sm:$0xf]
      %v1198 = vld [vmem:[#allocation2 + $0xd0] sm:$0xf]
      %v1199 = vld [vmem:[#allocation2 + $0xd4] sm:$0xf]
      %v1200 = vld [vmem:[#allocation2 + $0xd8] sm:$0xf]
      %v1201 = vld [vmem:[#allocation2 + $0xdc] sm:$0xf]
      %v1202 = vld [vmem:[#allocation2 + $0xe0] sm:$0xf]
      %v1203 = vld [vmem:[#allocation2 + $0xe4] sm:$0xf]
      %v1204 = vld [vmem:[#allocation2 + $0xe8] sm:$0xf]
      %v1205 = vld [vmem:[#allocation2 + $0xec] sm:$0xf]
      %v1206 = vld [vmem:[#allocation2 + $0xf0] sm:$0xf]
      %v1207 = vld [vmem:[#allocation2 + $0xf4] sm:$0xf]
      %v1208 = vld [vmem:[#allocation2 + $0xf8] sm:$0xf]
      %v1209 = vld [vmem:[#allocation2 + $0xfc] sm:$0xf]
      %v1226 = vunpack.c.l.b16 %v1146
      %v1227 = vunpack.c.l.b16 %v1147
      %v1228 = vunpack.c.l.b16 %v1148
      %v1229 = vunpack.c.l.b16 %v1149
      %v1230 = vunpack.c.l.b16 %v1150
      %v1231 = vunpack.c.l.b16 %v1151
      %v1232 = vunpack.c.l.b16 %v1152
      %v1233 = vunpack.c.l.b16 %v1153
      %v1234 = vunpack.c.l.b16 %v1154
      %v1235 = vunpack.c.l.b16 %v1155
      %v1236 = vunpack.c.l.b16 %v1156
      %v1237 = vunpack.c.l.b16 %v1157
      %v1238 = vunpack.c.l.b16 %v1158
      %v1239 = vunpack.c.l.b16 %v1159
      %v1240 = vunpack.c.l.b16 %v1160
      %v1241 = vunpack.c.l.b16 %v1161
      %v1242 = vpack.c.b16 %v1227, %v1226
      %v1243 = vpack.c.b16 %v1229, %v1228
      %v1244 = vpack.c.b16 %v1231, %v1230
      %v1245 = vpack.c.b16 %v1233, %v1232
      %v1246 = vpack.c.b16 %v1235, %v1234
      %v1247 = vpack.c.b16 %v1237, %v1236
      %v1248 = vpack.c.b16 %v1239, %v1238
      %v1249 = vpack.c.b16 %v1241, %v1240
      %1250 = vrot.lane.b32.xlu0 %v1242, 96
      %v1251 = vpop.permute.xlu0 %1250
      %1252 = vrot.lane.b32.xlu0 %v1243, 96
      %v1253 = vpop.permute.xlu0 %1252
      %1254 = vrot.lane.b32.xlu0 %v1244, 96
      %v1255 = vpop.permute.xlu0 %1254
      %1256 = vrot.lane.b32.xlu0 %v1245, 96
      %v1257 = vpop.permute.xlu0 %1256
      %1258 = vrot.lane.b32.xlu0 %v1246, 96
      %v1259 = vpop.permute.xlu0 %1258
      %1260 = vrot.lane.b32.xlu0 %v1247, 96
      %v1261 = vpop.permute.xlu0 %1260
      %1262 = vrot.lane.b32.xlu0 %v1248, 96
      %v1263 = vpop.permute.xlu0 %1262
      %1264 = vrot.lane.b32.xlu0 %v1249, 96
      %v1265 = vpop.permute.xlu0 %1264
      %vm1266 = vcmask 64512
      %v1268 = vsel %vm1266, %v1242, 0
      %v1271 = vsel %vm1266, %v1243, 0
      %v1274 = vsel %vm1266, %v1244, 0
      %v1277 = vsel %vm1266, %v1245, 0
      %v1280 = vsel %vm1266, %v1246, 0
      %v1283 = vsel %vm1266, %v1247, 0
      %v1286 = vsel %vm1266, %v1248, 0
      %v1289 = vsel %vm1266, %v1249, 0
      %v1292 = vsel %vm1266, %v1251, 0
      %v1295 = vsel %vm1266, %v1253, 0
      %v1298 = vsel %vm1266, %v1255, 0
      %v1301 = vsel %vm1266, %v1257, 0
      %v1304 = vsel %vm1266, %v1259, 0
      %v1307 = vsel %vm1266, %v1261, 0
      %v1310 = vsel %vm1266, %v1263, 0
      %v1313 = vsel %vm1266, %v1265, 0
      %1315 = vmatprep.subr.bf16.mxu0 0
      %1316 = vmatpush1.bf16.xpose.msra.mxu0 %v1313
      %1317 = vmatprep.subr.bf16.mxu0 0
      %1318 = vmatpush1.bf16.xpose.msra.mxu0 %v1310
      %1319 = vmatprep.subr.bf16.mxu0 0
      %1320 = vmatpush1.bf16.xpose.msra.mxu0 %v1307
      %1321 = vmatprep.subr.bf16.mxu0 0
      %1322 = vmatpush1.bf16.xpose.msra.mxu0 %v1304
      %1323 = vmatprep.subr.bf16.mxu0 0
      %1324 = vmatpush1.bf16.xpose.msra.mxu0 %v1301
      %1325 = vmatprep.subr.bf16.mxu0 0
      %1326 = vmatpush1.bf16.xpose.msra.mxu0 %v1298
      %1327 = vmatprep.subr.bf16.mxu0 0
      %1328 = vmatpush1.bf16.xpose.msra.mxu0 %v1295
      %1329 = vmatprep.subr.bf16.mxu0 0
      %1330 = vmatpush1.bf16.xpose.msra.mxu0 %v1292
      %1331 = vmatprep.subr.bf16.mxu0 0
      %1332 = vmatpush2.bf16.xpose.msra.mxu0 0
      %1333 = vmatprep.subr.bf16.mxu0 0
      %1334 = vmatpush2.bf16.xpose.msra.mxu0 0
      %1335 = vmatprep.subr.bf16.mxu0 0
      %1336 = vmatpush2.bf16.xpose.msra.mxu0 0
      %1337 = vmatprep.subr.bf16.mxu0 0
      %1338 = vmatpush2.bf16.xpose.msra.mxu0 0
      %1339 = vmatprep.subr.bf16.mxu0 0
      %1340 = vmatpush2.bf16.xpose.msra.mxu0 0
      %1341 = vmatprep.subr.bf16.mxu0 0
      %1342 = vmatpush2.bf16.xpose.msra.mxu0 0
      %1343 = vmatprep.subr.bf16.mxu0 0
      %1344 = vmatpush2.bf16.xpose.msra.mxu0 0
      %1345 = vmatprep.subr.bf16.mxu0 0
      %1346 = vmatpush2.bf16.xpose.msra.mxu0 0
      %1347 = vmatprep.mubr.bf16.mxu0 0
      %1348 = vmatmul.mubr.bf16.gmra.mxu0 %v1268
      %v1349 = vpop.f32.mrf.mxu0
      %v1350 = vadd.f32 0.0, %v1349
      %v1351 = vpop.f32.mrf.mxu0
      %v1352 = vpop.f32.mrf.mxu0
      %v1353 = vadd.f32 0.0, %v1352
      %v1354 = vpop.f32.mrf.mxu0
      %1355 = vmatprep.mubr.bf16.mxu0 0
      %1356 = vmatmul.mubr.bf16.gmra.mxu0 %v1271
      %v1357 = vpop.f32.mrf.mxu0
      %v1358 = vadd.f32 0.0, %v1357
      %v1359 = vpop.f32.mrf.mxu0
      %v1360 = vpop.f32.mrf.mxu0
      %v1361 = vadd.f32 0.0, %v1360
      %v1362 = vpop.f32.mrf.mxu0
      %1363 = vmatprep.mubr.bf16.mxu0 0
      %1364 = vmatmul.mubr.bf16.gmra.mxu0 %v1274
      %v1365 = vpop.f32.mrf.mxu0
      %v1366 = vadd.f32 0.0, %v1365
      %v1367 = vpop.f32.mrf.mxu0
      %v1368 = vpop.f32.mrf.mxu0
      %v1369 = vadd.f32 0.0, %v1368
      %v1370 = vpop.f32.mrf.mxu0
      %1371 = vmatprep.mubr.bf16.mxu0 0
      %1372 = vmatmul.mubr.bf16.gmra.mxu0 %v1277
      %v1373 = vpop.f32.mrf.mxu0
      %v1374 = vadd.f32 0.0, %v1373
      %v1375 = vpop.f32.mrf.mxu0
      %v1376 = vpop.f32.mrf.mxu0
      %v1377 = vadd.f32 0.0, %v1376
      %v1378 = vpop.f32.mrf.mxu0
      %1379 = vmatprep.mubr.bf16.mxu0 0
      %1380 = vmatmul.mubr.bf16.gmra.mxu0 %v1280
      %v1381 = vpop.f32.mrf.mxu0
      %v1382 = vadd.f32 0.0, %v1381
      %v1383 = vpop.f32.mrf.mxu0
      %v1384 = vpop.f32.mrf.mxu0
      %v1385 = vadd.f32 0.0, %v1384
      %v1386 = vpop.f32.mrf.mxu0
      %1387 = vmatprep.mubr.bf16.mxu0 0
      %1388 = vmatmul.mubr.bf16.gmra.mxu0 %v1283
      %v1389 = vpop.f32.mrf.mxu0
      %v1390 = vadd.f32 0.0, %v1389
      %v1391 = vpop.f32.mrf.mxu0
      %v1392 = vpop.f32.mrf.mxu0
      %v1393 = vadd.f32 0.0, %v1392
      %v1394 = vpop.f32.mrf.mxu0
      %1395 = vmatprep.mubr.bf16.mxu0 0
      %1396 = vmatmul.mubr.bf16.gmra.mxu0 %v1286
      %v1397 = vpop.f32.mrf.mxu0
      %v1398 = vadd.f32 0.0, %v1397
      %v1399 = vpop.f32.mrf.mxu0
      %v1400 = vpop.f32.mrf.mxu0
      %v1401 = vadd.f32 0.0, %v1400
      %v1402 = vpop.f32.mrf.mxu0
      %1403 = vmatprep.mubr.bf16.mxu0 0
      %1404 = vmatmul.mubr.bf16.gmra.mxu0 %v1289
      %v1405 = vpop.f32.mrf.mxu0
      %v1406 = vadd.f32 0.0, %v1405
      %v1407 = vpop.f32.mrf.mxu0
      %v1408 = vpop.f32.mrf.mxu0
      %v1409 = vadd.f32 0.0, %v1408
      %v1410 = vpop.f32.mrf.mxu0
      %1411 = vdwg.mxu0
      %v1428 = vunpack.c.l.b16 %v1162
      %v1429 = vunpack.c.l.b16 %v1163
      %v1430 = vunpack.c.l.b16 %v1164
      %v1431 = vunpack.c.l.b16 %v1165
      %v1432 = vunpack.c.l.b16 %v1166
      %v1433 = vunpack.c.l.b16 %v1167
      %v1434 = vunpack.c.l.b16 %v1168
      %v1435 = vunpack.c.l.b16 %v1169
      %v1436 = vunpack.c.l.b16 %v1170
      %v1437 = vunpack.c.l.b16 %v1171
      %v1438 = vunpack.c.l.b16 %v1172
      %v1439 = vunpack.c.l.b16 %v1173
      %v1440 = vunpack.c.l.b16 %v1174
      %v1441 = vunpack.c.l.b16 %v1175
      %v1442 = vunpack.c.l.b16 %v1176
      %v1443 = vunpack.c.l.b16 %v1177
      %v1444 = vpack.c.b16 %v1429, %v1428
      %v1445 = vpack.c.b16 %v1431, %v1430
      %v1446 = vpack.c.b16 %v1433, %v1432
      %v1447 = vpack.c.b16 %v1435, %v1434
      %v1448 = vpack.c.b16 %v1437, %v1436
      %v1449 = vpack.c.b16 %v1439, %v1438
      %v1450 = vpack.c.b16 %v1441, %v1440
      %v1451 = vpack.c.b16 %v1443, %v1442
      %1452 = vrot.lane.b32.xlu0 %v1444, 96
      %v1453 = vpop.permute.xlu0 %1452
      %1454 = vrot.lane.b32.xlu0 %v1445, 96
      %v1455 = vpop.permute.xlu0 %1454
      %1456 = vrot.lane.b32.xlu0 %v1446, 96
      %v1457 = vpop.permute.xlu0 %1456
      %1458 = vrot.lane.b32.xlu0 %v1447, 96
      %v1459 = vpop.permute.xlu0 %1458
      %1460 = vrot.lane.b32.xlu0 %v1448, 96
      %v1461 = vpop.permute.xlu0 %1460
      %1462 = vrot.lane.b32.xlu0 %v1449, 96
      %v1463 = vpop.permute.xlu0 %1462
      %1464 = vrot.lane.b32.xlu0 %v1450, 96
      %v1465 = vpop.permute.xlu0 %1464
      %1466 = vrot.lane.b32.xlu0 %v1451, 96
      %v1467 = vpop.permute.xlu0 %1466
      %v1469 = vsel %vm1266, %v1444, 0
      %v1472 = vsel %vm1266, %v1445, 0
      %v1475 = vsel %vm1266, %v1446, 0
      %v1478 = vsel %vm1266, %v1447, 0
      %v1481 = vsel %vm1266, %v1448, 0
      %v1484 = vsel %vm1266, %v1449, 0
      %v1487 = vsel %vm1266, %v1450, 0
      %v1490 = vsel %vm1266, %v1451, 0
      %v1493 = vsel %vm1266, %v1453, 0
      %v1496 = vsel %vm1266, %v1455, 0
      %v1499 = vsel %vm1266, %v1457, 0
      %v1502 = vsel %vm1266, %v1459, 0
      %v1505 = vsel %vm1266, %v1461, 0
      %v1508 = vsel %vm1266, %v1463, 0
      %v1511 = vsel %vm1266, %v1465, 0
      %v1514 = vsel %vm1266, %v1467, 0
      %1516 = vmatprep.subr.bf16.mxu0 0
      %1517 = vmatpush1.bf16.xpose.msra.mxu0 %v1514
      %1518 = vmatprep.subr.bf16.mxu0 0
      %1519 = vmatpush1.bf16.xpose.msra.mxu0 %v1511
      %1520 = vmatprep.subr.bf16.mxu0 0
      %1521 = vmatpush1.bf16.xpose.msra.mxu0 %v1508
      %1522 = vmatprep.subr.bf16.mxu0 0
      %1523 = vmatpush1.bf16.xpose.msra.mxu0 %v1505
      %1524 = vmatprep.subr.bf16.mxu0 0
      %1525 = vmatpush1.bf16.xpose.msra.mxu0 %v1502
      %1526 = vmatprep.subr.bf16.mxu0 0
      %1527 = vmatpush1.bf16.xpose.msra.mxu0 %v1499
      %1528 = vmatprep.subr.bf16.mxu0 0
      %1529 = vmatpush1.bf16.xpose.msra.mxu0 %v1496
      %1530 = vmatprep.subr.bf16.mxu0 0
      %1531 = vmatpush1.bf16.xpose.msra.mxu0 %v1493
      %1532 = vmatprep.subr.bf16.mxu0 0
      %1533 = vmatpush2.bf16.xpose.msra.mxu0 0
      %1534 = vmatprep.subr.bf16.mxu0 0
      %1535 = vmatpush2.bf16.xpose.msra.mxu0 0
      %1536 = vmatprep.subr.bf16.mxu0 0
      %1537 = vmatpush2.bf16.xpose.msra.mxu0 0
      %1538 = vmatprep.subr.bf16.mxu0 0
      %1539 = vmatpush2.bf16.xpose.msra.mxu0 0
      %1540 = vmatprep.subr.bf16.mxu0 0
      %1541 = vmatpush2.bf16.xpose.msra.mxu0 0
      %1542 = vmatprep.subr.bf16.mxu0 0
      %1543 = vmatpush2.bf16.xpose.msra.mxu0 0
      %1544 = vmatprep.subr.bf16.mxu0 0
      %1545 = vmatpush2.bf16.xpose.msra.mxu0 0
      %1546 = vmatprep.subr.bf16.mxu0 0
      %1547 = vmatpush2.bf16.xpose.msra.mxu0 0
      %1548 = vmatprep.mubr.bf16.mxu0 0
      %1549 = vmatmul.mubr.bf16.gmra.mxu0 %v1469
      %v1550 = vpop.f32.mrf.mxu0
      %v1551 = vadd.f32 0.0, %v1550
      %v1552 = vpop.f32.mrf.mxu0
      %v1553 = vpop.f32.mrf.mxu0
      %v1554 = vadd.f32 0.0, %v1553
      %v1555 = vpop.f32.mrf.mxu0
      %1556 = vmatprep.mubr.bf16.mxu0 0
      %1557 = vmatmul.mubr.bf16.gmra.mxu0 %v1472
      %v1558 = vpop.f32.mrf.mxu0
      %v1559 = vadd.f32 0.0, %v1558
      %v1560 = vpop.f32.mrf.mxu0
      %v1561 = vpop.f32.mrf.mxu0
      %v1562 = vadd.f32 0.0, %v1561
      %v1563 = vpop.f32.mrf.mxu0
      %1564 = vmatprep.mubr.bf16.mxu0 0
      %1565 = vmatmul.mubr.bf16.gmra.mxu0 %v1475
      %v1566 = vpop.f32.mrf.mxu0
      %v1567 = vadd.f32 0.0, %v1566
      %v1568 = vpop.f32.mrf.mxu0
      %v1569 = vpop.f32.mrf.mxu0
      %v1570 = vadd.f32 0.0, %v1569
      %v1571 = vpop.f32.mrf.mxu0
      %1572 = vmatprep.mubr.bf16.mxu0 0
      %1573 = vmatmul.mubr.bf16.gmra.mxu0 %v1478
      %v1574 = vpop.f32.mrf.mxu0
      %v1575 = vadd.f32 0.0, %v1574
      %v1576 = vpop.f32.mrf.mxu0
      %v1577 = vpop.f32.mrf.mxu0
      %v1578 = vadd.f32 0.0, %v1577
      %v1579 = vpop.f32.mrf.mxu0
      %1580 = vmatprep.mubr.bf16.mxu0 0
      %1581 = vmatmul.mubr.bf16.gmra.mxu0 %v1481
      %v1582 = vpop.f32.mrf.mxu0
      %v1583 = vadd.f32 0.0, %v1582
      %v1584 = vpop.f32.mrf.mxu0
      %v1585 = vpop.f32.mrf.mxu0
      %v1586 = vadd.f32 0.0, %v1585
      %v1587 = vpop.f32.mrf.mxu0
      %1588 = vmatprep.mubr.bf16.mxu0 0
      %1589 = vmatmul.mubr.bf16.gmra.mxu0 %v1484
      %v1590 = vpop.f32.mrf.mxu0
      %v1591 = vadd.f32 0.0, %v1590
      %v1592 = vpop.f32.mrf.mxu0
      %v1593 = vpop.f32.mrf.mxu0
      %v1594 = vadd.f32 0.0, %v1593
      %v1595 = vpop.f32.mrf.mxu0
      %1596 = vmatprep.mubr.bf16.mxu0 0
      %1597 = vmatmul.mubr.bf16.gmra.mxu0 %v1487
      %v1598 = vpop.f32.mrf.mxu0
      %v1599 = vadd.f32 0.0, %v1598
      %v1600 = vpop.f32.mrf.mxu0
      %v1601 = vpop.f32.mrf.mxu0
      %v1602 = vadd.f32 0.0, %v1601
      %v1603 = vpop.f32.mrf.mxu0
      %1604 = vmatprep.mubr.bf16.mxu0 0
      %1605 = vmatmul.mubr.bf16.gmra.mxu0 %v1490
      %v1606 = vpop.f32.mrf.mxu0
      %v1607 = vadd.f32 0.0, %v1606
      %v1608 = vpop.f32.mrf.mxu0
      %v1609 = vpop.f32.mrf.mxu0
      %v1610 = vadd.f32 0.0, %v1609
      %v1611 = vpop.f32.mrf.mxu0
      %1612 = vdwg.mxu0
      %v1629 = vunpack.c.l.b16 %v1178
      %v1630 = vunpack.c.l.b16 %v1179
      %v1631 = vunpack.c.l.b16 %v1180
      %v1632 = vunpack.c.l.b16 %v1181
      %v1633 = vunpack.c.l.b16 %v1182
      %v1634 = vunpack.c.l.b16 %v1183
      %v1635 = vunpack.c.l.b16 %v1184
      %v1636 = vunpack.c.l.b16 %v1185
      %v1637 = vunpack.c.l.b16 %v1186
      %v1638 = vunpack.c.l.b16 %v1187
      %v1639 = vunpack.c.l.b16 %v1188
      %v1640 = vunpack.c.l.b16 %v1189
      %v1641 = vunpack.c.l.b16 %v1190
      %v1642 = vunpack.c.l.b16 %v1191
      %v1643 = vunpack.c.l.b16 %v1192
      %v1644 = vunpack.c.l.b16 %v1193
      %v1645 = vpack.c.b16 %v1630, %v1629
      %v1646 = vpack.c.b16 %v1632, %v1631
      %v1647 = vpack.c.b16 %v1634, %v1633
      %v1648 = vpack.c.b16 %v1636, %v1635
      %v1649 = vpack.c.b16 %v1638, %v1637
      %v1650 = vpack.c.b16 %v1640, %v1639
      %v1651 = vpack.c.b16 %v1642, %v1641
      %v1652 = vpack.c.b16 %v1644, %v1643
      %1653 = vrot.lane.b32.xlu0 %v1645, 96
      %v1654 = vpop.permute.xlu0 %1653
      %1655 = vrot.lane.b32.xlu0 %v1646, 96
      %v1656 = vpop.permute.xlu0 %1655
      %1657 = vrot.lane.b32.xlu0 %v1647, 96
      %v1658 = vpop.permute.xlu0 %1657
      %1659 = vrot.lane.b32.xlu0 %v1648, 96
      %v1660 = vpop.permute.xlu0 %1659
      %1661 = vrot.lane.b32.xlu0 %v1649, 96
      %v1662 = vpop.permute.xlu0 %1661
      %1663 = vrot.lane.b32.xlu0 %v1650, 96
      %v1664 = vpop.permute.xlu0 %1663
      %1665 = vrot.lane.b32.xlu0 %v1651, 96
      %v1666 = vpop.permute.xlu0 %1665
      %1667 = vrot.lane.b32.xlu0 %v1652, 96
      %v1668 = vpop.permute.xlu0 %1667
      %v1670 = vsel %vm1266, %v1645, 0
      %v1673 = vsel %vm1266, %v1646, 0
      %v1676 = vsel %vm1266, %v1647, 0
      %v1679 = vsel %vm1266, %v1648, 0
      %v1682 = vsel %vm1266, %v1649, 0
      %v1685 = vsel %vm1266, %v1650, 0
      %v1688 = vsel %vm1266, %v1651, 0
      %v1691 = vsel %vm1266, %v1652, 0
      %v1694 = vsel %vm1266, %v1654, 0
      %v1697 = vsel %vm1266, %v1656, 0
      %v1700 = vsel %vm1266, %v1658, 0
      %v1703 = vsel %vm1266, %v1660, 0
      %v1706 = vsel %vm1266, %v1662, 0
      %v1709 = vsel %vm1266, %v1664, 0
      %v1712 = vsel %vm1266, %v1666, 0
      %v1715 = vsel %vm1266, %v1668, 0
      %1717 = vmatprep.subr.bf16.mxu0 0
      %1718 = vmatpush1.bf16.xpose.msra.mxu0 %v1715
      %1719 = vmatprep.subr.bf16.mxu0 0
      %1720 = vmatpush1.bf16.xpose.msra.mxu0 %v1712
      %1721 = vmatprep.subr.bf16.mxu0 0
      %1722 = vmatpush1.bf16.xpose.msra.mxu0 %v1709
      %1723 = vmatprep.subr.bf16.mxu0 0
      %1724 = vmatpush1.bf16.xpose.msra.mxu0 %v1706
      %1725 = vmatprep.subr.bf16.mxu0 0
      %1726 = vmatpush1.bf16.xpose.msra.mxu0 %v1703
      %1727 = vmatprep.subr.bf16.mxu0 0
      %1728 = vmatpush1.bf16.xpose.msra.mxu0 %v1700
      %1729 = vmatprep.subr.bf16.mxu0 0
      %1730 = vmatpush1.bf16.xpose.msra.mxu0 %v1697
      %1731 = vmatprep.subr.bf16.mxu0 0
      %1732 = vmatpush1.bf16.xpose.msra.mxu0 %v1694
      %1733 = vmatprep.subr.bf16.mxu0 0
      %1734 = vmatpush2.bf16.xpose.msra.mxu0 0
      %1735 = vmatprep.subr.bf16.mxu0 0
      %1736 = vmatpush2.bf16.xpose.msra.mxu0 0
      %1737 = vmatprep.subr.bf16.mxu0 0
      %1738 = vmatpush2.bf16.xpose.msra.mxu0 0
      %1739 = vmatprep.subr.bf16.mxu0 0
      %1740 = vmatpush2.bf16.xpose.msra.mxu0 0
      %1741 = vmatprep.subr.bf16.mxu0 0
      %1742 = vmatpush2.bf16.xpose.msra.mxu0 0
      %1743 = vmatprep.subr.bf16.mxu0 0
      %1744 = vmatpush2.bf16.xpose.msra.mxu0 0
      %1745 = vmatprep.subr.bf16.mxu0 0
      %1746 = vmatpush2.bf16.xpose.msra.mxu0 0
      %1747 = vmatprep.subr.bf16.mxu0 0
      %1748 = vmatpush2.bf16.xpose.msra.mxu0 0
      %1749 = vmatprep.mubr.bf16.mxu0 0
      %1750 = vmatmul.mubr.bf16.gmra.mxu0 %v1670
      %v1751 = vpop.f32.mrf.mxu0
      %v1752 = vadd.f32 0.0, %v1751
      %v1753 = vpop.f32.mrf.mxu0
      %v1754 = vpop.f32.mrf.mxu0
      %v1755 = vadd.f32 0.0, %v1754
      %v1756 = vpop.f32.mrf.mxu0
      %1757 = vmatprep.mubr.bf16.mxu0 0
      %1758 = vmatmul.mubr.bf16.gmra.mxu0 %v1673
      %v1759 = vpop.f32.mrf.mxu0
      %v1760 = vadd.f32 0.0, %v1759
      %v1761 = vpop.f32.mrf.mxu0
      %v1762 = vpop.f32.mrf.mxu0
      %v1763 = vadd.f32 0.0, %v1762
      %v1764 = vpop.f32.mrf.mxu0
      %1765 = vmatprep.mubr.bf16.mxu0 0
      %1766 = vmatmul.mubr.bf16.gmra.mxu0 %v1676
      %v1767 = vpop.f32.mrf.mxu0
      %v1768 = vadd.f32 0.0, %v1767
      %v1769 = vpop.f32.mrf.mxu0
      %v1770 = vpop.f32.mrf.mxu0
      %v1771 = vadd.f32 0.0, %v1770
      %v1772 = vpop.f32.mrf.mxu0
      %1773 = vmatprep.mubr.bf16.mxu0 0
      %1774 = vmatmul.mubr.bf16.gmra.mxu0 %v1679
      %v1775 = vpop.f32.mrf.mxu0
      %v1776 = vadd.f32 0.0, %v1775
      %v1777 = vpop.f32.mrf.mxu0
      %v1778 = vpop.f32.mrf.mxu0
      %v1779 = vadd.f32 0.0, %v1778
      %v1780 = vpop.f32.mrf.mxu0
      %1781 = vmatprep.mubr.bf16.mxu0 0
      %1782 = vmatmul.mubr.bf16.gmra.mxu0 %v1682
      %v1783 = vpop.f32.mrf.mxu0
      %v1784 = vadd.f32 0.0, %v1783
      %v1785 = vpop.f32.mrf.mxu0
      %v1786 = vpop.f32.mrf.mxu0
      %v1787 = vadd.f32 0.0, %v1786
      %v1788 = vpop.f32.mrf.mxu0
      %1789 = vmatprep.mubr.bf16.mxu0 0
      %1790 = vmatmul.mubr.bf16.gmra.mxu0 %v1685
      %v1791 = vpop.f32.mrf.mxu0
      %v1792 = vadd.f32 0.0, %v1791
      %v1793 = vpop.f32.mrf.mxu0
      %v1794 = vpop.f32.mrf.mxu0
      %v1795 = vadd.f32 0.0, %v1794
      %v1796 = vpop.f32.mrf.mxu0
      %1797 = vmatprep.mubr.bf16.mxu0 0
      %1798 = vmatmul.mubr.bf16.gmra.mxu0 %v1688
      %v1799 = vpop.f32.mrf.mxu0
      %v1800 = vadd.f32 0.0, %v1799
      %v1801 = vpop.f32.mrf.mxu0
      %v1802 = vpop.f32.mrf.mxu0
      %v1803 = vadd.f32 0.0, %v1802
      %v1804 = vpop.f32.mrf.mxu0
      %1805 = vmatprep.mubr.bf16.mxu0 0
      %1806 = vmatmul.mubr.bf16.gmra.mxu0 %v1691
      %v1807 = vpop.f32.mrf.mxu0
      %v1808 = vadd.f32 0.0, %v1807
      %v1809 = vpop.f32.mrf.mxu0
      %v1810 = vpop.f32.mrf.mxu0
      %v1811 = vadd.f32 0.0, %v1810
      %v1812 = vpop.f32.mrf.mxu0
      %1813 = vdwg.mxu0
      %v1830 = vunpack.c.l.b16 %v1194
      %v1831 = vunpack.c.l.b16 %v1195
      %v1832 = vunpack.c.l.b16 %v1196
      %v1833 = vunpack.c.l.b16 %v1197
      %v1834 = vunpack.c.l.b16 %v1198
      %v1835 = vunpack.c.l.b16 %v1199
      %v1836 = vunpack.c.l.b16 %v1200
      %v1837 = vunpack.c.l.b16 %v1201
      %v1838 = vunpack.c.l.b16 %v1202
      %v1839 = vunpack.c.l.b16 %v1203
      %v1840 = vunpack.c.l.b16 %v1204
      %v1841 = vunpack.c.l.b16 %v1205
      %v1842 = vunpack.c.l.b16 %v1206
      %v1843 = vunpack.c.l.b16 %v1207
      %v1844 = vunpack.c.l.b16 %v1208
      %v1845 = vunpack.c.l.b16 %v1209
      %v1846 = vpack.c.b16 %v1831, %v1830
      %v1847 = vpack.c.b16 %v1833, %v1832
      %v1848 = vpack.c.b16 %v1835, %v1834
      %v1849 = vpack.c.b16 %v1837, %v1836
      %v1850 = vpack.c.b16 %v1839, %v1838
      %v1851 = vpack.c.b16 %v1841, %v1840
      %v1852 = vpack.c.b16 %v1843, %v1842
      %v1853 = vpack.c.b16 %v1845, %v1844
      %1854 = vrot.lane.b32.xlu0 %v1846, 96
      %v1855 = vpop.permute.xlu0 %1854
      %1856 = vrot.lane.b32.xlu0 %v1847, 96
      %v1857 = vpop.permute.xlu0 %1856
      %1858 = vrot.lane.b32.xlu0 %v1848, 96
      %v1859 = vpop.permute.xlu0 %1858
      %1860 = vrot.lane.b32.xlu0 %v1849, 96
      %v1861 = vpop.permute.xlu0 %1860
      %1862 = vrot.lane.b32.xlu0 %v1850, 96
      %v1863 = vpop.permute.xlu0 %1862
      %1864 = vrot.lane.b32.xlu0 %v1851, 96
      %v1865 = vpop.permute.xlu0 %1864
      %1866 = vrot.lane.b32.xlu0 %v1852, 96
      %v1867 = vpop.permute.xlu0 %1866
      %1868 = vrot.lane.b32.xlu0 %v1853, 96
      %v1869 = vpop.permute.xlu0 %1868
      %v1871 = vsel %vm1266, %v1846, 0
      %v1874 = vsel %vm1266, %v1847, 0
      %v1877 = vsel %vm1266, %v1848, 0
      %v1880 = vsel %vm1266, %v1849, 0
      %v1883 = vsel %vm1266, %v1850, 0
      %v1886 = vsel %vm1266, %v1851, 0
      %v1889 = vsel %vm1266, %v1852, 0
      %v1892 = vsel %vm1266, %v1853, 0
      %v1895 = vsel %vm1266, %v1855, 0
      %v1898 = vsel %vm1266, %v1857, 0
      %v1901 = vsel %vm1266, %v1859, 0
      %v1904 = vsel %vm1266, %v1861, 0
      %v1907 = vsel %vm1266, %v1863, 0
      %v1910 = vsel %vm1266, %v1865, 0
      %v1913 = vsel %vm1266, %v1867, 0
      %v1916 = vsel %vm1266, %v1869, 0
      %1918 = vmatprep.subr.bf16.mxu0 0
      %1919 = vmatpush1.bf16.xpose.msra.mxu0 %v1916
      %1920 = vmatprep.subr.bf16.mxu0 0
      %1921 = vmatpush1.bf16.xpose.msra.mxu0 %v1913
      %1922 = vmatprep.subr.bf16.mxu0 0
      %1923 = vmatpush1.bf16.xpose.msra.mxu0 %v1910
      %1924 = vmatprep.subr.bf16.mxu0 0
      %1925 = vmatpush1.bf16.xpose.msra.mxu0 %v1907
      %1926 = vmatprep.subr.bf16.mxu0 0
      %1927 = vmatpush1.bf16.xpose.msra.mxu0 %v1904
      %1928 = vmatprep.subr.bf16.mxu0 0
      %1929 = vmatpush1.bf16.xpose.msra.mxu0 %v1901
      %1930 = vmatprep.subr.bf16.mxu0 0
      %1931 = vmatpush1.bf16.xpose.msra.mxu0 %v1898
      %1932 = vmatprep.subr.bf16.mxu0 0
      %1933 = vmatpush1.bf16.xpose.msra.mxu0 %v1895
      %1934 = vmatprep.subr.bf16.mxu0 0
      %1935 = vmatpush2.bf16.xpose.msra.mxu0 0
      %1936 = vmatprep.subr.bf16.mxu0 0
      %1937 = vmatpush2.bf16.xpose.msra.mxu0 0
      %1938 = vmatprep.subr.bf16.mxu0 0
      %1939 = vmatpush2.bf16.xpose.msra.mxu0 0
      %1940 = vmatprep.subr.bf16.mxu0 0
      %1941 = vmatpush2.bf16.xpose.msra.mxu0 0
      %1942 = vmatprep.subr.bf16.mxu0 0
      %1943 = vmatpush2.bf16.xpose.msra.mxu0 0
      %1944 = vmatprep.subr.bf16.mxu0 0
      %1945 = vmatpush2.bf16.xpose.msra.mxu0 0
      %1946 = vmatprep.subr.bf16.mxu0 0
      %1947 = vmatpush2.bf16.xpose.msra.mxu0 0
      %1948 = vmatprep.subr.bf16.mxu0 0
      %1949 = vmatpush2.bf16.xpose.msra.mxu0 0
      %1950 = vmatprep.mubr.bf16.mxu0 0
      %1951 = vmatmul.mubr.bf16.gmra.mxu0 %v1871
      %v1952 = vpop.f32.mrf.mxu0
      %v1953 = vadd.f32 0.0, %v1952
      %v1954 = vpop.f32.mrf.mxu0
      %v1955 = vpop.f32.mrf.mxu0
      %v1956 = vadd.f32 0.0, %v1955
      %v1957 = vpop.f32.mrf.mxu0
      %1958 = vmatprep.mubr.bf16.mxu0 0
      %1959 = vmatmul.mubr.bf16.gmra.mxu0 %v1874
      %v1960 = vpop.f32.mrf.mxu0
      %v1961 = vadd.f32 0.0, %v1960
      %v1962 = vpop.f32.mrf.mxu0
      %v1963 = vpop.f32.mrf.mxu0
      %v1964 = vadd.f32 0.0, %v1963
      %v1965 = vpop.f32.mrf.mxu0
      %1966 = vmatprep.mubr.bf16.mxu0 0
      %1967 = vmatmul.mubr.bf16.gmra.mxu0 %v1877
      %v1968 = vpop.f32.mrf.mxu0
      %v1969 = vadd.f32 0.0, %v1968
      %v1970 = vpop.f32.mrf.mxu0
      %v1971 = vpop.f32.mrf.mxu0
      %v1972 = vadd.f32 0.0, %v1971
      %v1973 = vpop.f32.mrf.mxu0
      %1974 = vmatprep.mubr.bf16.mxu0 0
      %1975 = vmatmul.mubr.bf16.gmra.mxu0 %v1880
      %v1976 = vpop.f32.mrf.mxu0
      %v1977 = vadd.f32 0.0, %v1976
      %v1978 = vpop.f32.mrf.mxu0
      %v1979 = vpop.f32.mrf.mxu0
      %v1980 = vadd.f32 0.0, %v1979
      %v1981 = vpop.f32.mrf.mxu0
      %1982 = vmatprep.mubr.bf16.mxu0 0
      %1983 = vmatmul.mubr.bf16.gmra.mxu0 %v1883
      %v1984 = vpop.f32.mrf.mxu0
      %v1985 = vadd.f32 0.0, %v1984
      %v1986 = vpop.f32.mrf.mxu0
      %v1987 = vpop.f32.mrf.mxu0
      %v1988 = vadd.f32 0.0, %v1987
      %v1989 = vpop.f32.mrf.mxu0
      %1990 = vmatprep.mubr.bf16.mxu0 0
      %1991 = vmatmul.mubr.bf16.gmra.mxu0 %v1886
      %v1992 = vpop.f32.mrf.mxu0
      %v1993 = vadd.f32 0.0, %v1992
      %v1994 = vpop.f32.mrf.mxu0
      %v1995 = vpop.f32.mrf.mxu0
      %v1996 = vadd.f32 0.0, %v1995
      %v1997 = vpop.f32.mrf.mxu0
      %1998 = vmatprep.mubr.bf16.mxu0 0
      %1999 = vmatmul.mubr.bf16.gmra.mxu0 %v1889
      %v2000 = vpop.f32.mrf.mxu0
      %v2001 = vadd.f32 0.0, %v2000
      %v2002 = vpop.f32.mrf.mxu0
      %v2003 = vpop.f32.mrf.mxu0
      %v2004 = vadd.f32 0.0, %v2003
      %v2005 = vpop.f32.mrf.mxu0
      %2006 = vmatprep.mubr.bf16.mxu0 0
      %2007 = vmatmul.mubr.bf16.gmra.mxu0 %v1892
      %v2008 = vpop.f32.mrf.mxu0
      %v2009 = vadd.f32 0.0, %v2008
      %v2010 = vpop.f32.mrf.mxu0
      %v2011 = vpop.f32.mrf.mxu0
      %v2012 = vadd.f32 0.0, %v2011
      %v2013 = vpop.f32.mrf.mxu0
      %2014 = vdwg.mxu0
      %v2015 = vld [vmem:[%s5] sm:$0xff]
      %v2016 = vld [vmem:[%s5 + $0x8] sm:$0xff]
      %v2017 = vld [vmem:[%s5 + $0x10] sm:$0xff]
      %v2018 = vld [vmem:[%s5 + $0x18] sm:$0xff]
      %v2019 = vld [vmem:[%s5 + $0x20] sm:$0xff]
      %v2020 = vld [vmem:[%s5 + $0x28] sm:$0xff]
      %v2021 = vld [vmem:[%s5 + $0x30] sm:$0xff]
      %v2022 = vld [vmem:[%s5 + $0x38] sm:$0xff]
      %v2023 = vld [vmem:[%s5 + $0x40] sm:$0xff]
      %v2024 = vld [vmem:[%s5 + $0x48] sm:$0xff]
      %v2025 = vld [vmem:[%s5 + $0x50] sm:$0xff]
      %v2026 = vld [vmem:[%s5 + $0x58] sm:$0xff]
      %v2027 = vld [vmem:[%s5 + $0x60] sm:$0xff]
      %v2028 = vld [vmem:[%s5 + $0x68] sm:$0xff]
      %v2029 = vld [vmem:[%s5 + $0x70] sm:$0xff]
      %v2030 = vld [vmem:[%s5 + $0x78] sm:$0xff]
      %v2031 = vld [vmem:[%s5 + $0x80] sm:$0xff]
      %v2032 = vld [vmem:[%s5 + $0x88] sm:$0xff]
      %v2033 = vld [vmem:[%s5 + $0x90] sm:$0xff]
      %v2034 = vld [vmem:[%s5 + $0x98] sm:$0xff]
      %v2035 = vld [vmem:[%s5 + $0xa0] sm:$0xff]
      %v2036 = vld [vmem:[%s5 + $0xa8] sm:$0xff]
      %v2037 = vld [vmem:[%s5 + $0xb0] sm:$0xff]
      %v2038 = vld [vmem:[%s5 + $0xb8] sm:$0xff]
      %v2039 = vld [vmem:[%s5 + $0xc0] sm:$0xff]
      %v2040 = vld [vmem:[%s5 + $0xc8] sm:$0xff]
      %v2041 = vld [vmem:[%s5 + $0xd0] sm:$0xff]
      %v2042 = vld [vmem:[%s5 + $0xd8] sm:$0xff]
      %v2043 = vld [vmem:[%s5 + $0xe0] sm:$0xff]
      %v2044 = vld [vmem:[%s5 + $0xe8] sm:$0xff]
      %v2045 = vld [vmem:[%s5 + $0xf0] sm:$0xff]
      %v2046 = vld [vmem:[%s5 + $0xf8] sm:$0xff]
      %v2047 = vadd.f32 %v1350, %v2015
      %v2048 = vadd.f32 %v1353, %v2016
      %v2049 = vadd.f32 %v1358, %v2017
      %v2050 = vadd.f32 %v1361, %v2018
      %v2051 = vadd.f32 %v1366, %v2019
      %v2052 = vadd.f32 %v1369, %v2020
      %v2053 = vadd.f32 %v1374, %v2021
      %v2054 = vadd.f32 %v1377, %v2022
      %v2055 = vadd.f32 %v1382, %v2023
      %v2056 = vadd.f32 %v1385, %v2024
      %v2057 = vadd.f32 %v1390, %v2025
      %v2058 = vadd.f32 %v1393, %v2026
      %v2059 = vadd.f32 %v1398, %v2027
      %v2060 = vadd.f32 %v1401, %v2028
      %v2061 = vadd.f32 %v1406, %v2029
      %v2062 = vadd.f32 %v1409, %v2030
      %v2063 = vadd.f32 %v1551, %v2031
      %v2064 = vadd.f32 %v1554, %v2032
      %v2065 = vadd.f32 %v1559, %v2033
      %v2066 = vadd.f32 %v1562, %v2034
      %v2067 = vadd.f32 %v1567, %v2035
      %v2068 = vadd.f32 %v1570, %v2036
      %v2069 = vadd.f32 %v1575, %v2037
      %v2070 = vadd.f32 %v1578, %v2038
      %v2071 = vadd.f32 %v1583, %v2039
      %v2072 = vadd.f32 %v1586, %v2040
      %v2073 = vadd.f32 %v1591, %v2041
      %v2074 = vadd.f32 %v1594, %v2042
      %v2075 = vadd.f32 %v1599, %v2043
      %v2076 = vadd.f32 %v1602, %v2044
      %v2077 = vadd.f32 %v1607, %v2045
      %v2078 = vadd.f32 %v1610, %v2046
      %v2079 = vadd.f32 %v1752, %v2015
      %v2080 = vadd.f32 %v1755, %v2016
      %v2081 = vadd.f32 %v1760, %v2017
      %v2082 = vadd.f32 %v1763, %v2018
      %v2083 = vadd.f32 %v1768, %v2019
      %v2084 = vadd.f32 %v1771, %v2020
      %v2085 = vadd.f32 %v1776, %v2021
      %v2086 = vadd.f32 %v1779, %v2022
      %v2087 = vadd.f32 %v1784, %v2023
      %v2088 = vadd.f32 %v1787, %v2024
      %v2089 = vadd.f32 %v1792, %v2025
      %v2090 = vadd.f32 %v1795, %v2026
      %v2091 = vadd.f32 %v1800, %v2027
      %v2092 = vadd.f32 %v1803, %v2028
      %v2093 = vadd.f32 %v1808, %v2029
      %v2094 = vadd.f32 %v1811, %v2030
      %v2095 = vadd.f32 %v1953, %v2031
      %v2096 = vadd.f32 %v1956, %v2032
      %v2097 = vadd.f32 %v1961, %v2033
      %v2098 = vadd.f32 %v1964, %v2034
      %v2099 = vadd.f32 %v1969, %v2035
      %v2100 = vadd.f32 %v1972, %v2036
      %v2101 = vadd.f32 %v1977, %v2037
      %v2102 = vadd.f32 %v1980, %v2038
      %v2103 = vadd.f32 %v1985, %v2039
      %v2104 = vadd.f32 %v1988, %v2040
      %v2105 = vadd.f32 %v1993, %v2041
      %v2106 = vadd.f32 %v1996, %v2042
      %v2107 = vadd.f32 %v2001, %v2043
      %v2108 = vadd.f32 %v2004, %v2044
      %v2109 = vadd.f32 %v2009, %v2045
      %v2110 = vadd.f32 %v2012, %v2046
      %2111 = vmax.xlane.f32.xlu0 %v2047
      %v2112 = vpop.xlane.xlu0 %2111
      %2113 = vmax.xlane.f32.xlu0 %v2048
      %v2114 = vpop.xlane.xlu0 %2113
      %2115 = vmax.xlane.f32.xlu0 %v2049
      %v2116 = vpop.xlane.xlu0 %2115
      %2117 = vmax.xlane.f32.xlu0 %v2050
      %v2118 = vpop.xlane.xlu0 %2117
      %2119 = vmax.xlane.f32.xlu0 %v2051
      %v2120 = vpop.xlane.xlu0 %2119
      %2121 = vmax.xlane.f32.xlu0 %v2052
      %v2122 = vpop.xlane.xlu0 %2121
      %2123 = vmax.xlane.f32.xlu0 %v2053
      %v2124 = vpop.xlane.xlu0 %2123
      %2125 = vmax.xlane.f32.xlu0 %v2054
      %v2126 = vpop.xlane.xlu0 %2125
      %2127 = vmax.xlane.f32.xlu0 %v2055
      %v2128 = vpop.xlane.xlu0 %2127
      %2129 = vmax.xlane.f32.xlu0 %v2056
      %v2130 = vpop.xlane.xlu0 %2129
      %2131 = vmax.xlane.f32.xlu0 %v2057
      %v2132 = vpop.xlane.xlu0 %2131
      %2133 = vmax.xlane.f32.xlu0 %v2058
      %v2134 = vpop.xlane.xlu0 %2133
      %2135 = vmax.xlane.f32.xlu0 %v2059
      %v2136 = vpop.xlane.xlu0 %2135
      %2137 = vmax.xlane.f32.xlu0 %v2060
      %v2138 = vpop.xlane.xlu0 %2137
      %2139 = vmax.xlane.f32.xlu0 %v2061
      %v2140 = vpop.xlane.xlu0 %2139
      %2141 = vmax.xlane.f32.xlu0 %v2062
      %v2142 = vpop.xlane.xlu0 %2141
      %2143 = vmax.xlane.f32.xlu0 %v2063
      %v2144 = vpop.xlane.xlu0 %2143
      %2145 = vmax.xlane.f32.xlu0 %v2064
      %v2146 = vpop.xlane.xlu0 %2145
      %2147 = vmax.xlane.f32.xlu0 %v2065
      %v2148 = vpop.xlane.xlu0 %2147
      %2149 = vmax.xlane.f32.xlu0 %v2066
      %v2150 = vpop.xlane.xlu0 %2149
      %2151 = vmax.xlane.f32.xlu0 %v2067
      %v2152 = vpop.xlane.xlu0 %2151
      %2153 = vmax.xlane.f32.xlu0 %v2068
      %v2154 = vpop.xlane.xlu0 %2153
      %2155 = vmax.xlane.f32.xlu0 %v2069
      %v2156 = vpop.xlane.xlu0 %2155
      %2157 = vmax.xlane.f32.xlu0 %v2070
      %v2158 = vpop.xlane.xlu0 %2157
      %2159 = vmax.xlane.f32.xlu0 %v2071
      %v2160 = vpop.xlane.xlu0 %2159
      %2161 = vmax.xlane.f32.xlu0 %v2072
      %v2162 = vpop.xlane.xlu0 %2161
      %2163 = vmax.xlane.f32.xlu0 %v2073
      %v2164 = vpop.xlane.xlu0 %2163
      %2165 = vmax.xlane.f32.xlu0 %v2074
      %v2166 = vpop.xlane.xlu0 %2165
      %2167 = vmax.xlane.f32.xlu0 %v2075
      %v2168 = vpop.xlane.xlu0 %2167
      %2169 = vmax.xlane.f32.xlu0 %v2076
      %v2170 = vpop.xlane.xlu0 %2169
      %2171 = vmax.xlane.f32.xlu0 %v2077
      %v2172 = vpop.xlane.xlu0 %2171
      %2173 = vmax.xlane.f32.xlu0 %v2078
      %v2174 = vpop.xlane.xlu0 %2173
      %2175 = vmax.xlane.f32.xlu0 %v2079
      %v2176 = vpop.xlane.xlu0 %2175
      %2177 = vmax.xlane.f32.xlu0 %v2080
      %v2178 = vpop.xlane.xlu0 %2177
      %2179 = vmax.xlane.f32.xlu0 %v2081
      %v2180 = vpop.xlane.xlu0 %2179
      %2181 = vmax.xlane.f32.xlu0 %v2082
      %v2182 = vpop.xlane.xlu0 %2181
      %2183 = vmax.xlane.f32.xlu0 %v2083
      %v2184 = vpop.xlane.xlu0 %2183
      %2185 = vmax.xlane.f32.xlu0 %v2084
      %v2186 = vpop.xlane.xlu0 %2185
      %2187 = vmax.xlane.f32.xlu0 %v2085
      %v2188 = vpop.xlane.xlu0 %2187
      %2189 = vmax.xlane.f32.xlu0 %v2086
      %v2190 = vpop.xlane.xlu0 %2189
      %2191 = vmax.xlane.f32.xlu0 %v2087
      %v2192 = vpop.xlane.xlu0 %2191
      %2193 = vmax.xlane.f32.xlu0 %v2088
      %v2194 = vpop.xlane.xlu0 %2193
      %2195 = vmax.xlane.f32.xlu0 %v2089
      %v2196 = vpop.xlane.xlu0 %2195
      %2197 = vmax.xlane.f32.xlu0 %v2090
      %v2198 = vpop.xlane.xlu0 %2197
      %2199 = vmax.xlane.f32.xlu0 %v2091
      %v2200 = vpop.xlane.xlu0 %2199
      %2201 = vmax.xlane.f32.xlu0 %v2092
      %v2202 = vpop.xlane.xlu0 %2201
      %2203 = vmax.xlane.f32.xlu0 %v2093
      %v2204 = vpop.xlane.xlu0 %2203
      %2205 = vmax.xlane.f32.xlu0 %v2094
      %v2206 = vpop.xlane.xlu0 %2205
      %2207 = vmax.xlane.f32.xlu0 %v2095
      %v2208 = vpop.xlane.xlu0 %2207
      %2209 = vmax.xlane.f32.xlu0 %v2096
      %v2210 = vpop.xlane.xlu0 %2209
      %2211 = vmax.xlane.f32.xlu0 %v2097
      %v2212 = vpop.xlane.xlu0 %2211
      %2213 = vmax.xlane.f32.xlu0 %v2098
      %v2214 = vpop.xlane.xlu0 %2213
      %2215 = vmax.xlane.f32.xlu0 %v2099
      %v2216 = vpop.xlane.xlu0 %2215
      %2217 = vmax.xlane.f32.xlu0 %v2100
      %v2218 = vpop.xlane.xlu0 %2217
      %2219 = vmax.xlane.f32.xlu0 %v2101
      %v2220 = vpop.xlane.xlu0 %2219
      %2221 = vmax.xlane.f32.xlu0 %v2102
      %v2222 = vpop.xlane.xlu0 %2221
      %2223 = vmax.xlane.f32.xlu0 %v2103
      %v2224 = vpop.xlane.xlu0 %2223
      %2225 = vmax.xlane.f32.xlu0 %v2104
      %v2226 = vpop.xlane.xlu0 %2225
      %2227 = vmax.xlane.f32.xlu0 %v2105
      %v2228 = vpop.xlane.xlu0 %2227
      %2229 = vmax.xlane.f32.xlu0 %v2106
      %v2230 = vpop.xlane.xlu0 %2229
      %2231 = vmax.xlane.f32.xlu0 %v2107
      %v2232 = vpop.xlane.xlu0 %2231
      %2233 = vmax.xlane.f32.xlu0 %v2108
      %v2234 = vpop.xlane.xlu0 %2233
      %2235 = vmax.xlane.f32.xlu0 %v2109
      %v2236 = vpop.xlane.xlu0 %2235
      %2237 = vmax.xlane.f32.xlu0 %v2110
      %v2238 = vpop.xlane.xlu0 %2237
      %v2239 = vsub.f32 %v2047, %v2112
      %v2240 = vsub.f32 %v2048, %v2114
      %v2241 = vsub.f32 %v2049, %v2116
      %v2242 = vsub.f32 %v2050, %v2118
      %v2243 = vsub.f32 %v2051, %v2120
      %v2244 = vsub.f32 %v2052, %v2122
      %v2245 = vsub.f32 %v2053, %v2124
      %v2246 = vsub.f32 %v2054, %v2126
      %v2247 = vsub.f32 %v2055, %v2128
      %v2248 = vsub.f32 %v2056, %v2130
      %v2249 = vsub.f32 %v2057, %v2132
      %v2250 = vsub.f32 %v2058, %v2134
      %v2251 = vsub.f32 %v2059, %v2136
      %v2252 = vsub.f32 %v2060, %v2138
      %v2253 = vsub.f32 %v2061, %v2140
      %v2254 = vsub.f32 %v2062, %v2142
      %v2255 = vsub.f32 %v2063, %v2144
      %v2256 = vsub.f32 %v2064, %v2146
      %v2257 = vsub.f32 %v2065, %v2148
      %v2258 = vsub.f32 %v2066, %v2150
      %v2259 = vsub.f32 %v2067, %v2152
      %v2260 = vsub.f32 %v2068, %v2154
      %v2261 = vsub.f32 %v2069, %v2156
      %v2262 = vsub.f32 %v2070, %v2158
      %v2263 = vsub.f32 %v2071, %v2160
      %v2264 = vsub.f32 %v2072, %v2162
      %v2265 = vsub.f32 %v2073, %v2164
      %v2266 = vsub.f32 %v2074, %v2166
      %v2267 = vsub.f32 %v2075, %v2168
      %v2268 = vsub.f32 %v2076, %v2170
      %v2269 = vsub.f32 %v2077, %v2172
      %v2270 = vsub.f32 %v2078, %v2174
      %v2271 = vsub.f32 %v2079, %v2176
      %v2272 = vsub.f32 %v2080, %v2178
      %v2273 = vsub.f32 %v2081, %v2180
      %v2274 = vsub.f32 %v2082, %v2182
      %v2275 = vsub.f32 %v2083, %v2184
      %v2276 = vsub.f32 %v2084, %v2186
      %v2277 = vsub.f32 %v2085, %v2188
      %v2278 = vsub.f32 %v2086, %v2190
      %v2279 = vsub.f32 %v2087, %v2192
      %v2280 = vsub.f32 %v2088, %v2194
      %v2281 = vsub.f32 %v2089, %v2196
      %v2282 = vsub.f32 %v2090, %v2198
      %v2283 = vsub.f32 %v2091, %v2200
      %v2284 = vsub.f32 %v2092, %v2202
      %v2285 = vsub.f32 %v2093, %v2204
      %v2286 = vsub.f32 %v2094, %v2206
      %v2287 = vsub.f32 %v2095, %v2208
      %v2288 = vsub.f32 %v2096, %v2210
      %v2289 = vsub.f32 %v2097, %v2212
      %v2290 = vsub.f32 %v2098, %v2214
      %v2291 = vsub.f32 %v2099, %v2216
      %v2292 = vsub.f32 %v2100, %v2218
      %v2293 = vsub.f32 %v2101, %v2220
      %v2294 = vsub.f32 %v2102, %v2222
      %v2295 = vsub.f32 %v2103, %v2224
      %v2296 = vsub.f32 %v2104, %v2226
      %v2297 = vsub.f32 %v2105, %v2228
      %v2298 = vsub.f32 %v2106, %v2230
      %v2299 = vsub.f32 %v2107, %v2232
      %v2300 = vsub.f32 %v2108, %v2234
      %v2301 = vsub.f32 %v2109, %v2236
      %v2302 = vsub.f32 %v2110, %v2238
      %v2303 = vmul.f32 %v2239, 1.442695
      %v2304 = vpow.pop %v2303
      %v2305 = vmul.f32 %v2240, 1.442695
      %v2306 = vpow.pop %v2305
      %v2307 = vmul.f32 %v2241, 1.442695
      %v2308 = vpow.pop %v2307
      %v2309 = vmul.f32 %v2242, 1.442695
      %v2310 = vpow.pop %v2309
      %v2311 = vmul.f32 %v2243, 1.442695
      %v2312 = vpow.pop %v2311
      %v2313 = vmul.f32 %v2244, 1.442695
      %v2314 = vpow.pop %v2313
      %v2315 = vmul.f32 %v2245, 1.442695
      %v2316 = vpow.pop %v2315
      %v2317 = vmul.f32 %v2246, 1.442695
      %v2318 = vpow.pop %v2317
      %v2319 = vmul.f32 %v2247, 1.442695
      %v2320 = vpow.pop %v2319
      %v2321 = vmul.f32 %v2248, 1.442695
      %v2322 = vpow.pop %v2321
      %v2323 = vmul.f32 %v2249, 1.442695
      %v2324 = vpow.pop %v2323
      %v2325 = vmul.f32 %v2250, 1.442695
      %v2326 = vpow.pop %v2325
      %v2327 = vmul.f32 %v2251, 1.442695
      %v2328 = vpow.pop %v2327
      %v2329 = vmul.f32 %v2252, 1.442695
      %v2330 = vpow.pop %v2329
      %v2331 = vmul.f32 %v2253, 1.442695
      %v2332 = vpow.pop %v2331
      %v2333 = vmul.f32 %v2254, 1.442695
      %v2334 = vpow.pop %v2333
      %v2335 = vmul.f32 %v2255, 1.442695
      %v2336 = vpow.pop %v2335
      %v2337 = vmul.f32 %v2256, 1.442695
      %v2338 = vpow.pop %v2337
      %v2339 = vmul.f32 %v2257, 1.442695
      %v2340 = vpow.pop %v2339
      %v2341 = vmul.f32 %v2258, 1.442695
      %v2342 = vpow.pop %v2341
      %v2343 = vmul.f32 %v2259, 1.442695
      %v2344 = vpow.pop %v2343
      %v2345 = vmul.f32 %v2260, 1.442695
      %v2346 = vpow.pop %v2345
      %v2347 = vmul.f32 %v2261, 1.442695
      %v2348 = vpow.pop %v2347
      %v2349 = vmul.f32 %v2262, 1.442695
      %v2350 = vpow.pop %v2349
      %v2351 = vmul.f32 %v2263, 1.442695
      %v2352 = vpow.pop %v2351
      %v2353 = vmul.f32 %v2264, 1.442695
      %v2354 = vpow.pop %v2353
      %v2355 = vmul.f32 %v2265, 1.442695
      %v2356 = vpow.pop %v2355
      %v2357 = vmul.f32 %v2266, 1.442695
      %v2358 = vpow.pop %v2357
      %v2359 = vmul.f32 %v2267, 1.442695
      %v2360 = vpow.pop %v2359
      %v2361 = vmul.f32 %v2268, 1.442695
      %v2362 = vpow.pop %v2361
      %v2363 = vmul.f32 %v2269, 1.442695
      %v2364 = vpow.pop %v2363
      %v2365 = vmul.f32 %v2270, 1.442695
      %v2366 = vpow.pop %v2365
      %v2367 = vmul.f32 %v2271, 1.442695
      %v2368 = vpow.pop %v2367
      %v2369 = vmul.f32 %v2272, 1.442695
      %v2370 = vpow.pop %v2369
      %v2371 = vmul.f32 %v2273, 1.442695
      %v2372 = vpow.pop %v2371
      %v2373 = vmul.f32 %v2274, 1.442695
      %v2374 = vpow.pop %v2373
      %v2375 = vmul.f32 %v2275, 1.442695
      %v2376 = vpow.pop %v2375
      %v2377 = vmul.f32 %v2276, 1.442695
      %v2378 = vpow.pop %v2377
      %v2379 = vmul.f32 %v2277, 1.442695
      %v2380 = vpow.pop %v2379
      %v2381 = vmul.f32 %v2278, 1.442695
      %v2382 = vpow.pop %v2381
      %v2383 = vmul.f32 %v2279, 1.442695
      %v2384 = vpow.pop %v2383
      %v2385 = vmul.f32 %v2280, 1.442695
      %v2386 = vpow.pop %v2385
      %v2387 = vmul.f32 %v2281, 1.442695
      %v2388 = vpow.pop %v2387
      %v2389 = vmul.f32 %v2282, 1.442695
      %v2390 = vpow.pop %v2389
      %v2391 = vmul.f32 %v2283, 1.442695
      %v2392 = vpow.pop %v2391
      %v2393 = vmul.f32 %v2284, 1.442695
      %v2394 = vpow.pop %v2393
      %v2395 = vmul.f32 %v2285, 1.442695
      %v2396 = vpow.pop %v2395
      %v2397 = vmul.f32 %v2286, 1.442695
      %v2398 = vpow.pop %v2397
      %v2399 = vmul.f32 %v2287, 1.442695
      %v2400 = vpow.pop %v2399
      %v2401 = vmul.f32 %v2288, 1.442695
      %v2402 = vpow.pop %v2401
      %v2403 = vmul.f32 %v2289, 1.442695
      %v2404 = vpow.pop %v2403
      %v2405 = vmul.f32 %v2290, 1.442695
      %v2406 = vpow.pop %v2405
      %v2407 = vmul.f32 %v2291, 1.442695
      %v2408 = vpow.pop %v2407
      %v2409 = vmul.f32 %v2292, 1.442695
      %v2410 = vpow.pop %v2409
      %v2411 = vmul.f32 %v2293, 1.442695
      %v2412 = vpow.pop %v2411
      %v2413 = vmul.f32 %v2294, 1.442695
      %v2414 = vpow.pop %v2413
      %v2415 = vmul.f32 %v2295, 1.442695
      %v2416 = vpow.pop %v2415
      %v2417 = vmul.f32 %v2296, 1.442695
      %v2418 = vpow.pop %v2417
      %v2419 = vmul.f32 %v2297, 1.442695
      %v2420 = vpow.pop %v2419
      %v2421 = vmul.f32 %v2298, 1.442695
      %v2422 = vpow.pop %v2421
      %v2423 = vmul.f32 %v2299, 1.442695
      %v2424 = vpow.pop %v2423
      %v2425 = vmul.f32 %v2300, 1.442695
      %v2426 = vpow.pop %v2425
      %v2427 = vmul.f32 %v2301, 1.442695
      %v2428 = vpow.pop %v2427
      %v2429 = vmul.f32 %v2302, 1.442695
      %v2430 = vpow.pop %v2429
      %2431 = vadd.xlane.f32.xlu0 %v2304
      %v2432 = vpop.xlane.xlu0 %2431
      %2433 = vadd.xlane.f32.xlu0 %v2306
      %v2434 = vpop.xlane.xlu0 %2433
      %2435 = vadd.xlane.f32.xlu0 %v2308
      %v2436 = vpop.xlane.xlu0 %2435
      %2437 = vadd.xlane.f32.xlu0 %v2310
      %v2438 = vpop.xlane.xlu0 %2437
      %2439 = vadd.xlane.f32.xlu0 %v2312
      %v2440 = vpop.xlane.xlu0 %2439
      %2441 = vadd.xlane.f32.xlu0 %v2314
      %v2442 = vpop.xlane.xlu0 %2441
      %2443 = vadd.xlane.f32.xlu0 %v2316
      %v2444 = vpop.xlane.xlu0 %2443
      %2445 = vadd.xlane.f32.xlu0 %v2318
      %v2446 = vpop.xlane.xlu0 %2445
      %2447 = vadd.xlane.f32.xlu0 %v2320
      %v2448 = vpop.xlane.xlu0 %2447
      %2449 = vadd.xlane.f32.xlu0 %v2322
      %v2450 = vpop.xlane.xlu0 %2449
      %2451 = vadd.xlane.f32.xlu0 %v2324
      %v2452 = vpop.xlane.xlu0 %2451
      %2453 = vadd.xlane.f32.xlu0 %v2326
      %v2454 = vpop.xlane.xlu0 %2453
      %2455 = vadd.xlane.f32.xlu0 %v2328
      %v2456 = vpop.xlane.xlu0 %2455
      %2457 = vadd.xlane.f32.xlu0 %v2330
      %v2458 = vpop.xlane.xlu0 %2457
      %2459 = vadd.xlane.f32.xlu0 %v2332
      %v2460 = vpop.xlane.xlu0 %2459
      %2461 = vadd.xlane.f32.xlu0 %v2334
      %v2462 = vpop.xlane.xlu0 %2461
      %2463 = vadd.xlane.f32.xlu0 %v2336
      %v2464 = vpop.xlane.xlu0 %2463
      %2465 = vadd.xlane.f32.xlu0 %v2338
      %v2466 = vpop.xlane.xlu0 %2465
      %2467 = vadd.xlane.f32.xlu0 %v2340
      %v2468 = vpop.xlane.xlu0 %2467
      %2469 = vadd.xlane.f32.xlu0 %v2342
      %v2470 = vpop.xlane.xlu0 %2469
      %2471 = vadd.xlane.f32.xlu0 %v2344
      %v2472 = vpop.xlane.xlu0 %2471
      %2473 = vadd.xlane.f32.xlu0 %v2346
      %v2474 = vpop.xlane.xlu0 %2473
      %2475 = vadd.xlane.f32.xlu0 %v2348
      %v2476 = vpop.xlane.xlu0 %2475
      %2477 = vadd.xlane.f32.xlu0 %v2350
      %v2478 = vpop.xlane.xlu0 %2477
      %2479 = vadd.xlane.f32.xlu0 %v2352
      %v2480 = vpop.xlane.xlu0 %2479
      %2481 = vadd.xlane.f32.xlu0 %v2354
      %v2482 = vpop.xlane.xlu0 %2481
      %2483 = vadd.xlane.f32.xlu0 %v2356
      %v2484 = vpop.xlane.xlu0 %2483
      %2485 = vadd.xlane.f32.xlu0 %v2358
      %v2486 = vpop.xlane.xlu0 %2485
      %2487 = vadd.xlane.f32.xlu0 %v2360
      %v2488 = vpop.xlane.xlu0 %2487
      %2489 = vadd.xlane.f32.xlu0 %v2362
      %v2490 = vpop.xlane.xlu0 %2489
      %2491 = vadd.xlane.f32.xlu0 %v2364
      %v2492 = vpop.xlane.xlu0 %2491
      %2493 = vadd.xlane.f32.xlu0 %v2366
      %v2494 = vpop.xlane.xlu0 %2493
      %2495 = vadd.xlane.f32.xlu0 %v2368
      %v2496 = vpop.xlane.xlu0 %2495
      %2497 = vadd.xlane.f32.xlu0 %v2370
      %v2498 = vpop.xlane.xlu0 %2497
      %2499 = vadd.xlane.f32.xlu0 %v2372
      %v2500 = vpop.xlane.xlu0 %2499
      %2501 = vadd.xlane.f32.xlu0 %v2374
      %v2502 = vpop.xlane.xlu0 %2501
      %2503 = vadd.xlane.f32.xlu0 %v2376
      %v2504 = vpop.xlane.xlu0 %2503
      %2505 = vadd.xlane.f32.xlu0 %v2378
      %v2506 = vpop.xlane.xlu0 %2505
      %2507 = vadd.xlane.f32.xlu0 %v2380
      %v2508 = vpop.xlane.xlu0 %2507
      %2509 = vadd.xlane.f32.xlu0 %v2382
      %v2510 = vpop.xlane.xlu0 %2509
      %2511 = vadd.xlane.f32.xlu0 %v2384
      %v2512 = vpop.xlane.xlu0 %2511
      %2513 = vadd.xlane.f32.xlu0 %v2386
      %v2514 = vpop.xlane.xlu0 %2513
      %2515 = vadd.xlane.f32.xlu0 %v2388
      %v2516 = vpop.xlane.xlu0 %2515
      %2517 = vadd.xlane.f32.xlu0 %v2390
      %v2518 = vpop.xlane.xlu0 %2517
      %2519 = vadd.xlane.f32.xlu0 %v2392
      %v2520 = vpop.xlane.xlu0 %2519
      %2521 = vadd.xlane.f32.xlu0 %v2394
      %v2522 = vpop.xlane.xlu0 %2521
      %2523 = vadd.xlane.f32.xlu0 %v2396
      %v2524 = vpop.xlane.xlu0 %2523
      %2525 = vadd.xlane.f32.xlu0 %v2398
      %v2526 = vpop.xlane.xlu0 %2525
      %2527 = vadd.xlane.f32.xlu0 %v2400
      %v2528 = vpop.xlane.xlu0 %2527
      %2529 = vadd.xlane.f32.xlu0 %v2402
      %v2530 = vpop.xlane.xlu0 %2529
      %2531 = vadd.xlane.f32.xlu0 %v2404
      %v2532 = vpop.xlane.xlu0 %2531
      %2533 = vadd.xlane.f32.xlu0 %v2406
      %v2534 = vpop.xlane.xlu0 %2533
      %2535 = vadd.xlane.f32.xlu0 %v2408
      %v2536 = vpop.xlane.xlu0 %2535
      %2537 = vadd.xlane.f32.xlu0 %v2410
      %v2538 = vpop.xlane.xlu0 %2537
      %2539 = vadd.xlane.f32.xlu0 %v2412
      %v2540 = vpop.xlane.xlu0 %2539
      %2541 = vadd.xlane.f32.xlu0 %v2414
      %v2542 = vpop.xlane.xlu0 %2541
      %2543 = vadd.xlane.f32.xlu0 %v2416
      %v2544 = vpop.xlane.xlu0 %2543
      %2545 = vadd.xlane.f32.xlu0 %v2418
      %v2546 = vpop.xlane.xlu0 %2545
      %2547 = vadd.xlane.f32.xlu0 %v2420
      %v2548 = vpop.xlane.xlu0 %2547
      %2549 = vadd.xlane.f32.xlu0 %v2422
      %v2550 = vpop.xlane.xlu0 %2549
      %2551 = vadd.xlane.f32.xlu0 %v2424
      %v2552 = vpop.xlane.xlu0 %2551
      %2553 = vadd.xlane.f32.xlu0 %v2426
      %v2554 = vpop.xlane.xlu0 %2553
      %2555 = vadd.xlane.f32.xlu0 %v2428
      %v2556 = vpop.xlane.xlu0 %2555
      %2557 = vadd.xlane.f32.xlu0 %v2430
      %v2558 = vpop.xlane.xlu0 %2557
      %v2559 = vrcp.pop %v2432
      %v2560 = vrcp.pop %v2434
      %v2561 = vrcp.pop %v2436
      %v2562 = vrcp.pop %v2438
      %v2563 = vrcp.pop %v2440
      %v2564 = vrcp.pop %v2442
      %v2565 = vrcp.pop %v2444
      %v2566 = vrcp.pop %v2446
      %v2567 = vrcp.pop %v2448
      %v2568 = vrcp.pop %v2450
      %v2569 = vrcp.pop %v2452
      %v2570 = vrcp.pop %v2454
      %v2571 = vrcp.pop %v2456
      %v2572 = vrcp.pop %v2458
      %v2573 = vrcp.pop %v2460
      %v2574 = vrcp.pop %v2462
      %v2575 = vrcp.pop %v2464
      %v2576 = vrcp.pop %v2466
      %v2577 = vrcp.pop %v2468
      %v2578 = vrcp.pop %v2470
      %v2579 = vrcp.pop %v2472
      %v2580 = vrcp.pop %v2474
      %v2581 = vrcp.pop %v2476
      %v2582 = vrcp.pop %v2478
      %v2583 = vrcp.pop %v2480
      %v2584 = vrcp.pop %v2482
      %v2585 = vrcp.pop %v2484
      %v2586 = vrcp.pop %v2486
      %v2587 = vrcp.pop %v2488
      %v2588 = vrcp.pop %v2490
      %v2589 = vrcp.pop %v2492
      %v2590 = vrcp.pop %v2494
      %v2591 = vrcp.pop %v2496
      %v2592 = vrcp.pop %v2498
      %v2593 = vrcp.pop %v2500
      %v2594 = vrcp.pop %v2502
      %v2595 = vrcp.pop %v2504
      %v2596 = vrcp.pop %v2506
      %v2597 = vrcp.pop %v2508
      %v2598 = vrcp.pop %v2510
      %v2599 = vrcp.pop %v2512
      %v2600 = vrcp.pop %v2514
      %v2601 = vrcp.pop %v2516
      %v2602 = vrcp.pop %v2518
      %v2603 = vrcp.pop %v2520
      %v2604 = vrcp.pop %v2522
      %v2605 = vrcp.pop %v2524
      %v2606 = vrcp.pop %v2526
      %v2607 = vrcp.pop %v2528
      %v2608 = vrcp.pop %v2530
      %v2609 = vrcp.pop %v2532
      %v2610 = vrcp.pop %v2534
      %v2611 = vrcp.pop %v2536
      %v2612 = vrcp.pop %v2538
      %v2613 = vrcp.pop %v2540
      %v2614 = vrcp.pop %v2542
      %v2615 = vrcp.pop %v2544
      %v2616 = vrcp.pop %v2546
      %v2617 = vrcp.pop %v2548
      %v2618 = vrcp.pop %v2550
      %v2619 = vrcp.pop %v2552
      %v2620 = vrcp.pop %v2554
      %v2621 = vrcp.pop %v2556
      %v2622 = vrcp.pop %v2558
      %v2623 = vmul.f32 %v2304, %v2559
      %v2624 = vmul.f32 %v2306, %v2560
      %v2625 = vmul.f32 %v2308, %v2561
      %v2626 = vmul.f32 %v2310, %v2562
      %v2627 = vmul.f32 %v2312, %v2563
      %v2628 = vmul.f32 %v2314, %v2564
      %v2629 = vmul.f32 %v2316, %v2565
      %v2630 = vmul.f32 %v2318, %v2566
      %v2631 = vmul.f32 %v2320, %v2567
      %v2632 = vmul.f32 %v2322, %v2568
      %v2633 = vmul.f32 %v2324, %v2569
      %v2634 = vmul.f32 %v2326, %v2570
      %v2635 = vmul.f32 %v2328, %v2571
      %v2636 = vmul.f32 %v2330, %v2572
      %v2637 = vmul.f32 %v2332, %v2573
      %v2638 = vmul.f32 %v2334, %v2574
      %v2639 = vmul.f32 %v2336, %v2575
      %v2640 = vmul.f32 %v2338, %v2576
      %v2641 = vmul.f32 %v2340, %v2577
      %v2642 = vmul.f32 %v2342, %v2578
      %v2643 = vmul.f32 %v2344, %v2579
      %v2644 = vmul.f32 %v2346, %v2580
      %v2645 = vmul.f32 %v2348, %v2581
      %v2646 = vmul.f32 %v2350, %v2582
      %v2647 = vmul.f32 %v2352, %v2583
      %v2648 = vmul.f32 %v2354, %v2584
      %v2649 = vmul.f32 %v2356, %v2585
      %v2650 = vmul.f32 %v2358, %v2586
      %v2651 = vmul.f32 %v2360, %v2587
      %v2652 = vmul.f32 %v2362, %v2588
      %v2653 = vmul.f32 %v2364, %v2589
      %v2654 = vmul.f32 %v2366, %v2590
      %v2655 = vmul.f32 %v2368, %v2591
      %v2656 = vmul.f32 %v2370, %v2592
      %v2657 = vmul.f32 %v2372, %v2593
      %v2658 = vmul.f32 %v2374, %v2594
      %v2659 = vmul.f32 %v2376, %v2595
      %v2660 = vmul.f32 %v2378, %v2596
      %v2661 = vmul.f32 %v2380, %v2597
      %v2662 = vmul.f32 %v2382, %v2598
      %v2663 = vmul.f32 %v2384, %v2599
      %v2664 = vmul.f32 %v2386, %v2600
      %v2665 = vmul.f32 %v2388, %v2601
      %v2666 = vmul.f32 %v2390, %v2602
      %v2667 = vmul.f32 %v2392, %v2603
      %v2668 = vmul.f32 %v2394, %v2604
      %v2669 = vmul.f32 %v2396, %v2605
      %v2670 = vmul.f32 %v2398, %v2606
      %v2671 = vmul.f32 %v2400, %v2607
      %v2672 = vmul.f32 %v2402, %v2608
      %v2673 = vmul.f32 %v2404, %v2609
      %v2674 = vmul.f32 %v2406, %v2610
      %v2675 = vmul.f32 %v2408, %v2611
      %v2676 = vmul.f32 %v2410, %v2612
      %v2677 = vmul.f32 %v2412, %v2613
      %v2678 = vmul.f32 %v2414, %v2614
      %v2679 = vmul.f32 %v2416, %v2615
      %v2680 = vmul.f32 %v2418, %v2616
      %v2681 = vmul.f32 %v2420, %v2617
      %v2682 = vmul.f32 %v2422, %v2618
      %v2683 = vmul.f32 %v2424, %v2619
      %v2684 = vmul.f32 %v2426, %v2620
      %v2685 = vmul.f32 %v2428, %v2621
      %v2686 = vmul.f32 %v2430, %v2622
      %v2687 = vpack.c.bf16 %v2624, %v2623
      %v2688 = vpack.c.bf16 %v2626, %v2625
      %v2689 = vpack.c.bf16 %v2628, %v2627
      %v2690 = vpack.c.bf16 %v2630, %v2629
      %v2691 = vpack.c.bf16 %v2632, %v2631
      %v2692 = vpack.c.bf16 %v2634, %v2633
      %v2693 = vpack.c.bf16 %v2636, %v2635
      %v2694 = vpack.c.bf16 %v2638, %v2637
      %v2695 = vpack.c.bf16 %v2640, %v2639
      %v2696 = vpack.c.bf16 %v2642, %v2641
      %v2697 = vpack.c.bf16 %v2644, %v2643
      %v2698 = vpack.c.bf16 %v2646, %v2645
      %v2699 = vpack.c.bf16 %v2648, %v2647
      %v2700 = vpack.c.bf16 %v2650, %v2649
      %v2701 = vpack.c.bf16 %v2652, %v2651
      %v2702 = vpack.c.bf16 %v2654, %v2653
      %v2703 = vpack.c.bf16 %v2656, %v2655
      %v2704 = vpack.c.bf16 %v2658, %v2657
      %v2705 = vpack.c.bf16 %v2660, %v2659
      %v2706 = vpack.c.bf16 %v2662, %v2661
      %v2707 = vpack.c.bf16 %v2664, %v2663
      %v2708 = vpack.c.bf16 %v2666, %v2665
      %v2709 = vpack.c.bf16 %v2668, %v2667
      %v2710 = vpack.c.bf16 %v2670, %v2669
      %v2711 = vpack.c.bf16 %v2672, %v2671
      %v2712 = vpack.c.bf16 %v2674, %v2673
      %v2713 = vpack.c.bf16 %v2676, %v2675
      %v2714 = vpack.c.bf16 %v2678, %v2677
      %v2715 = vpack.c.bf16 %v2680, %v2679
      %v2716 = vpack.c.bf16 %v2682, %v2681
      %v2717 = vpack.c.bf16 %v2684, %v2683
      %v2718 = vpack.c.bf16 %v2686, %v2685
      %2719 = vrot.lane.b32.xlu0 %v1242, 64
      %v2720 = vpop.permute.xlu0 %2719
      %2721 = vrot.lane.b32.xlu0 %v1243, 64
      %v2722 = vpop.permute.xlu0 %2721
      %2723 = vrot.lane.b32.xlu0 %v1244, 64
      %v2724 = vpop.permute.xlu0 %2723
      %2725 = vrot.lane.b32.xlu0 %v1245, 64
      %v2726 = vpop.permute.xlu0 %2725
      %2727 = vrot.lane.b32.xlu0 %v1246, 64
      %v2728 = vpop.permute.xlu0 %2727
      %2729 = vrot.lane.b32.xlu0 %v1247, 64
      %v2730 = vpop.permute.xlu0 %2729
      %2731 = vrot.lane.b32.xlu0 %v1248, 64
      %v2732 = vpop.permute.xlu0 %2731
      %2733 = vrot.lane.b32.xlu0 %v1249, 64
      %v2734 = vpop.permute.xlu0 %2733
      %2743 = vmatprep.subr.bf16.mxu0 0
      %2744 = vmatpush1.bf16.msra.mxu0 %v2734
      %2745 = vmatprep.subr.bf16.mxu0 0
      %2746 = vmatpush1.bf16.msra.mxu0 %v2732
      %2747 = vmatprep.subr.bf16.mxu0 0
      %2748 = vmatpush1.bf16.msra.mxu0 %v2730
      %2749 = vmatprep.subr.bf16.mxu0 0
      %2750 = vmatpush1.bf16.msra.mxu0 %v2728
      %2751 = vmatprep.subr.bf16.mxu0 0
      %2752 = vmatpush1.bf16.msra.mxu0 %v2726
      %2753 = vmatprep.subr.bf16.mxu0 0
      %2754 = vmatpush1.bf16.msra.mxu0 %v2724
      %2755 = vmatprep.subr.bf16.mxu0 0
      %2756 = vmatpush1.bf16.msra.mxu0 %v2722
      %2757 = vmatprep.subr.bf16.mxu0 0
      %2758 = vmatpush1.bf16.msra.mxu0 %v2720
      %2759 = vmatprep.subr.bf16.mxu0 0
      %2760 = vmatpush2.bf16.msra.mxu0 0
      %2761 = vmatprep.subr.bf16.mxu0 0
      %2762 = vmatpush2.bf16.msra.mxu0 0
      %2763 = vmatprep.subr.bf16.mxu0 0
      %2764 = vmatpush2.bf16.msra.mxu0 0
      %2765 = vmatprep.subr.bf16.mxu0 0
      %2766 = vmatpush2.bf16.msra.mxu0 0
      %2767 = vmatprep.subr.bf16.mxu0 0
      %2768 = vmatpush2.bf16.msra.mxu0 0
      %2769 = vmatprep.subr.bf16.mxu0 0
      %2770 = vmatpush2.bf16.msra.mxu0 0
      %2771 = vmatprep.subr.bf16.mxu0 0
      %2772 = vmatpush2.bf16.msra.mxu0 0
      %2773 = vmatprep.subr.bf16.mxu0 0
      %2774 = vmatpush2.bf16.msra.mxu0 0
      %2775 = vmatprep.mubr.bf16.mxu0 0
      %2776 = vmatmul.mubr.bf16.gmra.mxu0 %v2687
      %v2777 = vpop.f32.mrf.mxu0
      %v2778 = vadd.f32 0.0, %v2777
      %v2779 = vpop.f32.mrf.mxu0
      %v2780 = vpop.f32.mrf.mxu0
      %v2781 = vadd.f32 0.0, %v2780
      %v2782 = vpop.f32.mrf.mxu0
      %2783 = vmatprep.mubr.bf16.mxu0 0
      %2784 = vmatmul.mubr.bf16.gmra.mxu0 %v2688
      %v2785 = vpop.f32.mrf.mxu0
      %v2786 = vadd.f32 0.0, %v2785
      %v2787 = vpop.f32.mrf.mxu0
      %v2788 = vpop.f32.mrf.mxu0
      %v2789 = vadd.f32 0.0, %v2788
      %v2790 = vpop.f32.mrf.mxu0
      %2791 = vmatprep.mubr.bf16.mxu0 0
      %2792 = vmatmul.mubr.bf16.gmra.mxu0 %v2689
      %v2793 = vpop.f32.mrf.mxu0
      %v2794 = vadd.f32 0.0, %v2793
      %v2795 = vpop.f32.mrf.mxu0
      %v2796 = vpop.f32.mrf.mxu0
      %v2797 = vadd.f32 0.0, %v2796
      %v2798 = vpop.f32.mrf.mxu0
      %2799 = vmatprep.mubr.bf16.mxu0 0
      %2800 = vmatmul.mubr.bf16.gmra.mxu0 %v2690
      %v2801 = vpop.f32.mrf.mxu0
      %v2802 = vadd.f32 0.0, %v2801
      %v2803 = vpop.f32.mrf.mxu0
      %v2804 = vpop.f32.mrf.mxu0
      %v2805 = vadd.f32 0.0, %v2804
      %v2806 = vpop.f32.mrf.mxu0
      %2807 = vmatprep.mubr.bf16.mxu0 0
      %2808 = vmatmul.mubr.bf16.gmra.mxu0 %v2691
      %v2809 = vpop.f32.mrf.mxu0
      %v2810 = vadd.f32 0.0, %v2809
      %v2811 = vpop.f32.mrf.mxu0
      %v2812 = vpop.f32.mrf.mxu0
      %v2813 = vadd.f32 0.0, %v2812
      %v2814 = vpop.f32.mrf.mxu0
      %2815 = vmatprep.mubr.bf16.mxu0 0
      %2816 = vmatmul.mubr.bf16.gmra.mxu0 %v2692
      %v2817 = vpop.f32.mrf.mxu0
      %v2818 = vadd.f32 0.0, %v2817
      %v2819 = vpop.f32.mrf.mxu0
      %v2820 = vpop.f32.mrf.mxu0
      %v2821 = vadd.f32 0.0, %v2820
      %v2822 = vpop.f32.mrf.mxu0
      %2823 = vmatprep.mubr.bf16.mxu0 0
      %2824 = vmatmul.mubr.bf16.gmra.mxu0 %v2693
      %v2825 = vpop.f32.mrf.mxu0
      %v2826 = vadd.f32 0.0, %v2825
      %v2827 = vpop.f32.mrf.mxu0
      %v2828 = vpop.f32.mrf.mxu0
      %v2829 = vadd.f32 0.0, %v2828
      %v2830 = vpop.f32.mrf.mxu0
      %2831 = vmatprep.mubr.bf16.mxu0 0
      %2832 = vmatmul.mubr.bf16.gmra.mxu0 %v2694
      %v2833 = vpop.f32.mrf.mxu0
      %v2834 = vadd.f32 0.0, %v2833
      %v2835 = vpop.f32.mrf.mxu0
      %v2836 = vpop.f32.mrf.mxu0
      %v2837 = vadd.f32 0.0, %v2836
      %v2838 = vpop.f32.mrf.mxu0
      %2839 = vdwg.mxu0
      %2840 = vrot.lane.b32.xlu0 %v1444, 64
      %v2841 = vpop.permute.xlu0 %2840
      %2842 = vrot.lane.b32.xlu0 %v1445, 64
      %v2843 = vpop.permute.xlu0 %2842
      %2844 = vrot.lane.b32.xlu0 %v1446, 64
      %v2845 = vpop.permute.xlu0 %2844
      %2846 = vrot.lane.b32.xlu0 %v1447, 64
      %v2847 = vpop.permute.xlu0 %2846
      %2848 = vrot.lane.b32.xlu0 %v1448, 64
      %v2849 = vpop.permute.xlu0 %2848
      %2850 = vrot.lane.b32.xlu0 %v1449, 64
      %v2851 = vpop.permute.xlu0 %2850
      %2852 = vrot.lane.b32.xlu0 %v1450, 64
      %v2853 = vpop.permute.xlu0 %2852
      %2854 = vrot.lane.b32.xlu0 %v1451, 64
      %v2855 = vpop.permute.xlu0 %2854
      %2864 = vmatprep.subr.bf16.mxu0 0
      %2865 = vmatpush1.bf16.msra.mxu0 %v2855
      %2866 = vmatprep.subr.bf16.mxu0 0
      %2867 = vmatpush1.bf16.msra.mxu0 %v2853
      %2868 = vmatprep.subr.bf16.mxu0 0
      %2869 = vmatpush1.bf16.msra.mxu0 %v2851
      %2870 = vmatprep.subr.bf16.mxu0 0
      %2871 = vmatpush1.bf16.msra.mxu0 %v2849
      %2872 = vmatprep.subr.bf16.mxu0 0
      %2873 = vmatpush1.bf16.msra.mxu0 %v2847
      %2874 = vmatprep.subr.bf16.mxu0 0
      %2875 = vmatpush1.bf16.msra.mxu0 %v2845
      %2876 = vmatprep.subr.bf16.mxu0 0
      %2877 = vmatpush1.bf16.msra.mxu0 %v2843
      %2878 = vmatprep.subr.bf16.mxu0 0
      %2879 = vmatpush1.bf16.msra.mxu0 %v2841
      %2880 = vmatprep.subr.bf16.mxu0 0
      %2881 = vmatpush2.bf16.msra.mxu0 0
      %2882 = vmatprep.subr.bf16.mxu0 0
      %2883 = vmatpush2.bf16.msra.mxu0 0
      %2884 = vmatprep.subr.bf16.mxu0 0
      %2885 = vmatpush2.bf16.msra.mxu0 0
      %2886 = vmatprep.subr.bf16.mxu0 0
      %2887 = vmatpush2.bf16.msra.mxu0 0
      %2888 = vmatprep.subr.bf16.mxu0 0
      %2889 = vmatpush2.bf16.msra.mxu0 0
      %2890 = vmatprep.subr.bf16.mxu0 0
      %2891 = vmatpush2.bf16.msra.mxu0 0
      %2892 = vmatprep.subr.bf16.mxu0 0
      %2893 = vmatpush2.bf16.msra.mxu0 0
      %2894 = vmatprep.subr.bf16.mxu0 0
      %2895 = vmatpush2.bf16.msra.mxu0 0
      %2896 = vmatprep.mubr.bf16.mxu0 0
      %2897 = vmatmul.mubr.bf16.gmra.mxu0 %v2695
      %v2898 = vpop.f32.mrf.mxu0
      %v2899 = vadd.f32 0.0, %v2898
      %v2900 = vpop.f32.mrf.mxu0
      %v2901 = vpop.f32.mrf.mxu0
      %v2902 = vadd.f32 0.0, %v2901
      %v2903 = vpop.f32.mrf.mxu0
      %2904 = vmatprep.mubr.bf16.mxu0 0
      %2905 = vmatmul.mubr.bf16.gmra.mxu0 %v2696
      %v2906 = vpop.f32.mrf.mxu0
      %v2907 = vadd.f32 0.0, %v2906
      %v2908 = vpop.f32.mrf.mxu0
      %v2909 = vpop.f32.mrf.mxu0
      %v2910 = vadd.f32 0.0, %v2909
      %v2911 = vpop.f32.mrf.mxu0
      %2912 = vmatprep.mubr.bf16.mxu0 0
      %2913 = vmatmul.mubr.bf16.gmra.mxu0 %v2697
      %v2914 = vpop.f32.mrf.mxu0
      %v2915 = vadd.f32 0.0, %v2914
      %v2916 = vpop.f32.mrf.mxu0
      %v2917 = vpop.f32.mrf.mxu0
      %v2918 = vadd.f32 0.0, %v2917
      %v2919 = vpop.f32.mrf.mxu0
      %2920 = vmatprep.mubr.bf16.mxu0 0
      %2921 = vmatmul.mubr.bf16.gmra.mxu0 %v2698
      %v2922 = vpop.f32.mrf.mxu0
      %v2923 = vadd.f32 0.0, %v2922
      %v2924 = vpop.f32.mrf.mxu0
      %v2925 = vpop.f32.mrf.mxu0
      %v2926 = vadd.f32 0.0, %v2925
      %v2927 = vpop.f32.mrf.mxu0
      %2928 = vmatprep.mubr.bf16.mxu0 0
      %2929 = vmatmul.mubr.bf16.gmra.mxu0 %v2699
      %v2930 = vpop.f32.mrf.mxu0
      %v2931 = vadd.f32 0.0, %v2930
      %v2932 = vpop.f32.mrf.mxu0
      %v2933 = vpop.f32.mrf.mxu0
      %v2934 = vadd.f32 0.0, %v2933
      %v2935 = vpop.f32.mrf.mxu0
      %2936 = vmatprep.mubr.bf16.mxu0 0
      %2937 = vmatmul.mubr.bf16.gmra.mxu0 %v2700
      %v2938 = vpop.f32.mrf.mxu0
      %v2939 = vadd.f32 0.0, %v2938
      %v2940 = vpop.f32.mrf.mxu0
      %v2941 = vpop.f32.mrf.mxu0
      %v2942 = vadd.f32 0.0, %v2941
      %v2943 = vpop.f32.mrf.mxu0
      %2944 = vmatprep.mubr.bf16.mxu0 0
      %2945 = vmatmul.mubr.bf16.gmra.mxu0 %v2701
      %v2946 = vpop.f32.mrf.mxu0
      %v2947 = vadd.f32 0.0, %v2946
      %v2948 = vpop.f32.mrf.mxu0
      %v2949 = vpop.f32.mrf.mxu0
      %v2950 = vadd.f32 0.0, %v2949
      %v2951 = vpop.f32.mrf.mxu0
      %2952 = vmatprep.mubr.bf16.mxu0 0
      %2953 = vmatmul.mubr.bf16.gmra.mxu0 %v2702
      %v2954 = vpop.f32.mrf.mxu0
      %v2955 = vadd.f32 0.0, %v2954
      %v2956 = vpop.f32.mrf.mxu0
      %v2957 = vpop.f32.mrf.mxu0
      %v2958 = vadd.f32 0.0, %v2957
      %v2959 = vpop.f32.mrf.mxu0
      %2960 = vdwg.mxu0
      %2961 = vrot.lane.b32.xlu0 %v1645, 64
      %v2962 = vpop.permute.xlu0 %2961
      %2963 = vrot.lane.b32.xlu0 %v1646, 64
      %v2964 = vpop.permute.xlu0 %2963
      %2965 = vrot.lane.b32.xlu0 %v1647, 64
      %v2966 = vpop.permute.xlu0 %2965
      %2967 = vrot.lane.b32.xlu0 %v1648, 64
      %v2968 = vpop.permute.xlu0 %2967
      %2969 = vrot.lane.b32.xlu0 %v1649, 64
      %v2970 = vpop.permute.xlu0 %2969
      %2971 = vrot.lane.b32.xlu0 %v1650, 64
      %v2972 = vpop.permute.xlu0 %2971
      %2973 = vrot.lane.b32.xlu0 %v1651, 64
      %v2974 = vpop.permute.xlu0 %2973
      %2975 = vrot.lane.b32.xlu0 %v1652, 64
      %v2976 = vpop.permute.xlu0 %2975
      %2985 = vmatprep.subr.bf16.mxu0 0
      %2986 = vmatpush1.bf16.msra.mxu0 %v2976
      %2987 = vmatprep.subr.bf16.mxu0 0
      %2988 = vmatpush1.bf16.msra.mxu0 %v2974
      %2989 = vmatprep.subr.bf16.mxu0 0
      %2990 = vmatpush1.bf16.msra.mxu0 %v2972
      %2991 = vmatprep.subr.bf16.mxu0 0
      %2992 = vmatpush1.bf16.msra.mxu0 %v2970
      %2993 = vmatprep.subr.bf16.mxu0 0
      %2994 = vmatpush1.bf16.msra.mxu0 %v2968
      %2995 = vmatprep.subr.bf16.mxu0 0
      %2996 = vmatpush1.bf16.msra.mxu0 %v2966
      %2997 = vmatprep.subr.bf16.mxu0 0
      %2998 = vmatpush1.bf16.msra.mxu0 %v2964
      %2999 = vmatprep.subr.bf16.mxu0 0
      %3000 = vmatpush1.bf16.msra.mxu0 %v2962
      %3001 = vmatprep.subr.bf16.mxu0 0
      %3002 = vmatpush2.bf16.msra.mxu0 0
      %3003 = vmatprep.subr.bf16.mxu0 0
      %3004 = vmatpush2.bf16.msra.mxu0 0
      %3005 = vmatprep.subr.bf16.mxu0 0
      %3006 = vmatpush2.bf16.msra.mxu0 0
      %3007 = vmatprep.subr.bf16.mxu0 0
      %3008 = vmatpush2.bf16.msra.mxu0 0
      %3009 = vmatprep.subr.bf16.mxu0 0
      %3010 = vmatpush2.bf16.msra.mxu0 0
      %3011 = vmatprep.subr.bf16.mxu0 0
      %3012 = vmatpush2.bf16.msra.mxu0 0
      %3013 = vmatprep.subr.bf16.mxu0 0
      %3014 = vmatpush2.bf16.msra.mxu0 0
      %3015 = vmatprep.subr.bf16.mxu0 0
      %3016 = vmatpush2.bf16.msra.mxu0 0
      %3017 = vmatprep.mubr.bf16.mxu0 0
      %3018 = vmatmul.mubr.bf16.gmra.mxu0 %v2703
      %v3019 = vpop.f32.mrf.mxu0
      %v3020 = vadd.f32 0.0, %v3019
      %v3021 = vpop.f32.mrf.mxu0
      %v3022 = vpop.f32.mrf.mxu0
      %v3023 = vadd.f32 0.0, %v3022
      %v3024 = vpop.f32.mrf.mxu0
      %3025 = vmatprep.mubr.bf16.mxu0 0
      %3026 = vmatmul.mubr.bf16.gmra.mxu0 %v2704
      %v3027 = vpop.f32.mrf.mxu0
      %v3028 = vadd.f32 0.0, %v3027
      %v3029 = vpop.f32.mrf.mxu0
      %v3030 = vpop.f32.mrf.mxu0
      %v3031 = vadd.f32 0.0, %v3030
      %v3032 = vpop.f32.mrf.mxu0
      %3033 = vmatprep.mubr.bf16.mxu0 0
      %3034 = vmatmul.mubr.bf16.gmra.mxu0 %v2705
      %v3035 = vpop.f32.mrf.mxu0
      %v3036 = vadd.f32 0.0, %v3035
      %v3037 = vpop.f32.mrf.mxu0
      %v3038 = vpop.f32.mrf.mxu0
      %v3039 = vadd.f32 0.0, %v3038
      %v3040 = vpop.f32.mrf.mxu0
      %3041 = vmatprep.mubr.bf16.mxu0 0
      %3042 = vmatmul.mubr.bf16.gmra.mxu0 %v2706
      %v3043 = vpop.f32.mrf.mxu0
      %v3044 = vadd.f32 0.0, %v3043
      %v3045 = vpop.f32.mrf.mxu0
      %v3046 = vpop.f32.mrf.mxu0
      %v3047 = vadd.f32 0.0, %v3046
      %v3048 = vpop.f32.mrf.mxu0
      %3049 = vmatprep.mubr.bf16.mxu0 0
      %3050 = vmatmul.mubr.bf16.gmra.mxu0 %v2707
      %v3051 = vpop.f32.mrf.mxu0
      %v3052 = vadd.f32 0.0, %v3051
      %v3053 = vpop.f32.mrf.mxu0
      %v3054 = vpop.f32.mrf.mxu0
      %v3055 = vadd.f32 0.0, %v3054
      %v3056 = vpop.f32.mrf.mxu0
      %3057 = vmatprep.mubr.bf16.mxu0 0
      %3058 = vmatmul.mubr.bf16.gmra.mxu0 %v2708
      %v3059 = vpop.f32.mrf.mxu0
      %v3060 = vadd.f32 0.0, %v3059
      %v3061 = vpop.f32.mrf.mxu0
      %v3062 = vpop.f32.mrf.mxu0
      %v3063 = vadd.f32 0.0, %v3062
      %v3064 = vpop.f32.mrf.mxu0
      %3065 = vmatprep.mubr.bf16.mxu0 0
      %3066 = vmatmul.mubr.bf16.gmra.mxu0 %v2709
      %v3067 = vpop.f32.mrf.mxu0
      %v3068 = vadd.f32 0.0, %v3067
      %v3069 = vpop.f32.mrf.mxu0
      %v3070 = vpop.f32.mrf.mxu0
      %v3071 = vadd.f32 0.0, %v3070
      %v3072 = vpop.f32.mrf.mxu0
      %3073 = vmatprep.mubr.bf16.mxu0 0
      %3074 = vmatmul.mubr.bf16.gmra.mxu0 %v2710
      %v3075 = vpop.f32.mrf.mxu0
      %v3076 = vadd.f32 0.0, %v3075
      %v3077 = vpop.f32.mrf.mxu0
      %v3078 = vpop.f32.mrf.mxu0
      %v3079 = vadd.f32 0.0, %v3078
      %v3080 = vpop.f32.mrf.mxu0
      %3081 = vdwg.mxu0
      %3082 = vrot.lane.b32.xlu0 %v1846, 64
      %v3083 = vpop.permute.xlu0 %3082
      %3084 = vrot.lane.b32.xlu0 %v1847, 64
      %v3085 = vpop.permute.xlu0 %3084
      %3086 = vrot.lane.b32.xlu0 %v1848, 64
      %v3087 = vpop.permute.xlu0 %3086
      %3088 = vrot.lane.b32.xlu0 %v1849, 64
      %v3089 = vpop.permute.xlu0 %3088
      %3090 = vrot.lane.b32.xlu0 %v1850, 64
      %v3091 = vpop.permute.xlu0 %3090
      %3092 = vrot.lane.b32.xlu0 %v1851, 64
      %v3093 = vpop.permute.xlu0 %3092
      %3094 = vrot.lane.b32.xlu0 %v1852, 64
      %v3095 = vpop.permute.xlu0 %3094
      %3096 = vrot.lane.b32.xlu0 %v1853, 64
      %v3097 = vpop.permute.xlu0 %3096
      %3106 = vmatprep.subr.bf16.mxu0 0
      %3107 = vmatpush1.bf16.msra.mxu0 %v3097
      %3108 = vmatprep.subr.bf16.mxu0 0
      %3109 = vmatpush1.bf16.msra.mxu0 %v3095
      %3110 = vmatprep.subr.bf16.mxu0 0
      %3111 = vmatpush1.bf16.msra.mxu0 %v3093
      %3112 = vmatprep.subr.bf16.mxu0 0
      %3113 = vmatpush1.bf16.msra.mxu0 %v3091
      %3114 = vmatprep.subr.bf16.mxu0 0
      %3115 = vmatpush1.bf16.msra.mxu0 %v3089
      %3116 = vmatprep.subr.bf16.mxu0 0
      %3117 = vmatpush1.bf16.msra.mxu0 %v3087
      %3118 = vmatprep.subr.bf16.mxu0 0
      %3119 = vmatpush1.bf16.msra.mxu0 %v3085
      %3120 = vmatprep.subr.bf16.mxu0 0
      %3121 = vmatpush1.bf16.msra.mxu0 %v3083
      %3122 = vmatprep.subr.bf16.mxu0 0
      %3123 = vmatpush2.bf16.msra.mxu0 0
      %3124 = vmatprep.subr.bf16.mxu0 0
      %3125 = vmatpush2.bf16.msra.mxu0 0
      %3126 = vmatprep.subr.bf16.mxu0 0
      %3127 = vmatpush2.bf16.msra.mxu0 0
      %3128 = vmatprep.subr.bf16.mxu0 0
      %3129 = vmatpush2.bf16.msra.mxu0 0
      %3130 = vmatprep.subr.bf16.mxu0 0
      %3131 = vmatpush2.bf16.msra.mxu0 0
      %3132 = vmatprep.subr.bf16.mxu0 0
      %3133 = vmatpush2.bf16.msra.mxu0 0
      %3134 = vmatprep.subr.bf16.mxu0 0
      %3135 = vmatpush2.bf16.msra.mxu0 0
      %3136 = vmatprep.subr.bf16.mxu0 0
      %3137 = vmatpush2.bf16.msra.mxu0 0
      %3138 = vmatprep.mubr.bf16.mxu0 0
      %3139 = vmatmul.mubr.bf16.gmra.mxu0 %v2711
      %v3140 = vpop.f32.mrf.mxu0
      %v3141 = vadd.f32 0.0, %v3140
      %v3142 = vpop.f32.mrf.mxu0
      %v3143 = vpop.f32.mrf.mxu0
      %v3144 = vadd.f32 0.0, %v3143
      %v3145 = vpop.f32.mrf.mxu0
      %3146 = vmatprep.mubr.bf16.mxu0 0
      %3147 = vmatmul.mubr.bf16.gmra.mxu0 %v2712
      %v3148 = vpop.f32.mrf.mxu0
      %v3149 = vadd.f32 0.0, %v3148
      %v3150 = vpop.f32.mrf.mxu0
      %v3151 = vpop.f32.mrf.mxu0
      %v3152 = vadd.f32 0.0, %v3151
      %v3153 = vpop.f32.mrf.mxu0
      %3154 = vmatprep.mubr.bf16.mxu0 0
      %3155 = vmatmul.mubr.bf16.gmra.mxu0 %v2713
      %v3156 = vpop.f32.mrf.mxu0
      %v3157 = vadd.f32 0.0, %v3156
      %v3158 = vpop.f32.mrf.mxu0
      %v3159 = vpop.f32.mrf.mxu0
      %v3160 = vadd.f32 0.0, %v3159
      %v3161 = vpop.f32.mrf.mxu0
      %3162 = vmatprep.mubr.bf16.mxu0 0
      %3163 = vmatmul.mubr.bf16.gmra.mxu0 %v2714
      %v3164 = vpop.f32.mrf.mxu0
      %v3165 = vadd.f32 0.0, %v3164
      %v3166 = vpop.f32.mrf.mxu0
      %v3167 = vpop.f32.mrf.mxu0
      %v3168 = vadd.f32 0.0, %v3167
      %v3169 = vpop.f32.mrf.mxu0
      %3170 = vmatprep.mubr.bf16.mxu0 0
      %3171 = vmatmul.mubr.bf16.gmra.mxu0 %v2715
      %v3172 = vpop.f32.mrf.mxu0
      %v3173 = vadd.f32 0.0, %v3172
      %v3174 = vpop.f32.mrf.mxu0
      %v3175 = vpop.f32.mrf.mxu0
      %v3176 = vadd.f32 0.0, %v3175
      %v3177 = vpop.f32.mrf.mxu0
      %3178 = vmatprep.mubr.bf16.mxu0 0
      %3179 = vmatmul.mubr.bf16.gmra.mxu0 %v2716
      %v3180 = vpop.f32.mrf.mxu0
      %v3181 = vadd.f32 0.0, %v3180
      %v3182 = vpop.f32.mrf.mxu0
      %v3183 = vpop.f32.mrf.mxu0
      %v3184 = vadd.f32 0.0, %v3183
      %v3185 = vpop.f32.mrf.mxu0
      %3186 = vmatprep.mubr.bf16.mxu0 0
      %3187 = vmatmul.mubr.bf16.gmra.mxu0 %v2717
      %v3188 = vpop.f32.mrf.mxu0
      %v3189 = vadd.f32 0.0, %v3188
      %v3190 = vpop.f32.mrf.mxu0
      %v3191 = vpop.f32.mrf.mxu0
      %v3192 = vadd.f32 0.0, %v3191
      %v3193 = vpop.f32.mrf.mxu0
      %3194 = vmatprep.mubr.bf16.mxu0 0
      %3195 = vmatmul.mubr.bf16.gmra.mxu0 %v2718
      %v3196 = vpop.f32.mrf.mxu0
      %v3197 = vadd.f32 0.0, %v3196
      %v3198 = vpop.f32.mrf.mxu0
      %v3199 = vpop.f32.mrf.mxu0
      %v3200 = vadd.f32 0.0, %v3199
      %v3201 = vpop.f32.mrf.mxu0
      %3202 = vdwg.mxu0
      %v3203 = vld [vmem:[#allocation3] sm:$0xff]
      %v3204 = vld [vmem:[#allocation3 + $0x8] sm:$0xff]
      %v3205 = vld [vmem:[#allocation3 + $0x10] sm:$0xff]
      %v3206 = vld [vmem:[#allocation3 + $0x18] sm:$0xff]
      %v3207 = vld [vmem:[#allocation3 + $0x20] sm:$0xff]
      %v3208 = vld [vmem:[#allocation3 + $0x28] sm:$0xff]
      %v3209 = vld [vmem:[#allocation3 + $0x30] sm:$0xff]
      %v3210 = vld [vmem:[#allocation3 + $0x38] sm:$0xff]
      %v3211 = vld [vmem:[#allocation3 + $0x40] sm:$0xff]
      %v3212 = vld [vmem:[#allocation3 + $0x48] sm:$0xff]
      %v3213 = vld [vmem:[#allocation3 + $0x50] sm:$0xff]
      %v3214 = vld [vmem:[#allocation3 + $0x58] sm:$0xff]
      %v3215 = vld [vmem:[#allocation3 + $0x60] sm:$0xff]
      %v3216 = vld [vmem:[#allocation3 + $0x68] sm:$0xff]
      %v3217 = vld [vmem:[#allocation3 + $0x70] sm:$0xff]
      %v3218 = vld [vmem:[#allocation3 + $0x78] sm:$0xff]
      %v3219 = vld [vmem:[#allocation3 + $0x80] sm:$0xff]
      %v3220 = vld [vmem:[#allocation3 + $0x88] sm:$0xff]
      %v3221 = vld [vmem:[#allocation3 + $0x90] sm:$0xff]
      %v3222 = vld [vmem:[#allocation3 + $0x98] sm:$0xff]
      %v3223 = vld [vmem:[#allocation3 + $0xa0] sm:$0xff]
      %v3224 = vld [vmem:[#allocation3 + $0xa8] sm:$0xff]
      %v3225 = vld [vmem:[#allocation3 + $0xb0] sm:$0xff]
      %v3226 = vld [vmem:[#allocation3 + $0xb8] sm:$0xff]
      %v3227 = vld [vmem:[#allocation3 + $0xc0] sm:$0xff]
      %v3228 = vld [vmem:[#allocation3 + $0xc8] sm:$0xff]
      %v3229 = vld [vmem:[#allocation3 + $0xd0] sm:$0xff]
      %v3230 = vld [vmem:[#allocation3 + $0xd8] sm:$0xff]
      %v3231 = vld [vmem:[#allocation3 + $0xe0] sm:$0xff]
      %v3232 = vld [vmem:[#allocation3 + $0xe8] sm:$0xff]
      %v3233 = vld [vmem:[#allocation3 + $0xf0] sm:$0xff]
      %v3234 = vld [vmem:[#allocation3 + $0xf8] sm:$0xff]
      %v3235 = vld [vmem:[#allocation3 + $0x100] sm:$0xff]
      %v3236 = vld [vmem:[#allocation3 + $0x108] sm:$0xff]
      %v3237 = vld [vmem:[#allocation3 + $0x110] sm:$0xff]
      %v3238 = vld [vmem:[#allocation3 + $0x118] sm:$0xff]
      %v3239 = vld [vmem:[#allocation3 + $0x120] sm:$0xff]
      %v3240 = vld [vmem:[#allocation3 + $0x128] sm:$0xff]
      %v3241 = vld [vmem:[#allocation3 + $0x130] sm:$0xff]
      %v3242 = vld [vmem:[#allocation3 + $0x138] sm:$0xff]
      %v3243 = vld [vmem:[#allocation3 + $0x140] sm:$0xff]
      %v3244 = vld [vmem:[#allocation3 + $0x148] sm:$0xff]
      %v3245 = vld [vmem:[#allocation3 + $0x150] sm:$0xff]
      %v3246 = vld [vmem:[#allocation3 + $0x158] sm:$0xff]
      %v3247 = vld [vmem:[#allocation3 + $0x160] sm:$0xff]
      %v3248 = vld [vmem:[#allocation3 + $0x168] sm:$0xff]
      %v3249 = vld [vmem:[#allocation3 + $0x170] sm:$0xff]
      %v3250 = vld [vmem:[#allocation3 + $0x178] sm:$0xff]
      %v3251 = vld [vmem:[#allocation3 + $0x180] sm:$0xff]
      %v3252 = vld [vmem:[#allocation3 + $0x188] sm:$0xff]
      %v3253 = vld [vmem:[#allocation3 + $0x190] sm:$0xff]
      %v3254 = vld [vmem:[#allocation3 + $0x198] sm:$0xff]
      %v3255 = vld [vmem:[#allocation3 + $0x1a0] sm:$0xff]
      %v3256 = vld [vmem:[#allocation3 + $0x1a8] sm:$0xff]
      %v3257 = vld [vmem:[#allocation3 + $0x1b0] sm:$0xff]
      %v3258 = vld [vmem:[#allocation3 + $0x1b8] sm:$0xff]
      %v3259 = vld [vmem:[#allocation3 + $0x1c0] sm:$0xff]
      %v3260 = vld [vmem:[#allocation3 + $0x1c8] sm:$0xff]
      %v3261 = vld [vmem:[#allocation3 + $0x1d0] sm:$0xff]
      %v3262 = vld [vmem:[#allocation3 + $0x1d8] sm:$0xff]
      %v3263 = vld [vmem:[#allocation3 + $0x1e0] sm:$0xff]
      %v3264 = vld [vmem:[#allocation3 + $0x1e8] sm:$0xff]
      %v3265 = vld [vmem:[#allocation3 + $0x1f0] sm:$0xff]
      %v3266 = vld [vmem:[#allocation3 + $0x1f8] sm:$0xff]
      %v3267 = vpack.c.bf16 %v2781, %v2778
      %v3268 = vpack.c.bf16 %v2789, %v2786
      %v3269 = vpack.c.bf16 %v2797, %v2794
      %v3270 = vpack.c.bf16 %v2805, %v2802
      %v3271 = vpack.c.bf16 %v2813, %v2810
      %v3272 = vpack.c.bf16 %v2821, %v2818
      %v3273 = vpack.c.bf16 %v2829, %v2826
      %v3274 = vpack.c.bf16 %v2837, %v2834
      %v3275 = vpack.c.bf16 %v2902, %v2899
      %v3276 = vpack.c.bf16 %v2910, %v2907
      %v3277 = vpack.c.bf16 %v2918, %v2915
      %v3278 = vpack.c.bf16 %v2926, %v2923
      %v3279 = vpack.c.bf16 %v2934, %v2931
      %v3280 = vpack.c.bf16 %v2942, %v2939
      %v3281 = vpack.c.bf16 %v2950, %v2947
      %v3282 = vpack.c.bf16 %v2958, %v2955
      %v3283 = vpack.c.bf16 %v3023, %v3020
      %v3284 = vpack.c.bf16 %v3031, %v3028
      %v3285 = vpack.c.bf16 %v3039, %v3036
      %v3286 = vpack.c.bf16 %v3047, %v3044
      %v3287 = vpack.c.bf16 %v3055, %v3052
      %v3288 = vpack.c.bf16 %v3063, %v3060
      %v3289 = vpack.c.bf16 %v3071, %v3068
      %v3290 = vpack.c.bf16 %v3079, %v3076
      %v3291 = vpack.c.bf16 %v3144, %v3141
      %v3292 = vpack.c.bf16 %v3152, %v3149
      %v3293 = vpack.c.bf16 %v3160, %v3157
      %v3294 = vpack.c.bf16 %v3168, %v3165
      %v3295 = vpack.c.bf16 %v3176, %v3173
      %v3296 = vpack.c.bf16 %v3184, %v3181
      %v3297 = vpack.c.bf16 %v3192, %v3189
      %v3298 = vpack.c.bf16 %v3200, %v3197
      %v3299 = vld [vmem:[%s3] sm:$0xf]
      %v3301 = vsel %vm1266, %v3267, 0
      %v3304 = vsel %vm1266, %v3268, 0
      %v3307 = vsel %vm1266, %v3269, 0
      %v3310 = vsel %vm1266, %v3270, 0
      %v3313 = vsel %vm1266, %v3271, 0
      %v3316 = vsel %vm1266, %v3272, 0
      %v3319 = vsel %vm1266, %v3273, 0
      %v3322 = vsel %vm1266, %v3274, 0
      %v3325 = vsel %vm1266, %v3275, 0
      %v3328 = vsel %vm1266, %v3276, 0
      %v3331 = vsel %vm1266, %v3277, 0
      %v3334 = vsel %vm1266, %v3278, 0
      %v3337 = vsel %vm1266, %v3279, 0
      %v3340 = vsel %vm1266, %v3280, 0
      %v3343 = vsel %vm1266, %v3281, 0
      %v3346 = vsel %vm1266, %v3282, 0
      %v3349 = vsel %vm1266, %v3283, 0
      %v3352 = vsel %vm1266, %v3284, 0
      %v3355 = vsel %vm1266, %v3285, 0
      %v3358 = vsel %vm1266, %v3286, 0
      %v3361 = vsel %vm1266, %v3287, 0
      %v3364 = vsel %vm1266, %v3288, 0
      %v3367 = vsel %vm1266, %v3289, 0
      %v3370 = vsel %vm1266, %v3290, 0
      %v3373 = vsel %vm1266, %v3291, 0
      %v3376 = vsel %vm1266, %v3292, 0
      %v3379 = vsel %vm1266, %v3293, 0
      %v3382 = vsel %vm1266, %v3294, 0
      %v3385 = vsel %vm1266, %v3295, 0
      %v3388 = vsel %vm1266, %v3296, 0
      %v3391 = vsel %vm1266, %v3297, 0
      %v3394 = vsel %vm1266, %v3298, 0
      %vm3396 = vcmask 1043456
      %v3398 = vsel %vm3396, %v3299, 0
      %3400 = vmatprep.subr.bf16.mxu0 0
      %3401 = vmatpush1.bf16.msra.mxu0 0
      %3402 = vmatprep.subr.bf16.mxu0 0
      %3403 = vmatpush1.bf16.msra.mxu0 0
      %3404 = vmatprep.subr.bf16.mxu0 0
      %3405 = vmatpush1.bf16.msra.mxu0 0
      %3406 = vmatprep.subr.bf16.mxu0 0
      %3407 = vmatpush1.bf16.msra.mxu0 0
      %3408 = vmatprep.subr.bf16.mxu0 0
      %3409 = vmatpush1.bf16.msra.mxu0 0
      %3410 = vmatprep.subr.bf16.mxu0 0
      %3411 = vmatpush1.bf16.msra.mxu0 0
      %3412 = vmatprep.subr.bf16.mxu0 0
      %3413 = vmatpush1.bf16.msra.mxu0 0
      %3414 = vmatprep.subr.bf16.mxu0 0
      %3415 = vmatpush1.bf16.msra.mxu0 %v3398
      %3416 = vmatprep.subr.bf16.mxu0 0
      %3417 = vmatpush2.bf16.msra.mxu0 0
      %3418 = vmatprep.subr.bf16.mxu0 0
      %3419 = vmatpush2.bf16.msra.mxu0 0
      %3420 = vmatprep.subr.bf16.mxu0 0
      %3421 = vmatpush2.bf16.msra.mxu0 0
      %3422 = vmatprep.subr.bf16.mxu0 0
      %3423 = vmatpush2.bf16.msra.mxu0 0
      %3424 = vmatprep.subr.bf16.mxu0 0
      %3425 = vmatpush2.bf16.msra.mxu0 0
      %3426 = vmatprep.subr.bf16.mxu0 0
      %3427 = vmatpush2.bf16.msra.mxu0 0
      %3428 = vmatprep.subr.bf16.mxu0 0
      %3429 = vmatpush2.bf16.msra.mxu0 0
      %3430 = vmatprep.subr.bf16.mxu0 0
      %3431 = vmatpush2.bf16.msra.mxu0 0
      %3432 = vmatprep.mubr.bf16.mxu0 0
      %3433 = vmatmul.mubr.bf16.gmra.mxu0 %v3301
      %v3434 = vpop.f32.mrf.mxu0
      %v3435 = vadd.f32 0.0, %v3434
      %v3436 = vpop.f32.mrf.mxu0
      %v3437 = vpop.f32.mrf.mxu0
      %v3438 = vadd.f32 0.0, %v3437
      %v3439 = vpop.f32.mrf.mxu0
      %3440 = vmatprep.mubr.bf16.mxu0 0
      %3441 = vmatmul.mubr.bf16.gmra.mxu0 %v3304
      %v3442 = vpop.f32.mrf.mxu0
      %v3443 = vadd.f32 0.0, %v3442
      %v3444 = vpop.f32.mrf.mxu0
      %v3445 = vpop.f32.mrf.mxu0
      %v3446 = vadd.f32 0.0, %v3445
      %v3447 = vpop.f32.mrf.mxu0
      %3448 = vmatprep.mubr.bf16.mxu0 0
      %3449 = vmatmul.mubr.bf16.gmra.mxu0 %v3307
      %v3450 = vpop.f32.mrf.mxu0
      %v3451 = vadd.f32 0.0, %v3450
      %v3452 = vpop.f32.mrf.mxu0
      %v3453 = vpop.f32.mrf.mxu0
      %v3454 = vadd.f32 0.0, %v3453
      %v3455 = vpop.f32.mrf.mxu0
      %3456 = vmatprep.mubr.bf16.mxu0 0
      %3457 = vmatmul.mubr.bf16.gmra.mxu0 %v3310
      %v3458 = vpop.f32.mrf.mxu0
      %v3459 = vadd.f32 0.0, %v3458
      %v3460 = vpop.f32.mrf.mxu0
      %v3461 = vpop.f32.mrf.mxu0
      %v3462 = vadd.f32 0.0, %v3461
      %v3463 = vpop.f32.mrf.mxu0
      %3464 = vmatprep.mubr.bf16.mxu0 0
      %3465 = vmatmul.mubr.bf16.gmra.mxu0 %v3313
      %v3466 = vpop.f32.mrf.mxu0
      %v3467 = vadd.f32 0.0, %v3466
      %v3468 = vpop.f32.mrf.mxu0
      %v3469 = vpop.f32.mrf.mxu0
      %v3470 = vadd.f32 0.0, %v3469
      %v3471 = vpop.f32.mrf.mxu0
      %3472 = vmatprep.mubr.bf16.mxu0 0
      %3473 = vmatmul.mubr.bf16.gmra.mxu0 %v3316
      %v3474 = vpop.f32.mrf.mxu0
      %v3475 = vadd.f32 0.0, %v3474
      %v3476 = vpop.f32.mrf.mxu0
      %v3477 = vpop.f32.mrf.mxu0
      %v3478 = vadd.f32 0.0, %v3477
      %v3479 = vpop.f32.mrf.mxu0
      %3480 = vmatprep.mubr.bf16.mxu0 0
      %3481 = vmatmul.mubr.bf16.gmra.mxu0 %v3319
      %v3482 = vpop.f32.mrf.mxu0
      %v3483 = vadd.f32 0.0, %v3482
      %v3484 = vpop.f32.mrf.mxu0
      %v3485 = vpop.f32.mrf.mxu0
      %v3486 = vadd.f32 0.0, %v3485
      %v3487 = vpop.f32.mrf.mxu0
      %3488 = vmatprep.mubr.bf16.mxu0 0
      %3489 = vmatmul.mubr.bf16.gmra.mxu0 %v3322
      %v3490 = vpop.f32.mrf.mxu0
      %v3491 = vadd.f32 0.0, %v3490
      %v3492 = vpop.f32.mrf.mxu0
      %v3493 = vpop.f32.mrf.mxu0
      %v3494 = vadd.f32 0.0, %v3493
      %v3495 = vpop.f32.mrf.mxu0
      %3496 = vmatprep.mubr.bf16.mxu0 0
      %3497 = vmatmul.mubr.bf16.gmra.mxu0 %v3325
      %v3498 = vpop.f32.mrf.mxu0
      %v3499 = vadd.f32 0.0, %v3498
      %v3500 = vpop.f32.mrf.mxu0
      %v3501 = vpop.f32.mrf.mxu0
      %v3502 = vadd.f32 0.0, %v3501
      %v3503 = vpop.f32.mrf.mxu0
      %3504 = vmatprep.mubr.bf16.mxu0 0
      %3505 = vmatmul.mubr.bf16.gmra.mxu0 %v3328
      %v3506 = vpop.f32.mrf.mxu0
      %v3507 = vadd.f32 0.0, %v3506
      %v3508 = vpop.f32.mrf.mxu0
      %v3509 = vpop.f32.mrf.mxu0
      %v3510 = vadd.f32 0.0, %v3509
      %v3511 = vpop.f32.mrf.mxu0
      %3512 = vmatprep.mubr.bf16.mxu0 0
      %3513 = vmatmul.mubr.bf16.gmra.mxu0 %v3331
      %v3514 = vpop.f32.mrf.mxu0
      %v3515 = vadd.f32 0.0, %v3514
      %v3516 = vpop.f32.mrf.mxu0
      %v3517 = vpop.f32.mrf.mxu0
      %v3518 = vadd.f32 0.0, %v3517
      %v3519 = vpop.f32.mrf.mxu0
      %3520 = vmatprep.mubr.bf16.mxu0 0
      %3521 = vmatmul.mubr.bf16.gmra.mxu0 %v3334
      %v3522 = vpop.f32.mrf.mxu0
      %v3523 = vadd.f32 0.0, %v3522
      %v3524 = vpop.f32.mrf.mxu0
      %v3525 = vpop.f32.mrf.mxu0
      %v3526 = vadd.f32 0.0, %v3525
      %v3527 = vpop.f32.mrf.mxu0
      %3528 = vmatprep.mubr.bf16.mxu0 0
      %3529 = vmatmul.mubr.bf16.gmra.mxu0 %v3337
      %v3530 = vpop.f32.mrf.mxu0
      %v3531 = vadd.f32 0.0, %v3530
      %v3532 = vpop.f32.mrf.mxu0
      %v3533 = vpop.f32.mrf.mxu0
      %v3534 = vadd.f32 0.0, %v3533
      %v3535 = vpop.f32.mrf.mxu0
      %3536 = vmatprep.mubr.bf16.mxu0 0
      %3537 = vmatmul.mubr.bf16.gmra.mxu0 %v3340
      %v3538 = vpop.f32.mrf.mxu0
      %v3539 = vadd.f32 0.0, %v3538
      %v3540 = vpop.f32.mrf.mxu0
      %v3541 = vpop.f32.mrf.mxu0
      %v3542 = vadd.f32 0.0, %v3541
      %v3543 = vpop.f32.mrf.mxu0
      %3544 = vmatprep.mubr.bf16.mxu0 0
      %3545 = vmatmul.mubr.bf16.gmra.mxu0 %v3343
      %v3546 = vpop.f32.mrf.mxu0
      %v3547 = vadd.f32 0.0, %v3546
      %v3548 = vpop.f32.mrf.mxu0
      %v3549 = vpop.f32.mrf.mxu0
      %v3550 = vadd.f32 0.0, %v3549
      %v3551 = vpop.f32.mrf.mxu0
      %3552 = vmatprep.mubr.bf16.mxu0 0
      %3553 = vmatmul.mubr.bf16.gmra.mxu0 %v3346
      %v3554 = vpop.f32.mrf.mxu0
      %v3555 = vadd.f32 0.0, %v3554
      %v3556 = vpop.f32.mrf.mxu0
      %v3557 = vpop.f32.mrf.mxu0
      %v3558 = vadd.f32 0.0, %v3557
      %v3559 = vpop.f32.mrf.mxu0
      %3560 = vmatprep.mubr.bf16.mxu0 0
      %3561 = vmatmul.mubr.bf16.gmra.mxu0 %v3349
      %v3562 = vpop.f32.mrf.mxu0
      %v3563 = vadd.f32 0.0, %v3562
      %v3564 = vpop.f32.mrf.mxu0
      %v3565 = vpop.f32.mrf.mxu0
      %v3566 = vadd.f32 0.0, %v3565
      %v3567 = vpop.f32.mrf.mxu0
      %3568 = vmatprep.mubr.bf16.mxu0 0
      %3569 = vmatmul.mubr.bf16.gmra.mxu0 %v3352
      %v3570 = vpop.f32.mrf.mxu0
      %v3571 = vadd.f32 0.0, %v3570
      %v3572 = vpop.f32.mrf.mxu0
      %v3573 = vpop.f32.mrf.mxu0
      %v3574 = vadd.f32 0.0, %v3573
      %v3575 = vpop.f32.mrf.mxu0
      %3576 = vmatprep.mubr.bf16.mxu0 0
      %3577 = vmatmul.mubr.bf16.gmra.mxu0 %v3355
      %v3578 = vpop.f32.mrf.mxu0
      %v3579 = vadd.f32 0.0, %v3578
      %v3580 = vpop.f32.mrf.mxu0
      %v3581 = vpop.f32.mrf.mxu0
      %v3582 = vadd.f32 0.0, %v3581
      %v3583 = vpop.f32.mrf.mxu0
      %3584 = vmatprep.mubr.bf16.mxu0 0
      %3585 = vmatmul.mubr.bf16.gmra.mxu0 %v3358
      %v3586 = vpop.f32.mrf.mxu0
      %v3587 = vadd.f32 0.0, %v3586
      %v3588 = vpop.f32.mrf.mxu0
      %v3589 = vpop.f32.mrf.mxu0
      %v3590 = vadd.f32 0.0, %v3589
      %v3591 = vpop.f32.mrf.mxu0
      %3592 = vmatprep.mubr.bf16.mxu0 0
      %3593 = vmatmul.mubr.bf16.gmra.mxu0 %v3361
      %v3594 = vpop.f32.mrf.mxu0
      %v3595 = vadd.f32 0.0, %v3594
      %v3596 = vpop.f32.mrf.mxu0
      %v3597 = vpop.f32.mrf.mxu0
      %v3598 = vadd.f32 0.0, %v3597
      %v3599 = vpop.f32.mrf.mxu0
      %3600 = vmatprep.mubr.bf16.mxu0 0
      %3601 = vmatmul.mubr.bf16.gmra.mxu0 %v3364
      %v3602 = vpop.f32.mrf.mxu0
      %v3603 = vadd.f32 0.0, %v3602
      %v3604 = vpop.f32.mrf.mxu0
      %v3605 = vpop.f32.mrf.mxu0
      %v3606 = vadd.f32 0.0, %v3605
      %v3607 = vpop.f32.mrf.mxu0
      %3608 = vmatprep.mubr.bf16.mxu0 0
      %3609 = vmatmul.mubr.bf16.gmra.mxu0 %v3367
      %v3610 = vpop.f32.mrf.mxu0
      %v3611 = vadd.f32 0.0, %v3610
      %v3612 = vpop.f32.mrf.mxu0
      %v3613 = vpop.f32.mrf.mxu0
      %v3614 = vadd.f32 0.0, %v3613
      %v3615 = vpop.f32.mrf.mxu0
      %3616 = vmatprep.mubr.bf16.mxu0 0
      %3617 = vmatmul.mubr.bf16.gmra.mxu0 %v3370
      %v3618 = vpop.f32.mrf.mxu0
      %v3619 = vadd.f32 0.0, %v3618
      %v3620 = vpop.f32.mrf.mxu0
      %v3621 = vpop.f32.mrf.mxu0
      %v3622 = vadd.f32 0.0, %v3621
      %v3623 = vpop.f32.mrf.mxu0
      %3624 = vmatprep.mubr.bf16.mxu0 0
      %3625 = vmatmul.mubr.bf16.gmra.mxu0 %v3373
      %v3626 = vpop.f32.mrf.mxu0
      %v3627 = vadd.f32 0.0, %v3626
      %v3628 = vpop.f32.mrf.mxu0
      %v3629 = vpop.f32.mrf.mxu0
      %v3630 = vadd.f32 0.0, %v3629
      %v3631 = vpop.f32.mrf.mxu0
      %3632 = vmatprep.mubr.bf16.mxu0 0
      %3633 = vmatmul.mubr.bf16.gmra.mxu0 %v3376
      %v3634 = vpop.f32.mrf.mxu0
      %v3635 = vadd.f32 0.0, %v3634
      %v3636 = vpop.f32.mrf.mxu0
      %v3637 = vpop.f32.mrf.mxu0
      %v3638 = vadd.f32 0.0, %v3637
      %v3639 = vpop.f32.mrf.mxu0
      %3640 = vmatprep.mubr.bf16.mxu0 0
      %3641 = vmatmul.mubr.bf16.gmra.mxu0 %v3379
      %v3642 = vpop.f32.mrf.mxu0
      %v3643 = vadd.f32 0.0, %v3642
      %v3644 = vpop.f32.mrf.mxu0
      %v3645 = vpop.f32.mrf.mxu0
      %v3646 = vadd.f32 0.0, %v3645
      %v3647 = vpop.f32.mrf.mxu0
      %3648 = vmatprep.mubr.bf16.mxu0 0
      %3649 = vmatmul.mubr.bf16.gmra.mxu0 %v3382
      %v3650 = vpop.f32.mrf.mxu0
      %v3651 = vadd.f32 0.0, %v3650
      %v3652 = vpop.f32.mrf.mxu0
      %v3653 = vpop.f32.mrf.mxu0
      %v3654 = vadd.f32 0.0, %v3653
      %v3655 = vpop.f32.mrf.mxu0
      %3656 = vmatprep.mubr.bf16.mxu0 0
      %3657 = vmatmul.mubr.bf16.gmra.mxu0 %v3385
      %v3658 = vpop.f32.mrf.mxu0
      %v3659 = vadd.f32 0.0, %v3658
      %v3660 = vpop.f32.mrf.mxu0
      %v3661 = vpop.f32.mrf.mxu0
      %v3662 = vadd.f32 0.0, %v3661
      %v3663 = vpop.f32.mrf.mxu0
      %3664 = vmatprep.mubr.bf16.mxu0 0
      %3665 = vmatmul.mubr.bf16.gmra.mxu0 %v3388
      %v3666 = vpop.f32.mrf.mxu0
      %v3667 = vadd.f32 0.0, %v3666
      %v3668 = vpop.f32.mrf.mxu0
      %v3669 = vpop.f32.mrf.mxu0
      %v3670 = vadd.f32 0.0, %v3669
      %v3671 = vpop.f32.mrf.mxu0
      %3672 = vmatprep.mubr.bf16.mxu0 0
      %3673 = vmatmul.mubr.bf16.gmra.mxu0 %v3391
      %v3674 = vpop.f32.mrf.mxu0
      %v3675 = vadd.f32 0.0, %v3674
      %v3676 = vpop.f32.mrf.mxu0
      %v3677 = vpop.f32.mrf.mxu0
      %v3678 = vadd.f32 0.0, %v3677
      %v3679 = vpop.f32.mrf.mxu0
      %3680 = vmatprep.mubr.bf16.mxu0 0
      %3681 = vmatmul.mubr.bf16.gmra.mxu0 %v3394
      %v3682 = vpop.f32.mrf.mxu0
      %v3683 = vadd.f32 0.0, %v3682
      %v3684 = vpop.f32.mrf.mxu0
      %v3685 = vpop.f32.mrf.mxu0
      %v3686 = vadd.f32 0.0, %v3685
      %v3687 = vpop.f32.mrf.mxu0
      %3688 = vdwg.mxu0
      %v3689 = vadd.f32 %v3203, %v3435
      %v3690 = vadd.f32 %v3204, %v3438
      %v3691 = vadd.f32 %v3205, %v3443
      %v3692 = vadd.f32 %v3206, %v3446
      %v3693 = vadd.f32 %v3207, %v3451
      %v3694 = vadd.f32 %v3208, %v3454
      %v3695 = vadd.f32 %v3209, %v3459
      %v3696 = vadd.f32 %v3210, %v3462
      %v3697 = vadd.f32 %v3211, %v3467
      %v3698 = vadd.f32 %v3212, %v3470
      %v3699 = vadd.f32 %v3213, %v3475
      %v3700 = vadd.f32 %v3214, %v3478
      %v3701 = vadd.f32 %v3215, %v3483
      %v3702 = vadd.f32 %v3216, %v3486
      %v3703 = vadd.f32 %v3217, %v3491
      %v3704 = vadd.f32 %v3218, %v3494
      %v3705 = vadd.f32 %v3219, %v3499
      %v3706 = vadd.f32 %v3220, %v3502
      %v3707 = vadd.f32 %v3221, %v3507
      %v3708 = vadd.f32 %v3222, %v3510
      %v3709 = vadd.f32 %v3223, %v3515
      %v3710 = vadd.f32 %v3224, %v3518
      %v3711 = vadd.f32 %v3225, %v3523
      %v3712 = vadd.f32 %v3226, %v3526
      %v3713 = vadd.f32 %v3227, %v3531
      %v3714 = vadd.f32 %v3228, %v3534
      %v3715 = vadd.f32 %v3229, %v3539
      %v3716 = vadd.f32 %v3230, %v3542
      %v3717 = vadd.f32 %v3231, %v3547
      %v3718 = vadd.f32 %v3232, %v3550
      %v3719 = vadd.f32 %v3233, %v3555
      %v3720 = vadd.f32 %v3234, %v3558
      %v3721 = vadd.f32 %v3235, %v3563
      %v3722 = vadd.f32 %v3236, %v3566
      %v3723 = vadd.f32 %v3237, %v3571
      %v3724 = vadd.f32 %v3238, %v3574
      %v3725 = vadd.f32 %v3239, %v3579
      %v3726 = vadd.f32 %v3240, %v3582
      %v3727 = vadd.f32 %v3241, %v3587
      %v3728 = vadd.f32 %v3242, %v3590
      %v3729 = vadd.f32 %v3243, %v3595
      %v3730 = vadd.f32 %v3244, %v3598
      %v3731 = vadd.f32 %v3245, %v3603
      %v3732 = vadd.f32 %v3246, %v3606
      %v3733 = vadd.f32 %v3247, %v3611
      %v3734 = vadd.f32 %v3248, %v3614
      %v3735 = vadd.f32 %v3249, %v3619
      %v3736 = vadd.f32 %v3250, %v3622
      %v3737 = vadd.f32 %v3251, %v3627
      %v3738 = vadd.f32 %v3252, %v3630
      %v3739 = vadd.f32 %v3253, %v3635
      %v3740 = vadd.f32 %v3254, %v3638
      %v3741 = vadd.f32 %v3255, %v3643
      %v3742 = vadd.f32 %v3256, %v3646
      %v3743 = vadd.f32 %v3257, %v3651
      %v3744 = vadd.f32 %v3258, %v3654
      %v3745 = vadd.f32 %v3259, %v3659
      %v3746 = vadd.f32 %v3260, %v3662
      %v3747 = vadd.f32 %v3261, %v3667
      %v3748 = vadd.f32 %v3262, %v3670
      %v3749 = vadd.f32 %v3263, %v3675
      %v3750 = vadd.f32 %v3264, %v3678
      %v3751 = vadd.f32 %v3265, %v3683
      %v3752 = vadd.f32 %v3266, %v3686
      %3753 = vst.msk [vmem:[#allocation3] sm:$0xff] %vm375, %v3689
      %3754 = vst.msk [vmem:[#allocation3 + $0x8] sm:$0xff] %vm375, %v3690
      %3755 = vst.msk [vmem:[#allocation3 + $0x10] sm:$0xff] %vm375, %v3691
      %3756 = vst.msk [vmem:[#allocation3 + $0x18] sm:$0xff] %vm375, %v3692
      %3757 = vst.msk [vmem:[#allocation3 + $0x20] sm:$0xff] %vm375, %v3693
      %3758 = vst.msk [vmem:[#allocation3 + $0x28] sm:$0xff] %vm375, %v3694
      %3759 = vst.msk [vmem:[#allocation3 + $0x30] sm:$0xff] %vm375, %v3695
      %3760 = vst.msk [vmem:[#allocation3 + $0x38] sm:$0xff] %vm375, %v3696
      %3761 = vst.msk [vmem:[#allocation3 + $0x40] sm:$0xff] %vm375, %v3697
      %3762 = vst.msk [vmem:[#allocation3 + $0x48] sm:$0xff] %vm375, %v3698
      %3763 = vst.msk [vmem:[#allocation3 + $0x50] sm:$0xff] %vm375, %v3699
      %3764 = vst.msk [vmem:[#allocation3 + $0x58] sm:$0xff] %vm375, %v3700
      %3765 = vst.msk [vmem:[#allocation3 + $0x60] sm:$0xff] %vm375, %v3701
      %3766 = vst.msk [vmem:[#allocation3 + $0x68] sm:$0xff] %vm375, %v3702
      %3767 = vst.msk [vmem:[#allocation3 + $0x70] sm:$0xff] %vm375, %v3703
      %3768 = vst.msk [vmem:[#allocation3 + $0x78] sm:$0xff] %vm375, %v3704
      %3769 = vst.msk [vmem:[#allocation3 + $0x80] sm:$0xff] %vm375, %v3705
      %3770 = vst.msk [vmem:[#allocation3 + $0x88] sm:$0xff] %vm375, %v3706
      %3771 = vst.msk [vmem:[#allocation3 + $0x90] sm:$0xff] %vm375, %v3707
      %3772 = vst.msk [vmem:[#allocation3 + $0x98] sm:$0xff] %vm375, %v3708
      %3773 = vst.msk [vmem:[#allocation3 + $0xa0] sm:$0xff] %vm375, %v3709
      %3774 = vst.msk [vmem:[#allocation3 + $0xa8] sm:$0xff] %vm375, %v3710
      %3775 = vst.msk [vmem:[#allocation3 + $0xb0] sm:$0xff] %vm375, %v3711
      %3776 = vst.msk [vmem:[#allocation3 + $0xb8] sm:$0xff] %vm375, %v3712
      %3777 = vst.msk [vmem:[#allocation3 + $0xc0] sm:$0xff] %vm375, %v3713
      %3778 = vst.msk [vmem:[#allocation3 + $0xc8] sm:$0xff] %vm375, %v3714
      %3779 = vst.msk [vmem:[#allocation3 + $0xd0] sm:$0xff] %vm375, %v3715
      %3780 = vst.msk [vmem:[#allocation3 + $0xd8] sm:$0xff] %vm375, %v3716
      %3781 = vst.msk [vmem:[#allocation3 + $0xe0] sm:$0xff] %vm375, %v3717
      %3782 = vst.msk [vmem:[#allocation3 + $0xe8] sm:$0xff] %vm375, %v3718
      %3783 = vst.msk [vmem:[#allocation3 + $0xf0] sm:$0xff] %vm375, %v3719
      %3784 = vst.msk [vmem:[#allocation3 + $0xf8] sm:$0xff] %vm375, %v3720
      %3785 = vst.msk [vmem:[#allocation3 + $0x100] sm:$0xff] %vm375, %v3721
      %3786 = vst.msk [vmem:[#allocation3 + $0x108] sm:$0xff] %vm375, %v3722
      %3787 = vst.msk [vmem:[#allocation3 + $0x110] sm:$0xff] %vm375, %v3723
      %3788 = vst.msk [vmem:[#allocation3 + $0x118] sm:$0xff] %vm375, %v3724
      %3789 = vst.msk [vmem:[#allocation3 + $0x120] sm:$0xff] %vm375, %v3725
      %3790 = vst.msk [vmem:[#allocation3 + $0x128] sm:$0xff] %vm375, %v3726
      %3791 = vst.msk [vmem:[#allocation3 + $0x130] sm:$0xff] %vm375, %v3727
      %3792 = vst.msk [vmem:[#allocation3 + $0x138] sm:$0xff] %vm375, %v3728
      %3793 = vst.msk [vmem:[#allocation3 + $0x140] sm:$0xff] %vm375, %v3729
      %3794 = vst.msk [vmem:[#allocation3 + $0x148] sm:$0xff] %vm375, %v3730
      %3795 = vst.msk [vmem:[#allocation3 + $0x150] sm:$0xff] %vm375, %v3731
      %3796 = vst.msk [vmem:[#allocation3 + $0x158] sm:$0xff] %vm375, %v3732
      %3797 = vst.msk [vmem:[#allocation3 + $0x160] sm:$0xff] %vm375, %v3733
      %3798 = vst.msk [vmem:[#allocation3 + $0x168] sm:$0xff] %vm375, %v3734
      %3799 = vst.msk [vmem:[#allocation3 + $0x170] sm:$0xff] %vm375, %v3735
      %3800 = vst.msk [vmem:[#allocation3 + $0x178] sm:$0xff] %vm375, %v3736
      %3801 = vst.msk [vmem:[#allocation3 + $0x180] sm:$0xff] %vm375, %v3737
      %3802 = vst.msk [vmem:[#allocation3 + $0x188] sm:$0xff] %vm375, %v3738
      %3803 = vst.msk [vmem:[#allocation3 + $0x190] sm:$0xff] %vm375, %v3739
      %3804 = vst.msk [vmem:[#allocation3 + $0x198] sm:$0xff] %vm375, %v3740
      %3805 = vst.msk [vmem:[#allocation3 + $0x1a0] sm:$0xff] %vm375, %v3741
      %3806 = vst.msk [vmem:[#allocation3 + $0x1a8] sm:$0xff] %vm375, %v3742
      %3807 = vst.msk [vmem:[#allocation3 + $0x1b0] sm:$0xff] %vm375, %v3743
      %3808 = vst.msk [vmem:[#allocation3 + $0x1b8] sm:$0xff] %vm375, %v3744
      %3809 = vst.msk [vmem:[#allocation3 + $0x1c0] sm:$0xff] %vm375, %v3745
      %3810 = vst.msk [vmem:[#allocation3 + $0x1c8] sm:$0xff] %vm375, %v3746
      %3811 = vst.msk [vmem:[#allocation3 + $0x1d0] sm:$0xff] %vm375, %v3747
      %3812 = vst.msk [vmem:[#allocation3 + $0x1d8] sm:$0xff] %vm375, %v3748
      %3813 = vst.msk [vmem:[#allocation3 + $0x1e0] sm:$0xff] %vm375, %v3749
      %3814 = vst.msk [vmem:[#allocation3 + $0x1e8] sm:$0xff] %vm375, %v3750
      %3815 = vst.msk [vmem:[#allocation3 + $0x1f0] sm:$0xff] %vm375, %v3751
      %3816 = vst.msk [vmem:[#allocation3 + $0x1f8] sm:$0xff] %vm375, %v3752
      %v3817 = vld [vmem:[#allocation2] sm:$0xf]
      %v3818 = vld [vmem:[#allocation2 + $0x4] sm:$0xf]
      %v3819 = vld [vmem:[#allocation2 + $0x8] sm:$0xf]
      %v3820 = vld [vmem:[#allocation2 + $0xc] sm:$0xf]
      %v3821 = vld [vmem:[#allocation2 + $0x10] sm:$0xf]
      %v3822 = vld [vmem:[#allocation2 + $0x14] sm:$0xf]
      %v3823 = vld [vmem:[#allocation2 + $0x18] sm:$0xf]
      %v3824 = vld [vmem:[#allocation2 + $0x1c] sm:$0xf]
      %v3825 = vld [vmem:[#allocation2 + $0x20] sm:$0xf]
      %v3826 = vld [vmem:[#allocation2 + $0x24] sm:$0xf]
      %v3827 = vld [vmem:[#allocation2 + $0x28] sm:$0xf]
      %v3828 = vld [vmem:[#allocation2 + $0x2c] sm:$0xf]
      %v3829 = vld [vmem:[#allocation2 + $0x30] sm:$0xf]
      %v3830 = vld [vmem:[#allocation2 + $0x34] sm:$0xf]
      %v3831 = vld [vmem:[#allocation2 + $0x38] sm:$0xf]
      %v3832 = vld [vmem:[#allocation2 + $0x3c] sm:$0xf]
      %v3833 = vld [vmem:[#allocation2 + $0x40] sm:$0xf]
      %v3834 = vld [vmem:[#allocation2 + $0x44] sm:$0xf]
      %v3835 = vld [vmem:[#allocation2 + $0x48] sm:$0xf]
      %v3836 = vld [vmem:[#allocation2 + $0x4c] sm:$0xf]
      %v3837 = vld [vmem:[#allocation2 + $0x50] sm:$0xf]
      %v3838 = vld [vmem:[#allocation2 + $0x54] sm:$0xf]
      %v3839 = vld [vmem:[#allocation2 + $0x58] sm:$0xf]
      %v3840 = vld [vmem:[#allocation2 + $0x5c] sm:$0xf]
      %v3841 = vld [vmem:[#allocation2 + $0x60] sm:$0xf]
      %v3842 = vld [vmem:[#allocation2 + $0x64] sm:$0xf]
      %v3843 = vld [vmem:[#allocation2 + $0x68] sm:$0xf]
      %v3844 = vld [vmem:[#allocation2 + $0x6c] sm:$0xf]
      %v3845 = vld [vmem:[#allocation2 + $0x70] sm:$0xf]
      %v3846 = vld [vmem:[#allocation2 + $0x74] sm:$0xf]
      %v3847 = vld [vmem:[#allocation2 + $0x78] sm:$0xf]
      %v3848 = vld [vmem:[#allocation2 + $0x7c] sm:$0xf]
      %v3849 = vld [vmem:[#allocation2 + $0x80] sm:$0xf]
      %v3850 = vld [vmem:[#allocation2 + $0x84] sm:$0xf]
      %v3851 = vld [vmem:[#allocation2 + $0x88] sm:$0xf]
      %v3852 = vld [vmem:[#allocation2 + $0x8c] sm:$0xf]
      %v3853 = vld [vmem:[#allocation2 + $0x90] sm:$0xf]
      %v3854 = vld [vmem:[#allocation2 + $0x94] sm:$0xf]
      %v3855 = vld [vmem:[#allocation2 + $0x98] sm:$0xf]
      %v3856 = vld [vmem:[#allocation2 + $0x9c] sm:$0xf]
      %v3857 = vld [vmem:[#allocation2 + $0xa0] sm:$0xf]
      %v3858 = vld [vmem:[#allocation2 + $0xa4] sm:$0xf]
      %v3859 = vld [vmem:[#allocation2 + $0xa8] sm:$0xf]
      %v3860 = vld [vmem:[#allocation2 + $0xac] sm:$0xf]
      %v3861 = vld [vmem:[#allocation2 + $0xb0] sm:$0xf]
      %v3862 = vld [vmem:[#allocation2 + $0xb4] sm:$0xf]
      %v3863 = vld [vmem:[#allocation2 + $0xb8] sm:$0xf]
      %v3864 = vld [vmem:[#allocation2 + $0xbc] sm:$0xf]
      %v3865 = vld [vmem:[#allocation2 + $0xc0] sm:$0xf]
      %v3866 = vld [vmem:[#allocation2 + $0xc4] sm:$0xf]
      %v3867 = vld [vmem:[#allocation2 + $0xc8] sm:$0xf]
      %v3868 = vld [vmem:[#allocation2 + $0xcc] sm:$0xf]
      %v3869 = vld [vmem:[#allocation2 + $0xd0] sm:$0xf]
      %v3870 = vld [vmem:[#allocation2 + $0xd4] sm:$0xf]
      %v3871 = vld [vmem:[#allocation2 + $0xd8] sm:$0xf]
      %v3872 = vld [vmem:[#allocation2 + $0xdc] sm:$0xf]
      %v3873 = vld [vmem:[#allocation2 + $0xe0] sm:$0xf]
      %v3874 = vld [vmem:[#allocation2 + $0xe4] sm:$0xf]
      %v3875 = vld [vmem:[#allocation2 + $0xe8] sm:$0xf]
      %v3876 = vld [vmem:[#allocation2 + $0xec] sm:$0xf]
      %v3877 = vld [vmem:[#allocation2 + $0xf0] sm:$0xf]
      %v3878 = vld [vmem:[#allocation2 + $0xf4] sm:$0xf]
      %v3879 = vld [vmem:[#allocation2 + $0xf8] sm:$0xf]
      %v3880 = vld [vmem:[#allocation2 + $0xfc] sm:$0xf]
      %v3897 = vunpack.c.l.b16 %v3817
      %v3898 = vunpack.c.l.b16 %v3818
      %v3899 = vunpack.c.l.b16 %v3819
      %v3900 = vunpack.c.l.b16 %v3820
      %v3901 = vunpack.c.l.b16 %v3821
      %v3902 = vunpack.c.l.b16 %v3822
      %v3903 = vunpack.c.l.b16 %v3823
      %v3904 = vunpack.c.l.b16 %v3824
      %v3905 = vunpack.c.l.b16 %v3825
      %v3906 = vunpack.c.l.b16 %v3826
      %v3907 = vunpack.c.l.b16 %v3827
      %v3908 = vunpack.c.l.b16 %v3828
      %v3909 = vunpack.c.l.b16 %v3829
      %v3910 = vunpack.c.l.b16 %v3830
      %v3911 = vunpack.c.l.b16 %v3831
      %v3912 = vunpack.c.l.b16 %v3832
      %v3913 = vpack.c.b16 %v3898, %v3897
      %v3914 = vpack.c.b16 %v3900, %v3899
      %v3915 = vpack.c.b16 %v3902, %v3901
      %v3916 = vpack.c.b16 %v3904, %v3903
      %v3917 = vpack.c.b16 %v3906, %v3905
      %v3918 = vpack.c.b16 %v3908, %v3907
      %v3919 = vpack.c.b16 %v3910, %v3909
      %v3920 = vpack.c.b16 %v3912, %v3911
      %3921 = vrot.lane.b32.xlu0 %v3913, 120
      %v3922 = vpop.permute.xlu0 %3921
      %3923 = vrot.lane.b32.xlu0 %v3914, 120
      %v3924 = vpop.permute.xlu0 %3923
      %3925 = vrot.lane.b32.xlu0 %v3915, 120
      %v3926 = vpop.permute.xlu0 %3925
      %3927 = vrot.lane.b32.xlu0 %v3916, 120
      %v3928 = vpop.permute.xlu0 %3927
      %3929 = vrot.lane.b32.xlu0 %v3917, 120
      %v3930 = vpop.permute.xlu0 %3929
      %3931 = vrot.lane.b32.xlu0 %v3918, 120
      %v3932 = vpop.permute.xlu0 %3931
      %3933 = vrot.lane.b32.xlu0 %v3919, 120
      %v3934 = vpop.permute.xlu0 %3933
      %3935 = vrot.lane.b32.xlu0 %v3920, 120
      %v3936 = vpop.permute.xlu0 %3935
      %3937 = vrot.lane.b32.xlu0 %v3913, 88
      %v3938 = vpop.permute.xlu0 %3937
      %3939 = vrot.lane.b32.xlu0 %v3914, 88
      %v3940 = vpop.permute.xlu0 %3939
      %3941 = vrot.lane.b32.xlu0 %v3915, 88
      %v3942 = vpop.permute.xlu0 %3941
      %3943 = vrot.lane.b32.xlu0 %v3916, 88
      %v3944 = vpop.permute.xlu0 %3943
      %3945 = vrot.lane.b32.xlu0 %v3917, 88
      %v3946 = vpop.permute.xlu0 %3945
      %3947 = vrot.lane.b32.xlu0 %v3918, 88
      %v3948 = vpop.permute.xlu0 %3947
      %3949 = vrot.lane.b32.xlu0 %v3919, 88
      %v3950 = vpop.permute.xlu0 %3949
      %3951 = vrot.lane.b32.xlu0 %v3920, 88
      %v3952 = vpop.permute.xlu0 %3951
      %v3954 = vsel %vm1266, %v3922, 0
      %v3957 = vsel %vm1266, %v3924, 0
      %v3960 = vsel %vm1266, %v3926, 0
      %v3963 = vsel %vm1266, %v3928, 0
      %v3966 = vsel %vm1266, %v3930, 0
      %v3969 = vsel %vm1266, %v3932, 0
      %v3972 = vsel %vm1266, %v3934, 0
      %v3975 = vsel %vm1266, %v3936, 0
      %v3978 = vsel %vm1266, %v3938, 0
      %v3981 = vsel %vm1266, %v3940, 0
      %v3984 = vsel %vm1266, %v3942, 0
      %v3987 = vsel %vm1266, %v3944, 0
      %v3990 = vsel %vm1266, %v3946, 0
      %v3993 = vsel %vm1266, %v3948, 0
      %v3996 = vsel %vm1266, %v3950, 0
      %v3999 = vsel %vm1266, %v3952, 0
      %4001 = vmatprep.subr.bf16.mxu0 0
      %4002 = vmatpush1.bf16.xpose.msra.mxu0 %v3999
      %4003 = vmatprep.subr.bf16.mxu0 0
      %4004 = vmatpush1.bf16.xpose.msra.mxu0 %v3996
      %4005 = vmatprep.subr.bf16.mxu0 0
      %4006 = vmatpush1.bf16.xpose.msra.mxu0 %v3993
      %4007 = vmatprep.subr.bf16.mxu0 0
      %4008 = vmatpush1.bf16.xpose.msra.mxu0 %v3990
      %4009 = vmatprep.subr.bf16.mxu0 0
      %4010 = vmatpush1.bf16.xpose.msra.mxu0 %v3987
      %4011 = vmatprep.subr.bf16.mxu0 0
      %4012 = vmatpush1.bf16.xpose.msra.mxu0 %v3984
      %4013 = vmatprep.subr.bf16.mxu0 0
      %4014 = vmatpush1.bf16.xpose.msra.mxu0 %v3981
      %4015 = vmatprep.subr.bf16.mxu0 0
      %4016 = vmatpush1.bf16.xpose.msra.mxu0 %v3978
      %4017 = vmatprep.subr.bf16.mxu0 0
      %4018 = vmatpush2.bf16.xpose.msra.mxu0 0
      %4019 = vmatprep.subr.bf16.mxu0 0
      %4020 = vmatpush2.bf16.xpose.msra.mxu0 0
      %4021 = vmatprep.subr.bf16.mxu0 0
      %4022 = vmatpush2.bf16.xpose.msra.mxu0 0
      %4023 = vmatprep.subr.bf16.mxu0 0
      %4024 = vmatpush2.bf16.xpose.msra.mxu0 0
      %4025 = vmatprep.subr.bf16.mxu0 0
      %4026 = vmatpush2.bf16.xpose.msra.mxu0 0
      %4027 = vmatprep.subr.bf16.mxu0 0
      %4028 = vmatpush2.bf16.xpose.msra.mxu0 0
      %4029 = vmatprep.subr.bf16.mxu0 0
      %4030 = vmatpush2.bf16.xpose.msra.mxu0 0
      %4031 = vmatprep.subr.bf16.mxu0 0
      %4032 = vmatpush2.bf16.xpose.msra.mxu0 0
      %4033 = vmatprep.mubr.bf16.mxu0 0
      %4034 = vmatmul.mubr.bf16.gmra.mxu0 %v3954
      %v4035 = vpop.f32.mrf.mxu0
      %v4036 = vadd.f32 0.0, %v4035
      %v4037 = vpop.f32.mrf.mxu0
      %v4038 = vpop.f32.mrf.mxu0
      %v4039 = vadd.f32 0.0, %v4038
      %v4040 = vpop.f32.mrf.mxu0
      %4041 = vmatprep.mubr.bf16.mxu0 0
      %4042 = vmatmul.mubr.bf16.gmra.mxu0 %v3957
      %v4043 = vpop.f32.mrf.mxu0
      %v4044 = vadd.f32 0.0, %v4043
      %v4045 = vpop.f32.mrf.mxu0
      %v4046 = vpop.f32.mrf.mxu0
      %v4047 = vadd.f32 0.0, %v4046
      %v4048 = vpop.f32.mrf.mxu0
      %4049 = vmatprep.mubr.bf16.mxu0 0
      %4050 = vmatmul.mubr.bf16.gmra.mxu0 %v3960
      %v4051 = vpop.f32.mrf.mxu0
      %v4052 = vadd.f32 0.0, %v4051
      %v4053 = vpop.f32.mrf.mxu0
      %v4054 = vpop.f32.mrf.mxu0
      %v4055 = vadd.f32 0.0, %v4054
      %v4056 = vpop.f32.mrf.mxu0
      %4057 = vmatprep.mubr.bf16.mxu0 0
      %4058 = vmatmul.mubr.bf16.gmra.mxu0 %v3963
      %v4059 = vpop.f32.mrf.mxu0
      %v4060 = vadd.f32 0.0, %v4059
      %v4061 = vpop.f32.mrf.mxu0
      %v4062 = vpop.f32.mrf.mxu0
      %v4063 = vadd.f32 0.0, %v4062
      %v4064 = vpop.f32.mrf.mxu0
      %4065 = vmatprep.mubr.bf16.mxu0 0
      %4066 = vmatmul.mubr.bf16.gmra.mxu0 %v3966
      %v4067 = vpop.f32.mrf.mxu0
      %v4068 = vadd.f32 0.0, %v4067
      %v4069 = vpop.f32.mrf.mxu0
      %v4070 = vpop.f32.mrf.mxu0
      %v4071 = vadd.f32 0.0, %v4070
      %v4072 = vpop.f32.mrf.mxu0
      %4073 = vmatprep.mubr.bf16.mxu0 0
      %4074 = vmatmul.mubr.bf16.gmra.mxu0 %v3969
      %v4075 = vpop.f32.mrf.mxu0
      %v4076 = vadd.f32 0.0, %v4075
      %v4077 = vpop.f32.mrf.mxu0
      %v4078 = vpop.f32.mrf.mxu0
      %v4079 = vadd.f32 0.0, %v4078
      %v4080 = vpop.f32.mrf.mxu0
      %4081 = vmatprep.mubr.bf16.mxu0 0
      %4082 = vmatmul.mubr.bf16.gmra.mxu0 %v3972
      %v4083 = vpop.f32.mrf.mxu0
      %v4084 = vadd.f32 0.0, %v4083
      %v4085 = vpop.f32.mrf.mxu0
      %v4086 = vpop.f32.mrf.mxu0
      %v4087 = vadd.f32 0.0, %v4086
      %v4088 = vpop.f32.mrf.mxu0
      %4089 = vmatprep.mubr.bf16.mxu0 0
      %4090 = vmatmul.mubr.bf16.gmra.mxu0 %v3975
      %v4091 = vpop.f32.mrf.mxu0
      %v4092 = vadd.f32 0.0, %v4091
      %v4093 = vpop.f32.mrf.mxu0
      %v4094 = vpop.f32.mrf.mxu0
      %v4095 = vadd.f32 0.0, %v4094
      %v4096 = vpop.f32.mrf.mxu0
      %4097 = vdwg.mxu0
      %v4114 = vunpack.c.l.b16 %v3833
      %v4115 = vunpack.c.l.b16 %v3834
      %v4116 = vunpack.c.l.b16 %v3835
      %v4117 = vunpack.c.l.b16 %v3836
      %v4118 = vunpack.c.l.b16 %v3837
      %v4119 = vunpack.c.l.b16 %v3838
      %v4120 = vunpack.c.l.b16 %v3839
      %v4121 = vunpack.c.l.b16 %v3840
      %v4122 = vunpack.c.l.b16 %v3841
      %v4123 = vunpack.c.l.b16 %v3842
      %v4124 = vunpack.c.l.b16 %v3843
      %v4125 = vunpack.c.l.b16 %v3844
      %v4126 = vunpack.c.l.b16 %v3845
      %v4127 = vunpack.c.l.b16 %v3846
      %v4128 = vunpack.c.l.b16 %v3847
      %v4129 = vunpack.c.l.b16 %v3848
      %v4130 = vpack.c.b16 %v4115, %v4114
      %v4131 = vpack.c.b16 %v4117, %v4116
      %v4132 = vpack.c.b16 %v4119, %v4118
      %v4133 = vpack.c.b16 %v4121, %v4120
      %v4134 = vpack.c.b16 %v4123, %v4122
      %v4135 = vpack.c.b16 %v4125, %v4124
      %v4136 = vpack.c.b16 %v4127, %v4126
      %v4137 = vpack.c.b16 %v4129, %v4128
      %4138 = vrot.lane.b32.xlu0 %v4130, 120
      %v4139 = vpop.permute.xlu0 %4138
      %4140 = vrot.lane.b32.xlu0 %v4131, 120
      %v4141 = vpop.permute.xlu0 %4140
      %4142 = vrot.lane.b32.xlu0 %v4132, 120
      %v4143 = vpop.permute.xlu0 %4142
      %4144 = vrot.lane.b32.xlu0 %v4133, 120
      %v4145 = vpop.permute.xlu0 %4144
      %4146 = vrot.lane.b32.xlu0 %v4134, 120
      %v4147 = vpop.permute.xlu0 %4146
      %4148 = vrot.lane.b32.xlu0 %v4135, 120
      %v4149 = vpop.permute.xlu0 %4148
      %4150 = vrot.lane.b32.xlu0 %v4136, 120
      %v4151 = vpop.permute.xlu0 %4150
      %4152 = vrot.lane.b32.xlu0 %v4137, 120
      %v4153 = vpop.permute.xlu0 %4152
      %4154 = vrot.lane.b32.xlu0 %v4130, 88
      %v4155 = vpop.permute.xlu0 %4154
      %4156 = vrot.lane.b32.xlu0 %v4131, 88
      %v4157 = vpop.permute.xlu0 %4156
      %4158 = vrot.lane.b32.xlu0 %v4132, 88
      %v4159 = vpop.permute.xlu0 %4158
      %4160 = vrot.lane.b32.xlu0 %v4133, 88
      %v4161 = vpop.permute.xlu0 %4160
      %4162 = vrot.lane.b32.xlu0 %v4134, 88
      %v4163 = vpop.permute.xlu0 %4162
      %4164 = vrot.lane.b32.xlu0 %v4135, 88
      %v4165 = vpop.permute.xlu0 %4164
      %4166 = vrot.lane.b32.xlu0 %v4136, 88
      %v4167 = vpop.permute.xlu0 %4166
      %4168 = vrot.lane.b32.xlu0 %v4137, 88
      %v4169 = vpop.permute.xlu0 %4168
      %v4171 = vsel %vm1266, %v4139, 0
      %v4174 = vsel %vm1266, %v4141, 0
      %v4177 = vsel %vm1266, %v4143, 0
      %v4180 = vsel %vm1266, %v4145, 0
      %v4183 = vsel %vm1266, %v4147, 0
      %v4186 = vsel %vm1266, %v4149, 0
      %v4189 = vsel %vm1266, %v4151, 0
      %v4192 = vsel %vm1266, %v4153, 0
      %v4195 = vsel %vm1266, %v4155, 0
      %v4198 = vsel %vm1266, %v4157, 0
      %v4201 = vsel %vm1266, %v4159, 0
      %v4204 = vsel %vm1266, %v4161, 0
      %v4207 = vsel %vm1266, %v4163, 0
      %v4210 = vsel %vm1266, %v4165, 0
      %v4213 = vsel %vm1266, %v4167, 0
      %v4216 = vsel %vm1266, %v4169, 0
      %4218 = vmatprep.subr.bf16.mxu0 0
      %4219 = vmatpush1.bf16.xpose.msra.mxu0 %v4216
      %4220 = vmatprep.subr.bf16.mxu0 0
      %4221 = vmatpush1.bf16.xpose.msra.mxu0 %v4213
      %4222 = vmatprep.subr.bf16.mxu0 0
      %4223 = vmatpush1.bf16.xpose.msra.mxu0 %v4210
      %4224 = vmatprep.subr.bf16.mxu0 0
      %4225 = vmatpush1.bf16.xpose.msra.mxu0 %v4207
      %4226 = vmatprep.subr.bf16.mxu0 0
      %4227 = vmatpush1.bf16.xpose.msra.mxu0 %v4204
      %4228 = vmatprep.subr.bf16.mxu0 0
      %4229 = vmatpush1.bf16.xpose.msra.mxu0 %v4201
      %4230 = vmatprep.subr.bf16.mxu0 0
      %4231 = vmatpush1.bf16.xpose.msra.mxu0 %v4198
      %4232 = vmatprep.subr.bf16.mxu0 0
      %4233 = vmatpush1.bf16.xpose.msra.mxu0 %v4195
      %4234 = vmatprep.subr.bf16.mxu0 0
      %4235 = vmatpush2.bf16.xpose.msra.mxu0 0
      %4236 = vmatprep.subr.bf16.mxu0 0
      %4237 = vmatpush2.bf16.xpose.msra.mxu0 0
      %4238 = vmatprep.subr.bf16.mxu0 0
      %4239 = vmatpush2.bf16.xpose.msra.mxu0 0
      %4240 = vmatprep.subr.bf16.mxu0 0
      %4241 = vmatpush2.bf16.xpose.msra.mxu0 0
      %4242 = vmatprep.subr.bf16.mxu0 0
      %4243 = vmatpush2.bf16.xpose.msra.mxu0 0
      %4244 = vmatprep.subr.bf16.mxu0 0
      %4245 = vmatpush2.bf16.xpose.msra.mxu0 0
      %4246 = vmatprep.subr.bf16.mxu0 0
      %4247 = vmatpush2.bf16.xpose.msra.mxu0 0
      %4248 = vmatprep.subr.bf16.mxu0 0
      %4249 = vmatpush2.bf16.xpose.msra.mxu0 0
      %4250 = vmatprep.mubr.bf16.mxu0 0
      %4251 = vmatmul.mubr.bf16.gmra.mxu0 %v4171
      %v4252 = vpop.f32.mrf.mxu0
      %v4253 = vadd.f32 0.0, %v4252
      %v4254 = vpop.f32.mrf.mxu0
      %v4255 = vpop.f32.mrf.mxu0
      %v4256 = vadd.f32 0.0, %v4255
      %v4257 = vpop.f32.mrf.mxu0
      %4258 = vmatprep.mubr.bf16.mxu0 0
      %4259 = vmatmul.mubr.bf16.gmra.mxu0 %v4174
      %v4260 = vpop.f32.mrf.mxu0
      %v4261 = vadd.f32 0.0, %v4260
      %v4262 = vpop.f32.mrf.mxu0
      %v4263 = vpop.f32.mrf.mxu0
      %v4264 = vadd.f32 0.0, %v4263
      %v4265 = vpop.f32.mrf.mxu0
      %4266 = vmatprep.mubr.bf16.mxu0 0
      %4267 = vmatmul.mubr.bf16.gmra.mxu0 %v4177
      %v4268 = vpop.f32.mrf.mxu0
      %v4269 = vadd.f32 0.0, %v4268
      %v4270 = vpop.f32.mrf.mxu0
      %v4271 = vpop.f32.mrf.mxu0
      %v4272 = vadd.f32 0.0, %v4271
      %v4273 = vpop.f32.mrf.mxu0
      %4274 = vmatprep.mubr.bf16.mxu0 0
      %4275 = vmatmul.mubr.bf16.gmra.mxu0 %v4180
      %v4276 = vpop.f32.mrf.mxu0
      %v4277 = vadd.f32 0.0, %v4276
      %v4278 = vpop.f32.mrf.mxu0
      %v4279 = vpop.f32.mrf.mxu0
      %v4280 = vadd.f32 0.0, %v4279
      %v4281 = vpop.f32.mrf.mxu0
      %4282 = vmatprep.mubr.bf16.mxu0 0
      %4283 = vmatmul.mubr.bf16.gmra.mxu0 %v4183
      %v4284 = vpop.f32.mrf.mxu0
      %v4285 = vadd.f32 0.0, %v4284
      %v4286 = vpop.f32.mrf.mxu0
      %v4287 = vpop.f32.mrf.mxu0
      %v4288 = vadd.f32 0.0, %v4287
      %v4289 = vpop.f32.mrf.mxu0
      %4290 = vmatprep.mubr.bf16.mxu0 0
      %4291 = vmatmul.mubr.bf16.gmra.mxu0 %v4186
      %v4292 = vpop.f32.mrf.mxu0
      %v4293 = vadd.f32 0.0, %v4292
      %v4294 = vpop.f32.mrf.mxu0
      %v4295 = vpop.f32.mrf.mxu0
      %v4296 = vadd.f32 0.0, %v4295
      %v4297 = vpop.f32.mrf.mxu0
      %4298 = vmatprep.mubr.bf16.mxu0 0
      %4299 = vmatmul.mubr.bf16.gmra.mxu0 %v4189
      %v4300 = vpop.f32.mrf.mxu0
      %v4301 = vadd.f32 0.0, %v4300
      %v4302 = vpop.f32.mrf.mxu0
      %v4303 = vpop.f32.mrf.mxu0
      %v4304 = vadd.f32 0.0, %v4303
      %v4305 = vpop.f32.mrf.mxu0
      %4306 = vmatprep.mubr.bf16.mxu0 0
      %4307 = vmatmul.mubr.bf16.gmra.mxu0 %v4192
      %v4308 = vpop.f32.mrf.mxu0
      %v4309 = vadd.f32 0.0, %v4308
      %v4310 = vpop.f32.mrf.mxu0
      %v4311 = vpop.f32.mrf.mxu0
      %v4312 = vadd.f32 0.0, %v4311
      %v4313 = vpop.f32.mrf.mxu0
      %4314 = vdwg.mxu0
      %v4331 = vunpack.c.l.b16 %v3849
      %v4332 = vunpack.c.l.b16 %v3850
      %v4333 = vunpack.c.l.b16 %v3851
      %v4334 = vunpack.c.l.b16 %v3852
      %v4335 = vunpack.c.l.b16 %v3853
      %v4336 = vunpack.c.l.b16 %v3854
      %v4337 = vunpack.c.l.b16 %v3855
      %v4338 = vunpack.c.l.b16 %v3856
      %v4339 = vunpack.c.l.b16 %v3857
      %v4340 = vunpack.c.l.b16 %v3858
      %v4341 = vunpack.c.l.b16 %v3859
      %v4342 = vunpack.c.l.b16 %v3860
      %v4343 = vunpack.c.l.b16 %v3861
      %v4344 = vunpack.c.l.b16 %v3862
      %v4345 = vunpack.c.l.b16 %v3863
      %v4346 = vunpack.c.l.b16 %v3864
      %v4347 = vpack.c.b16 %v4332, %v4331
      %v4348 = vpack.c.b16 %v4334, %v4333
      %v4349 = vpack.c.b16 %v4336, %v4335
      %v4350 = vpack.c.b16 %v4338, %v4337
      %v4351 = vpack.c.b16 %v4340, %v4339
      %v4352 = vpack.c.b16 %v4342, %v4341
      %v4353 = vpack.c.b16 %v4344, %v4343
      %v4354 = vpack.c.b16 %v4346, %v4345
      %4355 = vrot.lane.b32.xlu0 %v4347, 120
      %v4356 = vpop.permute.xlu0 %4355
      %4357 = vrot.lane.b32.xlu0 %v4348, 120
      %v4358 = vpop.permute.xlu0 %4357
      %4359 = vrot.lane.b32.xlu0 %v4349, 120
      %v4360 = vpop.permute.xlu0 %4359
      %4361 = vrot.lane.b32.xlu0 %v4350, 120
      %v4362 = vpop.permute.xlu0 %4361
      %4363 = vrot.lane.b32.xlu0 %v4351, 120
      %v4364 = vpop.permute.xlu0 %4363
      %4365 = vrot.lane.b32.xlu0 %v4352, 120
      %v4366 = vpop.permute.xlu0 %4365
      %4367 = vrot.lane.b32.xlu0 %v4353, 120
      %v4368 = vpop.permute.xlu0 %4367
      %4369 = vrot.lane.b32.xlu0 %v4354, 120
      %v4370 = vpop.permute.xlu0 %4369
      %4371 = vrot.lane.b32.xlu0 %v4347, 88
      %v4372 = vpop.permute.xlu0 %4371
      %4373 = vrot.lane.b32.xlu0 %v4348, 88
      %v4374 = vpop.permute.xlu0 %4373
      %4375 = vrot.lane.b32.xlu0 %v4349, 88
      %v4376 = vpop.permute.xlu0 %4375
      %4377 = vrot.lane.b32.xlu0 %v4350, 88
      %v4378 = vpop.permute.xlu0 %4377
      %4379 = vrot.lane.b32.xlu0 %v4351, 88
      %v4380 = vpop.permute.xlu0 %4379
      %4381 = vrot.lane.b32.xlu0 %v4352, 88
      %v4382 = vpop.permute.xlu0 %4381
      %4383 = vrot.lane.b32.xlu0 %v4353, 88
      %v4384 = vpop.permute.xlu0 %4383
      %4385 = vrot.lane.b32.xlu0 %v4354, 88
      %v4386 = vpop.permute.xlu0 %4385
      %v4388 = vsel %vm1266, %v4356, 0
      %v4391 = vsel %vm1266, %v4358, 0
      %v4394 = vsel %vm1266, %v4360, 0
      %v4397 = vsel %vm1266, %v4362, 0
      %v4400 = vsel %vm1266, %v4364, 0
      %v4403 = vsel %vm1266, %v4366, 0
      %v4406 = vsel %vm1266, %v4368, 0
      %v4409 = vsel %vm1266, %v4370, 0
      %v4412 = vsel %vm1266, %v4372, 0
      %v4415 = vsel %vm1266, %v4374, 0
      %v4418 = vsel %vm1266, %v4376, 0
      %v4421 = vsel %vm1266, %v4378, 0
      %v4424 = vsel %vm1266, %v4380, 0
      %v4427 = vsel %vm1266, %v4382, 0
      %v4430 = vsel %vm1266, %v4384, 0
      %v4433 = vsel %vm1266, %v4386, 0
      %4435 = vmatprep.subr.bf16.mxu0 0
      %4436 = vmatpush1.bf16.xpose.msra.mxu0 %v4433
      %4437 = vmatprep.subr.bf16.mxu0 0
      %4438 = vmatpush1.bf16.xpose.msra.mxu0 %v4430
      %4439 = vmatprep.subr.bf16.mxu0 0
      %4440 = vmatpush1.bf16.xpose.msra.mxu0 %v4427
      %4441 = vmatprep.subr.bf16.mxu0 0
      %4442 = vmatpush1.bf16.xpose.msra.mxu0 %v4424
      %4443 = vmatprep.subr.bf16.mxu0 0
      %4444 = vmatpush1.bf16.xpose.msra.mxu0 %v4421
      %4445 = vmatprep.subr.bf16.mxu0 0
      %4446 = vmatpush1.bf16.xpose.msra.mxu0 %v4418
      %4447 = vmatprep.subr.bf16.mxu0 0
      %4448 = vmatpush1.bf16.xpose.msra.mxu0 %v4415
      %4449 = vmatprep.subr.bf16.mxu0 0
      %4450 = vmatpush1.bf16.xpose.msra.mxu0 %v4412
      %4451 = vmatprep.subr.bf16.mxu0 0
      %4452 = vmatpush2.bf16.xpose.msra.mxu0 0
      %4453 = vmatprep.subr.bf16.mxu0 0
      %4454 = vmatpush2.bf16.xpose.msra.mxu0 0
      %4455 = vmatprep.subr.bf16.mxu0 0
      %4456 = vmatpush2.bf16.xpose.msra.mxu0 0
      %4457 = vmatprep.subr.bf16.mxu0 0
      %4458 = vmatpush2.bf16.xpose.msra.mxu0 0
      %4459 = vmatprep.subr.bf16.mxu0 0
      %4460 = vmatpush2.bf16.xpose.msra.mxu0 0
      %4461 = vmatprep.subr.bf16.mxu0 0
      %4462 = vmatpush2.bf16.xpose.msra.mxu0 0
      %4463 = vmatprep.subr.bf16.mxu0 0
      %4464 = vmatpush2.bf16.xpose.msra.mxu0 0
      %4465 = vmatprep.subr.bf16.mxu0 0
      %4466 = vmatpush2.bf16.xpose.msra.mxu0 0
      %4467 = vmatprep.mubr.bf16.mxu0 0
      %4468 = vmatmul.mubr.bf16.gmra.mxu0 %v4388
      %v4469 = vpop.f32.mrf.mxu0
      %v4470 = vadd.f32 0.0, %v4469
      %v4471 = vpop.f32.mrf.mxu0
      %v4472 = vpop.f32.mrf.mxu0
      %v4473 = vadd.f32 0.0, %v4472
      %v4474 = vpop.f32.mrf.mxu0
      %4475 = vmatprep.mubr.bf16.mxu0 0
      %4476 = vmatmul.mubr.bf16.gmra.mxu0 %v4391
      %v4477 = vpop.f32.mrf.mxu0
      %v4478 = vadd.f32 0.0, %v4477
      %v4479 = vpop.f32.mrf.mxu0
      %v4480 = vpop.f32.mrf.mxu0
      %v4481 = vadd.f32 0.0, %v4480
      %v4482 = vpop.f32.mrf.mxu0
      %4483 = vmatprep.mubr.bf16.mxu0 0
      %4484 = vmatmul.mubr.bf16.gmra.mxu0 %v4394
      %v4485 = vpop.f32.mrf.mxu0
      %v4486 = vadd.f32 0.0, %v4485
      %v4487 = vpop.f32.mrf.mxu0
      %v4488 = vpop.f32.mrf.mxu0
      %v4489 = vadd.f32 0.0, %v4488
      %v4490 = vpop.f32.mrf.mxu0
      %4491 = vmatprep.mubr.bf16.mxu0 0
      %4492 = vmatmul.mubr.bf16.gmra.mxu0 %v4397
      %v4493 = vpop.f32.mrf.mxu0
      %v4494 = vadd.f32 0.0, %v4493
      %v4495 = vpop.f32.mrf.mxu0
      %v4496 = vpop.f32.mrf.mxu0
      %v4497 = vadd.f32 0.0, %v4496
      %v4498 = vpop.f32.mrf.mxu0
      %4499 = vmatprep.mubr.bf16.mxu0 0
      %4500 = vmatmul.mubr.bf16.gmra.mxu0 %v4400
      %v4501 = vpop.f32.mrf.mxu0
      %v4502 = vadd.f32 0.0, %v4501
      %v4503 = vpop.f32.mrf.mxu0
      %v4504 = vpop.f32.mrf.mxu0
      %v4505 = vadd.f32 0.0, %v4504
      %v4506 = vpop.f32.mrf.mxu0
      %4507 = vmatprep.mubr.bf16.mxu0 0
      %4508 = vmatmul.mubr.bf16.gmra.mxu0 %v4403
      %v4509 = vpop.f32.mrf.mxu0
      %v4510 = vadd.f32 0.0, %v4509
      %v4511 = vpop.f32.mrf.mxu0
      %v4512 = vpop.f32.mrf.mxu0
      %v4513 = vadd.f32 0.0, %v4512
      %v4514 = vpop.f32.mrf.mxu0
      %4515 = vmatprep.mubr.bf16.mxu0 0
      %4516 = vmatmul.mubr.bf16.gmra.mxu0 %v4406
      %v4517 = vpop.f32.mrf.mxu0
      %v4518 = vadd.f32 0.0, %v4517
      %v4519 = vpop.f32.mrf.mxu0
      %v4520 = vpop.f32.mrf.mxu0
      %v4521 = vadd.f32 0.0, %v4520
      %v4522 = vpop.f32.mrf.mxu0
      %4523 = vmatprep.mubr.bf16.mxu0 0
      %4524 = vmatmul.mubr.bf16.gmra.mxu0 %v4409
      %v4525 = vpop.f32.mrf.mxu0
      %v4526 = vadd.f32 0.0, %v4525
      %v4527 = vpop.f32.mrf.mxu0
      %v4528 = vpop.f32.mrf.mxu0
      %v4529 = vadd.f32 0.0, %v4528
      %v4530 = vpop.f32.mrf.mxu0
      %4531 = vdwg.mxu0
      %v4548 = vunpack.c.l.b16 %v3865
      %v4549 = vunpack.c.l.b16 %v3866
      %v4550 = vunpack.c.l.b16 %v3867
      %v4551 = vunpack.c.l.b16 %v3868
      %v4552 = vunpack.c.l.b16 %v3869
      %v4553 = vunpack.c.l.b16 %v3870
      %v4554 = vunpack.c.l.b16 %v3871
      %v4555 = vunpack.c.l.b16 %v3872
      %v4556 = vunpack.c.l.b16 %v3873
      %v4557 = vunpack.c.l.b16 %v3874
      %v4558 = vunpack.c.l.b16 %v3875
      %v4559 = vunpack.c.l.b16 %v3876
      %v4560 = vunpack.c.l.b16 %v3877
      %v4561 = vunpack.c.l.b16 %v3878
      %v4562 = vunpack.c.l.b16 %v3879
      %v4563 = vunpack.c.l.b16 %v3880
      %v4564 = vpack.c.b16 %v4549, %v4548
      %v4565 = vpack.c.b16 %v4551, %v4550
      %v4566 = vpack.c.b16 %v4553, %v4552
      %v4567 = vpack.c.b16 %v4555, %v4554
      %v4568 = vpack.c.b16 %v4557, %v4556
      %v4569 = vpack.c.b16 %v4559, %v4558
      %v4570 = vpack.c.b16 %v4561, %v4560
      %v4571 = vpack.c.b16 %v4563, %v4562
      %4572 = vrot.lane.b32.xlu0 %v4564, 120
      %v4573 = vpop.permute.xlu0 %4572
      %4574 = vrot.lane.b32.xlu0 %v4565, 120
      %v4575 = vpop.permute.xlu0 %4574
      %4576 = vrot.lane.b32.xlu0 %v4566, 120
      %v4577 = vpop.permute.xlu0 %4576
      %4578 = vrot.lane.b32.xlu0 %v4567, 120
      %v4579 = vpop.permute.xlu0 %4578
      %4580 = vrot.lane.b32.xlu0 %v4568, 120
      %v4581 = vpop.permute.xlu0 %4580
      %4582 = vrot.lane.b32.xlu0 %v4569, 120
      %v4583 = vpop.permute.xlu0 %4582
      %4584 = vrot.lane.b32.xlu0 %v4570, 120
      %v4585 = vpop.permute.xlu0 %4584
      %4586 = vrot.lane.b32.xlu0 %v4571, 120
      %v4587 = vpop.permute.xlu0 %4586
      %4588 = vrot.lane.b32.xlu0 %v4564, 88
      %v4589 = vpop.permute.xlu0 %4588
      %4590 = vrot.lane.b32.xlu0 %v4565, 88
      %v4591 = vpop.permute.xlu0 %4590
      %4592 = vrot.lane.b32.xlu0 %v4566, 88
      %v4593 = vpop.permute.xlu0 %4592
      %4594 = vrot.lane.b32.xlu0 %v4567, 88
      %v4595 = vpop.permute.xlu0 %4594
      %4596 = vrot.lane.b32.xlu0 %v4568, 88
      %v4597 = vpop.permute.xlu0 %4596
      %4598 = vrot.lane.b32.xlu0 %v4569, 88
      %v4599 = vpop.permute.xlu0 %4598
      %4600 = vrot.lane.b32.xlu0 %v4570, 88
      %v4601 = vpop.permute.xlu0 %4600
      %4602 = vrot.lane.b32.xlu0 %v4571, 88
      %v4603 = vpop.permute.xlu0 %4602
      %v4605 = vsel %vm1266, %v4573, 0
      %v4608 = vsel %vm1266, %v4575, 0
      %v4611 = vsel %vm1266, %v4577, 0
      %v4614 = vsel %vm1266, %v4579, 0
      %v4617 = vsel %vm1266, %v4581, 0
      %v4620 = vsel %vm1266, %v4583, 0
      %v4623 = vsel %vm1266, %v4585, 0
      %v4626 = vsel %vm1266, %v4587, 0
      %v4629 = vsel %vm1266, %v4589, 0
      %v4632 = vsel %vm1266, %v4591, 0
      %v4635 = vsel %vm1266, %v4593, 0
      %v4638 = vsel %vm1266, %v4595, 0
      %v4641 = vsel %vm1266, %v4597, 0
      %v4644 = vsel %vm1266, %v4599, 0
      %v4647 = vsel %vm1266, %v4601, 0
      %v4650 = vsel %vm1266, %v4603, 0
      %4652 = vmatprep.subr.bf16.mxu0 0
      %4653 = vmatpush1.bf16.xpose.msra.mxu0 %v4650
      %4654 = vmatprep.subr.bf16.mxu0 0
      %4655 = vmatpush1.bf16.xpose.msra.mxu0 %v4647
      %4656 = vmatprep.subr.bf16.mxu0 0
      %4657 = vmatpush1.bf16.xpose.msra.mxu0 %v4644
      %4658 = vmatprep.subr.bf16.mxu0 0
      %4659 = vmatpush1.bf16.xpose.msra.mxu0 %v4641
      %4660 = vmatprep.subr.bf16.mxu0 0
      %4661 = vmatpush1.bf16.xpose.msra.mxu0 %v4638
      %4662 = vmatprep.subr.bf16.mxu0 0
      %4663 = vmatpush1.bf16.xpose.msra.mxu0 %v4635
      %4664 = vmatprep.subr.bf16.mxu0 0
      %4665 = vmatpush1.bf16.xpose.msra.mxu0 %v4632
      %4666 = vmatprep.subr.bf16.mxu0 0
      %4667 = vmatpush1.bf16.xpose.msra.mxu0 %v4629
      %4668 = vmatprep.subr.bf16.mxu0 0
      %4669 = vmatpush2.bf16.xpose.msra.mxu0 0
      %4670 = vmatprep.subr.bf16.mxu0 0
      %4671 = vmatpush2.bf16.xpose.msra.mxu0 0
      %4672 = vmatprep.subr.bf16.mxu0 0
      %4673 = vmatpush2.bf16.xpose.msra.mxu0 0
      %4674 = vmatprep.subr.bf16.mxu0 0
      %4675 = vmatpush2.bf16.xpose.msra.mxu0 0
      %4676 = vmatprep.subr.bf16.mxu0 0
      %4677 = vmatpush2.bf16.xpose.msra.mxu0 0
      %4678 = vmatprep.subr.bf16.mxu0 0
      %4679 = vmatpush2.bf16.xpose.msra.mxu0 0
      %4680 = vmatprep.subr.bf16.mxu0 0
      %4681 = vmatpush2.bf16.xpose.msra.mxu0 0
      %4682 = vmatprep.subr.bf16.mxu0 0
      %4683 = vmatpush2.bf16.xpose.msra.mxu0 0
      %4684 = vmatprep.mubr.bf16.mxu0 0
      %4685 = vmatmul.mubr.bf16.gmra.mxu0 %v4605
      %v4686 = vpop.f32.mrf.mxu0
      %v4687 = vadd.f32 0.0, %v4686
      %v4688 = vpop.f32.mrf.mxu0
      %v4689 = vpop.f32.mrf.mxu0
      %v4690 = vadd.f32 0.0, %v4689
      %v4691 = vpop.f32.mrf.mxu0
      %4692 = vmatprep.mubr.bf16.mxu0 0
      %4693 = vmatmul.mubr.bf16.gmra.mxu0 %v4608
      %v4694 = vpop.f32.mrf.mxu0
      %v4695 = vadd.f32 0.0, %v4694
      %v4696 = vpop.f32.mrf.mxu0
      %v4697 = vpop.f32.mrf.mxu0
      %v4698 = vadd.f32 0.0, %v4697
      %v4699 = vpop.f32.mrf.mxu0
      %4700 = vmatprep.mubr.bf16.mxu0 0
      %4701 = vmatmul.mubr.bf16.gmra.mxu0 %v4611
      %v4702 = vpop.f32.mrf.mxu0
      %v4703 = vadd.f32 0.0, %v4702
      %v4704 = vpop.f32.mrf.mxu0
      %v4705 = vpop.f32.mrf.mxu0
      %v4706 = vadd.f32 0.0, %v4705
      %v4707 = vpop.f32.mrf.mxu0
      %4708 = vmatprep.mubr.bf16.mxu0 0
      %4709 = vmatmul.mubr.bf16.gmra.mxu0 %v4614
      %v4710 = vpop.f32.mrf.mxu0
      %v4711 = vadd.f32 0.0, %v4710
      %v4712 = vpop.f32.mrf.mxu0
      %v4713 = vpop.f32.mrf.mxu0
      %v4714 = vadd.f32 0.0, %v4713
      %v4715 = vpop.f32.mrf.mxu0
      %4716 = vmatprep.mubr.bf16.mxu0 0
      %4717 = vmatmul.mubr.bf16.gmra.mxu0 %v4617
      %v4718 = vpop.f32.mrf.mxu0
      %v4719 = vadd.f32 0.0, %v4718
      %v4720 = vpop.f32.mrf.mxu0
      %v4721 = vpop.f32.mrf.mxu0
      %v4722 = vadd.f32 0.0, %v4721
      %v4723 = vpop.f32.mrf.mxu0
      %4724 = vmatprep.mubr.bf16.mxu0 0
      %4725 = vmatmul.mubr.bf16.gmra.mxu0 %v4620
      %v4726 = vpop.f32.mrf.mxu0
      %v4727 = vadd.f32 0.0, %v4726
      %v4728 = vpop.f32.mrf.mxu0
      %v4729 = vpop.f32.mrf.mxu0
      %v4730 = vadd.f32 0.0, %v4729
      %v4731 = vpop.f32.mrf.mxu0
      %4732 = vmatprep.mubr.bf16.mxu0 0
      %4733 = vmatmul.mubr.bf16.gmra.mxu0 %v4623
      %v4734 = vpop.f32.mrf.mxu0
      %v4735 = vadd.f32 0.0, %v4734
      %v4736 = vpop.f32.mrf.mxu0
      %v4737 = vpop.f32.mrf.mxu0
      %v4738 = vadd.f32 0.0, %v4737
      %v4739 = vpop.f32.mrf.mxu0
      %4740 = vmatprep.mubr.bf16.mxu0 0
      %4741 = vmatmul.mubr.bf16.gmra.mxu0 %v4626
      %v4742 = vpop.f32.mrf.mxu0
      %v4743 = vadd.f32 0.0, %v4742
      %v4744 = vpop.f32.mrf.mxu0
      %v4745 = vpop.f32.mrf.mxu0
      %v4746 = vadd.f32 0.0, %v4745
      %v4747 = vpop.f32.mrf.mxu0
      %4748 = vdwg.mxu0
      %s4749 = scalar_lea.vmem %s5, 256
      %v4750 = vld [vmem:[%s4749] sm:$0xff]
      %v4751 = vld [vmem:[%s4749 + $0x8] sm:$0xff]
      %v4752 = vld [vmem:[%s4749 + $0x10] sm:$0xff]
      %v4753 = vld [vmem:[%s4749 + $0x18] sm:$0xff]
      %v4754 = vld [vmem:[%s4749 + $0x20] sm:$0xff]
      %v4755 = vld [vmem:[%s4749 + $0x28] sm:$0xff]
      %v4756 = vld [vmem:[%s4749 + $0x30] sm:$0xff]
      %v4757 = vld [vmem:[%s4749 + $0x38] sm:$0xff]
      %v4758 = vld [vmem:[%s4749 + $0x40] sm:$0xff]
      %v4759 = vld [vmem:[%s4749 + $0x48] sm:$0xff]
      %v4760 = vld [vmem:[%s4749 + $0x50] sm:$0xff]
      %v4761 = vld [vmem:[%s4749 + $0x58] sm:$0xff]
      %v4762 = vld [vmem:[%s4749 + $0x60] sm:$0xff]
      %v4763 = vld [vmem:[%s4749 + $0x68] sm:$0xff]
      %v4764 = vld [vmem:[%s4749 + $0x70] sm:$0xff]
      %v4765 = vld [vmem:[%s4749 + $0x78] sm:$0xff]
      %v4766 = vld [vmem:[%s4749 + $0x80] sm:$0xff]
      %v4767 = vld [vmem:[%s4749 + $0x88] sm:$0xff]
      %v4768 = vld [vmem:[%s4749 + $0x90] sm:$0xff]
      %v4769 = vld [vmem:[%s4749 + $0x98] sm:$0xff]
      %v4770 = vld [vmem:[%s4749 + $0xa0] sm:$0xff]
      %v4771 = vld [vmem:[%s4749 + $0xa8] sm:$0xff]
      %v4772 = vld [vmem:[%s4749 + $0xb0] sm:$0xff]
      %v4773 = vld [vmem:[%s4749 + $0xb8] sm:$0xff]
      %v4774 = vld [vmem:[%s4749 + $0xc0] sm:$0xff]
      %v4775 = vld [vmem:[%s4749 + $0xc8] sm:$0xff]
      %v4776 = vld [vmem:[%s4749 + $0xd0] sm:$0xff]
      %v4777 = vld [vmem:[%s4749 + $0xd8] sm:$0xff]
      %v4778 = vld [vmem:[%s4749 + $0xe0] sm:$0xff]
      %v4779 = vld [vmem:[%s4749 + $0xe8] sm:$0xff]
      %v4780 = vld [vmem:[%s4749 + $0xf0] sm:$0xff]
      %v4781 = vld [vmem:[%s4749 + $0xf8] sm:$0xff]
      %v4782 = vadd.f32 %v4036, %v4750
      %v4783 = vadd.f32 %v4039, %v4751
      %v4784 = vadd.f32 %v4044, %v4752
      %v4785 = vadd.f32 %v4047, %v4753
      %v4786 = vadd.f32 %v4052, %v4754
      %v4787 = vadd.f32 %v4055, %v4755
      %v4788 = vadd.f32 %v4060, %v4756
      %v4789 = vadd.f32 %v4063, %v4757
      %v4790 = vadd.f32 %v4068, %v4758
      %v4791 = vadd.f32 %v4071, %v4759
      %v4792 = vadd.f32 %v4076, %v4760
      %v4793 = vadd.f32 %v4079, %v4761
      %v4794 = vadd.f32 %v4084, %v4762
      %v4795 = vadd.f32 %v4087, %v4763
      %v4796 = vadd.f32 %v4092, %v4764
      %v4797 = vadd.f32 %v4095, %v4765
      %v4798 = vadd.f32 %v4253, %v4766
      %v4799 = vadd.f32 %v4256, %v4767
      %v4800 = vadd.f32 %v4261, %v4768
      %v4801 = vadd.f32 %v4264, %v4769
      %v4802 = vadd.f32 %v4269, %v4770
      %v4803 = vadd.f32 %v4272, %v4771
      %v4804 = vadd.f32 %v4277, %v4772
      %v4805 = vadd.f32 %v4280, %v4773
      %v4806 = vadd.f32 %v4285, %v4774
      %v4807 = vadd.f32 %v4288, %v4775
      %v4808 = vadd.f32 %v4293, %v4776
      %v4809 = vadd.f32 %v4296, %v4777
      %v4810 = vadd.f32 %v4301, %v4778
      %v4811 = vadd.f32 %v4304, %v4779
      %v4812 = vadd.f32 %v4309, %v4780
      %v4813 = vadd.f32 %v4312, %v4781
      %v4814 = vadd.f32 %v4470, %v4750
      %v4815 = vadd.f32 %v4473, %v4751
      %v4816 = vadd.f32 %v4478, %v4752
      %v4817 = vadd.f32 %v4481, %v4753
      %v4818 = vadd.f32 %v4486, %v4754
      %v4819 = vadd.f32 %v4489, %v4755
      %v4820 = vadd.f32 %v4494, %v4756
      %v4821 = vadd.f32 %v4497, %v4757
      %v4822 = vadd.f32 %v4502, %v4758
      %v4823 = vadd.f32 %v4505, %v4759
      %v4824 = vadd.f32 %v4510, %v4760
      %v4825 = vadd.f32 %v4513, %v4761
      %v4826 = vadd.f32 %v4518, %v4762
      %v4827 = vadd.f32 %v4521, %v4763
      %v4828 = vadd.f32 %v4526, %v4764
      %v4829 = vadd.f32 %v4529, %v4765
      %v4830 = vadd.f32 %v4687, %v4766
      %v4831 = vadd.f32 %v4690, %v4767
      %v4832 = vadd.f32 %v4695, %v4768
      %v4833 = vadd.f32 %v4698, %v4769
      %v4834 = vadd.f32 %v4703, %v4770
      %v4835 = vadd.f32 %v4706, %v4771
      %v4836 = vadd.f32 %v4711, %v4772
      %v4837 = vadd.f32 %v4714, %v4773
      %v4838 = vadd.f32 %v4719, %v4774
      %v4839 = vadd.f32 %v4722, %v4775
      %v4840 = vadd.f32 %v4727, %v4776
      %v4841 = vadd.f32 %v4730, %v4777
      %v4842 = vadd.f32 %v4735, %v4778
      %v4843 = vadd.f32 %v4738, %v4779
      %v4844 = vadd.f32 %v4743, %v4780
      %v4845 = vadd.f32 %v4746, %v4781
      %4846 = vmax.xlane.f32.xlu0 %v4782
      %v4847 = vpop.xlane.xlu0 %4846
      %4848 = vmax.xlane.f32.xlu0 %v4783
      %v4849 = vpop.xlane.xlu0 %4848
      %4850 = vmax.xlane.f32.xlu0 %v4784
      %v4851 = vpop.xlane.xlu0 %4850
      %4852 = vmax.xlane.f32.xlu0 %v4785
      %v4853 = vpop.xlane.xlu0 %4852
      %4854 = vmax.xlane.f32.xlu0 %v4786
      %v4855 = vpop.xlane.xlu0 %4854
      %4856 = vmax.xlane.f32.xlu0 %v4787
      %v4857 = vpop.xlane.xlu0 %4856
      %4858 = vmax.xlane.f32.xlu0 %v4788
      %v4859 = vpop.xlane.xlu0 %4858
      %4860 = vmax.xlane.f32.xlu0 %v4789
      %v4861 = vpop.xlane.xlu0 %4860
      %4862 = vmax.xlane.f32.xlu0 %v4790
      %v4863 = vpop.xlane.xlu0 %4862
      %4864 = vmax.xlane.f32.xlu0 %v4791
      %v4865 = vpop.xlane.xlu0 %4864
      %4866 = vmax.xlane.f32.xlu0 %v4792
      %v4867 = vpop.xlane.xlu0 %4866
      %4868 = vmax.xlane.f32.xlu0 %v4793
      %v4869 = vpop.xlane.xlu0 %4868
      %4870 = vmax.xlane.f32.xlu0 %v4794
      %v4871 = vpop.xlane.xlu0 %4870
      %4872 = vmax.xlane.f32.xlu0 %v4795
      %v4873 = vpop.xlane.xlu0 %4872
      %4874 = vmax.xlane.f32.xlu0 %v4796
      %v4875 = vpop.xlane.xlu0 %4874
      %4876 = vmax.xlane.f32.xlu0 %v4797
      %v4877 = vpop.xlane.xlu0 %4876
      %4878 = vmax.xlane.f32.xlu0 %v4798
      %v4879 = vpop.xlane.xlu0 %4878
      %4880 = vmax.xlane.f32.xlu0 %v4799
      %v4881 = vpop.xlane.xlu0 %4880
      %4882 = vmax.xlane.f32.xlu0 %v4800
      %v4883 = vpop.xlane.xlu0 %4882
      %4884 = vmax.xlane.f32.xlu0 %v4801
      %v4885 = vpop.xlane.xlu0 %4884
      %4886 = vmax.xlane.f32.xlu0 %v4802
      %v4887 = vpop.xlane.xlu0 %4886
      %4888 = vmax.xlane.f32.xlu0 %v4803
      %v4889 = vpop.xlane.xlu0 %4888
      %4890 = vmax.xlane.f32.xlu0 %v4804
      %v4891 = vpop.xlane.xlu0 %4890
      %4892 = vmax.xlane.f32.xlu0 %v4805
      %v4893 = vpop.xlane.xlu0 %4892
      %4894 = vmax.xlane.f32.xlu0 %v4806
      %v4895 = vpop.xlane.xlu0 %4894
      %4896 = vmax.xlane.f32.xlu0 %v4807
      %v4897 = vpop.xlane.xlu0 %4896
      %4898 = vmax.xlane.f32.xlu0 %v4808
      %v4899 = vpop.xlane.xlu0 %4898
      %4900 = vmax.xlane.f32.xlu0 %v4809
      %v4901 = vpop.xlane.xlu0 %4900
      %4902 = vmax.xlane.f32.xlu0 %v4810
      %v4903 = vpop.xlane.xlu0 %4902
      %4904 = vmax.xlane.f32.xlu0 %v4811
      %v4905 = vpop.xlane.xlu0 %4904
      %4906 = vmax.xlane.f32.xlu0 %v4812
      %v4907 = vpop.xlane.xlu0 %4906
      %4908 = vmax.xlane.f32.xlu0 %v4813
      %v4909 = vpop.xlane.xlu0 %4908
      %4910 = vmax.xlane.f32.xlu0 %v4814
      %v4911 = vpop.xlane.xlu0 %4910
      %4912 = vmax.xlane.f32.xlu0 %v4815
      %v4913 = vpop.xlane.xlu0 %4912
      %4914 = vmax.xlane.f32.xlu0 %v4816
      %v4915 = vpop.xlane.xlu0 %4914
      %4916 = vmax.xlane.f32.xlu0 %v4817
      %v4917 = vpop.xlane.xlu0 %4916
      %4918 = vmax.xlane.f32.xlu0 %v4818
      %v4919 = vpop.xlane.xlu0 %4918
      %4920 = vmax.xlane.f32.xlu0 %v4819
      %v4921 = vpop.xlane.xlu0 %4920
      %4922 = vmax.xlane.f32.xlu0 %v4820
      %v4923 = vpop.xlane.xlu0 %4922
      %4924 = vmax.xlane.f32.xlu0 %v4821
      %v4925 = vpop.xlane.xlu0 %4924
      %4926 = vmax.xlane.f32.xlu0 %v4822
      %v4927 = vpop.xlane.xlu0 %4926
      %4928 = vmax.xlane.f32.xlu0 %v4823
      %v4929 = vpop.xlane.xlu0 %4928
      %4930 = vmax.xlane.f32.xlu0 %v4824
      %v4931 = vpop.xlane.xlu0 %4930
      %4932 = vmax.xlane.f32.xlu0 %v4825
      %v4933 = vpop.xlane.xlu0 %4932
      %4934 = vmax.xlane.f32.xlu0 %v4826
      %v4935 = vpop.xlane.xlu0 %4934
      %4936 = vmax.xlane.f32.xlu0 %v4827
      %v4937 = vpop.xlane.xlu0 %4936
      %4938 = vmax.xlane.f32.xlu0 %v4828
      %v4939 = vpop.xlane.xlu0 %4938
      %4940 = vmax.xlane.f32.xlu0 %v4829
      %v4941 = vpop.xlane.xlu0 %4940
      %4942 = vmax.xlane.f32.xlu0 %v4830
      %v4943 = vpop.xlane.xlu0 %4942
      %4944 = vmax.xlane.f32.xlu0 %v4831
      %v4945 = vpop.xlane.xlu0 %4944
      %4946 = vmax.xlane.f32.xlu0 %v4832
      %v4947 = vpop.xlane.xlu0 %4946
      %4948 = vmax.xlane.f32.xlu0 %v4833
      %v4949 = vpop.xlane.xlu0 %4948
      %4950 = vmax.xlane.f32.xlu0 %v4834
      %v4951 = vpop.xlane.xlu0 %4950
      %4952 = vmax.xlane.f32.xlu0 %v4835
      %v4953 = vpop.xlane.xlu0 %4952
      %4954 = vmax.xlane.f32.xlu0 %v4836
      %v4955 = vpop.xlane.xlu0 %4954
      %4956 = vmax.xlane.f32.xlu0 %v4837
      %v4957 = vpop.xlane.xlu0 %4956
      %4958 = vmax.xlane.f32.xlu0 %v4838
      %v4959 = vpop.xlane.xlu0 %4958
      %4960 = vmax.xlane.f32.xlu0 %v4839
      %v4961 = vpop.xlane.xlu0 %4960
      %4962 = vmax.xlane.f32.xlu0 %v4840
      %v4963 = vpop.xlane.xlu0 %4962
      %4964 = vmax.xlane.f32.xlu0 %v4841
      %v4965 = vpop.xlane.xlu0 %4964
      %4966 = vmax.xlane.f32.xlu0 %v4842
      %v4967 = vpop.xlane.xlu0 %4966
      %4968 = vmax.xlane.f32.xlu0 %v4843
      %v4969 = vpop.xlane.xlu0 %4968
      %4970 = vmax.xlane.f32.xlu0 %v4844
      %v4971 = vpop.xlane.xlu0 %4970
      %4972 = vmax.xlane.f32.xlu0 %v4845
      %v4973 = vpop.xlane.xlu0 %4972
      %v4974 = vsub.f32 %v4782, %v4847
      %v4975 = vsub.f32 %v4783, %v4849
      %v4976 = vsub.f32 %v4784, %v4851
      %v4977 = vsub.f32 %v4785, %v4853
      %v4978 = vsub.f32 %v4786, %v4855
      %v4979 = vsub.f32 %v4787, %v4857
      %v4980 = vsub.f32 %v4788, %v4859
      %v4981 = vsub.f32 %v4789, %v4861
      %v4982 = vsub.f32 %v4790, %v4863
      %v4983 = vsub.f32 %v4791, %v4865
      %v4984 = vsub.f32 %v4792, %v4867
      %v4985 = vsub.f32 %v4793, %v4869
      %v4986 = vsub.f32 %v4794, %v4871
      %v4987 = vsub.f32 %v4795, %v4873
      %v4988 = vsub.f32 %v4796, %v4875
      %v4989 = vsub.f32 %v4797, %v4877
      %v4990 = vsub.f32 %v4798, %v4879
      %v4991 = vsub.f32 %v4799, %v4881
      %v4992 = vsub.f32 %v4800, %v4883
      %v4993 = vsub.f32 %v4801, %v4885
      %v4994 = vsub.f32 %v4802, %v4887
      %v4995 = vsub.f32 %v4803, %v4889
      %v4996 = vsub.f32 %v4804, %v4891
      %v4997 = vsub.f32 %v4805, %v4893
      %v4998 = vsub.f32 %v4806, %v4895
      %v4999 = vsub.f32 %v4807, %v4897
      %v5000 = vsub.f32 %v4808, %v4899
      %v5001 = vsub.f32 %v4809, %v4901
      %v5002 = vsub.f32 %v4810, %v4903
      %v5003 = vsub.f32 %v4811, %v4905
      %v5004 = vsub.f32 %v4812, %v4907
      %v5005 = vsub.f32 %v4813, %v4909
      %v5006 = vsub.f32 %v4814, %v4911
      %v5007 = vsub.f32 %v4815, %v4913
      %v5008 = vsub.f32 %v4816, %v4915
      %v5009 = vsub.f32 %v4817, %v4917
      %v5010 = vsub.f32 %v4818, %v4919
      %v5011 = vsub.f32 %v4819, %v4921
      %v5012 = vsub.f32 %v4820, %v4923
      %v5013 = vsub.f32 %v4821, %v4925
      %v5014 = vsub.f32 %v4822, %v4927
      %v5015 = vsub.f32 %v4823, %v4929
      %v5016 = vsub.f32 %v4824, %v4931
      %v5017 = vsub.f32 %v4825, %v4933
      %v5018 = vsub.f32 %v4826, %v4935
      %v5019 = vsub.f32 %v4827, %v4937
      %v5020 = vsub.f32 %v4828, %v4939
      %v5021 = vsub.f32 %v4829, %v4941
      %v5022 = vsub.f32 %v4830, %v4943
      %v5023 = vsub.f32 %v4831, %v4945
      %v5024 = vsub.f32 %v4832, %v4947
      %v5025 = vsub.f32 %v4833, %v4949
      %v5026 = vsub.f32 %v4834, %v4951
      %v5027 = vsub.f32 %v4835, %v4953
      %v5028 = vsub.f32 %v4836, %v4955
      %v5029 = vsub.f32 %v4837, %v4957
      %v5030 = vsub.f32 %v4838, %v4959
      %v5031 = vsub.f32 %v4839, %v4961
      %v5032 = vsub.f32 %v4840, %v4963
      %v5033 = vsub.f32 %v4841, %v4965
      %v5034 = vsub.f32 %v4842, %v4967
      %v5035 = vsub.f32 %v4843, %v4969
      %v5036 = vsub.f32 %v4844, %v4971
      %v5037 = vsub.f32 %v4845, %v4973
      %v5038 = vmul.f32 %v4974, 1.442695
      %v5039 = vpow.pop %v5038
      %v5040 = vmul.f32 %v4975, 1.442695
      %v5041 = vpow.pop %v5040
      %v5042 = vmul.f32 %v4976, 1.442695
      %v5043 = vpow.pop %v5042
      %v5044 = vmul.f32 %v4977, 1.442695
      %v5045 = vpow.pop %v5044
      %v5046 = vmul.f32 %v4978, 1.442695
      %v5047 = vpow.pop %v5046
      %v5048 = vmul.f32 %v4979, 1.442695
      %v5049 = vpow.pop %v5048
      %v5050 = vmul.f32 %v4980, 1.442695
      %v5051 = vpow.pop %v5050
      %v5052 = vmul.f32 %v4981, 1.442695
      %v5053 = vpow.pop %v5052
      %v5054 = vmul.f32 %v4982, 1.442695
      %v5055 = vpow.pop %v5054
      %v5056 = vmul.f32 %v4983, 1.442695
      %v5057 = vpow.pop %v5056
      %v5058 = vmul.f32 %v4984, 1.442695
      %v5059 = vpow.pop %v5058
      %v5060 = vmul.f32 %v4985, 1.442695
      %v5061 = vpow.pop %v5060
      %v5062 = vmul.f32 %v4986, 1.442695
      %v5063 = vpow.pop %v5062
      %v5064 = vmul.f32 %v4987, 1.442695
      %v5065 = vpow.pop %v5064
      %v5066 = vmul.f32 %v4988, 1.442695
      %v5067 = vpow.pop %v5066
      %v5068 = vmul.f32 %v4989, 1.442695
      %v5069 = vpow.pop %v5068
      %v5070 = vmul.f32 %v4990, 1.442695
      %v5071 = vpow.pop %v5070
      %v5072 = vmul.f32 %v4991, 1.442695
      %v5073 = vpow.pop %v5072
      %v5074 = vmul.f32 %v4992, 1.442695
      %v5075 = vpow.pop %v5074
      %v5076 = vmul.f32 %v4993, 1.442695
      %v5077 = vpow.pop %v5076
      %v5078 = vmul.f32 %v4994, 1.442695
      %v5079 = vpow.pop %v5078
      %v5080 = vmul.f32 %v4995, 1.442695
      %v5081 = vpow.pop %v5080
      %v5082 = vmul.f32 %v4996, 1.442695
      %v5083 = vpow.pop %v5082
      %v5084 = vmul.f32 %v4997, 1.442695
      %v5085 = vpow.pop %v5084
      %v5086 = vmul.f32 %v4998, 1.442695
      %v5087 = vpow.pop %v5086
      %v5088 = vmul.f32 %v4999, 1.442695
      %v5089 = vpow.pop %v5088
      %v5090 = vmul.f32 %v5000, 1.442695
      %v5091 = vpow.pop %v5090
      %v5092 = vmul.f32 %v5001, 1.442695
      %v5093 = vpow.pop %v5092
      %v5094 = vmul.f32 %v5002, 1.442695
      %v5095 = vpow.pop %v5094
      %v5096 = vmul.f32 %v5003, 1.442695
      %v5097 = vpow.pop %v5096
      %v5098 = vmul.f32 %v5004, 1.442695
      %v5099 = vpow.pop %v5098
      %v5100 = vmul.f32 %v5005, 1.442695
      %v5101 = vpow.pop %v5100
      %v5102 = vmul.f32 %v5006, 1.442695
      %v5103 = vpow.pop %v5102
      %v5104 = vmul.f32 %v5007, 1.442695
      %v5105 = vpow.pop %v5104
      %v5106 = vmul.f32 %v5008, 1.442695
      %v5107 = vpow.pop %v5106
      %v5108 = vmul.f32 %v5009, 1.442695
      %v5109 = vpow.pop %v5108
      %v5110 = vmul.f32 %v5010, 1.442695
      %v5111 = vpow.pop %v5110
      %v5112 = vmul.f32 %v5011, 1.442695
      %v5113 = vpow.pop %v5112
      %v5114 = vmul.f32 %v5012, 1.442695
      %v5115 = vpow.pop %v5114
      %v5116 = vmul.f32 %v5013, 1.442695
      %v5117 = vpow.pop %v5116
      %v5118 = vmul.f32 %v5014, 1.442695
      %v5119 = vpow.pop %v5118
      %v5120 = vmul.f32 %v5015, 1.442695
      %v5121 = vpow.pop %v5120
      %v5122 = vmul.f32 %v5016, 1.442695
      %v5123 = vpow.pop %v5122
      %v5124 = vmul.f32 %v5017, 1.442695
      %v5125 = vpow.pop %v5124
      %v5126 = vmul.f32 %v5018, 1.442695
      %v5127 = vpow.pop %v5126
      %v5128 = vmul.f32 %v5019, 1.442695
      %v5129 = vpow.pop %v5128
      %v5130 = vmul.f32 %v5020, 1.442695
      %v5131 = vpow.pop %v5130
      %v5132 = vmul.f32 %v5021, 1.442695
      %v5133 = vpow.pop %v5132
      %v5134 = vmul.f32 %v5022, 1.442695
      %v5135 = vpow.pop %v5134
      %v5136 = vmul.f32 %v5023, 1.442695
      %v5137 = vpow.pop %v5136
      %v5138 = vmul.f32 %v5024, 1.442695
      %v5139 = vpow.pop %v5138
      %v5140 = vmul.f32 %v5025, 1.442695
      %v5141 = vpow.pop %v5140
      %v5142 = vmul.f32 %v5026, 1.442695
      %v5143 = vpow.pop %v5142
      %v5144 = vmul.f32 %v5027, 1.442695
      %v5145 = vpow.pop %v5144
      %v5146 = vmul.f32 %v5028, 1.442695
      %v5147 = vpow.pop %v5146
      %v5148 = vmul.f32 %v5029, 1.442695
      %v5149 = vpow.pop %v5148
      %v5150 = vmul.f32 %v5030, 1.442695
      %v5151 = vpow.pop %v5150
      %v5152 = vmul.f32 %v5031, 1.442695
      %v5153 = vpow.pop %v5152
      %v5154 = vmul.f32 %v5032, 1.442695
      %v5155 = vpow.pop %v5154
      %v5156 = vmul.f32 %v5033, 1.442695
      %v5157 = vpow.pop %v5156
      %v5158 = vmul.f32 %v5034, 1.442695
      %v5159 = vpow.pop %v5158
      %v5160 = vmul.f32 %v5035, 1.442695
      %v5161 = vpow.pop %v5160
      %v5162 = vmul.f32 %v5036, 1.442695
      %v5163 = vpow.pop %v5162
      %v5164 = vmul.f32 %v5037, 1.442695
      %v5165 = vpow.pop %v5164
      %5166 = vadd.xlane.f32.xlu0 %v5039
      %v5167 = vpop.xlane.xlu0 %5166
      %5168 = vadd.xlane.f32.xlu0 %v5041
      %v5169 = vpop.xlane.xlu0 %5168
      %5170 = vadd.xlane.f32.xlu0 %v5043
      %v5171 = vpop.xlane.xlu0 %5170
      %5172 = vadd.xlane.f32.xlu0 %v5045
      %v5173 = vpop.xlane.xlu0 %5172
      %5174 = vadd.xlane.f32.xlu0 %v5047
      %v5175 = vpop.xlane.xlu0 %5174
      %5176 = vadd.xlane.f32.xlu0 %v5049
      %v5177 = vpop.xlane.xlu0 %5176
      %5178 = vadd.xlane.f32.xlu0 %v5051
      %v5179 = vpop.xlane.xlu0 %5178
      %5180 = vadd.xlane.f32.xlu0 %v5053
      %v5181 = vpop.xlane.xlu0 %5180
      %5182 = vadd.xlane.f32.xlu0 %v5055
      %v5183 = vpop.xlane.xlu0 %5182
      %5184 = vadd.xlane.f32.xlu0 %v5057
      %v5185 = vpop.xlane.xlu0 %5184
      %5186 = vadd.xlane.f32.xlu0 %v5059
      %v5187 = vpop.xlane.xlu0 %5186
      %5188 = vadd.xlane.f32.xlu0 %v5061
      %v5189 = vpop.xlane.xlu0 %5188
      %5190 = vadd.xlane.f32.xlu0 %v5063
      %v5191 = vpop.xlane.xlu0 %5190
      %5192 = vadd.xlane.f32.xlu0 %v5065
      %v5193 = vpop.xlane.xlu0 %5192
      %5194 = vadd.xlane.f32.xlu0 %v5067
      %v5195 = vpop.xlane.xlu0 %5194
      %5196 = vadd.xlane.f32.xlu0 %v5069
      %v5197 = vpop.xlane.xlu0 %5196
      %5198 = vadd.xlane.f32.xlu0 %v5071
      %v5199 = vpop.xlane.xlu0 %5198
      %5200 = vadd.xlane.f32.xlu0 %v5073
      %v5201 = vpop.xlane.xlu0 %5200
      %5202 = vadd.xlane.f32.xlu0 %v5075
      %v5203 = vpop.xlane.xlu0 %5202
      %5204 = vadd.xlane.f32.xlu0 %v5077
      %v5205 = vpop.xlane.xlu0 %5204
      %5206 = vadd.xlane.f32.xlu0 %v5079
      %v5207 = vpop.xlane.xlu0 %5206
      %5208 = vadd.xlane.f32.xlu0 %v5081
      %v5209 = vpop.xlane.xlu0 %5208
      %5210 = vadd.xlane.f32.xlu0 %v5083
      %v5211 = vpop.xlane.xlu0 %5210
      %5212 = vadd.xlane.f32.xlu0 %v5085
      %v5213 = vpop.xlane.xlu0 %5212
      %5214 = vadd.xlane.f32.xlu0 %v5087
      %v5215 = vpop.xlane.xlu0 %5214
      %5216 = vadd.xlane.f32.xlu0 %v5089
      %v5217 = vpop.xlane.xlu0 %5216
      %5218 = vadd.xlane.f32.xlu0 %v5091
      %v5219 = vpop.xlane.xlu0 %5218
      %5220 = vadd.xlane.f32.xlu0 %v5093
      %v5221 = vpop.xlane.xlu0 %5220
      %5222 = vadd.xlane.f32.xlu0 %v5095
      %v5223 = vpop.xlane.xlu0 %5222
      %5224 = vadd.xlane.f32.xlu0 %v5097
      %v5225 = vpop.xlane.xlu0 %5224
      %5226 = vadd.xlane.f32.xlu0 %v5099
      %v5227 = vpop.xlane.xlu0 %5226
      %5228 = vadd.xlane.f32.xlu0 %v5101
      %v5229 = vpop.xlane.xlu0 %5228
      %5230 = vadd.xlane.f32.xlu0 %v5103
      %v5231 = vpop.xlane.xlu0 %5230
      %5232 = vadd.xlane.f32.xlu0 %v5105
      %v5233 = vpop.xlane.xlu0 %5232
      %5234 = vadd.xlane.f32.xlu0 %v5107
      %v5235 = vpop.xlane.xlu0 %5234
      %5236 = vadd.xlane.f32.xlu0 %v5109
      %v5237 = vpop.xlane.xlu0 %5236
      %5238 = vadd.xlane.f32.xlu0 %v5111
      %v5239 = vpop.xlane.xlu0 %5238
      %5240 = vadd.xlane.f32.xlu0 %v5113
      %v5241 = vpop.xlane.xlu0 %5240
      %5242 = vadd.xlane.f32.xlu0 %v5115
      %v5243 = vpop.xlane.xlu0 %5242
      %5244 = vadd.xlane.f32.xlu0 %v5117
      %v5245 = vpop.xlane.xlu0 %5244
      %5246 = vadd.xlane.f32.xlu0 %v5119
      %v5247 = vpop.xlane.xlu0 %5246
      %5248 = vadd.xlane.f32.xlu0 %v5121
      %v5249 = vpop.xlane.xlu0 %5248
      %5250 = vadd.xlane.f32.xlu0 %v5123
      %v5251 = vpop.xlane.xlu0 %5250
      %5252 = vadd.xlane.f32.xlu0 %v5125
      %v5253 = vpop.xlane.xlu0 %5252
      %5254 = vadd.xlane.f32.xlu0 %v5127
      %v5255 = vpop.xlane.xlu0 %5254
      %5256 = vadd.xlane.f32.xlu0 %v5129
      %v5257 = vpop.xlane.xlu0 %5256
      %5258 = vadd.xlane.f32.xlu0 %v5131
      %v5259 = vpop.xlane.xlu0 %5258
      %5260 = vadd.xlane.f32.xlu0 %v5133
      %v5261 = vpop.xlane.xlu0 %5260
      %5262 = vadd.xlane.f32.xlu0 %v5135
      %v5263 = vpop.xlane.xlu0 %5262
      %5264 = vadd.xlane.f32.xlu0 %v5137
      %v5265 = vpop.xlane.xlu0 %5264
      %5266 = vadd.xlane.f32.xlu0 %v5139
      %v5267 = vpop.xlane.xlu0 %5266
      %5268 = vadd.xlane.f32.xlu0 %v5141
      %v5269 = vpop.xlane.xlu0 %5268
      %5270 = vadd.xlane.f32.xlu0 %v5143
      %v5271 = vpop.xlane.xlu0 %5270
      %5272 = vadd.xlane.f32.xlu0 %v5145
      %v5273 = vpop.xlane.xlu0 %5272
      %5274 = vadd.xlane.f32.xlu0 %v5147
      %v5275 = vpop.xlane.xlu0 %5274
      %5276 = vadd.xlane.f32.xlu0 %v5149
      %v5277 = vpop.xlane.xlu0 %5276
      %5278 = vadd.xlane.f32.xlu0 %v5151
      %v5279 = vpop.xlane.xlu0 %5278
      %5280 = vadd.xlane.f32.xlu0 %v5153
      %v5281 = vpop.xlane.xlu0 %5280
      %5282 = vadd.xlane.f32.xlu0 %v5155
      %v5283 = vpop.xlane.xlu0 %5282
      %5284 = vadd.xlane.f32.xlu0 %v5157
      %v5285 = vpop.xlane.xlu0 %5284
      %5286 = vadd.xlane.f32.xlu0 %v5159
      %v5287 = vpop.xlane.xlu0 %5286
      %5288 = vadd.xlane.f32.xlu0 %v5161
      %v5289 = vpop.xlane.xlu0 %5288
      %5290 = vadd.xlane.f32.xlu0 %v5163
      %v5291 = vpop.xlane.xlu0 %5290
      %5292 = vadd.xlane.f32.xlu0 %v5165
      %v5293 = vpop.xlane.xlu0 %5292
      %v5294 = vrcp.pop %v5167
      %v5295 = vrcp.pop %v5169
      %v5296 = vrcp.pop %v5171
      %v5297 = vrcp.pop %v5173
      %v5298 = vrcp.pop %v5175
      %v5299 = vrcp.pop %v5177
      %v5300 = vrcp.pop %v5179
      %v5301 = vrcp.pop %v5181
      %v5302 = vrcp.pop %v5183
      %v5303 = vrcp.pop %v5185
      %v5304 = vrcp.pop %v5187
      %v5305 = vrcp.pop %v5189
      %v5306 = vrcp.pop %v5191
      %v5307 = vrcp.pop %v5193
      %v5308 = vrcp.pop %v5195
      %v5309 = vrcp.pop %v5197
      %v5310 = vrcp.pop %v5199
      %v5311 = vrcp.pop %v5201
      %v5312 = vrcp.pop %v5203
      %v5313 = vrcp.pop %v5205
      %v5314 = vrcp.pop %v5207
      %v5315 = vrcp.pop %v5209
      %v5316 = vrcp.pop %v5211
      %v5317 = vrcp.pop %v5213
      %v5318 = vrcp.pop %v5215
      %v5319 = vrcp.pop %v5217
      %v5320 = vrcp.pop %v5219
      %v5321 = vrcp.pop %v5221
      %v5322 = vrcp.pop %v5223
      %v5323 = vrcp.pop %v5225
      %v5324 = vrcp.pop %v5227
      %v5325 = vrcp.pop %v5229
      %v5326 = vrcp.pop %v5231
      %v5327 = vrcp.pop %v5233
      %v5328 = vrcp.pop %v5235
      %v5329 = vrcp.pop %v5237
      %v5330 = vrcp.pop %v5239
      %v5331 = vrcp.pop %v5241
      %v5332 = vrcp.pop %v5243
      %v5333 = vrcp.pop %v5245
      %v5334 = vrcp.pop %v5247
      %v5335 = vrcp.pop %v5249
      %v5336 = vrcp.pop %v5251
      %v5337 = vrcp.pop %v5253
      %v5338 = vrcp.pop %v5255
      %v5339 = vrcp.pop %v5257
      %v5340 = vrcp.pop %v5259
      %v5341 = vrcp.pop %v5261
      %v5342 = vrcp.pop %v5263
      %v5343 = vrcp.pop %v5265
      %v5344 = vrcp.pop %v5267
      %v5345 = vrcp.pop %v5269
      %v5346 = vrcp.pop %v5271
      %v5347 = vrcp.pop %v5273
      %v5348 = vrcp.pop %v5275
      %v5349 = vrcp.pop %v5277
      %v5350 = vrcp.pop %v5279
      %v5351 = vrcp.pop %v5281
      %v5352 = vrcp.pop %v5283
      %v5353 = vrcp.pop %v5285
      %v5354 = vrcp.pop %v5287
      %v5355 = vrcp.pop %v5289
      %v5356 = vrcp.pop %v5291
      %v5357 = vrcp.pop %v5293
      %v5358 = vmul.f32 %v5039, %v5294
      %v5359 = vmul.f32 %v5041, %v5295
      %v5360 = vmul.f32 %v5043, %v5296
      %v5361 = vmul.f32 %v5045, %v5297
      %v5362 = vmul.f32 %v5047, %v5298
      %v5363 = vmul.f32 %v5049, %v5299
      %v5364 = vmul.f32 %v5051, %v5300
      %v5365 = vmul.f32 %v5053, %v5301
      %v5366 = vmul.f32 %v5055, %v5302
      %v5367 = vmul.f32 %v5057, %v5303
      %v5368 = vmul.f32 %v5059, %v5304
      %v5369 = vmul.f32 %v5061, %v5305
      %v5370 = vmul.f32 %v5063, %v5306
      %v5371 = vmul.f32 %v5065, %v5307
      %v5372 = vmul.f32 %v5067, %v5308
      %v5373 = vmul.f32 %v5069, %v5309
      %v5374 = vmul.f32 %v5071, %v5310
      %v5375 = vmul.f32 %v5073, %v5311
      %v5376 = vmul.f32 %v5075, %v5312
      %v5377 = vmul.f32 %v5077, %v5313
      %v5378 = vmul.f32 %v5079, %v5314
      %v5379 = vmul.f32 %v5081, %v5315
      %v5380 = vmul.f32 %v5083, %v5316
      %v5381 = vmul.f32 %v5085, %v5317
      %v5382 = vmul.f32 %v5087, %v5318
      %v5383 = vmul.f32 %v5089, %v5319
      %v5384 = vmul.f32 %v5091, %v5320
      %v5385 = vmul.f32 %v5093, %v5321
      %v5386 = vmul.f32 %v5095, %v5322
      %v5387 = vmul.f32 %v5097, %v5323
      %v5388 = vmul.f32 %v5099, %v5324
      %v5389 = vmul.f32 %v5101, %v5325
      %v5390 = vmul.f32 %v5103, %v5326
      %v5391 = vmul.f32 %v5105, %v5327
      %v5392 = vmul.f32 %v5107, %v5328
      %v5393 = vmul.f32 %v5109, %v5329
      %v5394 = vmul.f32 %v5111, %v5330
      %v5395 = vmul.f32 %v5113, %v5331
      %v5396 = vmul.f32 %v5115, %v5332
      %v5397 = vmul.f32 %v5117, %v5333
      %v5398 = vmul.f32 %v5119, %v5334
      %v5399 = vmul.f32 %v5121, %v5335
      %v5400 = vmul.f32 %v5123, %v5336
      %v5401 = vmul.f32 %v5125, %v5337
      %v5402 = vmul.f32 %v5127, %v5338
      %v5403 = vmul.f32 %v5129, %v5339
      %v5404 = vmul.f32 %v5131, %v5340
      %v5405 = vmul.f32 %v5133, %v5341
      %v5406 = vmul.f32 %v5135, %v5342
      %v5407 = vmul.f32 %v5137, %v5343
      %v5408 = vmul.f32 %v5139, %v5344
      %v5409 = vmul.f32 %v5141, %v5345
      %v5410 = vmul.f32 %v5143, %v5346
      %v5411 = vmul.f32 %v5145, %v5347
      %v5412 = vmul.f32 %v5147, %v5348
      %v5413 = vmul.f32 %v5149, %v5349
      %v5414 = vmul.f32 %v5151, %v5350
      %v5415 = vmul.f32 %v5153, %v5351
      %v5416 = vmul.f32 %v5155, %v5352
      %v5417 = vmul.f32 %v5157, %v5353
      %v5418 = vmul.f32 %v5159, %v5354
      %v5419 = vmul.f32 %v5161, %v5355
      %v5420 = vmul.f32 %v5163, %v5356
      %v5421 = vmul.f32 %v5165, %v5357
      %v5422 = vpack.c.bf16 %v5359, %v5358
      %v5423 = vpack.c.bf16 %v5361, %v5360
      %v5424 = vpack.c.bf16 %v5363, %v5362
      %v5425 = vpack.c.bf16 %v5365, %v5364
      %v5426 = vpack.c.bf16 %v5367, %v5366
      %v5427 = vpack.c.bf16 %v5369, %v5368
      %v5428 = vpack.c.bf16 %v5371, %v5370
      %v5429 = vpack.c.bf16 %v5373, %v5372
      %v5430 = vpack.c.bf16 %v5375, %v5374
      %v5431 = vpack.c.bf16 %v5377, %v5376
      %v5432 = vpack.c.bf16 %v5379, %v5378
      %v5433 = vpack.c.bf16 %v5381, %v5380
      %v5434 = vpack.c.bf16 %v5383, %v5382
      %v5435 = vpack.c.bf16 %v5385, %v5384
      %v5436 = vpack.c.bf16 %v5387, %v5386
      %v5437 = vpack.c.bf16 %v5389, %v5388
      %v5438 = vpack.c.bf16 %v5391, %v5390
      %v5439 = vpack.c.bf16 %v5393, %v5392
      %v5440 = vpack.c.bf16 %v5395, %v5394
      %v5441 = vpack.c.bf16 %v5397, %v5396
      %v5442 = vpack.c.bf16 %v5399, %v5398
      %v5443 = vpack.c.bf16 %v5401, %v5400
      %v5444 = vpack.c.bf16 %v5403, %v5402
      %v5445 = vpack.c.bf16 %v5405, %v5404
      %v5446 = vpack.c.bf16 %v5407, %v5406
      %v5447 = vpack.c.bf16 %v5409, %v5408
      %v5448 = vpack.c.bf16 %v5411, %v5410
      %v5449 = vpack.c.bf16 %v5413, %v5412
      %v5450 = vpack.c.bf16 %v5415, %v5414
      %v5451 = vpack.c.bf16 %v5417, %v5416
      %v5452 = vpack.c.bf16 %v5419, %v5418
      %v5453 = vpack.c.bf16 %v5421, %v5420
      %5454 = vrot.lane.b32.xlu0 %v3913, 56
      %v5455 = vpop.permute.xlu0 %5454
      %5456 = vrot.lane.b32.xlu0 %v3914, 56
      %v5457 = vpop.permute.xlu0 %5456
      %5458 = vrot.lane.b32.xlu0 %v3915, 56
      %v5459 = vpop.permute.xlu0 %5458
      %5460 = vrot.lane.b32.xlu0 %v3916, 56
      %v5461 = vpop.permute.xlu0 %5460
      %5462 = vrot.lane.b32.xlu0 %v3917, 56
      %v5463 = vpop.permute.xlu0 %5462
      %5464 = vrot.lane.b32.xlu0 %v3918, 56
      %v5465 = vpop.permute.xlu0 %5464
      %5466 = vrot.lane.b32.xlu0 %v3919, 56
      %v5467 = vpop.permute.xlu0 %5466
      %5468 = vrot.lane.b32.xlu0 %v3920, 56
      %v5469 = vpop.permute.xlu0 %5468
      %5478 = vmatprep.subr.bf16.mxu0 0
      %5479 = vmatpush1.bf16.msra.mxu0 %v5469
      %5480 = vmatprep.subr.bf16.mxu0 0
      %5481 = vmatpush1.bf16.msra.mxu0 %v5467
      %5482 = vmatprep.subr.bf16.mxu0 0
      %5483 = vmatpush1.bf16.msra.mxu0 %v5465
      %5484 = vmatprep.subr.bf16.mxu0 0
      %5485 = vmatpush1.bf16.msra.mxu0 %v5463
      %5486 = vmatprep.subr.bf16.mxu0 0
      %5487 = vmatpush1.bf16.msra.mxu0 %v5461
      %5488 = vmatprep.subr.bf16.mxu0 0
      %5489 = vmatpush1.bf16.msra.mxu0 %v5459
      %5490 = vmatprep.subr.bf16.mxu0 0
      %5491 = vmatpush1.bf16.msra.mxu0 %v5457
      %5492 = vmatprep.subr.bf16.mxu0 0
      %5493 = vmatpush1.bf16.msra.mxu0 %v5455
      %5494 = vmatprep.subr.bf16.mxu0 0
      %5495 = vmatpush2.bf16.msra.mxu0 0
      %5496 = vmatprep.subr.bf16.mxu0 0
      %5497 = vmatpush2.bf16.msra.mxu0 0
      %5498 = vmatprep.subr.bf16.mxu0 0
      %5499 = vmatpush2.bf16.msra.mxu0 0
      %5500 = vmatprep.subr.bf16.mxu0 0
      %5501 = vmatpush2.bf16.msra.mxu0 0
      %5502 = vmatprep.subr.bf16.mxu0 0
      %5503 = vmatpush2.bf16.msra.mxu0 0
      %5504 = vmatprep.subr.bf16.mxu0 0
      %5505 = vmatpush2.bf16.msra.mxu0 0
      %5506 = vmatprep.subr.bf16.mxu0 0
      %5507 = vmatpush2.bf16.msra.mxu0 0
      %5508 = vmatprep.subr.bf16.mxu0 0
      %5509 = vmatpush2.bf16.msra.mxu0 0
      %5510 = vmatprep.mubr.bf16.mxu0 0
      %5511 = vmatmul.mubr.bf16.gmra.mxu0 %v5422
      %v5512 = vpop.f32.mrf.mxu0
      %v5513 = vadd.f32 0.0, %v5512
      %v5514 = vpop.f32.mrf.mxu0
      %v5515 = vpop.f32.mrf.mxu0
      %v5516 = vadd.f32 0.0, %v5515
      %v5517 = vpop.f32.mrf.mxu0
      %5518 = vmatprep.mubr.bf16.mxu0 0
      %5519 = vmatmul.mubr.bf16.gmra.mxu0 %v5423
      %v5520 = vpop.f32.mrf.mxu0
      %v5521 = vadd.f32 0.0, %v5520
      %v5522 = vpop.f32.mrf.mxu0
      %v5523 = vpop.f32.mrf.mxu0
      %v5524 = vadd.f32 0.0, %v5523
      %v5525 = vpop.f32.mrf.mxu0
      %5526 = vmatprep.mubr.bf16.mxu0 0
      %5527 = vmatmul.mubr.bf16.gmra.mxu0 %v5424
      %v5528 = vpop.f32.mrf.mxu0
      %v5529 = vadd.f32 0.0, %v5528
      %v5530 = vpop.f32.mrf.mxu0
      %v5531 = vpop.f32.mrf.mxu0
      %v5532 = vadd.f32 0.0, %v5531
      %v5533 = vpop.f32.mrf.mxu0
      %5534 = vmatprep.mubr.bf16.mxu0 0
      %5535 = vmatmul.mubr.bf16.gmra.mxu0 %v5425
      %v5536 = vpop.f32.mrf.mxu0
      %v5537 = vadd.f32 0.0, %v5536
      %v5538 = vpop.f32.mrf.mxu0
      %v5539 = vpop.f32.mrf.mxu0
      %v5540 = vadd.f32 0.0, %v5539
      %v5541 = vpop.f32.mrf.mxu0
      %5542 = vmatprep.mubr.bf16.mxu0 0
      %5543 = vmatmul.mubr.bf16.gmra.mxu0 %v5426
      %v5544 = vpop.f32.mrf.mxu0
      %v5545 = vadd.f32 0.0, %v5544
      %v5546 = vpop.f32.mrf.mxu0
      %v5547 = vpop.f32.mrf.mxu0
      %v5548 = vadd.f32 0.0, %v5547
      %v5549 = vpop.f32.mrf.mxu0
      %5550 = vmatprep.mubr.bf16.mxu0 0
      %5551 = vmatmul.mubr.bf16.gmra.mxu0 %v5427
      %v5552 = vpop.f32.mrf.mxu0
      %v5553 = vadd.f32 0.0, %v5552
      %v5554 = vpop.f32.mrf.mxu0
      %v5555 = vpop.f32.mrf.mxu0
      %v5556 = vadd.f32 0.0, %v5555
      %v5557 = vpop.f32.mrf.mxu0
      %5558 = vmatprep.mubr.bf16.mxu0 0
      %5559 = vmatmul.mubr.bf16.gmra.mxu0 %v5428
      %v5560 = vpop.f32.mrf.mxu0
      %v5561 = vadd.f32 0.0, %v5560
      %v5562 = vpop.f32.mrf.mxu0
      %v5563 = vpop.f32.mrf.mxu0
      %v5564 = vadd.f32 0.0, %v5563
      %v5565 = vpop.f32.mrf.mxu0
      %5566 = vmatprep.mubr.bf16.mxu0 0
      %5567 = vmatmul.mubr.bf16.gmra.mxu0 %v5429
      %v5568 = vpop.f32.mrf.mxu0
      %v5569 = vadd.f32 0.0, %v5568
      %v5570 = vpop.f32.mrf.mxu0
      %v5571 = vpop.f32.mrf.mxu0
      %v5572 = vadd.f32 0.0, %v5571
      %v5573 = vpop.f32.mrf.mxu0
      %5574 = vdwg.mxu0
      %5575 = vrot.lane.b32.xlu0 %v4130, 56
      %v5576 = vpop.permute.xlu0 %5575
      %5577 = vrot.lane.b32.xlu0 %v4131, 56
      %v5578 = vpop.permute.xlu0 %5577
      %5579 = vrot.lane.b32.xlu0 %v4132, 56
      %v5580 = vpop.permute.xlu0 %5579
      %5581 = vrot.lane.b32.xlu0 %v4133, 56
      %v5582 = vpop.permute.xlu0 %5581
      %5583 = vrot.lane.b32.xlu0 %v4134, 56
      %v5584 = vpop.permute.xlu0 %5583
      %5585 = vrot.lane.b32.xlu0 %v4135, 56
      %v5586 = vpop.permute.xlu0 %5585
      %5587 = vrot.lane.b32.xlu0 %v4136, 56
      %v5588 = vpop.permute.xlu0 %5587
      %5589 = vrot.lane.b32.xlu0 %v4137, 56
      %v5590 = vpop.permute.xlu0 %5589
      %5599 = vmatprep.subr.bf16.mxu0 0
      %5600 = vmatpush1.bf16.msra.mxu0 %v5590
      %5601 = vmatprep.subr.bf16.mxu0 0
      %5602 = vmatpush1.bf16.msra.mxu0 %v5588
      %5603 = vmatprep.subr.bf16.mxu0 0
      %5604 = vmatpush1.bf16.msra.mxu0 %v5586
      %5605 = vmatprep.subr.bf16.mxu0 0
      %5606 = vmatpush1.bf16.msra.mxu0 %v5584
      %5607 = vmatprep.subr.bf16.mxu0 0
      %5608 = vmatpush1.bf16.msra.mxu0 %v5582
      %5609 = vmatprep.subr.bf16.mxu0 0
      %5610 = vmatpush1.bf16.msra.mxu0 %v5580
      %5611 = vmatprep.subr.bf16.mxu0 0
      %5612 = vmatpush1.bf16.msra.mxu0 %v5578
      %5613 = vmatprep.subr.bf16.mxu0 0
      %5614 = vmatpush1.bf16.msra.mxu0 %v5576
      %5615 = vmatprep.subr.bf16.mxu0 0
      %5616 = vmatpush2.bf16.msra.mxu0 0
      %5617 = vmatprep.subr.bf16.mxu0 0
      %5618 = vmatpush2.bf16.msra.mxu0 0
      %5619 = vmatprep.subr.bf16.mxu0 0
      %5620 = vmatpush2.bf16.msra.mxu0 0
      %5621 = vmatprep.subr.bf16.mxu0 0
      %5622 = vmatpush2.bf16.msra.mxu0 0
      %5623 = vmatprep.subr.bf16.mxu0 0
      %5624 = vmatpush2.bf16.msra.mxu0 0
      %5625 = vmatprep.subr.bf16.mxu0 0
      %5626 = vmatpush2.bf16.msra.mxu0 0
      %5627 = vmatprep.subr.bf16.mxu0 0
      %5628 = vmatpush2.bf16.msra.mxu0 0
      %5629 = vmatprep.subr.bf16.mxu0 0
      %5630 = vmatpush2.bf16.msra.mxu0 0
      %5631 = vmatprep.mubr.bf16.mxu0 0
      %5632 = vmatmul.mubr.bf16.gmra.mxu0 %v5430
      %v5633 = vpop.f32.mrf.mxu0
      %v5634 = vadd.f32 0.0, %v5633
      %v5635 = vpop.f32.mrf.mxu0
      %v5636 = vpop.f32.mrf.mxu0
      %v5637 = vadd.f32 0.0, %v5636
      %v5638 = vpop.f32.mrf.mxu0
      %5639 = vmatprep.mubr.bf16.mxu0 0
      %5640 = vmatmul.mubr.bf16.gmra.mxu0 %v5431
      %v5641 = vpop.f32.mrf.mxu0
      %v5642 = vadd.f32 0.0, %v5641
      %v5643 = vpop.f32.mrf.mxu0
      %v5644 = vpop.f32.mrf.mxu0
      %v5645 = vadd.f32 0.0, %v5644
      %v5646 = vpop.f32.mrf.mxu0
      %5647 = vmatprep.mubr.bf16.mxu0 0
      %5648 = vmatmul.mubr.bf16.gmra.mxu0 %v5432
      %v5649 = vpop.f32.mrf.mxu0
      %v5650 = vadd.f32 0.0, %v5649
      %v5651 = vpop.f32.mrf.mxu0
      %v5652 = vpop.f32.mrf.mxu0
      %v5653 = vadd.f32 0.0, %v5652
      %v5654 = vpop.f32.mrf.mxu0
      %5655 = vmatprep.mubr.bf16.mxu0 0
      %5656 = vmatmul.mubr.bf16.gmra.mxu0 %v5433
      %v5657 = vpop.f32.mrf.mxu0
      %v5658 = vadd.f32 0.0, %v5657
      %v5659 = vpop.f32.mrf.mxu0
      %v5660 = vpop.f32.mrf.mxu0
      %v5661 = vadd.f32 0.0, %v5660
      %v5662 = vpop.f32.mrf.mxu0
      %5663 = vmatprep.mubr.bf16.mxu0 0
      %5664 = vmatmul.mubr.bf16.gmra.mxu0 %v5434
      %v5665 = vpop.f32.mrf.mxu0
      %v5666 = vadd.f32 0.0, %v5665
      %v5667 = vpop.f32.mrf.mxu0
      %v5668 = vpop.f32.mrf.mxu0
      %v5669 = vadd.f32 0.0, %v5668
      %v5670 = vpop.f32.mrf.mxu0
      %5671 = vmatprep.mubr.bf16.mxu0 0
      %5672 = vmatmul.mubr.bf16.gmra.mxu0 %v5435
      %v5673 = vpop.f32.mrf.mxu0
      %v5674 = vadd.f32 0.0, %v5673
      %v5675 = vpop.f32.mrf.mxu0
      %v5676 = vpop.f32.mrf.mxu0
      %v5677 = vadd.f32 0.0, %v5676
      %v5678 = vpop.f32.mrf.mxu0
      %5679 = vmatprep.mubr.bf16.mxu0 0
      %5680 = vmatmul.mubr.bf16.gmra.mxu0 %v5436
      %v5681 = vpop.f32.mrf.mxu0
      %v5682 = vadd.f32 0.0, %v5681
      %v5683 = vpop.f32.mrf.mxu0
      %v5684 = vpop.f32.mrf.mxu0
      %v5685 = vadd.f32 0.0, %v5684
      %v5686 = vpop.f32.mrf.mxu0
      %5687 = vmatprep.mubr.bf16.mxu0 0
      %5688 = vmatmul.mubr.bf16.gmra.mxu0 %v5437
      %v5689 = vpop.f32.mrf.mxu0
      %v5690 = vadd.f32 0.0, %v5689
      %v5691 = vpop.f32.mrf.mxu0
      %v5692 = vpop.f32.mrf.mxu0
      %v5693 = vadd.f32 0.0, %v5692
      %v5694 = vpop.f32.mrf.mxu0
      %5695 = vdwg.mxu0
      %5696 = vrot.lane.b32.xlu0 %v4347, 56
      %v5697 = vpop.permute.xlu0 %5696
      %5698 = vrot.lane.b32.xlu0 %v4348, 56
      %v5699 = vpop.permute.xlu0 %5698
      %5700 = vrot.lane.b32.xlu0 %v4349, 56
      %v5701 = vpop.permute.xlu0 %5700
      %5702 = vrot.lane.b32.xlu0 %v4350, 56
      %v5703 = vpop.permute.xlu0 %5702
      %5704 = vrot.lane.b32.xlu0 %v4351, 56
      %v5705 = vpop.permute.xlu0 %5704
      %5706 = vrot.lane.b32.xlu0 %v4352, 56
      %v5707 = vpop.permute.xlu0 %5706
      %5708 = vrot.lane.b32.xlu0 %v4353, 56
      %v5709 = vpop.permute.xlu0 %5708
      %5710 = vrot.lane.b32.xlu0 %v4354, 56
      %v5711 = vpop.permute.xlu0 %5710
      %5720 = vmatprep.subr.bf16.mxu0 0
      %5721 = vmatpush1.bf16.msra.mxu0 %v5711
      %5722 = vmatprep.subr.bf16.mxu0 0
      %5723 = vmatpush1.bf16.msra.mxu0 %v5709
      %5724 = vmatprep.subr.bf16.mxu0 0
      %5725 = vmatpush1.bf16.msra.mxu0 %v5707
      %5726 = vmatprep.subr.bf16.mxu0 0
      %5727 = vmatpush1.bf16.msra.mxu0 %v5705
      %5728 = vmatprep.subr.bf16.mxu0 0
      %5729 = vmatpush1.bf16.msra.mxu0 %v5703
      %5730 = vmatprep.subr.bf16.mxu0 0
      %5731 = vmatpush1.bf16.msra.mxu0 %v5701
      %5732 = vmatprep.subr.bf16.mxu0 0
      %5733 = vmatpush1.bf16.msra.mxu0 %v5699
      %5734 = vmatprep.subr.bf16.mxu0 0
      %5735 = vmatpush1.bf16.msra.mxu0 %v5697
      %5736 = vmatprep.subr.bf16.mxu0 0
      %5737 = vmatpush2.bf16.msra.mxu0 0
      %5738 = vmatprep.subr.bf16.mxu0 0
      %5739 = vmatpush2.bf16.msra.mxu0 0
      %5740 = vmatprep.subr.bf16.mxu0 0
      %5741 = vmatpush2.bf16.msra.mxu0 0
      %5742 = vmatprep.subr.bf16.mxu0 0
      %5743 = vmatpush2.bf16.msra.mxu0 0
      %5744 = vmatprep.subr.bf16.mxu0 0
      %5745 = vmatpush2.bf16.msra.mxu0 0
      %5746 = vmatprep.subr.bf16.mxu0 0
      %5747 = vmatpush2.bf16.msra.mxu0 0
      %5748 = vmatprep.subr.bf16.mxu0 0
      %5749 = vmatpush2.bf16.msra.mxu0 0
      %5750 = vmatprep.subr.bf16.mxu0 0
      %5751 = vmatpush2.bf16.msra.mxu0 0
      %5752 = vmatprep.mubr.bf16.mxu0 0
      %5753 = vmatmul.mubr.bf16.gmra.mxu0 %v5438
      %v5754 = vpop.f32.mrf.mxu0
      %v5755 = vadd.f32 0.0, %v5754
      %v5756 = vpop.f32.mrf.mxu0
      %v5757 = vpop.f32.mrf.mxu0
      %v5758 = vadd.f32 0.0, %v5757
      %v5759 = vpop.f32.mrf.mxu0
      %5760 = vmatprep.mubr.bf16.mxu0 0
      %5761 = vmatmul.mubr.bf16.gmra.mxu0 %v5439
      %v5762 = vpop.f32.mrf.mxu0
      %v5763 = vadd.f32 0.0, %v5762
      %v5764 = vpop.f32.mrf.mxu0
      %v5765 = vpop.f32.mrf.mxu0
      %v5766 = vadd.f32 0.0, %v5765
      %v5767 = vpop.f32.mrf.mxu0
      %5768 = vmatprep.mubr.bf16.mxu0 0
      %5769 = vmatmul.mubr.bf16.gmra.mxu0 %v5440
      %v5770 = vpop.f32.mrf.mxu0
      %v5771 = vadd.f32 0.0, %v5770
      %v5772 = vpop.f32.mrf.mxu0
      %v5773 = vpop.f32.mrf.mxu0
      %v5774 = vadd.f32 0.0, %v5773
      %v5775 = vpop.f32.mrf.mxu0
      %5776 = vmatprep.mubr.bf16.mxu0 0
      %5777 = vmatmul.mubr.bf16.gmra.mxu0 %v5441
      %v5778 = vpop.f32.mrf.mxu0
      %v5779 = vadd.f32 0.0, %v5778
      %v5780 = vpop.f32.mrf.mxu0
      %v5781 = vpop.f32.mrf.mxu0
      %v5782 = vadd.f32 0.0, %v5781
      %v5783 = vpop.f32.mrf.mxu0
      %5784 = vmatprep.mubr.bf16.mxu0 0
      %5785 = vmatmul.mubr.bf16.gmra.mxu0 %v5442
      %v5786 = vpop.f32.mrf.mxu0
      %v5787 = vadd.f32 0.0, %v5786
      %v5788 = vpop.f32.mrf.mxu0
      %v5789 = vpop.f32.mrf.mxu0
      %v5790 = vadd.f32 0.0, %v5789
      %v5791 = vpop.f32.mrf.mxu0
      %5792 = vmatprep.mubr.bf16.mxu0 0
      %5793 = vmatmul.mubr.bf16.gmra.mxu0 %v5443
      %v5794 = vpop.f32.mrf.mxu0
      %v5795 = vadd.f32 0.0, %v5794
      %v5796 = vpop.f32.mrf.mxu0
      %v5797 = vpop.f32.mrf.mxu0
      %v5798 = vadd.f32 0.0, %v5797
      %v5799 = vpop.f32.mrf.mxu0
      %5800 = vmatprep.mubr.bf16.mxu0 0
      %5801 = vmatmul.mubr.bf16.gmra.mxu0 %v5444
      %v5802 = vpop.f32.mrf.mxu0
      %v5803 = vadd.f32 0.0, %v5802
      %v5804 = vpop.f32.mrf.mxu0
      %v5805 = vpop.f32.mrf.mxu0
      %v5806 = vadd.f32 0.0, %v5805
      %v5807 = vpop.f32.mrf.mxu0
      %5808 = vmatprep.mubr.bf16.mxu0 0
      %5809 = vmatmul.mubr.bf16.gmra.mxu0 %v5445
      %v5810 = vpop.f32.mrf.mxu0
      %v5811 = vadd.f32 0.0, %v5810
      %v5812 = vpop.f32.mrf.mxu0
      %v5813 = vpop.f32.mrf.mxu0
      %v5814 = vadd.f32 0.0, %v5813
      %v5815 = vpop.f32.mrf.mxu0
      %5816 = vdwg.mxu0
      %5817 = vrot.lane.b32.xlu0 %v4564, 56
      %v5818 = vpop.permute.xlu0 %5817
      %5819 = vrot.lane.b32.xlu0 %v4565, 56
      %v5820 = vpop.permute.xlu0 %5819
      %5821 = vrot.lane.b32.xlu0 %v4566, 56
      %v5822 = vpop.permute.xlu0 %5821
      %5823 = vrot.lane.b32.xlu0 %v4567, 56
      %v5824 = vpop.permute.xlu0 %5823
      %5825 = vrot.lane.b32.xlu0 %v4568, 56
      %v5826 = vpop.permute.xlu0 %5825
      %5827 = vrot.lane.b32.xlu0 %v4569, 56
      %v5828 = vpop.permute.xlu0 %5827
      %5829 = vrot.lane.b32.xlu0 %v4570, 56
      %v5830 = vpop.permute.xlu0 %5829
      %5831 = vrot.lane.b32.xlu0 %v4571, 56
      %v5832 = vpop.permute.xlu0 %5831
      %5841 = vmatprep.subr.bf16.mxu0 0
      %5842 = vmatpush1.bf16.msra.mxu0 %v5832
      %5843 = vmatprep.subr.bf16.mxu0 0
      %5844 = vmatpush1.bf16.msra.mxu0 %v5830
      %5845 = vmatprep.subr.bf16.mxu0 0
      %5846 = vmatpush1.bf16.msra.mxu0 %v5828
      %5847 = vmatprep.subr.bf16.mxu0 0
      %5848 = vmatpush1.bf16.msra.mxu0 %v5826
      %5849 = vmatprep.subr.bf16.mxu0 0
      %5850 = vmatpush1.bf16.msra.mxu0 %v5824
      %5851 = vmatprep.subr.bf16.mxu0 0
      %5852 = vmatpush1.bf16.msra.mxu0 %v5822
      %5853 = vmatprep.subr.bf16.mxu0 0
      %5854 = vmatpush1.bf16.msra.mxu0 %v5820
      %5855 = vmatprep.subr.bf16.mxu0 0
      %5856 = vmatpush1.bf16.msra.mxu0 %v5818
      %5857 = vmatprep.subr.bf16.mxu0 0
      %5858 = vmatpush2.bf16.msra.mxu0 0
      %5859 = vmatprep.subr.bf16.mxu0 0
      %5860 = vmatpush2.bf16.msra.mxu0 0
      %5861 = vmatprep.subr.bf16.mxu0 0
      %5862 = vmatpush2.bf16.msra.mxu0 0
      %5863 = vmatprep.subr.bf16.mxu0 0
      %5864 = vmatpush2.bf16.msra.mxu0 0
      %5865 = vmatprep.subr.bf16.mxu0 0
      %5866 = vmatpush2.bf16.msra.mxu0 0
      %5867 = vmatprep.subr.bf16.mxu0 0
      %5868 = vmatpush2.bf16.msra.mxu0 0
      %5869 = vmatprep.subr.bf16.mxu0 0
      %5870 = vmatpush2.bf16.msra.mxu0 0
      %5871 = vmatprep.subr.bf16.mxu0 0
      %5872 = vmatpush2.bf16.msra.mxu0 0
      %5873 = vmatprep.mubr.bf16.mxu0 0
      %5874 = vmatmul.mubr.bf16.gmra.mxu0 %v5446
      %v5875 = vpop.f32.mrf.mxu0
      %v5876 = vadd.f32 0.0, %v5875
      %v5877 = vpop.f32.mrf.mxu0
      %v5878 = vpop.f32.mrf.mxu0
      %v5879 = vadd.f32 0.0, %v5878
      %v5880 = vpop.f32.mrf.mxu0
      %5881 = vmatprep.mubr.bf16.mxu0 0
      %5882 = vmatmul.mubr.bf16.gmra.mxu0 %v5447
      %v5883 = vpop.f32.mrf.mxu0
      %v5884 = vadd.f32 0.0, %v5883
      %v5885 = vpop.f32.mrf.mxu0
      %v5886 = vpop.f32.mrf.mxu0
      %v5887 = vadd.f32 0.0, %v5886
      %v5888 = vpop.f32.mrf.mxu0
      %5889 = vmatprep.mubr.bf16.mxu0 0
      %5890 = vmatmul.mubr.bf16.gmra.mxu0 %v5448
      %v5891 = vpop.f32.mrf.mxu0
      %v5892 = vadd.f32 0.0, %v5891
      %v5893 = vpop.f32.mrf.mxu0
      %v5894 = vpop.f32.mrf.mxu0
      %v5895 = vadd.f32 0.0, %v5894
      %v5896 = vpop.f32.mrf.mxu0
      %5897 = vmatprep.mubr.bf16.mxu0 0
      %5898 = vmatmul.mubr.bf16.gmra.mxu0 %v5449
      %v5899 = vpop.f32.mrf.mxu0
      %v5900 = vadd.f32 0.0, %v5899
      %v5901 = vpop.f32.mrf.mxu0
      %v5902 = vpop.f32.mrf.mxu0
      %v5903 = vadd.f32 0.0, %v5902
      %v5904 = vpop.f32.mrf.mxu0
      %5905 = vmatprep.mubr.bf16.mxu0 0
      %5906 = vmatmul.mubr.bf16.gmra.mxu0 %v5450
      %v5907 = vpop.f32.mrf.mxu0
      %v5908 = vadd.f32 0.0, %v5907
      %v5909 = vpop.f32.mrf.mxu0
      %v5910 = vpop.f32.mrf.mxu0
      %v5911 = vadd.f32 0.0, %v5910
      %v5912 = vpop.f32.mrf.mxu0
      %5913 = vmatprep.mubr.bf16.mxu0 0
      %5914 = vmatmul.mubr.bf16.gmra.mxu0 %v5451
      %v5915 = vpop.f32.mrf.mxu0
      %v5916 = vadd.f32 0.0, %v5915
      %v5917 = vpop.f32.mrf.mxu0
      %v5918 = vpop.f32.mrf.mxu0
      %v5919 = vadd.f32 0.0, %v5918
      %v5920 = vpop.f32.mrf.mxu0
      %5921 = vmatprep.mubr.bf16.mxu0 0
      %5922 = vmatmul.mubr.bf16.gmra.mxu0 %v5452
      %v5923 = vpop.f32.mrf.mxu0
      %v5924 = vadd.f32 0.0, %v5923
      %v5925 = vpop.f32.mrf.mxu0
      %v5926 = vpop.f32.mrf.mxu0
      %v5927 = vadd.f32 0.0, %v5926
      %v5928 = vpop.f32.mrf.mxu0
      %5929 = vmatprep.mubr.bf16.mxu0 0
      %5930 = vmatmul.mubr.bf16.gmra.mxu0 %v5453
      %v5931 = vpop.f32.mrf.mxu0
      %v5932 = vadd.f32 0.0, %v5931
      %v5933 = vpop.f32.mrf.mxu0
      %v5934 = vpop.f32.mrf.mxu0
      %v5935 = vadd.f32 0.0, %v5934
      %v5936 = vpop.f32.mrf.mxu0
      %5937 = vdwg.mxu0
      %v5938 = vld [vmem:[#allocation3] sm:$0xff]
      %v5939 = vld [vmem:[#allocation3 + $0x8] sm:$0xff]
      %v5940 = vld [vmem:[#allocation3 + $0x10] sm:$0xff]
      %v5941 = vld [vmem:[#allocation3 + $0x18] sm:$0xff]
      %v5942 = vld [vmem:[#allocation3 + $0x20] sm:$0xff]
      %v5943 = vld [vmem:[#allocation3 + $0x28] sm:$0xff]
      %v5944 = vld [vmem:[#allocation3 + $0x30] sm:$0xff]
      %v5945 = vld [vmem:[#allocation3 + $0x38] sm:$0xff]
      %v5946 = vld [vmem:[#allocation3 + $0x40] sm:$0xff]
      %v5947 = vld [vmem:[#allocation3 + $0x48] sm:$0xff]
      %v5948 = vld [vmem:[#allocation3 + $0x50] sm:$0xff]
      %v5949 = vld [vmem:[#allocation3 + $0x58] sm:$0xff]
      %v5950 = vld [vmem:[#allocation3 + $0x60] sm:$0xff]
      %v5951 = vld [vmem:[#allocation3 + $0x68] sm:$0xff]
      %v5952 = vld [vmem:[#allocation3 + $0x70] sm:$0xff]
      %v5953 = vld [vmem:[#allocation3 + $0x78] sm:$0xff]
      %v5954 = vld [vmem:[#allocation3 + $0x80] sm:$0xff]
      %v5955 = vld [vmem:[#allocation3 + $0x88] sm:$0xff]
      %v5956 = vld [vmem:[#allocation3 + $0x90] sm:$0xff]
      %v5957 = vld [vmem:[#allocation3 + $0x98] sm:$0xff]
      %v5958 = vld [vmem:[#allocation3 + $0xa0] sm:$0xff]
      %v5959 = vld [vmem:[#allocation3 + $0xa8] sm:$0xff]
      %v5960 = vld [vmem:[#allocation3 + $0xb0] sm:$0xff]
      %v5961 = vld [vmem:[#allocation3 + $0xb8] sm:$0xff]
      %v5962 = vld [vmem:[#allocation3 + $0xc0] sm:$0xff]
      %v5963 = vld [vmem:[#allocation3 + $0xc8] sm:$0xff]
      %v5964 = vld [vmem:[#allocation3 + $0xd0] sm:$0xff]
      %v5965 = vld [vmem:[#allocation3 + $0xd8] sm:$0xff]
      %v5966 = vld [vmem:[#allocation3 + $0xe0] sm:$0xff]
      %v5967 = vld [vmem:[#allocation3 + $0xe8] sm:$0xff]
      %v5968 = vld [vmem:[#allocation3 + $0xf0] sm:$0xff]
      %v5969 = vld [vmem:[#allocation3 + $0xf8] sm:$0xff]
      %v5970 = vld [vmem:[#allocation3 + $0x100] sm:$0xff]
      %v5971 = vld [vmem:[#allocation3 + $0x108] sm:$0xff]
      %v5972 = vld [vmem:[#allocation3 + $0x110] sm:$0xff]
      %v5973 = vld [vmem:[#allocation3 + $0x118] sm:$0xff]
      %v5974 = vld [vmem:[#allocation3 + $0x120] sm:$0xff]
      %v5975 = vld [vmem:[#allocation3 + $0x128] sm:$0xff]
      %v5976 = vld [vmem:[#allocation3 + $0x130] sm:$0xff]
      %v5977 = vld [vmem:[#allocation3 + $0x138] sm:$0xff]
      %v5978 = vld [vmem:[#allocation3 + $0x140] sm:$0xff]
      %v5979 = vld [vmem:[#allocation3 + $0x148] sm:$0xff]
      %v5980 = vld [vmem:[#allocation3 + $0x150] sm:$0xff]
      %v5981 = vld [vmem:[#allocation3 + $0x158] sm:$0xff]
      %v5982 = vld [vmem:[#allocation3 + $0x160] sm:$0xff]
      %v5983 = vld [vmem:[#allocation3 + $0x168] sm:$0xff]
      %v5984 = vld [vmem:[#allocation3 + $0x170] sm:$0xff]
      %v5985 = vld [vmem:[#allocation3 + $0x178] sm:$0xff]
      %v5986 = vld [vmem:[#allocation3 + $0x180] sm:$0xff]
      %v5987 = vld [vmem:[#allocation3 + $0x188] sm:$0xff]
      %v5988 = vld [vmem:[#allocation3 + $0x190] sm:$0xff]
      %v5989 = vld [vmem:[#allocation3 + $0x198] sm:$0xff]
      %v5990 = vld [vmem:[#allocation3 + $0x1a0] sm:$0xff]
      %v5991 = vld [vmem:[#allocation3 + $0x1a8] sm:$0xff]
      %v5992 = vld [vmem:[#allocation3 + $0x1b0] sm:$0xff]
      %v5993 = vld [vmem:[#allocation3 + $0x1b8] sm:$0xff]
      %v5994 = vld [vmem:[#allocation3 + $0x1c0] sm:$0xff]
      %v5995 = vld [vmem:[#allocation3 + $0x1c8] sm:$0xff]
      %v5996 = vld [vmem:[#allocation3 + $0x1d0] sm:$0xff]
      %v5997 = vld [vmem:[#allocation3 + $0x1d8] sm:$0xff]
      %v5998 = vld [vmem:[#allocation3 + $0x1e0] sm:$0xff]
      %v5999 = vld [vmem:[#allocation3 + $0x1e8] sm:$0xff]
      %v6000 = vld [vmem:[#allocation3 + $0x1f0] sm:$0xff]
      %v6001 = vld [vmem:[#allocation3 + $0x1f8] sm:$0xff]
      %v6002 = vpack.c.bf16 %v5516, %v5513
      %v6003 = vpack.c.bf16 %v5524, %v5521
      %v6004 = vpack.c.bf16 %v5532, %v5529
      %v6005 = vpack.c.bf16 %v5540, %v5537
      %v6006 = vpack.c.bf16 %v5548, %v5545
      %v6007 = vpack.c.bf16 %v5556, %v5553
      %v6008 = vpack.c.bf16 %v5564, %v5561
      %v6009 = vpack.c.bf16 %v5572, %v5569
      %v6010 = vpack.c.bf16 %v5637, %v5634
      %v6011 = vpack.c.bf16 %v5645, %v5642
      %v6012 = vpack.c.bf16 %v5653, %v5650
      %v6013 = vpack.c.bf16 %v5661, %v5658
      %v6014 = vpack.c.bf16 %v5669, %v5666
      %v6015 = vpack.c.bf16 %v5677, %v5674
      %v6016 = vpack.c.bf16 %v5685, %v5682
      %v6017 = vpack.c.bf16 %v5693, %v5690
      %v6018 = vpack.c.bf16 %v5758, %v5755
      %v6019 = vpack.c.bf16 %v5766, %v5763
      %v6020 = vpack.c.bf16 %v5774, %v5771
      %v6021 = vpack.c.bf16 %v5782, %v5779
      %v6022 = vpack.c.bf16 %v5790, %v5787
      %v6023 = vpack.c.bf16 %v5798, %v5795
      %v6024 = vpack.c.bf16 %v5806, %v5803
      %v6025 = vpack.c.bf16 %v5814, %v5811
      %v6026 = vpack.c.bf16 %v5879, %v5876
      %v6027 = vpack.c.bf16 %v5887, %v5884
      %v6028 = vpack.c.bf16 %v5895, %v5892
      %v6029 = vpack.c.bf16 %v5903, %v5900
      %v6030 = vpack.c.bf16 %v5911, %v5908
      %v6031 = vpack.c.bf16 %v5919, %v5916
      %v6032 = vpack.c.bf16 %v5927, %v5924
      %v6033 = vpack.c.bf16 %v5935, %v5932
      %v6034 = vld [vmem:[%s3 + $0x4] sm:$0xf]
      %v6036 = vsel %vm1266, %v6002, 0
      %v6039 = vsel %vm1266, %v6003, 0
      %v6042 = vsel %vm1266, %v6004, 0
      %v6045 = vsel %vm1266, %v6005, 0
      %v6048 = vsel %vm1266, %v6006, 0
      %v6051 = vsel %vm1266, %v6007, 0
      %v6054 = vsel %vm1266, %v6008, 0
      %v6057 = vsel %vm1266, %v6009, 0
      %v6060 = vsel %vm1266, %v6010, 0
      %v6063 = vsel %vm1266, %v6011, 0
      %v6066 = vsel %vm1266, %v6012, 0
      %v6069 = vsel %vm1266, %v6013, 0
      %v6072 = vsel %vm1266, %v6014, 0
      %v6075 = vsel %vm1266, %v6015, 0
      %v6078 = vsel %vm1266, %v6016, 0
      %v6081 = vsel %vm1266, %v6017, 0
      %v6084 = vsel %vm1266, %v6018, 0
      %v6087 = vsel %vm1266, %v6019, 0
      %v6090 = vsel %vm1266, %v6020, 0
      %v6093 = vsel %vm1266, %v6021, 0
      %v6096 = vsel %vm1266, %v6022, 0
      %v6099 = vsel %vm1266, %v6023, 0
      %v6102 = vsel %vm1266, %v6024, 0
      %v6105 = vsel %vm1266, %v6025, 0
      %v6108 = vsel %vm1266, %v6026, 0
      %v6111 = vsel %vm1266, %v6027, 0
      %v6114 = vsel %vm1266, %v6028, 0
      %v6117 = vsel %vm1266, %v6029, 0
      %v6120 = vsel %vm1266, %v6030, 0
      %v6123 = vsel %vm1266, %v6031, 0
      %v6126 = vsel %vm1266, %v6032, 0
      %v6129 = vsel %vm1266, %v6033, 0
      %v6132 = vsel %vm3396, %v6034, 0
      %6134 = vmatprep.subr.bf16.mxu0 0
      %6135 = vmatpush1.bf16.msra.mxu0 0
      %6136 = vmatprep.subr.bf16.mxu0 0
      %6137 = vmatpush1.bf16.msra.mxu0 0
      %6138 = vmatprep.subr.bf16.mxu0 0
      %6139 = vmatpush1.bf16.msra.mxu0 0
      %6140 = vmatprep.subr.bf16.mxu0 0
      %6141 = vmatpush1.bf16.msra.mxu0 0
      %6142 = vmatprep.subr.bf16.mxu0 0
      %6143 = vmatpush1.bf16.msra.mxu0 0
      %6144 = vmatprep.subr.bf16.mxu0 0
      %6145 = vmatpush1.bf16.msra.mxu0 0
      %6146 = vmatprep.subr.bf16.mxu0 0
      %6147 = vmatpush1.bf16.msra.mxu0 0
      %6148 = vmatprep.subr.bf16.mxu0 0
      %6149 = vmatpush1.bf16.msra.mxu0 %v6132
      %6150 = vmatprep.subr.bf16.mxu0 0
      %6151 = vmatpush2.bf16.msra.mxu0 0
      %6152 = vmatprep.subr.bf16.mxu0 0
      %6153 = vmatpush2.bf16.msra.mxu0 0
      %6154 = vmatprep.subr.bf16.mxu0 0
      %6155 = vmatpush2.bf16.msra.mxu0 0
      %6156 = vmatprep.subr.bf16.mxu0 0
      %6157 = vmatpush2.bf16.msra.mxu0 0
      %6158 = vmatprep.subr.bf16.mxu0 0
      %6159 = vmatpush2.bf16.msra.mxu0 0
      %6160 = vmatprep.subr.bf16.mxu0 0
      %6161 = vmatpush2.bf16.msra.mxu0 0
      %6162 = vmatprep.subr.bf16.mxu0 0
      %6163 = vmatpush2.bf16.msra.mxu0 0
      %6164 = vmatprep.subr.bf16.mxu0 0
      %6165 = vmatpush2.bf16.msra.mxu0 0
      %6166 = vmatprep.mubr.bf16.mxu0 0
      %6167 = vmatmul.mubr.bf16.gmra.mxu0 %v6036
      %v6168 = vpop.f32.mrf.mxu0
      %v6169 = vadd.f32 0.0, %v6168
      %v6170 = vpop.f32.mrf.mxu0
      %v6171 = vpop.f32.mrf.mxu0
      %v6172 = vadd.f32 0.0, %v6171
      %v6173 = vpop.f32.mrf.mxu0
      %6174 = vmatprep.mubr.bf16.mxu0 0
      %6175 = vmatmul.mubr.bf16.gmra.mxu0 %v6039
      %v6176 = vpop.f32.mrf.mxu0
      %v6177 = vadd.f32 0.0, %v6176
      %v6178 = vpop.f32.mrf.mxu0
      %v6179 = vpop.f32.mrf.mxu0
      %v6180 = vadd.f32 0.0, %v6179
      %v6181 = vpop.f32.mrf.mxu0
      %6182 = vmatprep.mubr.bf16.mxu0 0
      %6183 = vmatmul.mubr.bf16.gmra.mxu0 %v6042
      %v6184 = vpop.f32.mrf.mxu0
      %v6185 = vadd.f32 0.0, %v6184
      %v6186 = vpop.f32.mrf.mxu0
      %v6187 = vpop.f32.mrf.mxu0
      %v6188 = vadd.f32 0.0, %v6187
      %v6189 = vpop.f32.mrf.mxu0
      %6190 = vmatprep.mubr.bf16.mxu0 0
      %6191 = vmatmul.mubr.bf16.gmra.mxu0 %v6045
      %v6192 = vpop.f32.mrf.mxu0
      %v6193 = vadd.f32 0.0, %v6192
      %v6194 = vpop.f32.mrf.mxu0
      %v6195 = vpop.f32.mrf.mxu0
      %v6196 = vadd.f32 0.0, %v6195
      %v6197 = vpop.f32.mrf.mxu0
      %6198 = vmatprep.mubr.bf16.mxu0 0
      %6199 = vmatmul.mubr.bf16.gmra.mxu0 %v6048
      %v6200 = vpop.f32.mrf.mxu0
      %v6201 = vadd.f32 0.0, %v6200
      %v6202 = vpop.f32.mrf.mxu0
      %v6203 = vpop.f32.mrf.mxu0
      %v6204 = vadd.f32 0.0, %v6203
      %v6205 = vpop.f32.mrf.mxu0
      %6206 = vmatprep.mubr.bf16.mxu0 0
      %6207 = vmatmul.mubr.bf16.gmra.mxu0 %v6051
      %v6208 = vpop.f32.mrf.mxu0
      %v6209 = vadd.f32 0.0, %v6208
      %v6210 = vpop.f32.mrf.mxu0
      %v6211 = vpop.f32.mrf.mxu0
      %v6212 = vadd.f32 0.0, %v6211
      %v6213 = vpop.f32.mrf.mxu0
      %6214 = vmatprep.mubr.bf16.mxu0 0
      %6215 = vmatmul.mubr.bf16.gmra.mxu0 %v6054
      %v6216 = vpop.f32.mrf.mxu0
      %v6217 = vadd.f32 0.0, %v6216
      %v6218 = vpop.f32.mrf.mxu0
      %v6219 = vpop.f32.mrf.mxu0
      %v6220 = vadd.f32 0.0, %v6219
      %v6221 = vpop.f32.mrf.mxu0
      %6222 = vmatprep.mubr.bf16.mxu0 0
      %6223 = vmatmul.mubr.bf16.gmra.mxu0 %v6057
      %v6224 = vpop.f32.mrf.mxu0
      %v6225 = vadd.f32 0.0, %v6224
      %v6226 = vpop.f32.mrf.mxu0
      %v6227 = vpop.f32.mrf.mxu0
      %v6228 = vadd.f32 0.0, %v6227
      %v6229 = vpop.f32.mrf.mxu0
      %6230 = vmatprep.mubr.bf16.mxu0 0
      %6231 = vmatmul.mubr.bf16.gmra.mxu0 %v6060
      %v6232 = vpop.f32.mrf.mxu0
      %v6233 = vadd.f32 0.0, %v6232
      %v6234 = vpop.f32.mrf.mxu0
      %v6235 = vpop.f32.mrf.mxu0
      %v6236 = vadd.f32 0.0, %v6235
      %v6237 = vpop.f32.mrf.mxu0
      %6238 = vmatprep.mubr.bf16.mxu0 0
      %6239 = vmatmul.mubr.bf16.gmra.mxu0 %v6063
      %v6240 = vpop.f32.mrf.mxu0
      %v6241 = vadd.f32 0.0, %v6240
      %v6242 = vpop.f32.mrf.mxu0
      %v6243 = vpop.f32.mrf.mxu0
      %v6244 = vadd.f32 0.0, %v6243
      %v6245 = vpop.f32.mrf.mxu0
      %6246 = vmatprep.mubr.bf16.mxu0 0
      %6247 = vmatmul.mubr.bf16.gmra.mxu0 %v6066
      %v6248 = vpop.f32.mrf.mxu0
      %v6249 = vadd.f32 0.0, %v6248
      %v6250 = vpop.f32.mrf.mxu0
      %v6251 = vpop.f32.mrf.mxu0
      %v6252 = vadd.f32 0.0, %v6251
      %v6253 = vpop.f32.mrf.mxu0
      %6254 = vmatprep.mubr.bf16.mxu0 0
      %6255 = vmatmul.mubr.bf16.gmra.mxu0 %v6069
      %v6256 = vpop.f32.mrf.mxu0
      %v6257 = vadd.f32 0.0, %v6256
      %v6258 = vpop.f32.mrf.mxu0
      %v6259 = vpop.f32.mrf.mxu0
      %v6260 = vadd.f32 0.0, %v6259
      %v6261 = vpop.f32.mrf.mxu0
      %6262 = vmatprep.mubr.bf16.mxu0 0
      %6263 = vmatmul.mubr.bf16.gmra.mxu0 %v6072
      %v6264 = vpop.f32.mrf.mxu0
      %v6265 = vadd.f32 0.0, %v6264
      %v6266 = vpop.f32.mrf.mxu0
      %v6267 = vpop.f32.mrf.mxu0
      %v6268 = vadd.f32 0.0, %v6267
      %v6269 = vpop.f32.mrf.mxu0
      %6270 = vmatprep.mubr.bf16.mxu0 0
      %6271 = vmatmul.mubr.bf16.gmra.mxu0 %v6075
      %v6272 = vpop.f32.mrf.mxu0
      %v6273 = vadd.f32 0.0, %v6272
      %v6274 = vpop.f32.mrf.mxu0
      %v6275 = vpop.f32.mrf.mxu0
      %v6276 = vadd.f32 0.0, %v6275
      %v6277 = vpop.f32.mrf.mxu0
      %6278 = vmatprep.mubr.bf16.mxu0 0
      %6279 = vmatmul.mubr.bf16.gmra.mxu0 %v6078
      %v6280 = vpop.f32.mrf.mxu0
      %v6281 = vadd.f32 0.0, %v6280
      %v6282 = vpop.f32.mrf.mxu0
      %v6283 = vpop.f32.mrf.mxu0
      %v6284 = vadd.f32 0.0, %v6283
      %v6285 = vpop.f32.mrf.mxu0
      %6286 = vmatprep.mubr.bf16.mxu0 0
      %6287 = vmatmul.mubr.bf16.gmra.mxu0 %v6081
      %v6288 = vpop.f32.mrf.mxu0
      %v6289 = vadd.f32 0.0, %v6288
      %v6290 = vpop.f32.mrf.mxu0
      %v6291 = vpop.f32.mrf.mxu0
      %v6292 = vadd.f32 0.0, %v6291
      %v6293 = vpop.f32.mrf.mxu0
      %6294 = vmatprep.mubr.bf16.mxu0 0
      %6295 = vmatmul.mubr.bf16.gmra.mxu0 %v6084
      %v6296 = vpop.f32.mrf.mxu0
      %v6297 = vadd.f32 0.0, %v6296
      %v6298 = vpop.f32.mrf.mxu0
      %v6299 = vpop.f32.mrf.mxu0
      %v6300 = vadd.f32 0.0, %v6299
      %v6301 = vpop.f32.mrf.mxu0
      %6302 = vmatprep.mubr.bf16.mxu0 0
      %6303 = vmatmul.mubr.bf16.gmra.mxu0 %v6087
      %v6304 = vpop.f32.mrf.mxu0
      %v6305 = vadd.f32 0.0, %v6304
      %v6306 = vpop.f32.mrf.mxu0
      %v6307 = vpop.f32.mrf.mxu0
      %v6308 = vadd.f32 0.0, %v6307
      %v6309 = vpop.f32.mrf.mxu0
      %6310 = vmatprep.mubr.bf16.mxu0 0
      %6311 = vmatmul.mubr.bf16.gmra.mxu0 %v6090
      %v6312 = vpop.f32.mrf.mxu0
      %v6313 = vadd.f32 0.0, %v6312
      %v6314 = vpop.f32.mrf.mxu0
      %v6315 = vpop.f32.mrf.mxu0
      %v6316 = vadd.f32 0.0, %v6315
      %v6317 = vpop.f32.mrf.mxu0
      %6318 = vmatprep.mubr.bf16.mxu0 0
      %6319 = vmatmul.mubr.bf16.gmra.mxu0 %v6093
      %v6320 = vpop.f32.mrf.mxu0
      %v6321 = vadd.f32 0.0, %v6320
      %v6322 = vpop.f32.mrf.mxu0
      %v6323 = vpop.f32.mrf.mxu0
      %v6324 = vadd.f32 0.0, %v6323
      %v6325 = vpop.f32.mrf.mxu0
      %6326 = vmatprep.mubr.bf16.mxu0 0
      %6327 = vmatmul.mubr.bf16.gmra.mxu0 %v6096
      %v6328 = vpop.f32.mrf.mxu0
      %v6329 = vadd.f32 0.0, %v6328
      %v6330 = vpop.f32.mrf.mxu0
      %v6331 = vpop.f32.mrf.mxu0
      %v6332 = vadd.f32 0.0, %v6331
      %v6333 = vpop.f32.mrf.mxu0
      %6334 = vmatprep.mubr.bf16.mxu0 0
      %6335 = vmatmul.mubr.bf16.gmra.mxu0 %v6099
      %v6336 = vpop.f32.mrf.mxu0
      %v6337 = vadd.f32 0.0, %v6336
      %v6338 = vpop.f32.mrf.mxu0
      %v6339 = vpop.f32.mrf.mxu0
      %v6340 = vadd.f32 0.0, %v6339
      %v6341 = vpop.f32.mrf.mxu0
      %6342 = vmatprep.mubr.bf16.mxu0 0
      %6343 = vmatmul.mubr.bf16.gmra.mxu0 %v6102
      %v6344 = vpop.f32.mrf.mxu0
      %v6345 = vadd.f32 0.0, %v6344
      %v6346 = vpop.f32.mrf.mxu0
      %v6347 = vpop.f32.mrf.mxu0
      %v6348 = vadd.f32 0.0, %v6347
      %v6349 = vpop.f32.mrf.mxu0
      %6350 = vmatprep.mubr.bf16.mxu0 0
      %6351 = vmatmul.mubr.bf16.gmra.mxu0 %v6105
      %v6352 = vpop.f32.mrf.mxu0
      %v6353 = vadd.f32 0.0, %v6352
      %v6354 = vpop.f32.mrf.mxu0
      %v6355 = vpop.f32.mrf.mxu0
      %v6356 = vadd.f32 0.0, %v6355
      %v6357 = vpop.f32.mrf.mxu0
      %6358 = vmatprep.mubr.bf16.mxu0 0
      %6359 = vmatmul.mubr.bf16.gmra.mxu0 %v6108
      %v6360 = vpop.f32.mrf.mxu0
      %v6361 = vadd.f32 0.0, %v6360
      %v6362 = vpop.f32.mrf.mxu0
      %v6363 = vpop.f32.mrf.mxu0
      %v6364 = vadd.f32 0.0, %v6363
      %v6365 = vpop.f32.mrf.mxu0
      %6366 = vmatprep.mubr.bf16.mxu0 0
      %6367 = vmatmul.mubr.bf16.gmra.mxu0 %v6111
      %v6368 = vpop.f32.mrf.mxu0
      %v6369 = vadd.f32 0.0, %v6368
      %v6370 = vpop.f32.mrf.mxu0
      %v6371 = vpop.f32.mrf.mxu0
      %v6372 = vadd.f32 0.0, %v6371
      %v6373 = vpop.f32.mrf.mxu0
      %6374 = vmatprep.mubr.bf16.mxu0 0
      %6375 = vmatmul.mubr.bf16.gmra.mxu0 %v6114
      %v6376 = vpop.f32.mrf.mxu0
      %v6377 = vadd.f32 0.0, %v6376
      %v6378 = vpop.f32.mrf.mxu0
      %v6379 = vpop.f32.mrf.mxu0
      %v6380 = vadd.f32 0.0, %v6379
      %v6381 = vpop.f32.mrf.mxu0
      %6382 = vmatprep.mubr.bf16.mxu0 0
      %6383 = vmatmul.mubr.bf16.gmra.mxu0 %v6117
      %v6384 = vpop.f32.mrf.mxu0
      %v6385 = vadd.f32 0.0, %v6384
      %v6386 = vpop.f32.mrf.mxu0
      %v6387 = vpop.f32.mrf.mxu0
      %v6388 = vadd.f32 0.0, %v6387
      %v6389 = vpop.f32.mrf.mxu0
      %6390 = vmatprep.mubr.bf16.mxu0 0
      %6391 = vmatmul.mubr.bf16.gmra.mxu0 %v6120
      %v6392 = vpop.f32.mrf.mxu0
      %v6393 = vadd.f32 0.0, %v6392
      %v6394 = vpop.f32.mrf.mxu0
      %v6395 = vpop.f32.mrf.mxu0
      %v6396 = vadd.f32 0.0, %v6395
      %v6397 = vpop.f32.mrf.mxu0
      %6398 = vmatprep.mubr.bf16.mxu0 0
      %6399 = vmatmul.mubr.bf16.gmra.mxu0 %v6123
      %v6400 = vpop.f32.mrf.mxu0
      %v6401 = vadd.f32 0.0, %v6400
      %v6402 = vpop.f32.mrf.mxu0
      %v6403 = vpop.f32.mrf.mxu0
      %v6404 = vadd.f32 0.0, %v6403
      %v6405 = vpop.f32.mrf.mxu0
      %6406 = vmatprep.mubr.bf16.mxu0 0
      %6407 = vmatmul.mubr.bf16.gmra.mxu0 %v6126
      %v6408 = vpop.f32.mrf.mxu0
      %v6409 = vadd.f32 0.0, %v6408
      %v6410 = vpop.f32.mrf.mxu0
      %v6411 = vpop.f32.mrf.mxu0
      %v6412 = vadd.f32 0.0, %v6411
      %v6413 = vpop.f32.mrf.mxu0
      %6414 = vmatprep.mubr.bf16.mxu0 0
      %6415 = vmatmul.mubr.bf16.gmra.mxu0 %v6129
      %v6416 = vpop.f32.mrf.mxu0
      %v6417 = vadd.f32 0.0, %v6416
      %v6418 = vpop.f32.mrf.mxu0
      %v6419 = vpop.f32.mrf.mxu0
      %v6420 = vadd.f32 0.0, %v6419
      %v6421 = vpop.f32.mrf.mxu0
      %6422 = vdwg.mxu0
      %v6423 = vadd.f32 %v5938, %v6169
      %v6424 = vadd.f32 %v5939, %v6172
      %v6425 = vadd.f32 %v5940, %v6177
      %v6426 = vadd.f32 %v5941, %v6180
      %v6427 = vadd.f32 %v5942, %v6185
      %v6428 = vadd.f32 %v5943, %v6188
      %v6429 = vadd.f32 %v5944, %v6193
      %v6430 = vadd.f32 %v5945, %v6196
      %v6431 = vadd.f32 %v5946, %v6201
      %v6432 = vadd.f32 %v5947, %v6204
      %v6433 = vadd.f32 %v5948, %v6209
      %v6434 = vadd.f32 %v5949, %v6212
      %v6435 = vadd.f32 %v5950, %v6217
      %v6436 = vadd.f32 %v5951, %v6220
      %v6437 = vadd.f32 %v5952, %v6225
      %v6438 = vadd.f32 %v5953, %v6228
      %v6439 = vadd.f32 %v5954, %v6233
      %v6440 = vadd.f32 %v5955, %v6236
      %v6441 = vadd.f32 %v5956, %v6241
      %v6442 = vadd.f32 %v5957, %v6244
      %v6443 = vadd.f32 %v5958, %v6249
      %v6444 = vadd.f32 %v5959, %v6252
      %v6445 = vadd.f32 %v5960, %v6257
      %v6446 = vadd.f32 %v5961, %v6260
      %v6447 = vadd.f32 %v5962, %v6265
      %v6448 = vadd.f32 %v5963, %v6268
      %v6449 = vadd.f32 %v5964, %v6273
      %v6450 = vadd.f32 %v5965, %v6276
      %v6451 = vadd.f32 %v5966, %v6281
      %v6452 = vadd.f32 %v5967, %v6284
      %v6453 = vadd.f32 %v5968, %v6289
      %v6454 = vadd.f32 %v5969, %v6292
      %v6455 = vadd.f32 %v5970, %v6297
      %v6456 = vadd.f32 %v5971, %v6300
      %v6457 = vadd.f32 %v5972, %v6305
      %v6458 = vadd.f32 %v5973, %v6308
      %v6459 = vadd.f32 %v5974, %v6313
      %v6460 = vadd.f32 %v5975, %v6316
      %v6461 = vadd.f32 %v5976, %v6321
      %v6462 = vadd.f32 %v5977, %v6324
      %v6463 = vadd.f32 %v5978, %v6329
      %v6464 = vadd.f32 %v5979, %v6332
      %v6465 = vadd.f32 %v5980, %v6337
      %v6466 = vadd.f32 %v5981, %v6340
      %v6467 = vadd.f32 %v5982, %v6345
      %v6468 = vadd.f32 %v5983, %v6348
      %v6469 = vadd.f32 %v5984, %v6353
      %v6470 = vadd.f32 %v5985, %v6356
      %v6471 = vadd.f32 %v5986, %v6361
      %v6472 = vadd.f32 %v5987, %v6364
      %v6473 = vadd.f32 %v5988, %v6369
      %v6474 = vadd.f32 %v5989, %v6372
      %v6475 = vadd.f32 %v5990, %v6377
      %v6476 = vadd.f32 %v5991, %v6380
      %v6477 = vadd.f32 %v5992, %v6385
      %v6478 = vadd.f32 %v5993, %v6388
      %v6479 = vadd.f32 %v5994, %v6393
      %v6480 = vadd.f32 %v5995, %v6396
      %v6481 = vadd.f32 %v5996, %v6401
      %v6482 = vadd.f32 %v5997, %v6404
      %v6483 = vadd.f32 %v5998, %v6409
      %v6484 = vadd.f32 %v5999, %v6412
      %v6485 = vadd.f32 %v6000, %v6417
      %v6486 = vadd.f32 %v6001, %v6420
      %6487 = vst.msk [vmem:[#allocation3] sm:$0xff] %vm375, %v6423
      %6488 = vst.msk [vmem:[#allocation3 + $0x8] sm:$0xff] %vm375, %v6424
      %6489 = vst.msk [vmem:[#allocation3 + $0x10] sm:$0xff] %vm375, %v6425
      %6490 = vst.msk [vmem:[#allocation3 + $0x18] sm:$0xff] %vm375, %v6426
      %6491 = vst.msk [vmem:[#allocation3 + $0x20] sm:$0xff] %vm375, %v6427
      %6492 = vst.msk [vmem:[#allocation3 + $0x28] sm:$0xff] %vm375, %v6428
      %6493 = vst.msk [vmem:[#allocation3 + $0x30] sm:$0xff] %vm375, %v6429
      %6494 = vst.msk [vmem:[#allocation3 + $0x38] sm:$0xff] %vm375, %v6430
      %6495 = vst.msk [vmem:[#allocation3 + $0x40] sm:$0xff] %vm375, %v6431
      %6496 = vst.msk [vmem:[#allocation3 + $0x48] sm:$0xff] %vm375, %v6432
      %6497 = vst.msk [vmem:[#allocation3 + $0x50] sm:$0xff] %vm375, %v6433
      %6498 = vst.msk [vmem:[#allocation3 + $0x58] sm:$0xff] %vm375, %v6434
      %6499 = vst.msk [vmem:[#allocation3 + $0x60] sm:$0xff] %vm375, %v6435
      %6500 = vst.msk [vmem:[#allocation3 + $0x68] sm:$0xff] %vm375, %v6436
      %6501 = vst.msk [vmem:[#allocation3 + $0x70] sm:$0xff] %vm375, %v6437
      %6502 = vst.msk [vmem:[#allocation3 + $0x78] sm:$0xff] %vm375, %v6438
      %6503 = vst.msk [vmem:[#allocation3 + $0x80] sm:$0xff] %vm375, %v6439
      %6504 = vst.msk [vmem:[#allocation3 + $0x88] sm:$0xff] %vm375, %v6440
      %6505 = vst.msk [vmem:[#allocation3 + $0x90] sm:$0xff] %vm375, %v6441
      %6506 = vst.msk [vmem:[#allocation3 + $0x98] sm:$0xff] %vm375, %v6442
      %6507 = vst.msk [vmem:[#allocation3 + $0xa0] sm:$0xff] %vm375, %v6443
      %6508 = vst.msk [vmem:[#allocation3 + $0xa8] sm:$0xff] %vm375, %v6444
      %6509 = vst.msk [vmem:[#allocation3 + $0xb0] sm:$0xff] %vm375, %v6445
      %6510 = vst.msk [vmem:[#allocation3 + $0xb8] sm:$0xff] %vm375, %v6446
      %6511 = vst.msk [vmem:[#allocation3 + $0xc0] sm:$0xff] %vm375, %v6447
      %6512 = vst.msk [vmem:[#allocation3 + $0xc8] sm:$0xff] %vm375, %v6448
      %6513 = vst.msk [vmem:[#allocation3 + $0xd0] sm:$0xff] %vm375, %v6449
      %6514 = vst.msk [vmem:[#allocation3 + $0xd8] sm:$0xff] %vm375, %v6450
      %6515 = vst.msk [vmem:[#allocation3 + $0xe0] sm:$0xff] %vm375, %v6451
      %6516 = vst.msk [vmem:[#allocation3 + $0xe8] sm:$0xff] %vm375, %v6452
      %6517 = vst.msk [vmem:[#allocation3 + $0xf0] sm:$0xff] %vm375, %v6453
      %6518 = vst.msk [vmem:[#allocation3 + $0xf8] sm:$0xff] %vm375, %v6454
      %6519 = vst.msk [vmem:[#allocation3 + $0x100] sm:$0xff] %vm375, %v6455
      %6520 = vst.msk [vmem:[#allocation3 + $0x108] sm:$0xff] %vm375, %v6456
      %6521 = vst.msk [vmem:[#allocation3 + $0x110] sm:$0xff] %vm375, %v6457
      %6522 = vst.msk [vmem:[#allocation3 + $0x118] sm:$0xff] %vm375, %v6458
      %6523 = vst.msk [vmem:[#allocation3 + $0x120] sm:$0xff] %vm375, %v6459
      %6524 = vst.msk [vmem:[#allocation3 + $0x128] sm:$0xff] %vm375, %v6460
      %6525 = vst.msk [vmem:[#allocation3 + $0x130] sm:$0xff] %vm375, %v6461
      %6526 = vst.msk [vmem:[#allocation3 + $0x138] sm:$0xff] %vm375, %v6462
      %6527 = vst.msk [vmem:[#allocation3 + $0x140] sm:$0xff] %vm375, %v6463
      %6528 = vst.msk [vmem:[#allocation3 + $0x148] sm:$0xff] %vm375, %v6464
      %6529 = vst.msk [vmem:[#allocation3 + $0x150] sm:$0xff] %vm375, %v6465
      %6530 = vst.msk [vmem:[#allocation3 + $0x158] sm:$0xff] %vm375, %v6466
      %6531 = vst.msk [vmem:[#allocation3 + $0x160] sm:$0xff] %vm375, %v6467
      %6532 = vst.msk [vmem:[#allocation3 + $0x168] sm:$0xff] %vm375, %v6468
      %6533 = vst.msk [vmem:[#allocation3 + $0x170] sm:$0xff] %vm375, %v6469
      %6534 = vst.msk [vmem:[#allocation3 + $0x178] sm:$0xff] %vm375, %v6470
      %6535 = vst.msk [vmem:[#allocation3 + $0x180] sm:$0xff] %vm375, %v6471
      %6536 = vst.msk [vmem:[#allocation3 + $0x188] sm:$0xff] %vm375, %v6472
      %6537 = vst.msk [vmem:[#allocation3 + $0x190] sm:$0xff] %vm375, %v6473
      %6538 = vst.msk [vmem:[#allocation3 + $0x198] sm:$0xff] %vm375, %v6474
      %6539 = vst.msk [vmem:[#allocation3 + $0x1a0] sm:$0xff] %vm375, %v6475
      %6540 = vst.msk [vmem:[#allocation3 + $0x1a8] sm:$0xff] %vm375, %v6476
      %6541 = vst.msk [vmem:[#allocation3 + $0x1b0] sm:$0xff] %vm375, %v6477
      %6542 = vst.msk [vmem:[#allocation3 + $0x1b8] sm:$0xff] %vm375, %v6478
      %6543 = vst.msk [vmem:[#allocation3 + $0x1c0] sm:$0xff] %vm375, %v6479
      %6544 = vst.msk [vmem:[#allocation3 + $0x1c8] sm:$0xff] %vm375, %v6480
      %6545 = vst.msk [vmem:[#allocation3 + $0x1d0] sm:$0xff] %vm375, %v6481
      %6546 = vst.msk [vmem:[#allocation3 + $0x1d8] sm:$0xff] %vm375, %v6482
      %6547 = vst.msk [vmem:[#allocation3 + $0x1e0] sm:$0xff] %vm375, %v6483
      %6548 = vst.msk [vmem:[#allocation3 + $0x1e8] sm:$0xff] %vm375, %v6484
      %6549 = vst.msk [vmem:[#allocation3 + $0x1f0] sm:$0xff] %vm375, %v6485
      %6550 = vst.msk [vmem:[#allocation3 + $0x1f8] sm:$0xff] %vm375, %v6486
      %v6551 = vld [vmem:[#allocation2] sm:$0xf]
      %v6552 = vld [vmem:[#allocation2 + $0x4] sm:$0xf]
      %v6553 = vld [vmem:[#allocation2 + $0x8] sm:$0xf]
      %v6554 = vld [vmem:[#allocation2 + $0xc] sm:$0xf]
      %v6555 = vld [vmem:[#allocation2 + $0x10] sm:$0xf]
      %v6556 = vld [vmem:[#allocation2 + $0x14] sm:$0xf]
      %v6557 = vld [vmem:[#allocation2 + $0x18] sm:$0xf]
      %v6558 = vld [vmem:[#allocation2 + $0x1c] sm:$0xf]
      %v6559 = vld [vmem:[#allocation2 + $0x20] sm:$0xf]
      %v6560 = vld [vmem:[#allocation2 + $0x24] sm:$0xf]
      %v6561 = vld [vmem:[#allocation2 + $0x28] sm:$0xf]
      %v6562 = vld [vmem:[#allocation2 + $0x2c] sm:$0xf]
      %v6563 = vld [vmem:[#allocation2 + $0x30] sm:$0xf]
      %v6564 = vld [vmem:[#allocation2 + $0x34] sm:$0xf]
      %v6565 = vld [vmem:[#allocation2 + $0x38] sm:$0xf]
      %v6566 = vld [vmem:[#allocation2 + $0x3c] sm:$0xf]
      %v6567 = vld [vmem:[#allocation2 + $0x40] sm:$0xf]
      %v6568 = vld [vmem:[#allocation2 + $0x44] sm:$0xf]
      %v6569 = vld [vmem:[#allocation2 + $0x48] sm:$0xf]
      %v6570 = vld [vmem:[#allocation2 + $0x4c] sm:$0xf]
      %v6571 = vld [vmem:[#allocation2 + $0x50] sm:$0xf]
      %v6572 = vld [vmem:[#allocation2 + $0x54] sm:$0xf]
      %v6573 = vld [vmem:[#allocation2 + $0x58] sm:$0xf]
      %v6574 = vld [vmem:[#allocation2 + $0x5c] sm:$0xf]
      %v6575 = vld [vmem:[#allocation2 + $0x60] sm:$0xf]
      %v6576 = vld [vmem:[#allocation2 + $0x64] sm:$0xf]
      %v6577 = vld [vmem:[#allocation2 + $0x68] sm:$0xf]
      %v6578 = vld [vmem:[#allocation2 + $0x6c] sm:$0xf]
      %v6579 = vld [vmem:[#allocation2 + $0x70] sm:$0xf]
      %v6580 = vld [vmem:[#allocation2 + $0x74] sm:$0xf]
      %v6581 = vld [vmem:[#allocation2 + $0x78] sm:$0xf]
      %v6582 = vld [vmem:[#allocation2 + $0x7c] sm:$0xf]
      %v6583 = vld [vmem:[#allocation2 + $0x80] sm:$0xf]
      %v6584 = vld [vmem:[#allocation2 + $0x84] sm:$0xf]
      %v6585 = vld [vmem:[#allocation2 + $0x88] sm:$0xf]
      %v6586 = vld [vmem:[#allocation2 + $0x8c] sm:$0xf]
      %v6587 = vld [vmem:[#allocation2 + $0x90] sm:$0xf]
      %v6588 = vld [vmem:[#allocation2 + $0x94] sm:$0xf]
      %v6589 = vld [vmem:[#allocation2 + $0x98] sm:$0xf]
      %v6590 = vld [vmem:[#allocation2 + $0x9c] sm:$0xf]
      %v6591 = vld [vmem:[#allocation2 + $0xa0] sm:$0xf]
      %v6592 = vld [vmem:[#allocation2 + $0xa4] sm:$0xf]
      %v6593 = vld [vmem:[#allocation2 + $0xa8] sm:$0xf]
      %v6594 = vld [vmem:[#allocation2 + $0xac] sm:$0xf]
      %v6595 = vld [vmem:[#allocation2 + $0xb0] sm:$0xf]
      %v6596 = vld [vmem:[#allocation2 + $0xb4] sm:$0xf]
      %v6597 = vld [vmem:[#allocation2 + $0xb8] sm:$0xf]
      %v6598 = vld [vmem:[#allocation2 + $0xbc] sm:$0xf]
      %v6599 = vld [vmem:[#allocation2 + $0xc0] sm:$0xf]
      %v6600 = vld [vmem:[#allocation2 + $0xc4] sm:$0xf]
      %v6601 = vld [vmem:[#allocation2 + $0xc8] sm:$0xf]
      %v6602 = vld [vmem:[#allocation2 + $0xcc] sm:$0xf]
      %v6603 = vld [vmem:[#allocation2 + $0xd0] sm:$0xf]
      %v6604 = vld [vmem:[#allocation2 + $0xd4] sm:$0xf]
      %v6605 = vld [vmem:[#allocation2 + $0xd8] sm:$0xf]
      %v6606 = vld [vmem:[#allocation2 + $0xdc] sm:$0xf]
      %v6607 = vld [vmem:[#allocation2 + $0xe0] sm:$0xf]
      %v6608 = vld [vmem:[#allocation2 + $0xe4] sm:$0xf]
      %v6609 = vld [vmem:[#allocation2 + $0xe8] sm:$0xf]
      %v6610 = vld [vmem:[#allocation2 + $0xec] sm:$0xf]
      %v6611 = vld [vmem:[#allocation2 + $0xf0] sm:$0xf]
      %v6612 = vld [vmem:[#allocation2 + $0xf4] sm:$0xf]
      %v6613 = vld [vmem:[#allocation2 + $0xf8] sm:$0xf]
      %v6614 = vld [vmem:[#allocation2 + $0xfc] sm:$0xf]
      %v6631 = vunpack.c.l.b16 %v6551
      %v6632 = vunpack.c.l.b16 %v6552
      %v6633 = vunpack.c.l.b16 %v6553
      %v6634 = vunpack.c.l.b16 %v6554
      %v6635 = vunpack.c.l.b16 %v6555
      %v6636 = vunpack.c.l.b16 %v6556
      %v6637 = vunpack.c.l.b16 %v6557
      %v6638 = vunpack.c.l.b16 %v6558
      %v6639 = vunpack.c.l.b16 %v6559
      %v6640 = vunpack.c.l.b16 %v6560
      %v6641 = vunpack.c.l.b16 %v6561
      %v6642 = vunpack.c.l.b16 %v6562
      %v6643 = vunpack.c.l.b16 %v6563
      %v6644 = vunpack.c.l.b16 %v6564
      %v6645 = vunpack.c.l.b16 %v6565
      %v6646 = vunpack.c.l.b16 %v6566
      %v6647 = vpack.c.b16 %v6632, %v6631
      %v6648 = vpack.c.b16 %v6634, %v6633
      %v6649 = vpack.c.b16 %v6636, %v6635
      %v6650 = vpack.c.b16 %v6638, %v6637
      %v6651 = vpack.c.b16 %v6640, %v6639
      %v6652 = vpack.c.b16 %v6642, %v6641
      %v6653 = vpack.c.b16 %v6644, %v6643
      %v6654 = vpack.c.b16 %v6646, %v6645
      %6655 = vrot.lane.b32.xlu0 %v6647, 112
      %v6656 = vpop.permute.xlu0 %6655
      %6657 = vrot.lane.b32.xlu0 %v6648, 112
      %v6658 = vpop.permute.xlu0 %6657
      %6659 = vrot.lane.b32.xlu0 %v6649, 112
      %v6660 = vpop.permute.xlu0 %6659
      %6661 = vrot.lane.b32.xlu0 %v6650, 112
      %v6662 = vpop.permute.xlu0 %6661
      %6663 = vrot.lane.b32.xlu0 %v6651, 112
      %v6664 = vpop.permute.xlu0 %6663
      %6665 = vrot.lane.b32.xlu0 %v6652, 112
      %v6666 = vpop.permute.xlu0 %6665
      %6667 = vrot.lane.b32.xlu0 %v6653, 112
      %v6668 = vpop.permute.xlu0 %6667
      %6669 = vrot.lane.b32.xlu0 %v6654, 112
      %v6670 = vpop.permute.xlu0 %6669
      %6671 = vrot.lane.b32.xlu0 %v6647, 80
      %v6672 = vpop.permute.xlu0 %6671
      %6673 = vrot.lane.b32.xlu0 %v6648, 80
      %v6674 = vpop.permute.xlu0 %6673
      %6675 = vrot.lane.b32.xlu0 %v6649, 80
      %v6676 = vpop.permute.xlu0 %6675
      %6677 = vrot.lane.b32.xlu0 %v6650, 80
      %v6678 = vpop.permute.xlu0 %6677
      %6679 = vrot.lane.b32.xlu0 %v6651, 80
      %v6680 = vpop.permute.xlu0 %6679
      %6681 = vrot.lane.b32.xlu0 %v6652, 80
      %v6682 = vpop.permute.xlu0 %6681
      %6683 = vrot.lane.b32.xlu0 %v6653, 80
      %v6684 = vpop.permute.xlu0 %6683
      %6685 = vrot.lane.b32.xlu0 %v6654, 80
      %v6686 = vpop.permute.xlu0 %6685
      %v6688 = vsel %vm1266, %v6656, 0
      %v6691 = vsel %vm1266, %v6658, 0
      %v6694 = vsel %vm1266, %v6660, 0
      %v6697 = vsel %vm1266, %v6662, 0
      %v6700 = vsel %vm1266, %v6664, 0
      %v6703 = vsel %vm1266, %v6666, 0
      %v6706 = vsel %vm1266, %v6668, 0
      %v6709 = vsel %vm1266, %v6670, 0
      %v6712 = vsel %vm1266, %v6672, 0
      %v6715 = vsel %vm1266, %v6674, 0
      %v6718 = vsel %vm1266, %v6676, 0
      %v6721 = vsel %vm1266, %v6678, 0
      %v6724 = vsel %vm1266, %v6680, 0
      %v6727 = vsel %vm1266, %v6682, 0
      %v6730 = vsel %vm1266, %v6684, 0
      %v6733 = vsel %vm1266, %v6686, 0
      %6735 = vmatprep.subr.bf16.mxu0 0
      %6736 = vmatpush1.bf16.xpose.msra.mxu0 %v6733
      %6737 = vmatprep.subr.bf16.mxu0 0
      %6738 = vmatpush1.bf16.xpose.msra.mxu0 %v6730
      %6739 = vmatprep.subr.bf16.mxu0 0
      %6740 = vmatpush1.bf16.xpose.msra.mxu0 %v6727
      %6741 = vmatprep.subr.bf16.mxu0 0
      %6742 = vmatpush1.bf16.xpose.msra.mxu0 %v6724
      %6743 = vmatprep.subr.bf16.mxu0 0
      %6744 = vmatpush1.bf16.xpose.msra.mxu0 %v6721
      %6745 = vmatprep.subr.bf16.mxu0 0
      %6746 = vmatpush1.bf16.xpose.msra.mxu0 %v6718
      %6747 = vmatprep.subr.bf16.mxu0 0
      %6748 = vmatpush1.bf16.xpose.msra.mxu0 %v6715
      %6749 = vmatprep.subr.bf16.mxu0 0
      %6750 = vmatpush1.bf16.xpose.msra.mxu0 %v6712
      %6751 = vmatprep.subr.bf16.mxu0 0
      %6752 = vmatpush2.bf16.xpose.msra.mxu0 0
      %6753 = vmatprep.subr.bf16.mxu0 0
      %6754 = vmatpush2.bf16.xpose.msra.mxu0 0
      %6755 = vmatprep.subr.bf16.mxu0 0
      %6756 = vmatpush2.bf16.xpose.msra.mxu0 0
      %6757 = vmatprep.subr.bf16.mxu0 0
      %6758 = vmatpush2.bf16.xpose.msra.mxu0 0
      %6759 = vmatprep.subr.bf16.mxu0 0
      %6760 = vmatpush2.bf16.xpose.msra.mxu0 0
      %6761 = vmatprep.subr.bf16.mxu0 0
      %6762 = vmatpush2.bf16.xpose.msra.mxu0 0
      %6763 = vmatprep.subr.bf16.mxu0 0
      %6764 = vmatpush2.bf16.xpose.msra.mxu0 0
      %6765 = vmatprep.subr.bf16.mxu0 0
      %6766 = vmatpush2.bf16.xpose.msra.mxu0 0
      %6767 = vmatprep.mubr.bf16.mxu0 0
      %6768 = vmatmul.mubr.bf16.gmra.mxu0 %v6688
      %v6769 = vpop.f32.mrf.mxu0
      %v6770 = vadd.f32 0.0, %v6769
      %v6771 = vpop.f32.mrf.mxu0
      %v6772 = vpop.f32.mrf.mxu0
      %v6773 = vadd.f32 0.0, %v6772
      %v6774 = vpop.f32.mrf.mxu0
      %6775 = vmatprep.mubr.bf16.mxu0 0
      %6776 = vmatmul.mubr.bf16.gmra.mxu0 %v6691
      %v6777 = vpop.f32.mrf.mxu0
      %v6778 = vadd.f32 0.0, %v6777
      %v6779 = vpop.f32.mrf.mxu0
      %v6780 = vpop.f32.mrf.mxu0
      %v6781 = vadd.f32 0.0, %v6780
      %v6782 = vpop.f32.mrf.mxu0
      %6783 = vmatprep.mubr.bf16.mxu0 0
      %6784 = vmatmul.mubr.bf16.gmra.mxu0 %v6694
      %v6785 = vpop.f32.mrf.mxu0
      %v6786 = vadd.f32 0.0, %v6785
      %v6787 = vpop.f32.mrf.mxu0
      %v6788 = vpop.f32.mrf.mxu0
      %v6789 = vadd.f32 0.0, %v6788
      %v6790 = vpop.f32.mrf.mxu0
      %6791 = vmatprep.mubr.bf16.mxu0 0
      %6792 = vmatmul.mubr.bf16.gmra.mxu0 %v6697
      %v6793 = vpop.f32.mrf.mxu0
      %v6794 = vadd.f32 0.0, %v6793
      %v6795 = vpop.f32.mrf.mxu0
      %v6796 = vpop.f32.mrf.mxu0
      %v6797 = vadd.f32 0.0, %v6796
      %v6798 = vpop.f32.mrf.mxu0
      %6799 = vmatprep.mubr.bf16.mxu0 0
      %6800 = vmatmul.mubr.bf16.gmra.mxu0 %v6700
      %v6801 = vpop.f32.mrf.mxu0
      %v6802 = vadd.f32 0.0, %v6801
      %v6803 = vpop.f32.mrf.mxu0
      %v6804 = vpop.f32.mrf.mxu0
      %v6805 = vadd.f32 0.0, %v6804
      %v6806 = vpop.f32.mrf.mxu0
      %6807 = vmatprep.mubr.bf16.mxu0 0
      %6808 = vmatmul.mubr.bf16.gmra.mxu0 %v6703
      %v6809 = vpop.f32.mrf.mxu0
      %v6810 = vadd.f32 0.0, %v6809
      %v6811 = vpop.f32.mrf.mxu0
      %v6812 = vpop.f32.mrf.mxu0
      %v6813 = vadd.f32 0.0, %v6812
      %v6814 = vpop.f32.mrf.mxu0
      %6815 = vmatprep.mubr.bf16.mxu0 0
      %6816 = vmatmul.mubr.bf16.gmra.mxu0 %v6706
      %v6817 = vpop.f32.mrf.mxu0
      %v6818 = vadd.f32 0.0, %v6817
      %v6819 = vpop.f32.mrf.mxu0
      %v6820 = vpop.f32.mrf.mxu0
      %v6821 = vadd.f32 0.0, %v6820
      %v6822 = vpop.f32.mrf.mxu0
      %6823 = vmatprep.mubr.bf16.mxu0 0
      %6824 = vmatmul.mubr.bf16.gmra.mxu0 %v6709
      %v6825 = vpop.f32.mrf.mxu0
      %v6826 = vadd.f32 0.0, %v6825
      %v6827 = vpop.f32.mrf.mxu0
      %v6828 = vpop.f32.mrf.mxu0
      %v6829 = vadd.f32 0.0, %v6828
      %v6830 = vpop.f32.mrf.mxu0
      %6831 = vdwg.mxu0
      %v6848 = vunpack.c.l.b16 %v6567
      %v6849 = vunpack.c.l.b16 %v6568
      %v6850 = vunpack.c.l.b16 %v6569
      %v6851 = vunpack.c.l.b16 %v6570
      %v6852 = vunpack.c.l.b16 %v6571
      %v6853 = vunpack.c.l.b16 %v6572
      %v6854 = vunpack.c.l.b16 %v6573
      %v6855 = vunpack.c.l.b16 %v6574
      %v6856 = vunpack.c.l.b16 %v6575
      %v6857 = vunpack.c.l.b16 %v6576
      %v6858 = vunpack.c.l.b16 %v6577
      %v6859 = vunpack.c.l.b16 %v6578
      %v6860 = vunpack.c.l.b16 %v6579
      %v6861 = vunpack.c.l.b16 %v6580
      %v6862 = vunpack.c.l.b16 %v6581
      %v6863 = vunpack.c.l.b16 %v6582
      %v6864 = vpack.c.b16 %v6849, %v6848
      %v6865 = vpack.c.b16 %v6851, %v6850
      %v6866 = vpack.c.b16 %v6853, %v6852
      %v6867 = vpack.c.b16 %v6855, %v6854
      %v6868 = vpack.c.b16 %v6857, %v6856
      %v6869 = vpack.c.b16 %v6859, %v6858
      %v6870 = vpack.c.b16 %v6861, %v6860
      %v6871 = vpack.c.b16 %v6863, %v6862
      %6872 = vrot.lane.b32.xlu0 %v6864, 112
      %v6873 = vpop.permute.xlu0 %6872
      %6874 = vrot.lane.b32.xlu0 %v6865, 112
      %v6875 = vpop.permute.xlu0 %6874
      %6876 = vrot.lane.b32.xlu0 %v6866, 112
      %v6877 = vpop.permute.xlu0 %6876
      %6878 = vrot.lane.b32.xlu0 %v6867, 112
      %v6879 = vpop.permute.xlu0 %6878
      %6880 = vrot.lane.b32.xlu0 %v6868, 112
      %v6881 = vpop.permute.xlu0 %6880
      %6882 = vrot.lane.b32.xlu0 %v6869, 112
      %v6883 = vpop.permute.xlu0 %6882
      %6884 = vrot.lane.b32.xlu0 %v6870, 112
      %v6885 = vpop.permute.xlu0 %6884
      %6886 = vrot.lane.b32.xlu0 %v6871, 112
      %v6887 = vpop.permute.xlu0 %6886
      %6888 = vrot.lane.b32.xlu0 %v6864, 80
      %v6889 = vpop.permute.xlu0 %6888
      %6890 = vrot.lane.b32.xlu0 %v6865, 80
      %v6891 = vpop.permute.xlu0 %6890
      %6892 = vrot.lane.b32.xlu0 %v6866, 80
      %v6893 = vpop.permute.xlu0 %6892
      %6894 = vrot.lane.b32.xlu0 %v6867, 80
      %v6895 = vpop.permute.xlu0 %6894
      %6896 = vrot.lane.b32.xlu0 %v6868, 80
      %v6897 = vpop.permute.xlu0 %6896
      %6898 = vrot.lane.b32.xlu0 %v6869, 80
      %v6899 = vpop.permute.xlu0 %6898
      %6900 = vrot.lane.b32.xlu0 %v6870, 80
      %v6901 = vpop.permute.xlu0 %6900
      %6902 = vrot.lane.b32.xlu0 %v6871, 80
      %v6903 = vpop.permute.xlu0 %6902
      %v6905 = vsel %vm1266, %v6873, 0
      %v6908 = vsel %vm1266, %v6875, 0
      %v6911 = vsel %vm1266, %v6877, 0
      %v6914 = vsel %vm1266, %v6879, 0
      %v6917 = vsel %vm1266, %v6881, 0
      %v6920 = vsel %vm1266, %v6883, 0
      %v6923 = vsel %vm1266, %v6885, 0
      %v6926 = vsel %vm1266, %v6887, 0
      %v6929 = vsel %vm1266, %v6889, 0
      %v6932 = vsel %vm1266, %v6891, 0
      %v6935 = vsel %vm1266, %v6893, 0
      %v6938 = vsel %vm1266, %v6895, 0
      %v6941 = vsel %vm1266, %v6897, 0
      %v6944 = vsel %vm1266, %v6899, 0
      %v6947 = vsel %vm1266, %v6901, 0
      %v6950 = vsel %vm1266, %v6903, 0
      %6952 = vmatprep.subr.bf16.mxu0 0
      %6953 = vmatpush1.bf16.xpose.msra.mxu0 %v6950
      %6954 = vmatprep.subr.bf16.mxu0 0
      %6955 = vmatpush1.bf16.xpose.msra.mxu0 %v6947
      %6956 = vmatprep.subr.bf16.mxu0 0
      %6957 = vmatpush1.bf16.xpose.msra.mxu0 %v6944
      %6958 = vmatprep.subr.bf16.mxu0 0
      %6959 = vmatpush1.bf16.xpose.msra.mxu0 %v6941
      %6960 = vmatprep.subr.bf16.mxu0 0
      %6961 = vmatpush1.bf16.xpose.msra.mxu0 %v6938
      %6962 = vmatprep.subr.bf16.mxu0 0
      %6963 = vmatpush1.bf16.xpose.msra.mxu0 %v6935
      %6964 = vmatprep.subr.bf16.mxu0 0
      %6965 = vmatpush1.bf16.xpose.msra.mxu0 %v6932
      %6966 = vmatprep.subr.bf16.mxu0 0
      %6967 = vmatpush1.bf16.xpose.msra.mxu0 %v6929
      %6968 = vmatprep.subr.bf16.mxu0 0
      %6969 = vmatpush2.bf16.xpose.msra.mxu0 0
      %6970 = vmatprep.subr.bf16.mxu0 0
      %6971 = vmatpush2.bf16.xpose.msra.mxu0 0
      %6972 = vmatprep.subr.bf16.mxu0 0
      %6973 = vmatpush2.bf16.xpose.msra.mxu0 0
      %6974 = vmatprep.subr.bf16.mxu0 0
      %6975 = vmatpush2.bf16.xpose.msra.mxu0 0
      %6976 = vmatprep.subr.bf16.mxu0 0
      %6977 = vmatpush2.bf16.xpose.msra.mxu0 0
      %6978 = vmatprep.subr.bf16.mxu0 0
      %6979 = vmatpush2.bf16.xpose.msra.mxu0 0
      %6980 = vmatprep.subr.bf16.mxu0 0
      %6981 = vmatpush2.bf16.xpose.msra.mxu0 0
      %6982 = vmatprep.subr.bf16.mxu0 0
      %6983 = vmatpush2.bf16.xpose.msra.mxu0 0
      %6984 = vmatprep.mubr.bf16.mxu0 0
      %6985 = vmatmul.mubr.bf16.gmra.mxu0 %v6905
      %v6986 = vpop.f32.mrf.mxu0
      %v6987 = vadd.f32 0.0, %v6986
      %v6988 = vpop.f32.mrf.mxu0
      %v6989 = vpop.f32.mrf.mxu0
      %v6990 = vadd.f32 0.0, %v6989
      %v6991 = vpop.f32.mrf.mxu0
      %6992 = vmatprep.mubr.bf16.mxu0 0
      %6993 = vmatmul.mubr.bf16.gmra.mxu0 %v6908
      %v6994 = vpop.f32.mrf.mxu0
      %v6995 = vadd.f32 0.0, %v6994
      %v6996 = vpop.f32.mrf.mxu0
      %v6997 = vpop.f32.mrf.mxu0
      %v6998 = vadd.f32 0.0, %v6997
      %v6999 = vpop.f32.mrf.mxu0
      %7000 = vmatprep.mubr.bf16.mxu0 0
      %7001 = vmatmul.mubr.bf16.gmra.mxu0 %v6911
      %v7002 = vpop.f32.mrf.mxu0
      %v7003 = vadd.f32 0.0, %v7002
      %v7004 = vpop.f32.mrf.mxu0
      %v7005 = vpop.f32.mrf.mxu0
      %v7006 = vadd.f32 0.0, %v7005
      %v7007 = vpop.f32.mrf.mxu0
      %7008 = vmatprep.mubr.bf16.mxu0 0
      %7009 = vmatmul.mubr.bf16.gmra.mxu0 %v6914
      %v7010 = vpop.f32.mrf.mxu0
      %v7011 = vadd.f32 0.0, %v7010
      %v7012 = vpop.f32.mrf.mxu0
      %v7013 = vpop.f32.mrf.mxu0
      %v7014 = vadd.f32 0.0, %v7013
      %v7015 = vpop.f32.mrf.mxu0
      %7016 = vmatprep.mubr.bf16.mxu0 0
      %7017 = vmatmul.mubr.bf16.gmra.mxu0 %v6917
      %v7018 = vpop.f32.mrf.mxu0
      %v7019 = vadd.f32 0.0, %v7018
      %v7020 = vpop.f32.mrf.mxu0
      %v7021 = vpop.f32.mrf.mxu0
      %v7022 = vadd.f32 0.0, %v7021
      %v7023 = vpop.f32.mrf.mxu0
      %7024 = vmatprep.mubr.bf16.mxu0 0
      %7025 = vmatmul.mubr.bf16.gmra.mxu0 %v6920
      %v7026 = vpop.f32.mrf.mxu0
      %v7027 = vadd.f32 0.0, %v7026
      %v7028 = vpop.f32.mrf.mxu0
      %v7029 = vpop.f32.mrf.mxu0
      %v7030 = vadd.f32 0.0, %v7029
      %v7031 = vpop.f32.mrf.mxu0
      %7032 = vmatprep.mubr.bf16.mxu0 0
      %7033 = vmatmul.mubr.bf16.gmra.mxu0 %v6923
      %v7034 = vpop.f32.mrf.mxu0
      %v7035 = vadd.f32 0.0, %v7034
      %v7036 = vpop.f32.mrf.mxu0
      %v7037 = vpop.f32.mrf.mxu0
      %v7038 = vadd.f32 0.0, %v7037
      %v7039 = vpop.f32.mrf.mxu0
      %7040 = vmatprep.mubr.bf16.mxu0 0
      %7041 = vmatmul.mubr.bf16.gmra.mxu0 %v6926
      %v7042 = vpop.f32.mrf.mxu0
      %v7043 = vadd.f32 0.0, %v7042
      %v7044 = vpop.f32.mrf.mxu0
      %v7045 = vpop.f32.mrf.mxu0
      %v7046 = vadd.f32 0.0, %v7045
      %v7047 = vpop.f32.mrf.mxu0
      %7048 = vdwg.mxu0
      %v7065 = vunpack.c.l.b16 %v6583
      %v7066 = vunpack.c.l.b16 %v6584
      %v7067 = vunpack.c.l.b16 %v6585
      %v7068 = vunpack.c.l.b16 %v6586
      %v7069 = vunpack.c.l.b16 %v6587
      %v7070 = vunpack.c.l.b16 %v6588
      %v7071 = vunpack.c.l.b16 %v6589
      %v7072 = vunpack.c.l.b16 %v6590
      %v7073 = vunpack.c.l.b16 %v6591
      %v7074 = vunpack.c.l.b16 %v6592
      %v7075 = vunpack.c.l.b16 %v6593
      %v7076 = vunpack.c.l.b16 %v6594
      %v7077 = vunpack.c.l.b16 %v6595
      %v7078 = vunpack.c.l.b16 %v6596
      %v7079 = vunpack.c.l.b16 %v6597
      %v7080 = vunpack.c.l.b16 %v6598
      %v7081 = vpack.c.b16 %v7066, %v7065
      %v7082 = vpack.c.b16 %v7068, %v7067
      %v7083 = vpack.c.b16 %v7070, %v7069
      %v7084 = vpack.c.b16 %v7072, %v7071
      %v7085 = vpack.c.b16 %v7074, %v7073
      %v7086 = vpack.c.b16 %v7076, %v7075
      %v7087 = vpack.c.b16 %v7078, %v7077
      %v7088 = vpack.c.b16 %v7080, %v7079
      %7089 = vrot.lane.b32.xlu0 %v7081, 112
      %v7090 = vpop.permute.xlu0 %7089
      %7091 = vrot.lane.b32.xlu0 %v7082, 112
      %v7092 = vpop.permute.xlu0 %7091
      %7093 = vrot.lane.b32.xlu0 %v7083, 112
      %v7094 = vpop.permute.xlu0 %7093
      %7095 = vrot.lane.b32.xlu0 %v7084, 112
      %v7096 = vpop.permute.xlu0 %7095
      %7097 = vrot.lane.b32.xlu0 %v7085, 112
      %v7098 = vpop.permute.xlu0 %7097
      %7099 = vrot.lane.b32.xlu0 %v7086, 112
      %v7100 = vpop.permute.xlu0 %7099
      %7101 = vrot.lane.b32.xlu0 %v7087, 112
      %v7102 = vpop.permute.xlu0 %7101
      %7103 = vrot.lane.b32.xlu0 %v7088, 112
      %v7104 = vpop.permute.xlu0 %7103
      %7105 = vrot.lane.b32.xlu0 %v7081, 80
      %v7106 = vpop.permute.xlu0 %7105
      %7107 = vrot.lane.b32.xlu0 %v7082, 80
      %v7108 = vpop.permute.xlu0 %7107
      %7109 = vrot.lane.b32.xlu0 %v7083, 80
      %v7110 = vpop.permute.xlu0 %7109
      %7111 = vrot.lane.b32.xlu0 %v7084, 80
      %v7112 = vpop.permute.xlu0 %7111
      %7113 = vrot.lane.b32.xlu0 %v7085, 80
      %v7114 = vpop.permute.xlu0 %7113
      %7115 = vrot.lane.b32.xlu0 %v7086, 80
      %v7116 = vpop.permute.xlu0 %7115
      %7117 = vrot.lane.b32.xlu0 %v7087, 80
      %v7118 = vpop.permute.xlu0 %7117
      %7119 = vrot.lane.b32.xlu0 %v7088, 80
      %v7120 = vpop.permute.xlu0 %7119
      %v7122 = vsel %vm1266, %v7090, 0
      %v7125 = vsel %vm1266, %v7092, 0
      %v7128 = vsel %vm1266, %v7094, 0
      %v7131 = vsel %vm1266, %v7096, 0
      %v7134 = vsel %vm1266, %v7098, 0
      %v7137 = vsel %vm1266, %v7100, 0
      %v7140 = vsel %vm1266, %v7102, 0
      %v7143 = vsel %vm1266, %v7104, 0
      %v7146 = vsel %vm1266, %v7106, 0
      %v7149 = vsel %vm1266, %v7108, 0
      %v7152 = vsel %vm1266, %v7110, 0
      %v7155 = vsel %vm1266, %v7112, 0
      %v7158 = vsel %vm1266, %v7114, 0
      %v7161 = vsel %vm1266, %v7116, 0
      %v7164 = vsel %vm1266, %v7118, 0
      %v7167 = vsel %vm1266, %v7120, 0
      %7169 = vmatprep.subr.bf16.mxu0 0
      %7170 = vmatpush1.bf16.xpose.msra.mxu0 %v7167
      %7171 = vmatprep.subr.bf16.mxu0 0
      %7172 = vmatpush1.bf16.xpose.msra.mxu0 %v7164
      %7173 = vmatprep.subr.bf16.mxu0 0
      %7174 = vmatpush1.bf16.xpose.msra.mxu0 %v7161
      %7175 = vmatprep.subr.bf16.mxu0 0
      %7176 = vmatpush1.bf16.xpose.msra.mxu0 %v7158
      %7177 = vmatprep.subr.bf16.mxu0 0
      %7178 = vmatpush1.bf16.xpose.msra.mxu0 %v7155
      %7179 = vmatprep.subr.bf16.mxu0 0
      %7180 = vmatpush1.bf16.xpose.msra.mxu0 %v7152
      %7181 = vmatprep.subr.bf16.mxu0 0
      %7182 = vmatpush1.bf16.xpose.msra.mxu0 %v7149
      %7183 = vmatprep.subr.bf16.mxu0 0
      %7184 = vmatpush1.bf16.xpose.msra.mxu0 %v7146
      %7185 = vmatprep.subr.bf16.mxu0 0
      %7186 = vmatpush2.bf16.xpose.msra.mxu0 0
      %7187 = vmatprep.subr.bf16.mxu0 0
      %7188 = vmatpush2.bf16.xpose.msra.mxu0 0
      %7189 = vmatprep.subr.bf16.mxu0 0
      %7190 = vmatpush2.bf16.xpose.msra.mxu0 0
      %7191 = vmatprep.subr.bf16.mxu0 0
      %7192 = vmatpush2.bf16.xpose.msra.mxu0 0
      %7193 = vmatprep.subr.bf16.mxu0 0
      %7194 = vmatpush2.bf16.xpose.msra.mxu0 0
      %7195 = vmatprep.subr.bf16.mxu0 0
      %7196 = vmatpush2.bf16.xpose.msra.mxu0 0
      %7197 = vmatprep.subr.bf16.mxu0 0
      %7198 = vmatpush2.bf16.xpose.msra.mxu0 0
      %7199 = vmatprep.subr.bf16.mxu0 0
      %7200 = vmatpush2.bf16.xpose.msra.mxu0 0
      %7201 = vmatprep.mubr.bf16.mxu0 0
      %7202 = vmatmul.mubr.bf16.gmra.mxu0 %v7122
      %v7203 = vpop.f32.mrf.mxu0
      %v7204 = vadd.f32 0.0, %v7203
      %v7205 = vpop.f32.mrf.mxu0
      %v7206 = vpop.f32.mrf.mxu0
      %v7207 = vadd.f32 0.0, %v7206
      %v7208 = vpop.f32.mrf.mxu0
      %7209 = vmatprep.mubr.bf16.mxu0 0
      %7210 = vmatmul.mubr.bf16.gmra.mxu0 %v7125
      %v7211 = vpop.f32.mrf.mxu0
      %v7212 = vadd.f32 0.0, %v7211
      %v7213 = vpop.f32.mrf.mxu0
      %v7214 = vpop.f32.mrf.mxu0
      %v7215 = vadd.f32 0.0, %v7214
      %v7216 = vpop.f32.mrf.mxu0
      %7217 = vmatprep.mubr.bf16.mxu0 0
      %7218 = vmatmul.mubr.bf16.gmra.mxu0 %v7128
      %v7219 = vpop.f32.mrf.mxu0
      %v7220 = vadd.f32 0.0, %v7219
      %v7221 = vpop.f32.mrf.mxu0
      %v7222 = vpop.f32.mrf.mxu0
      %v7223 = vadd.f32 0.0, %v7222
      %v7224 = vpop.f32.mrf.mxu0
      %7225 = vmatprep.mubr.bf16.mxu0 0
      %7226 = vmatmul.mubr.bf16.gmra.mxu0 %v7131
      %v7227 = vpop.f32.mrf.mxu0
      %v7228 = vadd.f32 0.0, %v7227
      %v7229 = vpop.f32.mrf.mxu0
      %v7230 = vpop.f32.mrf.mxu0
      %v7231 = vadd.f32 0.0, %v7230
      %v7232 = vpop.f32.mrf.mxu0
      %7233 = vmatprep.mubr.bf16.mxu0 0
      %7234 = vmatmul.mubr.bf16.gmra.mxu0 %v7134
      %v7235 = vpop.f32.mrf.mxu0
      %v7236 = vadd.f32 0.0, %v7235
      %v7237 = vpop.f32.mrf.mxu0
      %v7238 = vpop.f32.mrf.mxu0
      %v7239 = vadd.f32 0.0, %v7238
      %v7240 = vpop.f32.mrf.mxu0
      %7241 = vmatprep.mubr.bf16.mxu0 0
      %7242 = vmatmul.mubr.bf16.gmra.mxu0 %v7137
      %v7243 = vpop.f32.mrf.mxu0
      %v7244 = vadd.f32 0.0, %v7243
      %v7245 = vpop.f32.mrf.mxu0
      %v7246 = vpop.f32.mrf.mxu0
      %v7247 = vadd.f32 0.0, %v7246
      %v7248 = vpop.f32.mrf.mxu0
      %7249 = vmatprep.mubr.bf16.mxu0 0
      %7250 = vmatmul.mubr.bf16.gmra.mxu0 %v7140
      %v7251 = vpop.f32.mrf.mxu0
      %v7252 = vadd.f32 0.0, %v7251
      %v7253 = vpop.f32.mrf.mxu0
      %v7254 = vpop.f32.mrf.mxu0
      %v7255 = vadd.f32 0.0, %v7254
      %v7256 = vpop.f32.mrf.mxu0
      %7257 = vmatprep.mubr.bf16.mxu0 0
      %7258 = vmatmul.mubr.bf16.gmra.mxu0 %v7143
      %v7259 = vpop.f32.mrf.mxu0
      %v7260 = vadd.f32 0.0, %v7259
      %v7261 = vpop.f32.mrf.mxu0
      %v7262 = vpop.f32.mrf.mxu0
      %v7263 = vadd.f32 0.0, %v7262
      %v7264 = vpop.f32.mrf.mxu0
      %7265 = vdwg.mxu0
      %v7282 = vunpack.c.l.b16 %v6599
      %v7283 = vunpack.c.l.b16 %v6600
      %v7284 = vunpack.c.l.b16 %v6601
      %v7285 = vunpack.c.l.b16 %v6602
      %v7286 = vunpack.c.l.b16 %v6603
      %v7287 = vunpack.c.l.b16 %v6604
      %v7288 = vunpack.c.l.b16 %v6605
      %v7289 = vunpack.c.l.b16 %v6606
      %v7290 = vunpack.c.l.b16 %v6607
      %v7291 = vunpack.c.l.b16 %v6608
      %v7292 = vunpack.c.l.b16 %v6609
      %v7293 = vunpack.c.l.b16 %v6610
      %v7294 = vunpack.c.l.b16 %v6611
      %v7295 = vunpack.c.l.b16 %v6612
      %v7296 = vunpack.c.l.b16 %v6613
      %v7297 = vunpack.c.l.b16 %v6614
      %v7298 = vpack.c.b16 %v7283, %v7282
      %v7299 = vpack.c.b16 %v7285, %v7284
      %v7300 = vpack.c.b16 %v7287, %v7286
      %v7301 = vpack.c.b16 %v7289, %v7288
      %v7302 = vpack.c.b16 %v7291, %v7290
      %v7303 = vpack.c.b16 %v7293, %v7292
      %v7304 = vpack.c.b16 %v7295, %v7294
      %v7305 = vpack.c.b16 %v7297, %v7296
      %7306 = vrot.lane.b32.xlu0 %v7298, 112
      %v7307 = vpop.permute.xlu0 %7306
      %7308 = vrot.lane.b32.xlu0 %v7299, 112
      %v7309 = vpop.permute.xlu0 %7308
      %7310 = vrot.lane.b32.xlu0 %v7300, 112
      %v7311 = vpop.permute.xlu0 %7310
      %7312 = vrot.lane.b32.xlu0 %v7301, 112
      %v7313 = vpop.permute.xlu0 %7312
      %7314 = vrot.lane.b32.xlu0 %v7302, 112
      %v7315 = vpop.permute.xlu0 %7314
      %7316 = vrot.lane.b32.xlu0 %v7303, 112
      %v7317 = vpop.permute.xlu0 %7316
      %7318 = vrot.lane.b32.xlu0 %v7304, 112
      %v7319 = vpop.permute.xlu0 %7318
      %7320 = vrot.lane.b32.xlu0 %v7305, 112
      %v7321 = vpop.permute.xlu0 %7320
      %7322 = vrot.lane.b32.xlu0 %v7298, 80
      %v7323 = vpop.permute.xlu0 %7322
      %7324 = vrot.lane.b32.xlu0 %v7299, 80
      %v7325 = vpop.permute.xlu0 %7324
      %7326 = vrot.lane.b32.xlu0 %v7300, 80
      %v7327 = vpop.permute.xlu0 %7326
      %7328 = vrot.lane.b32.xlu0 %v7301, 80
      %v7329 = vpop.permute.xlu0 %7328
      %7330 = vrot.lane.b32.xlu0 %v7302, 80
      %v7331 = vpop.permute.xlu0 %7330
      %7332 = vrot.lane.b32.xlu0 %v7303, 80
      %v7333 = vpop.permute.xlu0 %7332
      %7334 = vrot.lane.b32.xlu0 %v7304, 80
      %v7335 = vpop.permute.xlu0 %7334
      %7336 = vrot.lane.b32.xlu0 %v7305, 80
      %v7337 = vpop.permute.xlu0 %7336
      %v7339 = vsel %vm1266, %v7307, 0
      %v7342 = vsel %vm1266, %v7309, 0
      %v7345 = vsel %vm1266, %v7311, 0
      %v7348 = vsel %vm1266, %v7313, 0
      %v7351 = vsel %vm1266, %v7315, 0
      %v7354 = vsel %vm1266, %v7317, 0
      %v7357 = vsel %vm1266, %v7319, 0
      %v7360 = vsel %vm1266, %v7321, 0
      %v7363 = vsel %vm1266, %v7323, 0
      %v7366 = vsel %vm1266, %v7325, 0
      %v7369 = vsel %vm1266, %v7327, 0
      %v7372 = vsel %vm1266, %v7329, 0
      %v7375 = vsel %vm1266, %v7331, 0
      %v7378 = vsel %vm1266, %v7333, 0
      %v7381 = vsel %vm1266, %v7335, 0
      %v7384 = vsel %vm1266, %v7337, 0
      %7386 = vmatprep.subr.bf16.mxu0 0
      %7387 = vmatpush1.bf16.xpose.msra.mxu0 %v7384
      %7388 = vmatprep.subr.bf16.mxu0 0
      %7389 = vmatpush1.bf16.xpose.msra.mxu0 %v7381
      %7390 = vmatprep.subr.bf16.mxu0 0
      %7391 = vmatpush1.bf16.xpose.msra.mxu0 %v7378
      %7392 = vmatprep.subr.bf16.mxu0 0
      %7393 = vmatpush1.bf16.xpose.msra.mxu0 %v7375
      %7394 = vmatprep.subr.bf16.mxu0 0
      %7395 = vmatpush1.bf16.xpose.msra.mxu0 %v7372
      %7396 = vmatprep.subr.bf16.mxu0 0
      %7397 = vmatpush1.bf16.xpose.msra.mxu0 %v7369
      %7398 = vmatprep.subr.bf16.mxu0 0
      %7399 = vmatpush1.bf16.xpose.msra.mxu0 %v7366
      %7400 = vmatprep.subr.bf16.mxu0 0
      %7401 = vmatpush1.bf16.xpose.msra.mxu0 %v7363
      %7402 = vmatprep.subr.bf16.mxu0 0
      %7403 = vmatpush2.bf16.xpose.msra.mxu0 0
      %7404 = vmatprep.subr.bf16.mxu0 0
      %7405 = vmatpush2.bf16.xpose.msra.mxu0 0
      %7406 = vmatprep.subr.bf16.mxu0 0
      %7407 = vmatpush2.bf16.xpose.msra.mxu0 0
      %7408 = vmatprep.subr.bf16.mxu0 0
      %7409 = vmatpush2.bf16.xpose.msra.mxu0 0
      %7410 = vmatprep.subr.bf16.mxu0 0
      %7411 = vmatpush2.bf16.xpose.msra.mxu0 0
      %7412 = vmatprep.subr.bf16.mxu0 0
      %7413 = vmatpush2.bf16.xpose.msra.mxu0 0
      %7414 = vmatprep.subr.bf16.mxu0 0
      %7415 = vmatpush2.bf16.xpose.msra.mxu0 0
      %7416 = vmatprep.subr.bf16.mxu0 0
      %7417 = vmatpush2.bf16.xpose.msra.mxu0 0
      %7418 = vmatprep.mubr.bf16.mxu0 0
      %7419 = vmatmul.mubr.bf16.gmra.mxu0 %v7339
      %v7420 = vpop.f32.mrf.mxu0
      %v7421 = vadd.f32 0.0, %v7420
      %v7422 = vpop.f32.mrf.mxu0
      %v7423 = vpop.f32.mrf.mxu0
      %v7424 = vadd.f32 0.0, %v7423
      %v7425 = vpop.f32.mrf.mxu0
      %7426 = vmatprep.mubr.bf16.mxu0 0
      %7427 = vmatmul.mubr.bf16.gmra.mxu0 %v7342
      %v7428 = vpop.f32.mrf.mxu0
      %v7429 = vadd.f32 0.0, %v7428
      %v7430 = vpop.f32.mrf.mxu0
      %v7431 = vpop.f32.mrf.mxu0
      %v7432 = vadd.f32 0.0, %v7431
      %v7433 = vpop.f32.mrf.mxu0
      %7434 = vmatprep.mubr.bf16.mxu0 0
      %7435 = vmatmul.mubr.bf16.gmra.mxu0 %v7345
      %v7436 = vpop.f32.mrf.mxu0
      %v7437 = vadd.f32 0.0, %v7436
      %v7438 = vpop.f32.mrf.mxu0
      %v7439 = vpop.f32.mrf.mxu0
      %v7440 = vadd.f32 0.0, %v7439
      %v7441 = vpop.f32.mrf.mxu0
      %7442 = vmatprep.mubr.bf16.mxu0 0
      %7443 = vmatmul.mubr.bf16.gmra.mxu0 %v7348
      %v7444 = vpop.f32.mrf.mxu0
      %v7445 = vadd.f32 0.0, %v7444
      %v7446 = vpop.f32.mrf.mxu0
      %v7447 = vpop.f32.mrf.mxu0
      %v7448 = vadd.f32 0.0, %v7447
      %v7449 = vpop.f32.mrf.mxu0
      %7450 = vmatprep.mubr.bf16.mxu0 0
      %7451 = vmatmul.mubr.bf16.gmra.mxu0 %v7351
      %v7452 = vpop.f32.mrf.mxu0
      %v7453 = vadd.f32 0.0, %v7452
      %v7454 = vpop.f32.mrf.mxu0
      %v7455 = vpop.f32.mrf.mxu0
      %v7456 = vadd.f32 0.0, %v7455
      %v7457 = vpop.f32.mrf.mxu0
      %7458 = vmatprep.mubr.bf16.mxu0 0
      %7459 = vmatmul.mubr.bf16.gmra.mxu0 %v7354
      %v7460 = vpop.f32.mrf.mxu0
      %v7461 = vadd.f32 0.0, %v7460
      %v7462 = vpop.f32.mrf.mxu0
      %v7463 = vpop.f32.mrf.mxu0
      %v7464 = vadd.f32 0.0, %v7463
      %v7465 = vpop.f32.mrf.mxu0
      %7466 = vmatprep.mubr.bf16.mxu0 0
      %7467 = vmatmul.mubr.bf16.gmra.mxu0 %v7357
      %v7468 = vpop.f32.mrf.mxu0
      %v7469 = vadd.f32 0.0, %v7468
      %v7470 = vpop.f32.mrf.mxu0
      %v7471 = vpop.f32.mrf.mxu0
      %v7472 = vadd.f32 0.0, %v7471
      %v7473 = vpop.f32.mrf.mxu0
      %7474 = vmatprep.mubr.bf16.mxu0 0
      %7475 = vmatmul.mubr.bf16.gmra.mxu0 %v7360
      %v7476 = vpop.f32.mrf.mxu0
      %v7477 = vadd.f32 0.0, %v7476
      %v7478 = vpop.f32.mrf.mxu0
      %v7479 = vpop.f32.mrf.mxu0
      %v7480 = vadd.f32 0.0, %v7479
      %v7481 = vpop.f32.mrf.mxu0
      %7482 = vdwg.mxu0
      %s7483 = scalar_lea.vmem %s5, 512
      %v7484 = vld [vmem:[%s7483] sm:$0xff]
      %v7485 = vld [vmem:[%s7483 + $0x8] sm:$0xff]
      %v7486 = vld [vmem:[%s7483 + $0x10] sm:$0xff]
      %v7487 = vld [vmem:[%s7483 + $0x18] sm:$0xff]
      %v7488 = vld [vmem:[%s7483 + $0x20] sm:$0xff]
      %v7489 = vld [vmem:[%s7483 + $0x28] sm:$0xff]
      %v7490 = vld [vmem:[%s7483 + $0x30] sm:$0xff]
      %v7491 = vld [vmem:[%s7483 + $0x38] sm:$0xff]
      %v7492 = vld [vmem:[%s7483 + $0x40] sm:$0xff]
      %v7493 = vld [vmem:[%s7483 + $0x48] sm:$0xff]
      %v7494 = vld [vmem:[%s7483 + $0x50] sm:$0xff]
      %v7495 = vld [vmem:[%s7483 + $0x58] sm:$0xff]
      %v7496 = vld [vmem:[%s7483 + $0x60] sm:$0xff]
      %v7497 = vld [vmem:[%s7483 + $0x68] sm:$0xff]
      %v7498 = vld [vmem:[%s7483 + $0x70] sm:$0xff]
      %v7499 = vld [vmem:[%s7483 + $0x78] sm:$0xff]
      %v7500 = vld [vmem:[%s7483 + $0x80] sm:$0xff]
      %v7501 = vld [vmem:[%s7483 + $0x88] sm:$0xff]
      %v7502 = vld [vmem:[%s7483 + $0x90] sm:$0xff]
      %v7503 = vld [vmem:[%s7483 + $0x98] sm:$0xff]
      %v7504 = vld [vmem:[%s7483 + $0xa0] sm:$0xff]
      %v7505 = vld [vmem:[%s7483 + $0xa8] sm:$0xff]
      %v7506 = vld [vmem:[%s7483 + $0xb0] sm:$0xff]
      %v7507 = vld [vmem:[%s7483 + $0xb8] sm:$0xff]
      %v7508 = vld [vmem:[%s7483 + $0xc0] sm:$0xff]
      %v7509 = vld [vmem:[%s7483 + $0xc8] sm:$0xff]
      %v7510 = vld [vmem:[%s7483 + $0xd0] sm:$0xff]
      %v7511 = vld [vmem:[%s7483 + $0xd8] sm:$0xff]
      %v7512 = vld [vmem:[%s7483 + $0xe0] sm:$0xff]
      %v7513 = vld [vmem:[%s7483 + $0xe8] sm:$0xff]
      %v7514 = vld [vmem:[%s7483 + $0xf0] sm:$0xff]
      %v7515 = vld [vmem:[%s7483 + $0xf8] sm:$0xff]
      %v7516 = vadd.f32 %v6770, %v7484
      %v7517 = vadd.f32 %v6773, %v7485
      %v7518 = vadd.f32 %v6778, %v7486
      %v7519 = vadd.f32 %v6781, %v7487
      %v7520 = vadd.f32 %v6786, %v7488
      %v7521 = vadd.f32 %v6789, %v7489
      %v7522 = vadd.f32 %v6794, %v7490
      %v7523 = vadd.f32 %v6797, %v7491
      %v7524 = vadd.f32 %v6802, %v7492
      %v7525 = vadd.f32 %v6805, %v7493
      %v7526 = vadd.f32 %v6810, %v7494
      %v7527 = vadd.f32 %v6813, %v7495
      %v7528 = vadd.f32 %v6818, %v7496
      %v7529 = vadd.f32 %v6821, %v7497
      %v7530 = vadd.f32 %v6826, %v7498
      %v7531 = vadd.f32 %v6829, %v7499
      %v7532 = vadd.f32 %v6987, %v7500
      %v7533 = vadd.f32 %v6990, %v7501
      %v7534 = vadd.f32 %v6995, %v7502
      %v7535 = vadd.f32 %v6998, %v7503
      %v7536 = vadd.f32 %v7003, %v7504
      %v7537 = vadd.f32 %v7006, %v7505
      %v7538 = vadd.f32 %v7011, %v7506
      %v7539 = vadd.f32 %v7014, %v7507
      %v7540 = vadd.f32 %v7019, %v7508
      %v7541 = vadd.f32 %v7022, %v7509
      %v7542 = vadd.f32 %v7027, %v7510
      %v7543 = vadd.f32 %v7030, %v7511
      %v7544 = vadd.f32 %v7035, %v7512
      %v7545 = vadd.f32 %v7038, %v7513
      %v7546 = vadd.f32 %v7043, %v7514
      %v7547 = vadd.f32 %v7046, %v7515
      %v7548 = vadd.f32 %v7204, %v7484
      %v7549 = vadd.f32 %v7207, %v7485
      %v7550 = vadd.f32 %v7212, %v7486
      %v7551 = vadd.f32 %v7215, %v7487
      %v7552 = vadd.f32 %v7220, %v7488
      %v7553 = vadd.f32 %v7223, %v7489
      %v7554 = vadd.f32 %v7228, %v7490
      %v7555 = vadd.f32 %v7231, %v7491
      %v7556 = vadd.f32 %v7236, %v7492
      %v7557 = vadd.f32 %v7239, %v7493
      %v7558 = vadd.f32 %v7244, %v7494
      %v7559 = vadd.f32 %v7247, %v7495
      %v7560 = vadd.f32 %v7252, %v7496
      %v7561 = vadd.f32 %v7255, %v7497
      %v7562 = vadd.f32 %v7260, %v7498
      %v7563 = vadd.f32 %v7263, %v7499
      %v7564 = vadd.f32 %v7421, %v7500
      %v7565 = vadd.f32 %v7424, %v7501
      %v7566 = vadd.f32 %v7429, %v7502
      %v7567 = vadd.f32 %v7432, %v7503
      %v7568 = vadd.f32 %v7437, %v7504
      %v7569 = vadd.f32 %v7440, %v7505
      %v7570 = vadd.f32 %v7445, %v7506
      %v7571 = vadd.f32 %v7448, %v7507
      %v7572 = vadd.f32 %v7453, %v7508
      %v7573 = vadd.f32 %v7456, %v7509
      %v7574 = vadd.f32 %v7461, %v7510
      %v7575 = vadd.f32 %v7464, %v7511
      %v7576 = vadd.f32 %v7469, %v7512
      %v7577 = vadd.f32 %v7472, %v7513
      %v7578 = vadd.f32 %v7477, %v7514
      %v7579 = vadd.f32 %v7480, %v7515
      %7580 = vmax.xlane.f32.xlu0 %v7516
      %v7581 = vpop.xlane.xlu0 %7580
      %7582 = vmax.xlane.f32.xlu0 %v7517
      %v7583 = vpop.xlane.xlu0 %7582
      %7584 = vmax.xlane.f32.xlu0 %v7518
      %v7585 = vpop.xlane.xlu0 %7584
      %7586 = vmax.xlane.f32.xlu0 %v7519
      %v7587 = vpop.xlane.xlu0 %7586
      %7588 = vmax.xlane.f32.xlu0 %v7520
      %v7589 = vpop.xlane.xlu0 %7588
      %7590 = vmax.xlane.f32.xlu0 %v7521
      %v7591 = vpop.xlane.xlu0 %7590
      %7592 = vmax.xlane.f32.xlu0 %v7522
      %v7593 = vpop.xlane.xlu0 %7592
      %7594 = vmax.xlane.f32.xlu0 %v7523
      %v7595 = vpop.xlane.xlu0 %7594
      %7596 = vmax.xlane.f32.xlu0 %v7524
      %v7597 = vpop.xlane.xlu0 %7596
      %7598 = vmax.xlane.f32.xlu0 %v7525
      %v7599 = vpop.xlane.xlu0 %7598
      %7600 = vmax.xlane.f32.xlu0 %v7526
      %v7601 = vpop.xlane.xlu0 %7600
      %7602 = vmax.xlane.f32.xlu0 %v7527
      %v7603 = vpop.xlane.xlu0 %7602
      %7604 = vmax.xlane.f32.xlu0 %v7528
      %v7605 = vpop.xlane.xlu0 %7604
      %7606 = vmax.xlane.f32.xlu0 %v7529
      %v7607 = vpop.xlane.xlu0 %7606
      %7608 = vmax.xlane.f32.xlu0 %v7530
      %v7609 = vpop.xlane.xlu0 %7608
      %7610 = vmax.xlane.f32.xlu0 %v7531
      %v7611 = vpop.xlane.xlu0 %7610
      %7612 = vmax.xlane.f32.xlu0 %v7532
      %v7613 = vpop.xlane.xlu0 %7612
      %7614 = vmax.xlane.f32.xlu0 %v7533
      %v7615 = vpop.xlane.xlu0 %7614
      %7616 = vmax.xlane.f32.xlu0 %v7534
      %v7617 = vpop.xlane.xlu0 %7616
      %7618 = vmax.xlane.f32.xlu0 %v7535
      %v7619 = vpop.xlane.xlu0 %7618
      %7620 = vmax.xlane.f32.xlu0 %v7536
      %v7621 = vpop.xlane.xlu0 %7620
      %7622 = vmax.xlane.f32.xlu0 %v7537
      %v7623 = vpop.xlane.xlu0 %7622
      %7624 = vmax.xlane.f32.xlu0 %v7538
      %v7625 = vpop.xlane.xlu0 %7624
      %7626 = vmax.xlane.f32.xlu0 %v7539
      %v7627 = vpop.xlane.xlu0 %7626
      %7628 = vmax.xlane.f32.xlu0 %v7540
      %v7629 = vpop.xlane.xlu0 %7628
      %7630 = vmax.xlane.f32.xlu0 %v7541
      %v7631 = vpop.xlane.xlu0 %7630
      %7632 = vmax.xlane.f32.xlu0 %v7542
      %v7633 = vpop.xlane.xlu0 %7632
      %7634 = vmax.xlane.f32.xlu0 %v7543
      %v7635 = vpop.xlane.xlu0 %7634
      %7636 = vmax.xlane.f32.xlu0 %v7544
      %v7637 = vpop.xlane.xlu0 %7636
      %7638 = vmax.xlane.f32.xlu0 %v7545
      %v7639 = vpop.xlane.xlu0 %7638
      %7640 = vmax.xlane.f32.xlu0 %v7546
      %v7641 = vpop.xlane.xlu0 %7640
      %7642 = vmax.xlane.f32.xlu0 %v7547
      %v7643 = vpop.xlane.xlu0 %7642
      %7644 = vmax.xlane.f32.xlu0 %v7548
      %v7645 = vpop.xlane.xlu0 %7644
      %7646 = vmax.xlane.f32.xlu0 %v7549
      %v7647 = vpop.xlane.xlu0 %7646
      %7648 = vmax.xlane.f32.xlu0 %v7550
      %v7649 = vpop.xlane.xlu0 %7648
      %7650 = vmax.xlane.f32.xlu0 %v7551
      %v7651 = vpop.xlane.xlu0 %7650
      %7652 = vmax.xlane.f32.xlu0 %v7552
      %v7653 = vpop.xlane.xlu0 %7652
      %7654 = vmax.xlane.f32.xlu0 %v7553
      %v7655 = vpop.xlane.xlu0 %7654
      %7656 = vmax.xlane.f32.xlu0 %v7554
      %v7657 = vpop.xlane.xlu0 %7656
      %7658 = vmax.xlane.f32.xlu0 %v7555
      %v7659 = vpop.xlane.xlu0 %7658
      %7660 = vmax.xlane.f32.xlu0 %v7556
      %v7661 = vpop.xlane.xlu0 %7660
      %7662 = vmax.xlane.f32.xlu0 %v7557
      %v7663 = vpop.xlane.xlu0 %7662
      %7664 = vmax.xlane.f32.xlu0 %v7558
      %v7665 = vpop.xlane.xlu0 %7664
      %7666 = vmax.xlane.f32.xlu0 %v7559
      %v7667 = vpop.xlane.xlu0 %7666
      %7668 = vmax.xlane.f32.xlu0 %v7560
      %v7669 = vpop.xlane.xlu0 %7668
      %7670 = vmax.xlane.f32.xlu0 %v7561
      %v7671 = vpop.xlane.xlu0 %7670
      %7672 = vmax.xlane.f32.xlu0 %v7562
      %v7673 = vpop.xlane.xlu0 %7672
      %7674 = vmax.xlane.f32.xlu0 %v7563
      %v7675 = vpop.xlane.xlu0 %7674
      %7676 = vmax.xlane.f32.xlu0 %v7564
      %v7677 = vpop.xlane.xlu0 %7676
      %7678 = vmax.xlane.f32.xlu0 %v7565
      %v7679 = vpop.xlane.xlu0 %7678
      %7680 = vmax.xlane.f32.xlu0 %v7566
      %v7681 = vpop.xlane.xlu0 %7680
      %7682 = vmax.xlane.f32.xlu0 %v7567
      %v7683 = vpop.xlane.xlu0 %7682
      %7684 = vmax.xlane.f32.xlu0 %v7568
      %v7685 = vpop.xlane.xlu0 %7684
      %7686 = vmax.xlane.f32.xlu0 %v7569
      %v7687 = vpop.xlane.xlu0 %7686
      %7688 = vmax.xlane.f32.xlu0 %v7570
      %v7689 = vpop.xlane.xlu0 %7688
      %7690 = vmax.xlane.f32.xlu0 %v7571
      %v7691 = vpop.xlane.xlu0 %7690
      %7692 = vmax.xlane.f32.xlu0 %v7572
      %v7693 = vpop.xlane.xlu0 %7692
      %7694 = vmax.xlane.f32.xlu0 %v7573
      %v7695 = vpop.xlane.xlu0 %7694
      %7696 = vmax.xlane.f32.xlu0 %v7574
      %v7697 = vpop.xlane.xlu0 %7696
      %7698 = vmax.xlane.f32.xlu0 %v7575
      %v7699 = vpop.xlane.xlu0 %7698
      %7700 = vmax.xlane.f32.xlu0 %v7576
      %v7701 = vpop.xlane.xlu0 %7700
      %7702 = vmax.xlane.f32.xlu0 %v7577
      %v7703 = vpop.xlane.xlu0 %7702
      %7704 = vmax.xlane.f32.xlu0 %v7578
      %v7705 = vpop.xlane.xlu0 %7704
      %7706 = vmax.xlane.f32.xlu0 %v7579
      %v7707 = vpop.xlane.xlu0 %7706
      %v7708 = vsub.f32 %v7516, %v7581
      %v7709 = vsub.f32 %v7517, %v7583
      %v7710 = vsub.f32 %v7518, %v7585
      %v7711 = vsub.f32 %v7519, %v7587
      %v7712 = vsub.f32 %v7520, %v7589
      %v7713 = vsub.f32 %v7521, %v7591
      %v7714 = vsub.f32 %v7522, %v7593
      %v7715 = vsub.f32 %v7523, %v7595
      %v7716 = vsub.f32 %v7524, %v7597
      %v7717 = vsub.f32 %v7525, %v7599
      %v7718 = vsub.f32 %v7526, %v7601
      %v7719 = vsub.f32 %v7527, %v7603
      %v7720 = vsub.f32 %v7528, %v7605
      %v7721 = vsub.f32 %v7529, %v7607
      %v7722 = vsub.f32 %v7530, %v7609
      %v7723 = vsub.f32 %v7531, %v7611
      %v7724 = vsub.f32 %v7532, %v7613
      %v7725 = vsub.f32 %v7533, %v7615
      %v7726 = vsub.f32 %v7534, %v7617
      %v7727 = vsub.f32 %v7535, %v7619
      %v7728 = vsub.f32 %v7536, %v7621
      %v7729 = vsub.f32 %v7537, %v7623
      %v7730 = vsub.f32 %v7538, %v7625
      %v7731 = vsub.f32 %v7539, %v7627
      %v7732 = vsub.f32 %v7540, %v7629
      %v7733 = vsub.f32 %v7541, %v7631
      %v7734 = vsub.f32 %v7542, %v7633
      %v7735 = vsub.f32 %v7543, %v7635
      %v7736 = vsub.f32 %v7544, %v7637
      %v7737 = vsub.f32 %v7545, %v7639
      %v7738 = vsub.f32 %v7546, %v7641
      %v7739 = vsub.f32 %v7547, %v7643
      %v7740 = vsub.f32 %v7548, %v7645
      %v7741 = vsub.f32 %v7549, %v7647
      %v7742 = vsub.f32 %v7550, %v7649
      %v7743 = vsub.f32 %v7551, %v7651
      %v7744 = vsub.f32 %v7552, %v7653
      %v7745 = vsub.f32 %v7553, %v7655
      %v7746 = vsub.f32 %v7554, %v7657
      %v7747 = vsub.f32 %v7555, %v7659
      %v7748 = vsub.f32 %v7556, %v7661
      %v7749 = vsub.f32 %v7557, %v7663
      %v7750 = vsub.f32 %v7558, %v7665
      %v7751 = vsub.f32 %v7559, %v7667
      %v7752 = vsub.f32 %v7560, %v7669
      %v7753 = vsub.f32 %v7561, %v7671
      %v7754 = vsub.f32 %v7562, %v7673
      %v7755 = vsub.f32 %v7563, %v7675
      %v7756 = vsub.f32 %v7564, %v7677
      %v7757 = vsub.f32 %v7565, %v7679
      %v7758 = vsub.f32 %v7566, %v7681
      %v7759 = vsub.f32 %v7567, %v7683
      %v7760 = vsub.f32 %v7568, %v7685
      %v7761 = vsub.f32 %v7569, %v7687
      %v7762 = vsub.f32 %v7570, %v7689
      %v7763 = vsub.f32 %v7571, %v7691
      %v7764 = vsub.f32 %v7572, %v7693
      %v7765 = vsub.f32 %v7573, %v7695
      %v7766 = vsub.f32 %v7574, %v7697
      %v7767 = vsub.f32 %v7575, %v7699
      %v7768 = vsub.f32 %v7576, %v7701
      %v7769 = vsub.f32 %v7577, %v7703
      %v7770 = vsub.f32 %v7578, %v7705
      %v7771 = vsub.f32 %v7579, %v7707
      %v7772 = vmul.f32 %v7708, 1.442695
      %v7773 = vpow.pop %v7772
      %v7774 = vmul.f32 %v7709, 1.442695
      %v7775 = vpow.pop %v7774
      %v7776 = vmul.f32 %v7710, 1.442695
      %v7777 = vpow.pop %v7776
      %v7778 = vmul.f32 %v7711, 1.442695
      %v7779 = vpow.pop %v7778
      %v7780 = vmul.f32 %v7712, 1.442695
      %v7781 = vpow.pop %v7780
      %v7782 = vmul.f32 %v7713, 1.442695
      %v7783 = vpow.pop %v7782
      %v7784 = vmul.f32 %v7714, 1.442695
      %v7785 = vpow.pop %v7784
      %v7786 = vmul.f32 %v7715, 1.442695
      %v7787 = vpow.pop %v7786
      %v7788 = vmul.f32 %v7716, 1.442695
      %v7789 = vpow.pop %v7788
      %v7790 = vmul.f32 %v7717, 1.442695
      %v7791 = vpow.pop %v7790
      %v7792 = vmul.f32 %v7718, 1.442695
      %v7793 = vpow.pop %v7792
      %v7794 = vmul.f32 %v7719, 1.442695
      %v7795 = vpow.pop %v7794
      %v7796 = vmul.f32 %v7720, 1.442695
      %v7797 = vpow.pop %v7796
      %v7798 = vmul.f32 %v7721, 1.442695
      %v7799 = vpow.pop %v7798
      %v7800 = vmul.f32 %v7722, 1.442695
      %v7801 = vpow.pop %v7800
      %v7802 = vmul.f32 %v7723, 1.442695
      %v7803 = vpow.pop %v7802
      %v7804 = vmul.f32 %v7724, 1.442695
      %v7805 = vpow.pop %v7804
      %v7806 = vmul.f32 %v7725, 1.442695
      %v7807 = vpow.pop %v7806
      %v7808 = vmul.f32 %v7726, 1.442695
      %v7809 = vpow.pop %v7808
      %v7810 = vmul.f32 %v7727, 1.442695
      %v7811 = vpow.pop %v7810
      %v7812 = vmul.f32 %v7728, 1.442695
      %v7813 = vpow.pop %v7812
      %v7814 = vmul.f32 %v7729, 1.442695
      %v7815 = vpow.pop %v7814
      %v7816 = vmul.f32 %v7730, 1.442695
      %v7817 = vpow.pop %v7816
      %v7818 = vmul.f32 %v7731, 1.442695
      %v7819 = vpow.pop %v7818
      %v7820 = vmul.f32 %v7732, 1.442695
      %v7821 = vpow.pop %v7820
      %v7822 = vmul.f32 %v7733, 1.442695
      %v7823 = vpow.pop %v7822
      %v7824 = vmul.f32 %v7734, 1.442695
      %v7825 = vpow.pop %v7824
      %v7826 = vmul.f32 %v7735, 1.442695
      %v7827 = vpow.pop %v7826
      %v7828 = vmul.f32 %v7736, 1.442695
      %v7829 = vpow.pop %v7828
      %v7830 = vmul.f32 %v7737, 1.442695
      %v7831 = vpow.pop %v7830
      %v7832 = vmul.f32 %v7738, 1.442695
      %v7833 = vpow.pop %v7832
      %v7834 = vmul.f32 %v7739, 1.442695
      %v7835 = vpow.pop %v7834
      %v7836 = vmul.f32 %v7740, 1.442695
      %v7837 = vpow.pop %v7836
      %v7838 = vmul.f32 %v7741, 1.442695
      %v7839 = vpow.pop %v7838
      %v7840 = vmul.f32 %v7742, 1.442695
      %v7841 = vpow.pop %v7840
      %v7842 = vmul.f32 %v7743, 1.442695
      %v7843 = vpow.pop %v7842
      %v7844 = vmul.f32 %v7744, 1.442695
      %v7845 = vpow.pop %v7844
      %v7846 = vmul.f32 %v7745, 1.442695
      %v7847 = vpow.pop %v7846
      %v7848 = vmul.f32 %v7746, 1.442695
      %v7849 = vpow.pop %v7848
      %v7850 = vmul.f32 %v7747, 1.442695
      %v7851 = vpow.pop %v7850
      %v7852 = vmul.f32 %v7748, 1.442695
      %v7853 = vpow.pop %v7852
      %v7854 = vmul.f32 %v7749, 1.442695
      %v7855 = vpow.pop %v7854
      %v7856 = vmul.f32 %v7750, 1.442695
      %v7857 = vpow.pop %v7856
      %v7858 = vmul.f32 %v7751, 1.442695
      %v7859 = vpow.pop %v7858
      %v7860 = vmul.f32 %v7752, 1.442695
      %v7861 = vpow.pop %v7860
      %v7862 = vmul.f32 %v7753, 1.442695
      %v7863 = vpow.pop %v7862
      %v7864 = vmul.f32 %v7754, 1.442695
      %v7865 = vpow.pop %v7864
      %v7866 = vmul.f32 %v7755, 1.442695
      %v7867 = vpow.pop %v7866
      %v7868 = vmul.f32 %v7756, 1.442695
      %v7869 = vpow.pop %v7868
      %v7870 = vmul.f32 %v7757, 1.442695
      %v7871 = vpow.pop %v7870
      %v7872 = vmul.f32 %v7758, 1.442695
      %v7873 = vpow.pop %v7872
      %v7874 = vmul.f32 %v7759, 1.442695
      %v7875 = vpow.pop %v7874
      %v7876 = vmul.f32 %v7760, 1.442695
      %v7877 = vpow.pop %v7876
      %v7878 = vmul.f32 %v7761, 1.442695
      %v7879 = vpow.pop %v7878
      %v7880 = vmul.f32 %v7762, 1.442695
      %v7881 = vpow.pop %v7880
      %v7882 = vmul.f32 %v7763, 1.442695
      %v7883 = vpow.pop %v7882
      %v7884 = vmul.f32 %v7764, 1.442695
      %v7885 = vpow.pop %v7884
      %v7886 = vmul.f32 %v7765, 1.442695
      %v7887 = vpow.pop %v7886
      %v7888 = vmul.f32 %v7766, 1.442695
      %v7889 = vpow.pop %v7888
      %v7890 = vmul.f32 %v7767, 1.442695
      %v7891 = vpow.pop %v7890
      %v7892 = vmul.f32 %v7768, 1.442695
      %v7893 = vpow.pop %v7892
      %v7894 = vmul.f32 %v7769, 1.442695
      %v7895 = vpow.pop %v7894
      %v7896 = vmul.f32 %v7770, 1.442695
      %v7897 = vpow.pop %v7896
      %v7898 = vmul.f32 %v7771, 1.442695
      %v7899 = vpow.pop %v7898
      %7900 = vadd.xlane.f32.xlu0 %v7773
      %v7901 = vpop.xlane.xlu0 %7900
      %7902 = vadd.xlane.f32.xlu0 %v7775
      %v7903 = vpop.xlane.xlu0 %7902
      %7904 = vadd.xlane.f32.xlu0 %v7777
      %v7905 = vpop.xlane.xlu0 %7904
      %7906 = vadd.xlane.f32.xlu0 %v7779
      %v7907 = vpop.xlane.xlu0 %7906
      %7908 = vadd.xlane.f32.xlu0 %v7781
      %v7909 = vpop.xlane.xlu0 %7908
      %7910 = vadd.xlane.f32.xlu0 %v7783
      %v7911 = vpop.xlane.xlu0 %7910
      %7912 = vadd.xlane.f32.xlu0 %v7785
      %v7913 = vpop.xlane.xlu0 %7912
      %7914 = vadd.xlane.f32.xlu0 %v7787
      %v7915 = vpop.xlane.xlu0 %7914
      %7916 = vadd.xlane.f32.xlu0 %v7789
      %v7917 = vpop.xlane.xlu0 %7916
      %7918 = vadd.xlane.f32.xlu0 %v7791
      %v7919 = vpop.xlane.xlu0 %7918
      %7920 = vadd.xlane.f32.xlu0 %v7793
      %v7921 = vpop.xlane.xlu0 %7920
      %7922 = vadd.xlane.f32.xlu0 %v7795
      %v7923 = vpop.xlane.xlu0 %7922
      %7924 = vadd.xlane.f32.xlu0 %v7797
      %v7925 = vpop.xlane.xlu0 %7924
      %7926 = vadd.xlane.f32.xlu0 %v7799
      %v7927 = vpop.xlane.xlu0 %7926
      %7928 = vadd.xlane.f32.xlu0 %v7801
      %v7929 = vpop.xlane.xlu0 %7928
      %7930 = vadd.xlane.f32.xlu0 %v7803
      %v7931 = vpop.xlane.xlu0 %7930
      %7932 = vadd.xlane.f32.xlu0 %v7805
      %v7933 = vpop.xlane.xlu0 %7932
      %7934 = vadd.xlane.f32.xlu0 %v7807
      %v7935 = vpop.xlane.xlu0 %7934
      %7936 = vadd.xlane.f32.xlu0 %v7809
      %v7937 = vpop.xlane.xlu0 %7936
      %7938 = vadd.xlane.f32.xlu0 %v7811
      %v7939 = vpop.xlane.xlu0 %7938
      %7940 = vadd.xlane.f32.xlu0 %v7813
      %v7941 = vpop.xlane.xlu0 %7940
      %7942 = vadd.xlane.f32.xlu0 %v7815
      %v7943 = vpop.xlane.xlu0 %7942
      %7944 = vadd.xlane.f32.xlu0 %v7817
      %v7945 = vpop.xlane.xlu0 %7944
      %7946 = vadd.xlane.f32.xlu0 %v7819
      %v7947 = vpop.xlane.xlu0 %7946
      %7948 = vadd.xlane.f32.xlu0 %v7821
      %v7949 = vpop.xlane.xlu0 %7948
      %7950 = vadd.xlane.f32.xlu0 %v7823
      %v7951 = vpop.xlane.xlu0 %7950
      %7952 = vadd.xlane.f32.xlu0 %v7825
      %v7953 = vpop.xlane.xlu0 %7952
      %7954 = vadd.xlane.f32.xlu0 %v7827
      %v7955 = vpop.xlane.xlu0 %7954
      %7956 = vadd.xlane.f32.xlu0 %v7829
      %v7957 = vpop.xlane.xlu0 %7956
      %7958 = vadd.xlane.f32.xlu0 %v7831
      %v7959 = vpop.xlane.xlu0 %7958
      %7960 = vadd.xlane.f32.xlu0 %v7833
      %v7961 = vpop.xlane.xlu0 %7960
      %7962 = vadd.xlane.f32.xlu0 %v7835
      %v7963 = vpop.xlane.xlu0 %7962
      %7964 = vadd.xlane.f32.xlu0 %v7837
      %v7965 = vpop.xlane.xlu0 %7964
      %7966 = vadd.xlane.f32.xlu0 %v7839
      %v7967 = vpop.xlane.xlu0 %7966
      %7968 = vadd.xlane.f32.xlu0 %v7841
      %v7969 = vpop.xlane.xlu0 %7968
      %7970 = vadd.xlane.f32.xlu0 %v7843
      %v7971 = vpop.xlane.xlu0 %7970
      %7972 = vadd.xlane.f32.xlu0 %v7845
      %v7973 = vpop.xlane.xlu0 %7972
      %7974 = vadd.xlane.f32.xlu0 %v7847
      %v7975 = vpop.xlane.xlu0 %7974
      %7976 = vadd.xlane.f32.xlu0 %v7849
      %v7977 = vpop.xlane.xlu0 %7976
      %7978 = vadd.xlane.f32.xlu0 %v7851
      %v7979 = vpop.xlane.xlu0 %7978
      %7980 = vadd.xlane.f32.xlu0 %v7853
      %v7981 = vpop.xlane.xlu0 %7980
      %7982 = vadd.xlane.f32.xlu0 %v7855
      %v7983 = vpop.xlane.xlu0 %7982
      %7984 = vadd.xlane.f32.xlu0 %v7857
      %v7985 = vpop.xlane.xlu0 %7984
      %7986 = vadd.xlane.f32.xlu0 %v7859
      %v7987 = vpop.xlane.xlu0 %7986
      %7988 = vadd.xlane.f32.xlu0 %v7861
      %v7989 = vpop.xlane.xlu0 %7988
      %7990 = vadd.xlane.f32.xlu0 %v7863
      %v7991 = vpop.xlane.xlu0 %7990
      %7992 = vadd.xlane.f32.xlu0 %v7865
      %v7993 = vpop.xlane.xlu0 %7992
      %7994 = vadd.xlane.f32.xlu0 %v7867
      %v7995 = vpop.xlane.xlu0 %7994
      %7996 = vadd.xlane.f32.xlu0 %v7869
      %v7997 = vpop.xlane.xlu0 %7996
      %7998 = vadd.xlane.f32.xlu0 %v7871
      %v7999 = vpop.xlane.xlu0 %7998
      %8000 = vadd.xlane.f32.xlu0 %v7873
      %v8001 = vpop.xlane.xlu0 %8000
      %8002 = vadd.xlane.f32.xlu0 %v7875
      %v8003 = vpop.xlane.xlu0 %8002
      %8004 = vadd.xlane.f32.xlu0 %v7877
      %v8005 = vpop.xlane.xlu0 %8004
      %8006 = vadd.xlane.f32.xlu0 %v7879
      %v8007 = vpop.xlane.xlu0 %8006
      %8008 = vadd.xlane.f32.xlu0 %v7881
      %v8009 = vpop.xlane.xlu0 %8008
      %8010 = vadd.xlane.f32.xlu0 %v7883
      %v8011 = vpop.xlane.xlu0 %8010
      %8012 = vadd.xlane.f32.xlu0 %v7885
      %v8013 = vpop.xlane.xlu0 %8012
      %8014 = vadd.xlane.f32.xlu0 %v7887
      %v8015 = vpop.xlane.xlu0 %8014
      %8016 = vadd.xlane.f32.xlu0 %v7889
      %v8017 = vpop.xlane.xlu0 %8016
      %8018 = vadd.xlane.f32.xlu0 %v7891
      %v8019 = vpop.xlane.xlu0 %8018
      %8020 = vadd.xlane.f32.xlu0 %v7893
      %v8021 = vpop.xlane.xlu0 %8020
      %8022 = vadd.xlane.f32.xlu0 %v7895
      %v8023 = vpop.xlane.xlu0 %8022
      %8024 = vadd.xlane.f32.xlu0 %v7897
      %v8025 = vpop.xlane.xlu0 %8024
      %8026 = vadd.xlane.f32.xlu0 %v7899
      %v8027 = vpop.xlane.xlu0 %8026
      %v8028 = vrcp.pop %v7901
      %v8029 = vrcp.pop %v7903
      %v8030 = vrcp.pop %v7905
      %v8031 = vrcp.pop %v7907
      %v8032 = vrcp.pop %v7909
      %v8033 = vrcp.pop %v7911
      %v8034 = vrcp.pop %v7913
      %v8035 = vrcp.pop %v7915
      %v8036 = vrcp.pop %v7917
      %v8037 = vrcp.pop %v7919
      %v8038 = vrcp.pop %v7921
      %v8039 = vrcp.pop %v7923
      %v8040 = vrcp.pop %v7925
      %v8041 = vrcp.pop %v7927
      %v8042 = vrcp.pop %v7929
      %v8043 = vrcp.pop %v7931
      %v8044 = vrcp.pop %v7933
      %v8045 = vrcp.pop %v7935
      %v8046 = vrcp.pop %v7937
      %v8047 = vrcp.pop %v7939
      %v8048 = vrcp.pop %v7941
      %v8049 = vrcp.pop %v7943
      %v8050 = vrcp.pop %v7945
      %v8051 = vrcp.pop %v7947
      %v8052 = vrcp.pop %v7949
      %v8053 = vrcp.pop %v7951
      %v8054 = vrcp.pop %v7953
      %v8055 = vrcp.pop %v7955
      %v8056 = vrcp.pop %v7957
      %v8057 = vrcp.pop %v7959
      %v8058 = vrcp.pop %v7961
      %v8059 = vrcp.pop %v7963
      %v8060 = vrcp.pop %v7965
      %v8061 = vrcp.pop %v7967
      %v8062 = vrcp.pop %v7969
      %v8063 = vrcp.pop %v7971
      %v8064 = vrcp.pop %v7973
      %v8065 = vrcp.pop %v7975
      %v8066 = vrcp.pop %v7977
      %v8067 = vrcp.pop %v7979
      %v8068 = vrcp.pop %v7981
      %v8069 = vrcp.pop %v7983
      %v8070 = vrcp.pop %v7985
      %v8071 = vrcp.pop %v7987
      %v8072 = vrcp.pop %v7989
      %v8073 = vrcp.pop %v7991
      %v8074 = vrcp.pop %v7993
      %v8075 = vrcp.pop %v7995
      %v8076 = vrcp.pop %v7997
      %v8077 = vrcp.pop %v7999
      %v8078 = vrcp.pop %v8001
      %v8079 = vrcp.pop %v8003
      %v8080 = vrcp.pop %v8005
      %v8081 = vrcp.pop %v8007
      %v8082 = vrcp.pop %v8009
      %v8083 = vrcp.pop %v8011
      %v8084 = vrcp.pop %v8013
      %v8085 = vrcp.pop %v8015
      %v8086 = vrcp.pop %v8017
      %v8087 = vrcp.pop %v8019
      %v8088 = vrcp.pop %v8021
      %v8089 = vrcp.pop %v8023
      %v8090 = vrcp.pop %v8025
      %v8091 = vrcp.pop %v8027
      %v8092 = vmul.f32 %v7773, %v8028
      %v8093 = vmul.f32 %v7775, %v8029
      %v8094 = vmul.f32 %v7777, %v8030
      %v8095 = vmul.f32 %v7779, %v8031
      %v8096 = vmul.f32 %v7781, %v8032
      %v8097 = vmul.f32 %v7783, %v8033
      %v8098 = vmul.f32 %v7785, %v8034
      %v8099 = vmul.f32 %v7787, %v8035
      %v8100 = vmul.f32 %v7789, %v8036
      %v8101 = vmul.f32 %v7791, %v8037
      %v8102 = vmul.f32 %v7793, %v8038
      %v8103 = vmul.f32 %v7795, %v8039
      %v8104 = vmul.f32 %v7797, %v8040
      %v8105 = vmul.f32 %v7799, %v8041
      %v8106 = vmul.f32 %v7801, %v8042
      %v8107 = vmul.f32 %v7803, %v8043
      %v8108 = vmul.f32 %v7805, %v8044
      %v8109 = vmul.f32 %v7807, %v8045
      %v8110 = vmul.f32 %v7809, %v8046
      %v8111 = vmul.f32 %v7811, %v8047
      %v8112 = vmul.f32 %v7813, %v8048
      %v8113 = vmul.f32 %v7815, %v8049
      %v8114 = vmul.f32 %v7817, %v8050
      %v8115 = vmul.f32 %v7819, %v8051
      %v8116 = vmul.f32 %v7821, %v8052
      %v8117 = vmul.f32 %v7823, %v8053
      %v8118 = vmul.f32 %v7825, %v8054
      %v8119 = vmul.f32 %v7827, %v8055
      %v8120 = vmul.f32 %v7829, %v8056
      %v8121 = vmul.f32 %v7831, %v8057
      %v8122 = vmul.f32 %v7833, %v8058
      %v8123 = vmul.f32 %v7835, %v8059
      %v8124 = vmul.f32 %v7837, %v8060
      %v8125 = vmul.f32 %v7839, %v8061
      %v8126 = vmul.f32 %v7841, %v8062
      %v8127 = vmul.f32 %v7843, %v8063
      %v8128 = vmul.f32 %v7845, %v8064
      %v8129 = vmul.f32 %v7847, %v8065
      %v8130 = vmul.f32 %v7849, %v8066
      %v8131 = vmul.f32 %v7851, %v8067
      %v8132 = vmul.f32 %v7853, %v8068
      %v8133 = vmul.f32 %v7855, %v8069
      %v8134 = vmul.f32 %v7857, %v8070
      %v8135 = vmul.f32 %v7859, %v8071
      %v8136 = vmul.f32 %v7861, %v8072
      %v8137 = vmul.f32 %v7863, %v8073
      %v8138 = vmul.f32 %v7865, %v8074
      %v8139 = vmul.f32 %v7867, %v8075
      %v8140 = vmul.f32 %v7869, %v8076
      %v8141 = vmul.f32 %v7871, %v8077
      %v8142 = vmul.f32 %v7873, %v8078
      %v8143 = vmul.f32 %v7875, %v8079
      %v8144 = vmul.f32 %v7877, %v8080
      %v8145 = vmul.f32 %v7879, %v8081
      %v8146 = vmul.f32 %v7881, %v8082
      %v8147 = vmul.f32 %v7883, %v8083
      %v8148 = vmul.f32 %v7885, %v8084
      %v8149 = vmul.f32 %v7887, %v8085
      %v8150 = vmul.f32 %v7889, %v8086
      %v8151 = vmul.f32 %v7891, %v8087
      %v8152 = vmul.f32 %v7893, %v8088
      %v8153 = vmul.f32 %v7895, %v8089
      %v8154 = vmul.f32 %v7897, %v8090
      %v8155 = vmul.f32 %v7899, %v8091
      %v8156 = vpack.c.bf16 %v8093, %v8092
      %v8157 = vpack.c.bf16 %v8095, %v8094
      %v8158 = vpack.c.bf16 %v8097, %v8096
      %v8159 = vpack.c.bf16 %v8099, %v8098
      %v8160 = vpack.c.bf16 %v8101, %v8100
      %v8161 = vpack.c.bf16 %v8103, %v8102
      %v8162 = vpack.c.bf16 %v8105, %v8104
      %v8163 = vpack.c.bf16 %v8107, %v8106
      %v8164 = vpack.c.bf16 %v8109, %v8108
      %v8165 = vpack.c.bf16 %v8111, %v8110
      %v8166 = vpack.c.bf16 %v8113, %v8112
      %v8167 = vpack.c.bf16 %v8115, %v8114
      %v8168 = vpack.c.bf16 %v8117, %v8116
      %v8169 = vpack.c.bf16 %v8119, %v8118
      %v8170 = vpack.c.bf16 %v8121, %v8120
      %v8171 = vpack.c.bf16 %v8123, %v8122
      %v8172 = vpack.c.bf16 %v8125, %v8124
      %v8173 = vpack.c.bf16 %v8127, %v8126
      %v8174 = vpack.c.bf16 %v8129, %v8128
      %v8175 = vpack.c.bf16 %v8131, %v8130
      %v8176 = vpack.c.bf16 %v8133, %v8132
      %v8177 = vpack.c.bf16 %v8135, %v8134
      %v8178 = vpack.c.bf16 %v8137, %v8136
      %v8179 = vpack.c.bf16 %v8139, %v8138
      %v8180 = vpack.c.bf16 %v8141, %v8140
      %v8181 = vpack.c.bf16 %v8143, %v8142
      %v8182 = vpack.c.bf16 %v8145, %v8144
      %v8183 = vpack.c.bf16 %v8147, %v8146
      %v8184 = vpack.c.bf16 %v8149, %v8148
      %v8185 = vpack.c.bf16 %v8151, %v8150
      %v8186 = vpack.c.bf16 %v8153, %v8152
      %v8187 = vpack.c.bf16 %v8155, %v8154
      %8188 = vrot.lane.b32.xlu0 %v6647, 48
      %v8189 = vpop.permute.xlu0 %8188
      %8190 = vrot.lane.b32.xlu0 %v6648, 48
      %v8191 = vpop.permute.xlu0 %8190
      %8192 = vrot.lane.b32.xlu0 %v6649, 48
      %v8193 = vpop.permute.xlu0 %8192
      %8194 = vrot.lane.b32.xlu0 %v6650, 48
      %v8195 = vpop.permute.xlu0 %8194
      %8196 = vrot.lane.b32.xlu0 %v6651, 48
      %v8197 = vpop.permute.xlu0 %8196
      %8198 = vrot.lane.b32.xlu0 %v6652, 48
      %v8199 = vpop.permute.xlu0 %8198
      %8200 = vrot.lane.b32.xlu0 %v6653, 48
      %v8201 = vpop.permute.xlu0 %8200
      %8202 = vrot.lane.b32.xlu0 %v6654, 48
      %v8203 = vpop.permute.xlu0 %8202
      %8212 = vmatprep.subr.bf16.mxu0 0
      %8213 = vmatpush1.bf16.msra.mxu0 %v8203
      %8214 = vmatprep.subr.bf16.mxu0 0
      %8215 = vmatpush1.bf16.msra.mxu0 %v8201
      %8216 = vmatprep.subr.bf16.mxu0 0
      %8217 = vmatpush1.bf16.msra.mxu0 %v8199
      %8218 = vmatprep.subr.bf16.mxu0 0
      %8219 = vmatpush1.bf16.msra.mxu0 %v8197
      %8220 = vmatprep.subr.bf16.mxu0 0
      %8221 = vmatpush1.bf16.msra.mxu0 %v8195
      %8222 = vmatprep.subr.bf16.mxu0 0
      %8223 = vmatpush1.bf16.msra.mxu0 %v8193
      %8224 = vmatprep.subr.bf16.mxu0 0
      %8225 = vmatpush1.bf16.msra.mxu0 %v8191
      %8226 = vmatprep.subr.bf16.mxu0 0
      %8227 = vmatpush1.bf16.msra.mxu0 %v8189
      %8228 = vmatprep.subr.bf16.mxu0 0
      %8229 = vmatpush2.bf16.msra.mxu0 0
      %8230 = vmatprep.subr.bf16.mxu0 0
      %8231 = vmatpush2.bf16.msra.mxu0 0
      %8232 = vmatprep.subr.bf16.mxu0 0
      %8233 = vmatpush2.bf16.msra.mxu0 0
      %8234 = vmatprep.subr.bf16.mxu0 0
      %8235 = vmatpush2.bf16.msra.mxu0 0
      %8236 = vmatprep.subr.bf16.mxu0 0
      %8237 = vmatpush2.bf16.msra.mxu0 0
      %8238 = vmatprep.subr.bf16.mxu0 0
      %8239 = vmatpush2.bf16.msra.mxu0 0
      %8240 = vmatprep.subr.bf16.mxu0 0
      %8241 = vmatpush2.bf16.msra.mxu0 0
      %8242 = vmatprep.subr.bf16.mxu0 0
      %8243 = vmatpush2.bf16.msra.mxu0 0
      %8244 = vmatprep.mubr.bf16.mxu0 0
      %8245 = vmatmul.mubr.bf16.gmra.mxu0 %v8156
      %v8246 = vpop.f32.mrf.mxu0
      %v8247 = vadd.f32 0.0, %v8246
      %v8248 = vpop.f32.mrf.mxu0
      %v8249 = vpop.f32.mrf.mxu0
      %v8250 = vadd.f32 0.0, %v8249
      %v8251 = vpop.f32.mrf.mxu0
      %8252 = vmatprep.mubr.bf16.mxu0 0
      %8253 = vmatmul.mubr.bf16.gmra.mxu0 %v8157
      %v8254 = vpop.f32.mrf.mxu0
      %v8255 = vadd.f32 0.0, %v8254
      %v8256 = vpop.f32.mrf.mxu0
      %v8257 = vpop.f32.mrf.mxu0
      %v8258 = vadd.f32 0.0, %v8257
      %v8259 = vpop.f32.mrf.mxu0
      %8260 = vmatprep.mubr.bf16.mxu0 0
      %8261 = vmatmul.mubr.bf16.gmra.mxu0 %v8158
      %v8262 = vpop.f32.mrf.mxu0
      %v8263 = vadd.f32 0.0, %v8262
      %v8264 = vpop.f32.mrf.mxu0
      %v8265 = vpop.f32.mrf.mxu0
      %v8266 = vadd.f32 0.0, %v8265
      %v8267 = vpop.f32.mrf.mxu0
      %8268 = vmatprep.mubr.bf16.mxu0 0
      %8269 = vmatmul.mubr.bf16.gmra.mxu0 %v8159
      %v8270 = vpop.f32.mrf.mxu0
      %v8271 = vadd.f32 0.0, %v8270
      %v8272 = vpop.f32.mrf.mxu0
      %v8273 = vpop.f32.mrf.mxu0
      %v8274 = vadd.f32 0.0, %v8273
      %v8275 = vpop.f32.mrf.mxu0
      %8276 = vmatprep.mubr.bf16.mxu0 0
      %8277 = vmatmul.mubr.bf16.gmra.mxu0 %v8160
      %v8278 = vpop.f32.mrf.mxu0
      %v8279 = vadd.f32 0.0, %v8278
      %v8280 = vpop.f32.mrf.mxu0
      %v8281 = vpop.f32.mrf.mxu0
      %v8282 = vadd.f32 0.0, %v8281
      %v8283 = vpop.f32.mrf.mxu0
      %8284 = vmatprep.mubr.bf16.mxu0 0
      %8285 = vmatmul.mubr.bf16.gmra.mxu0 %v8161
      %v8286 = vpop.f32.mrf.mxu0
      %v8287 = vadd.f32 0.0, %v8286
      %v8288 = vpop.f32.mrf.mxu0
      %v8289 = vpop.f32.mrf.mxu0
      %v8290 = vadd.f32 0.0, %v8289
      %v8291 = vpop.f32.mrf.mxu0
      %8292 = vmatprep.mubr.bf16.mxu0 0
      %8293 = vmatmul.mubr.bf16.gmra.mxu0 %v8162
      %v8294 = vpop.f32.mrf.mxu0
      %v8295 = vadd.f32 0.0, %v8294
      %v8296 = vpop.f32.mrf.mxu0
      %v8297 = vpop.f32.mrf.mxu0
      %v8298 = vadd.f32 0.0, %v8297
      %v8299 = vpop.f32.mrf.mxu0
      %8300 = vmatprep.mubr.bf16.mxu0 0
      %8301 = vmatmul.mubr.bf16.gmra.mxu0 %v8163
      %v8302 = vpop.f32.mrf.mxu0
      %v8303 = vadd.f32 0.0, %v8302
      %v8304 = vpop.f32.mrf.mxu0
      %v8305 = vpop.f32.mrf.mxu0
      %v8306 = vadd.f32 0.0, %v8305
      %v8307 = vpop.f32.mrf.mxu0
      %8308 = vdwg.mxu0
      %8309 = vrot.lane.b32.xlu0 %v6864, 48
      %v8310 = vpop.permute.xlu0 %8309
      %8311 = vrot.lane.b32.xlu0 %v6865, 48
      %v8312 = vpop.permute.xlu0 %8311
      %8313 = vrot.lane.b32.xlu0 %v6866, 48
      %v8314 = vpop.permute.xlu0 %8313
      %8315 = vrot.lane.b32.xlu0 %v6867, 48
      %v8316 = vpop.permute.xlu0 %8315
      %8317 = vrot.lane.b32.xlu0 %v6868, 48
      %v8318 = vpop.permute.xlu0 %8317
      %8319 = vrot.lane.b32.xlu0 %v6869, 48
      %v8320 = vpop.permute.xlu0 %8319
      %8321 = vrot.lane.b32.xlu0 %v6870, 48
      %v8322 = vpop.permute.xlu0 %8321
      %8323 = vrot.lane.b32.xlu0 %v6871, 48
      %v8324 = vpop.permute.xlu0 %8323
      %8333 = vmatprep.subr.bf16.mxu0 0
      %8334 = vmatpush1.bf16.msra.mxu0 %v8324
      %8335 = vmatprep.subr.bf16.mxu0 0
      %8336 = vmatpush1.bf16.msra.mxu0 %v8322
      %8337 = vmatprep.subr.bf16.mxu0 0
      %8338 = vmatpush1.bf16.msra.mxu0 %v8320
      %8339 = vmatprep.subr.bf16.mxu0 0
      %8340 = vmatpush1.bf16.msra.mxu0 %v8318
      %8341 = vmatprep.subr.bf16.mxu0 0
      %8342 = vmatpush1.bf16.msra.mxu0 %v8316
      %8343 = vmatprep.subr.bf16.mxu0 0
      %8344 = vmatpush1.bf16.msra.mxu0 %v8314
      %8345 = vmatprep.subr.bf16.mxu0 0
      %8346 = vmatpush1.bf16.msra.mxu0 %v8312
      %8347 = vmatprep.subr.bf16.mxu0 0
      %8348 = vmatpush1.bf16.msra.mxu0 %v8310
      %8349 = vmatprep.subr.bf16.mxu0 0
      %8350 = vmatpush2.bf16.msra.mxu0 0
      %8351 = vmatprep.subr.bf16.mxu0 0
      %8352 = vmatpush2.bf16.msra.mxu0 0
      %8353 = vmatprep.subr.bf16.mxu0 0
      %8354 = vmatpush2.bf16.msra.mxu0 0
      %8355 = vmatprep.subr.bf16.mxu0 0
      %8356 = vmatpush2.bf16.msra.mxu0 0
      %8357 = vmatprep.subr.bf16.mxu0 0
      %8358 = vmatpush2.bf16.msra.mxu0 0
      %8359 = vmatprep.subr.bf16.mxu0 0
      %8360 = vmatpush2.bf16.msra.mxu0 0
      %8361 = vmatprep.subr.bf16.mxu0 0
      %8362 = vmatpush2.bf16.msra.mxu0 0
      %8363 = vmatprep.subr.bf16.mxu0 0
      %8364 = vmatpush2.bf16.msra.mxu0 0
      %8365 = vmatprep.mubr.bf16.mxu0 0
      %8366 = vmatmul.mubr.bf16.gmra.mxu0 %v8164
      %v8367 = vpop.f32.mrf.mxu0
      %v8368 = vadd.f32 0.0, %v8367
      %v8369 = vpop.f32.mrf.mxu0
      %v8370 = vpop.f32.mrf.mxu0
      %v8371 = vadd.f32 0.0, %v8370
      %v8372 = vpop.f32.mrf.mxu0
      %8373 = vmatprep.mubr.bf16.mxu0 0
      %8374 = vmatmul.mubr.bf16.gmra.mxu0 %v8165
      %v8375 = vpop.f32.mrf.mxu0
      %v8376 = vadd.f32 0.0, %v8375
      %v8377 = vpop.f32.mrf.mxu0
      %v8378 = vpop.f32.mrf.mxu0
      %v8379 = vadd.f32 0.0, %v8378
      %v8380 = vpop.f32.mrf.mxu0
      %8381 = vmatprep.mubr.bf16.mxu0 0
      %8382 = vmatmul.mubr.bf16.gmra.mxu0 %v8166
      %v8383 = vpop.f32.mrf.mxu0
      %v8384 = vadd.f32 0.0, %v8383
      %v8385 = vpop.f32.mrf.mxu0
      %v8386 = vpop.f32.mrf.mxu0
      %v8387 = vadd.f32 0.0, %v8386
      %v8388 = vpop.f32.mrf.mxu0
      %8389 = vmatprep.mubr.bf16.mxu0 0
      %8390 = vmatmul.mubr.bf16.gmra.mxu0 %v8167
      %v8391 = vpop.f32.mrf.mxu0
      %v8392 = vadd.f32 0.0, %v8391
      %v8393 = vpop.f32.mrf.mxu0
      %v8394 = vpop.f32.mrf.mxu0
      %v8395 = vadd.f32 0.0, %v8394
      %v8396 = vpop.f32.mrf.mxu0
      %8397 = vmatprep.mubr.bf16.mxu0 0
      %8398 = vmatmul.mubr.bf16.gmra.mxu0 %v8168
      %v8399 = vpop.f32.mrf.mxu0
      %v8400 = vadd.f32 0.0, %v8399
      %v8401 = vpop.f32.mrf.mxu0
      %v8402 = vpop.f32.mrf.mxu0
      %v8403 = vadd.f32 0.0, %v8402
      %v8404 = vpop.f32.mrf.mxu0
      %8405 = vmatprep.mubr.bf16.mxu0 0
      %8406 = vmatmul.mubr.bf16.gmra.mxu0 %v8169
      %v8407 = vpop.f32.mrf.mxu0
      %v8408 = vadd.f32 0.0, %v8407
      %v8409 = vpop.f32.mrf.mxu0
      %v8410 = vpop.f32.mrf.mxu0
      %v8411 = vadd.f32 0.0, %v8410
      %v8412 = vpop.f32.mrf.mxu0
      %8413 = vmatprep.mubr.bf16.mxu0 0
      %8414 = vmatmul.mubr.bf16.gmra.mxu0 %v8170
      %v8415 = vpop.f32.mrf.mxu0
      %v8416 = vadd.f32 0.0, %v8415
      %v8417 = vpop.f32.mrf.mxu0
      %v8418 = vpop.f32.mrf.mxu0
      %v8419 = vadd.f32 0.0, %v8418
      %v8420 = vpop.f32.mrf.mxu0
      %8421 = vmatprep.mubr.bf16.mxu0 0
      %8422 = vmatmul.mubr.bf16.gmra.mxu0 %v8171
      %v8423 = vpop.f32.mrf.mxu0
      %v8424 = vadd.f32 0.0, %v8423
      %v8425 = vpop.f32.mrf.mxu0
      %v8426 = vpop.f32.mrf.mxu0
      %v8427 = vadd.f32 0.0, %v8426
      %v8428 = vpop.f32.mrf.mxu0
      %8429 = vdwg.mxu0
      %8430 = vrot.lane.b32.xlu0 %v7081, 48
      %v8431 = vpop.permute.xlu0 %8430
      %8432 = vrot.lane.b32.xlu0 %v7082, 48
      %v8433 = vpop.permute.xlu0 %8432
      %8434 = vrot.lane.b32.xlu0 %v7083, 48
      %v8435 = vpop.permute.xlu0 %8434
      %8436 = vrot.lane.b32.xlu0 %v7084, 48
      %v8437 = vpop.permute.xlu0 %8436
      %8438 = vrot.lane.b32.xlu0 %v7085, 48
      %v8439 = vpop.permute.xlu0 %8438
      %8440 = vrot.lane.b32.xlu0 %v7086, 48
      %v8441 = vpop.permute.xlu0 %8440
      %8442 = vrot.lane.b32.xlu0 %v7087, 48
      %v8443 = vpop.permute.xlu0 %8442
      %8444 = vrot.lane.b32.xlu0 %v7088, 48
      %v8445 = vpop.permute.xlu0 %8444
      %8454 = vmatprep.subr.bf16.mxu0 0
      %8455 = vmatpush1.bf16.msra.mxu0 %v8445
      %8456 = vmatprep.subr.bf16.mxu0 0
      %8457 = vmatpush1.bf16.msra.mxu0 %v8443
      %8458 = vmatprep.subr.bf16.mxu0 0
      %8459 = vmatpush1.bf16.msra.mxu0 %v8441
      %8460 = vmatprep.subr.bf16.mxu0 0
      %8461 = vmatpush1.bf16.msra.mxu0 %v8439
      %8462 = vmatprep.subr.bf16.mxu0 0
      %8463 = vmatpush1.bf16.msra.mxu0 %v8437
      %8464 = vmatprep.subr.bf16.mxu0 0
      %8465 = vmatpush1.bf16.msra.mxu0 %v8435
      %8466 = vmatprep.subr.bf16.mxu0 0
      %8467 = vmatpush1.bf16.msra.mxu0 %v8433
      %8468 = vmatprep.subr.bf16.mxu0 0
      %8469 = vmatpush1.bf16.msra.mxu0 %v8431
      %8470 = vmatprep.subr.bf16.mxu0 0
      %8471 = vmatpush2.bf16.msra.mxu0 0
      %8472 = vmatprep.subr.bf16.mxu0 0
      %8473 = vmatpush2.bf16.msra.mxu0 0
      %8474 = vmatprep.subr.bf16.mxu0 0
      %8475 = vmatpush2.bf16.msra.mxu0 0
      %8476 = vmatprep.subr.bf16.mxu0 0
      %8477 = vmatpush2.bf16.msra.mxu0 0
      %8478 = vmatprep.subr.bf16.mxu0 0
      %8479 = vmatpush2.bf16.msra.mxu0 0
      %8480 = vmatprep.subr.bf16.mxu0 0
      %8481 = vmatpush2.bf16.msra.mxu0 0
      %8482 = vmatprep.subr.bf16.mxu0 0
      %8483 = vmatpush2.bf16.msra.mxu0 0
      %8484 = vmatprep.subr.bf16.mxu0 0
      %8485 = vmatpush2.bf16.msra.mxu0 0
      %8486 = vmatprep.mubr.bf16.mxu0 0
      %8487 = vmatmul.mubr.bf16.gmra.mxu0 %v8172
      %v8488 = vpop.f32.mrf.mxu0
      %v8489 = vadd.f32 0.0, %v8488
      %v8490 = vpop.f32.mrf.mxu0
      %v8491 = vpop.f32.mrf.mxu0
      %v8492 = vadd.f32 0.0, %v8491
      %v8493 = vpop.f32.mrf.mxu0
      %8494 = vmatprep.mubr.bf16.mxu0 0
      %8495 = vmatmul.mubr.bf16.gmra.mxu0 %v8173
      %v8496 = vpop.f32.mrf.mxu0
      %v8497 = vadd.f32 0.0, %v8496
      %v8498 = vpop.f32.mrf.mxu0
      %v8499 = vpop.f32.mrf.mxu0
      %v8500 = vadd.f32 0.0, %v8499
      %v8501 = vpop.f32.mrf.mxu0
      %8502 = vmatprep.mubr.bf16.mxu0 0
      %8503 = vmatmul.mubr.bf16.gmra.mxu0 %v8174
      %v8504 = vpop.f32.mrf.mxu0
      %v8505 = vadd.f32 0.0, %v8504
      %v8506 = vpop.f32.mrf.mxu0
      %v8507 = vpop.f32.mrf.mxu0
      %v8508 = vadd.f32 0.0, %v8507
      %v8509 = vpop.f32.mrf.mxu0
      %8510 = vmatprep.mubr.bf16.mxu0 0
      %8511 = vmatmul.mubr.bf16.gmra.mxu0 %v8175
      %v8512 = vpop.f32.mrf.mxu0
      %v8513 = vadd.f32 0.0, %v8512
      %v8514 = vpop.f32.mrf.mxu0
      %v8515 = vpop.f32.mrf.mxu0
      %v8516 = vadd.f32 0.0, %v8515
      %v8517 = vpop.f32.mrf.mxu0
      %8518 = vmatprep.mubr.bf16.mxu0 0
      %8519 = vmatmul.mubr.bf16.gmra.mxu0 %v8176
      %v8520 = vpop.f32.mrf.mxu0
      %v8521 = vadd.f32 0.0, %v8520
      %v8522 = vpop.f32.mrf.mxu0
      %v8523 = vpop.f32.mrf.mxu0
      %v8524 = vadd.f32 0.0, %v8523
      %v8525 = vpop.f32.mrf.mxu0
      %8526 = vmatprep.mubr.bf16.mxu0 0
      %8527 = vmatmul.mubr.bf16.gmra.mxu0 %v8177
      %v8528 = vpop.f32.mrf.mxu0
      %v8529 = vadd.f32 0.0, %v8528
      %v8530 = vpop.f32.mrf.mxu0
      %v8531 = vpop.f32.mrf.mxu0
      %v8532 = vadd.f32 0.0, %v8531
      %v8533 = vpop.f32.mrf.mxu0
      %8534 = vmatprep.mubr.bf16.mxu0 0
      %8535 = vmatmul.mubr.bf16.gmra.mxu0 %v8178
      %v8536 = vpop.f32.mrf.mxu0
      %v8537 = vadd.f32 0.0, %v8536
      %v8538 = vpop.f32.mrf.mxu0
      %v8539 = vpop.f32.mrf.mxu0
      %v8540 = vadd.f32 0.0, %v8539
      %v8541 = vpop.f32.mrf.mxu0
      %8542 = vmatprep.mubr.bf16.mxu0 0
      %8543 = vmatmul.mubr.bf16.gmra.mxu0 %v8179
      %v8544 = vpop.f32.mrf.mxu0
      %v8545 = vadd.f32 0.0, %v8544
      %v8546 = vpop.f32.mrf.mxu0
      %v8547 = vpop.f32.mrf.mxu0
      %v8548 = vadd.f32 0.0, %v8547
      %v8549 = vpop.f32.mrf.mxu0
      %8550 = vdwg.mxu0
      %8551 = vrot.lane.b32.xlu0 %v7298, 48
      %v8552 = vpop.permute.xlu0 %8551
      %8553 = vrot.lane.b32.xlu0 %v7299, 48
      %v8554 = vpop.permute.xlu0 %8553
      %8555 = vrot.lane.b32.xlu0 %v7300, 48
      %v8556 = vpop.permute.xlu0 %8555
      %8557 = vrot.lane.b32.xlu0 %v7301, 48
      %v8558 = vpop.permute.xlu0 %8557
      %8559 = vrot.lane.b32.xlu0 %v7302, 48
      %v8560 = vpop.permute.xlu0 %8559
      %8561 = vrot.lane.b32.xlu0 %v7303, 48
      %v8562 = vpop.permute.xlu0 %8561
      %8563 = vrot.lane.b32.xlu0 %v7304, 48
      %v8564 = vpop.permute.xlu0 %8563
      %8565 = vrot.lane.b32.xlu0 %v7305, 48
      %v8566 = vpop.permute.xlu0 %8565
      %8575 = vmatprep.subr.bf16.mxu0 0
      %8576 = vmatpush1.bf16.msra.mxu0 %v8566
      %8577 = vmatprep.subr.bf16.mxu0 0
      %8578 = vmatpush1.bf16.msra.mxu0 %v8564
      %8579 = vmatprep.subr.bf16.mxu0 0
      %8580 = vmatpush1.bf16.msra.mxu0 %v8562
      %8581 = vmatprep.subr.bf16.mxu0 0
      %8582 = vmatpush1.bf16.msra.mxu0 %v8560
      %8583 = vmatprep.subr.bf16.mxu0 0
      %8584 = vmatpush1.bf16.msra.mxu0 %v8558
      %8585 = vmatprep.subr.bf16.mxu0 0
      %8586 = vmatpush1.bf16.msra.mxu0 %v8556
      %8587 = vmatprep.subr.bf16.mxu0 0
      %8588 = vmatpush1.bf16.msra.mxu0 %v8554
      %8589 = vmatprep.subr.bf16.mxu0 0
      %8590 = vmatpush1.bf16.msra.mxu0 %v8552
      %8591 = vmatprep.subr.bf16.mxu0 0
      %8592 = vmatpush2.bf16.msra.mxu0 0
      %8593 = vmatprep.subr.bf16.mxu0 0
      %8594 = vmatpush2.bf16.msra.mxu0 0
      %8595 = vmatprep.subr.bf16.mxu0 0
      %8596 = vmatpush2.bf16.msra.mxu0 0
      %8597 = vmatprep.subr.bf16.mxu0 0
      %8598 = vmatpush2.bf16.msra.mxu0 0
      %8599 = vmatprep.subr.bf16.mxu0 0
      %8600 = vmatpush2.bf16.msra.mxu0 0
      %8601 = vmatprep.subr.bf16.mxu0 0
      %8602 = vmatpush2.bf16.msra.mxu0 0
      %8603 = vmatprep.subr.bf16.mxu0 0
      %8604 = vmatpush2.bf16.msra.mxu0 0
      %8605 = vmatprep.subr.bf16.mxu0 0
      %8606 = vmatpush2.bf16.msra.mxu0 0
      %8607 = vmatprep.mubr.bf16.mxu0 0
      %8608 = vmatmul.mubr.bf16.gmra.mxu0 %v8180
      %v8609 = vpop.f32.mrf.mxu0
      %v8610 = vadd.f32 0.0, %v8609
      %v8611 = vpop.f32.mrf.mxu0
      %v8612 = vpop.f32.mrf.mxu0
      %v8613 = vadd.f32 0.0, %v8612
      %v8614 = vpop.f32.mrf.mxu0
      %8615 = vmatprep.mubr.bf16.mxu0 0
      %8616 = vmatmul.mubr.bf16.gmra.mxu0 %v8181
      %v8617 = vpop.f32.mrf.mxu0
      %v8618 = vadd.f32 0.0, %v8617
      %v8619 = vpop.f32.mrf.mxu0
      %v8620 = vpop.f32.mrf.mxu0
      %v8621 = vadd.f32 0.0, %v8620
      %v8622 = vpop.f32.mrf.mxu0
      %8623 = vmatprep.mubr.bf16.mxu0 0
      %8624 = vmatmul.mubr.bf16.gmra.mxu0 %v8182
      %v8625 = vpop.f32.mrf.mxu0
      %v8626 = vadd.f32 0.0, %v8625
      %v8627 = vpop.f32.mrf.mxu0
      %v8628 = vpop.f32.mrf.mxu0
      %v8629 = vadd.f32 0.0, %v8628
      %v8630 = vpop.f32.mrf.mxu0
      %8631 = vmatprep.mubr.bf16.mxu0 0
      %8632 = vmatmul.mubr.bf16.gmra.mxu0 %v8183
      %v8633 = vpop.f32.mrf.mxu0
      %v8634 = vadd.f32 0.0, %v8633
      %v8635 = vpop.f32.mrf.mxu0
      %v8636 = vpop.f32.mrf.mxu0
      %v8637 = vadd.f32 0.0, %v8636
      %v8638 = vpop.f32.mrf.mxu0
      %8639 = vmatprep.mubr.bf16.mxu0 0
      %8640 = vmatmul.mubr.bf16.gmra.mxu0 %v8184
      %v8641 = vpop.f32.mrf.mxu0
      %v8642 = vadd.f32 0.0, %v8641
      %v8643 = vpop.f32.mrf.mxu0
      %v8644 = vpop.f32.mrf.mxu0
      %v8645 = vadd.f32 0.0, %v8644
      %v8646 = vpop.f32.mrf.mxu0
      %8647 = vmatprep.mubr.bf16.mxu0 0
      %8648 = vmatmul.mubr.bf16.gmra.mxu0 %v8185
      %v8649 = vpop.f32.mrf.mxu0
      %v8650 = vadd.f32 0.0, %v8649
      %v8651 = vpop.f32.mrf.mxu0
      %v8652 = vpop.f32.mrf.mxu0
      %v8653 = vadd.f32 0.0, %v8652
      %v8654 = vpop.f32.mrf.mxu0
      %8655 = vmatprep.mubr.bf16.mxu0 0
      %8656 = vmatmul.mubr.bf16.gmra.mxu0 %v8186
      %v8657 = vpop.f32.mrf.mxu0
      %v8658 = vadd.f32 0.0, %v8657
      %v8659 = vpop.f32.mrf.mxu0
      %v8660 = vpop.f32.mrf.mxu0
      %v8661 = vadd.f32 0.0, %v8660
      %v8662 = vpop.f32.mrf.mxu0
      %8663 = vmatprep.mubr.bf16.mxu0 0
      %8664 = vmatmul.mubr.bf16.gmra.mxu0 %v8187
      %v8665 = vpop.f32.mrf.mxu0
      %v8666 = vadd.f32 0.0, %v8665
      %v8667 = vpop.f32.mrf.mxu0
      %v8668 = vpop.f32.mrf.mxu0
      %v8669 = vadd.f32 0.0, %v8668
      %v8670 = vpop.f32.mrf.mxu0
      %8671 = vdwg.mxu0
      %v8672 = vld [vmem:[#allocation3] sm:$0xff]
      %v8673 = vld [vmem:[#allocation3 + $0x8] sm:$0xff]
      %v8674 = vld [vmem:[#allocation3 + $0x10] sm:$0xff]
      %v8675 = vld [vmem:[#allocation3 + $0x18] sm:$0xff]
      %v8676 = vld [vmem:[#allocation3 + $0x20] sm:$0xff]
      %v8677 = vld [vmem:[#allocation3 + $0x28] sm:$0xff]
      %v8678 = vld [vmem:[#allocation3 + $0x30] sm:$0xff]
      %v8679 = vld [vmem:[#allocation3 + $0x38] sm:$0xff]
      %v8680 = vld [vmem:[#allocation3 + $0x40] sm:$0xff]
      %v8681 = vld [vmem:[#allocation3 + $0x48] sm:$0xff]
      %v8682 = vld [vmem:[#allocation3 + $0x50] sm:$0xff]
      %v8683 = vld [vmem:[#allocation3 + $0x58] sm:$0xff]
      %v8684 = vld [vmem:[#allocation3 + $0x60] sm:$0xff]
      %v8685 = vld [vmem:[#allocation3 + $0x68] sm:$0xff]
      %v8686 = vld [vmem:[#allocation3 + $0x70] sm:$0xff]
      %v8687 = vld [vmem:[#allocation3 + $0x78] sm:$0xff]
      %v8688 = vld [vmem:[#allocation3 + $0x80] sm:$0xff]
      %v8689 = vld [vmem:[#allocation3 + $0x88] sm:$0xff]
      %v8690 = vld [vmem:[#allocation3 + $0x90] sm:$0xff]
      %v8691 = vld [vmem:[#allocation3 + $0x98] sm:$0xff]
      %v8692 = vld [vmem:[#allocation3 + $0xa0] sm:$0xff]
      %v8693 = vld [vmem:[#allocation3 + $0xa8] sm:$0xff]
      %v8694 = vld [vmem:[#allocation3 + $0xb0] sm:$0xff]
      %v8695 = vld [vmem:[#allocation3 + $0xb8] sm:$0xff]
      %v8696 = vld [vmem:[#allocation3 + $0xc0] sm:$0xff]
      %v8697 = vld [vmem:[#allocation3 + $0xc8] sm:$0xff]
      %v8698 = vld [vmem:[#allocation3 + $0xd0] sm:$0xff]
      %v8699 = vld [vmem:[#allocation3 + $0xd8] sm:$0xff]
      %v8700 = vld [vmem:[#allocation3 + $0xe0] sm:$0xff]
      %v8701 = vld [vmem:[#allocation3 + $0xe8] sm:$0xff]
      %v8702 = vld [vmem:[#allocation3 + $0xf0] sm:$0xff]
      %v8703 = vld [vmem:[#allocation3 + $0xf8] sm:$0xff]
      %v8704 = vld [vmem:[#allocation3 + $0x100] sm:$0xff]
      %v8705 = vld [vmem:[#allocation3 + $0x108] sm:$0xff]
      %v8706 = vld [vmem:[#allocation3 + $0x110] sm:$0xff]
      %v8707 = vld [vmem:[#allocation3 + $0x118] sm:$0xff]
      %v8708 = vld [vmem:[#allocation3 + $0x120] sm:$0xff]
      %v8709 = vld [vmem:[#allocation3 + $0x128] sm:$0xff]
      %v8710 = vld [vmem:[#allocation3 + $0x130] sm:$0xff]
      %v8711 = vld [vmem:[#allocation3 + $0x138] sm:$0xff]
      %v8712 = vld [vmem:[#allocation3 + $0x140] sm:$0xff]
      %v8713 = vld [vmem:[#allocation3 + $0x148] sm:$0xff]
      %v8714 = vld [vmem:[#allocation3 + $0x150] sm:$0xff]
      %v8715 = vld [vmem:[#allocation3 + $0x158] sm:$0xff]
      %v8716 = vld [vmem:[#allocation3 + $0x160] sm:$0xff]
      %v8717 = vld [vmem:[#allocation3 + $0x168] sm:$0xff]
      %v8718 = vld [vmem:[#allocation3 + $0x170] sm:$0xff]
      %v8719 = vld [vmem:[#allocation3 + $0x178] sm:$0xff]
      %v8720 = vld [vmem:[#allocation3 + $0x180] sm:$0xff]
      %v8721 = vld [vmem:[#allocation3 + $0x188] sm:$0xff]
      %v8722 = vld [vmem:[#allocation3 + $0x190] sm:$0xff]
      %v8723 = vld [vmem:[#allocation3 + $0x198] sm:$0xff]
      %v8724 = vld [vmem:[#allocation3 + $0x1a0] sm:$0xff]
      %v8725 = vld [vmem:[#allocation3 + $0x1a8] sm:$0xff]
      %v8726 = vld [vmem:[#allocation3 + $0x1b0] sm:$0xff]
      %v8727 = vld [vmem:[#allocation3 + $0x1b8] sm:$0xff]
      %v8728 = vld [vmem:[#allocation3 + $0x1c0] sm:$0xff]
      %v8729 = vld [vmem:[#allocation3 + $0x1c8] sm:$0xff]
      %v8730 = vld [vmem:[#allocation3 + $0x1d0] sm:$0xff]
      %v8731 = vld [vmem:[#allocation3 + $0x1d8] sm:$0xff]
      %v8732 = vld [vmem:[#allocation3 + $0x1e0] sm:$0xff]
      %v8733 = vld [vmem:[#allocation3 + $0x1e8] sm:$0xff]
      %v8734 = vld [vmem:[#allocation3 + $0x1f0] sm:$0xff]
      %v8735 = vld [vmem:[#allocation3 + $0x1f8] sm:$0xff]
      %v8736 = vpack.c.bf16 %v8250, %v8247
      %v8737 = vpack.c.bf16 %v8258, %v8255
      %v8738 = vpack.c.bf16 %v8266, %v8263
      %v8739 = vpack.c.bf16 %v8274, %v8271
      %v8740 = vpack.c.bf16 %v8282, %v8279
      %v8741 = vpack.c.bf16 %v8290, %v8287
      %v8742 = vpack.c.bf16 %v8298, %v8295
      %v8743 = vpack.c.bf16 %v8306, %v8303
      %v8744 = vpack.c.bf16 %v8371, %v8368
      %v8745 = vpack.c.bf16 %v8379, %v8376
      %v8746 = vpack.c.bf16 %v8387, %v8384
      %v8747 = vpack.c.bf16 %v8395, %v8392
      %v8748 = vpack.c.bf16 %v8403, %v8400
      %v8749 = vpack.c.bf16 %v8411, %v8408
      %v8750 = vpack.c.bf16 %v8419, %v8416
      %v8751 = vpack.c.bf16 %v8427, %v8424
      %v8752 = vpack.c.bf16 %v8492, %v8489
      %v8753 = vpack.c.bf16 %v8500, %v8497
      %v8754 = vpack.c.bf16 %v8508, %v8505
      %v8755 = vpack.c.bf16 %v8516, %v8513
      %v8756 = vpack.c.bf16 %v8524, %v8521
      %v8757 = vpack.c.bf16 %v8532, %v8529
      %v8758 = vpack.c.bf16 %v8540, %v8537
      %v8759 = vpack.c.bf16 %v8548, %v8545
      %v8760 = vpack.c.bf16 %v8613, %v8610
      %v8761 = vpack.c.bf16 %v8621, %v8618
      %v8762 = vpack.c.bf16 %v8629, %v8626
      %v8763 = vpack.c.bf16 %v8637, %v8634
      %v8764 = vpack.c.bf16 %v8645, %v8642
      %v8765 = vpack.c.bf16 %v8653, %v8650
      %v8766 = vpack.c.bf16 %v8661, %v8658
      %v8767 = vpack.c.bf16 %v8669, %v8666
      %v8768 = vld [vmem:[%s3 + $0x8] sm:$0xf]
      %v8770 = vsel %vm1266, %v8736, 0
      %v8773 = vsel %vm1266, %v8737, 0
      %v8776 = vsel %vm1266, %v8738, 0
      %v8779 = vsel %vm1266, %v8739, 0
      %v8782 = vsel %vm1266, %v8740, 0
      %v8785 = vsel %vm1266, %v8741, 0
      %v8788 = vsel %vm1266, %v8742, 0
      %v8791 = vsel %vm1266, %v8743, 0
      %v8794 = vsel %vm1266, %v8744, 0
      %v8797 = vsel %vm1266, %v8745, 0
      %v8800 = vsel %vm1266, %v8746, 0
      %v8803 = vsel %vm1266, %v8747, 0
      %v8806 = vsel %vm1266, %v8748, 0
      %v8809 = vsel %vm1266, %v8749, 0
      %v8812 = vsel %vm1266, %v8750, 0
      %v8815 = vsel %vm1266, %v8751, 0
      %v8818 = vsel %vm1266, %v8752, 0
      %v8821 = vsel %vm1266, %v8753, 0
      %v8824 = vsel %vm1266, %v8754, 0
      %v8827 = vsel %vm1266, %v8755, 0
      %v8830 = vsel %vm1266, %v8756, 0
      %v8833 = vsel %vm1266, %v8757, 0
      %v8836 = vsel %vm1266, %v8758, 0
      %v8839 = vsel %vm1266, %v8759, 0
      %v8842 = vsel %vm1266, %v8760, 0
      %v8845 = vsel %vm1266, %v8761, 0
      %v8848 = vsel %vm1266, %v8762, 0
      %v8851 = vsel %vm1266, %v8763, 0
      %v8854 = vsel %vm1266, %v8764, 0
      %v8857 = vsel %vm1266, %v8765, 0
      %v8860 = vsel %vm1266, %v8766, 0
      %v8863 = vsel %vm1266, %v8767, 0
      %v8866 = vsel %vm3396, %v8768, 0
      %8868 = vmatprep.subr.bf16.mxu0 0
      %8869 = vmatpush1.bf16.msra.mxu0 0
      %8870 = vmatprep.subr.bf16.mxu0 0
      %8871 = vmatpush1.bf16.msra.mxu0 0
      %8872 = vmatprep.subr.bf16.mxu0 0
      %8873 = vmatpush1.bf16.msra.mxu0 0
      %8874 = vmatprep.subr.bf16.mxu0 0
      %8875 = vmatpush1.bf16.msra.mxu0 0
      %8876 = vmatprep.subr.bf16.mxu0 0
      %8877 = vmatpush1.bf16.msra.mxu0 0
      %8878 = vmatprep.subr.bf16.mxu0 0
      %8879 = vmatpush1.bf16.msra.mxu0 0
      %8880 = vmatprep.subr.bf16.mxu0 0
      %8881 = vmatpush1.bf16.msra.mxu0 0
      %8882 = vmatprep.subr.bf16.mxu0 0
      %8883 = vmatpush1.bf16.msra.mxu0 %v8866
      %8884 = vmatprep.subr.bf16.mxu0 0
      %8885 = vmatpush2.bf16.msra.mxu0 0
      %8886 = vmatprep.subr.bf16.mxu0 0
      %8887 = vmatpush2.bf16.msra.mxu0 0
      %8888 = vmatprep.subr.bf16.mxu0 0
      %8889 = vmatpush2.bf16.msra.mxu0 0
      %8890 = vmatprep.subr.bf16.mxu0 0
      %8891 = vmatpush2.bf16.msra.mxu0 0
      %8892 = vmatprep.subr.bf16.mxu0 0
      %8893 = vmatpush2.bf16.msra.mxu0 0
      %8894 = vmatprep.subr.bf16.mxu0 0
      %8895 = vmatpush2.bf16.msra.mxu0 0
      %8896 = vmatprep.subr.bf16.mxu0 0
      %8897 = vmatpush2.bf16.msra.mxu0 0
      %8898 = vmatprep.subr.bf16.mxu0 0
      %8899 = vmatpush2.bf16.msra.mxu0 0
      %8900 = vmatprep.mubr.bf16.mxu0 0
      %8901 = vmatmul.mubr.bf16.gmra.mxu0 %v8770
      %v8902 = vpop.f32.mrf.mxu0
      %v8903 = vadd.f32 0.0, %v8902
      %v8904 = vpop.f32.mrf.mxu0
      %v8905 = vpop.f32.mrf.mxu0
      %v8906 = vadd.f32 0.0, %v8905
      %v8907 = vpop.f32.mrf.mxu0
      %8908 = vmatprep.mubr.bf16.mxu0 0
      %8909 = vmatmul.mubr.bf16.gmra.mxu0 %v8773
      %v8910 = vpop.f32.mrf.mxu0
      %v8911 = vadd.f32 0.0, %v8910
      %v8912 = vpop.f32.mrf.mxu0
      %v8913 = vpop.f32.mrf.mxu0
      %v8914 = vadd.f32 0.0, %v8913
      %v8915 = vpop.f32.mrf.mxu0
      %8916 = vmatprep.mubr.bf16.mxu0 0
      %8917 = vmatmul.mubr.bf16.gmra.mxu0 %v8776
      %v8918 = vpop.f32.mrf.mxu0
      %v8919 = vadd.f32 0.0, %v8918
      %v8920 = vpop.f32.mrf.mxu0
      %v8921 = vpop.f32.mrf.mxu0
      %v8922 = vadd.f32 0.0, %v8921
      %v8923 = vpop.f32.mrf.mxu0
      %8924 = vmatprep.mubr.bf16.mxu0 0
      %8925 = vmatmul.mubr.bf16.gmra.mxu0 %v8779
      %v8926 = vpop.f32.mrf.mxu0
      %v8927 = vadd.f32 0.0, %v8926
      %v8928 = vpop.f32.mrf.mxu0
      %v8929 = vpop.f32.mrf.mxu0
      %v8930 = vadd.f32 0.0, %v8929
      %v8931 = vpop.f32.mrf.mxu0
      %8932 = vmatprep.mubr.bf16.mxu0 0
      %8933 = vmatmul.mubr.bf16.gmra.mxu0 %v8782
      %v8934 = vpop.f32.mrf.mxu0
      %v8935 = vadd.f32 0.0, %v8934
      %v8936 = vpop.f32.mrf.mxu0
      %v8937 = vpop.f32.mrf.mxu0
      %v8938 = vadd.f32 0.0, %v8937
      %v8939 = vpop.f32.mrf.mxu0
      %8940 = vmatprep.mubr.bf16.mxu0 0
      %8941 = vmatmul.mubr.bf16.gmra.mxu0 %v8785
      %v8942 = vpop.f32.mrf.mxu0
      %v8943 = vadd.f32 0.0, %v8942
      %v8944 = vpop.f32.mrf.mxu0
      %v8945 = vpop.f32.mrf.mxu0
      %v8946 = vadd.f32 0.0, %v8945
      %v8947 = vpop.f32.mrf.mxu0
      %8948 = vmatprep.mubr.bf16.mxu0 0
      %8949 = vmatmul.mubr.bf16.gmra.mxu0 %v8788
      %v8950 = vpop.f32.mrf.mxu0
      %v8951 = vadd.f32 0.0, %v8950
      %v8952 = vpop.f32.mrf.mxu0
      %v8953 = vpop.f32.mrf.mxu0
      %v8954 = vadd.f32 0.0, %v8953
      %v8955 = vpop.f32.mrf.mxu0
      %8956 = vmatprep.mubr.bf16.mxu0 0
      %8957 = vmatmul.mubr.bf16.gmra.mxu0 %v8791
      %v8958 = vpop.f32.mrf.mxu0
      %v8959 = vadd.f32 0.0, %v8958
      %v8960 = vpop.f32.mrf.mxu0
      %v8961 = vpop.f32.mrf.mxu0
      %v8962 = vadd.f32 0.0, %v8961
      %v8963 = vpop.f32.mrf.mxu0
      %8964 = vmatprep.mubr.bf16.mxu0 0
      %8965 = vmatmul.mubr.bf16.gmra.mxu0 %v8794
      %v8966 = vpop.f32.mrf.mxu0
      %v8967 = vadd.f32 0.0, %v8966
      %v8968 = vpop.f32.mrf.mxu0
      %v8969 = vpop.f32.mrf.mxu0
      %v8970 = vadd.f32 0.0, %v8969
      %v8971 = vpop.f32.mrf.mxu0
      %8972 = vmatprep.mubr.bf16.mxu0 0
      %8973 = vmatmul.mubr.bf16.gmra.mxu0 %v8797
      %v8974 = vpop.f32.mrf.mxu0
      %v8975 = vadd.f32 0.0, %v8974
      %v8976 = vpop.f32.mrf.mxu0
      %v8977 = vpop.f32.mrf.mxu0
      %v8978 = vadd.f32 0.0, %v8977
      %v8979 = vpop.f32.mrf.mxu0
      %8980 = vmatprep.mubr.bf16.mxu0 0
      %8981 = vmatmul.mubr.bf16.gmra.mxu0 %v8800
      %v8982 = vpop.f32.mrf.mxu0
      %v8983 = vadd.f32 0.0, %v8982
      %v8984 = vpop.f32.mrf.mxu0
      %v8985 = vpop.f32.mrf.mxu0
      %v8986 = vadd.f32 0.0, %v8985
      %v8987 = vpop.f32.mrf.mxu0
      %8988 = vmatprep.mubr.bf16.mxu0 0
      %8989 = vmatmul.mubr.bf16.gmra.mxu0 %v8803
      %v8990 = vpop.f32.mrf.mxu0
      %v8991 = vadd.f32 0.0, %v8990
      %v8992 = vpop.f32.mrf.mxu0
      %v8993 = vpop.f32.mrf.mxu0
      %v8994 = vadd.f32 0.0, %v8993
      %v8995 = vpop.f32.mrf.mxu0
      %8996 = vmatprep.mubr.bf16.mxu0 0
      %8997 = vmatmul.mubr.bf16.gmra.mxu0 %v8806
      %v8998 = vpop.f32.mrf.mxu0
      %v8999 = vadd.f32 0.0, %v8998
      %v9000 = vpop.f32.mrf.mxu0
      %v9001 = vpop.f32.mrf.mxu0
      %v9002 = vadd.f32 0.0, %v9001
      %v9003 = vpop.f32.mrf.mxu0
      %9004 = vmatprep.mubr.bf16.mxu0 0
      %9005 = vmatmul.mubr.bf16.gmra.mxu0 %v8809
      %v9006 = vpop.f32.mrf.mxu0
      %v9007 = vadd.f32 0.0, %v9006
      %v9008 = vpop.f32.mrf.mxu0
      %v9009 = vpop.f32.mrf.mxu0
      %v9010 = vadd.f32 0.0, %v9009
      %v9011 = vpop.f32.mrf.mxu0
      %9012 = vmatprep.mubr.bf16.mxu0 0
      %9013 = vmatmul.mubr.bf16.gmra.mxu0 %v8812
      %v9014 = vpop.f32.mrf.mxu0
      %v9015 = vadd.f32 0.0, %v9014
      %v9016 = vpop.f32.mrf.mxu0
      %v9017 = vpop.f32.mrf.mxu0
      %v9018 = vadd.f32 0.0, %v9017
      %v9019 = vpop.f32.mrf.mxu0
      %9020 = vmatprep.mubr.bf16.mxu0 0
      %9021 = vmatmul.mubr.bf16.gmra.mxu0 %v8815
      %v9022 = vpop.f32.mrf.mxu0
      %v9023 = vadd.f32 0.0, %v9022
      %v9024 = vpop.f32.mrf.mxu0
      %v9025 = vpop.f32.mrf.mxu0
      %v9026 = vadd.f32 0.0, %v9025
      %v9027 = vpop.f32.mrf.mxu0
      %9028 = vmatprep.mubr.bf16.mxu0 0
      %9029 = vmatmul.mubr.bf16.gmra.mxu0 %v8818
      %v9030 = vpop.f32.mrf.mxu0
      %v9031 = vadd.f32 0.0, %v9030
      %v9032 = vpop.f32.mrf.mxu0
      %v9033 = vpop.f32.mrf.mxu0
      %v9034 = vadd.f32 0.0, %v9033
      %v9035 = vpop.f32.mrf.mxu0
      %9036 = vmatprep.mubr.bf16.mxu0 0
      %9037 = vmatmul.mubr.bf16.gmra.mxu0 %v8821
      %v9038 = vpop.f32.mrf.mxu0
      %v9039 = vadd.f32 0.0, %v9038
      %v9040 = vpop.f32.mrf.mxu0
      %v9041 = vpop.f32.mrf.mxu0
      %v9042 = vadd.f32 0.0, %v9041
      %v9043 = vpop.f32.mrf.mxu0
      %9044 = vmatprep.mubr.bf16.mxu0 0
      %9045 = vmatmul.mubr.bf16.gmra.mxu0 %v8824
      %v9046 = vpop.f32.mrf.mxu0
      %v9047 = vadd.f32 0.0, %v9046
      %v9048 = vpop.f32.mrf.mxu0
      %v9049 = vpop.f32.mrf.mxu0
      %v9050 = vadd.f32 0.0, %v9049
      %v9051 = vpop.f32.mrf.mxu0
      %9052 = vmatprep.mubr.bf16.mxu0 0
      %9053 = vmatmul.mubr.bf16.gmra.mxu0 %v8827
      %v9054 = vpop.f32.mrf.mxu0
      %v9055 = vadd.f32 0.0, %v9054
      %v9056 = vpop.f32.mrf.mxu0
      %v9057 = vpop.f32.mrf.mxu0
      %v9058 = vadd.f32 0.0, %v9057
      %v9059 = vpop.f32.mrf.mxu0
      %9060 = vmatprep.mubr.bf16.mxu0 0
      %9061 = vmatmul.mubr.bf16.gmra.mxu0 %v8830
      %v9062 = vpop.f32.mrf.mxu0
      %v9063 = vadd.f32 0.0, %v9062
      %v9064 = vpop.f32.mrf.mxu0
      %v9065 = vpop.f32.mrf.mxu0
      %v9066 = vadd.f32 0.0, %v9065
      %v9067 = vpop.f32.mrf.mxu0
      %9068 = vmatprep.mubr.bf16.mxu0 0
      %9069 = vmatmul.mubr.bf16.gmra.mxu0 %v8833
      %v9070 = vpop.f32.mrf.mxu0
      %v9071 = vadd.f32 0.0, %v9070
      %v9072 = vpop.f32.mrf.mxu0
      %v9073 = vpop.f32.mrf.mxu0
      %v9074 = vadd.f32 0.0, %v9073
      %v9075 = vpop.f32.mrf.mxu0
      %9076 = vmatprep.mubr.bf16.mxu0 0
      %9077 = vmatmul.mubr.bf16.gmra.mxu0 %v8836
      %v9078 = vpop.f32.mrf.mxu0
      %v9079 = vadd.f32 0.0, %v9078
      %v9080 = vpop.f32.mrf.mxu0
      %v9081 = vpop.f32.mrf.mxu0
      %v9082 = vadd.f32 0.0, %v9081
      %v9083 = vpop.f32.mrf.mxu0
      %9084 = vmatprep.mubr.bf16.mxu0 0
      %9085 = vmatmul.mubr.bf16.gmra.mxu0 %v8839
      %v9086 = vpop.f32.mrf.mxu0
      %v9087 = vadd.f32 0.0, %v9086
      %v9088 = vpop.f32.mrf.mxu0
      %v9089 = vpop.f32.mrf.mxu0
      %v9090 = vadd.f32 0.0, %v9089
      %v9091 = vpop.f32.mrf.mxu0
      %9092 = vmatprep.mubr.bf16.mxu0 0
      %9093 = vmatmul.mubr.bf16.gmra.mxu0 %v8842
      %v9094 = vpop.f32.mrf.mxu0
      %v9095 = vadd.f32 0.0, %v9094
      %v9096 = vpop.f32.mrf.mxu0
      %v9097 = vpop.f32.mrf.mxu0
      %v9098 = vadd.f32 0.0, %v9097
      %v9099 = vpop.f32.mrf.mxu0
      %9100 = vmatprep.mubr.bf16.mxu0 0
      %9101 = vmatmul.mubr.bf16.gmra.mxu0 %v8845
      %v9102 = vpop.f32.mrf.mxu0
      %v9103 = vadd.f32 0.0, %v9102
      %v9104 = vpop.f32.mrf.mxu0
      %v9105 = vpop.f32.mrf.mxu0
      %v9106 = vadd.f32 0.0, %v9105
      %v9107 = vpop.f32.mrf.mxu0
      %9108 = vmatprep.mubr.bf16.mxu0 0
      %9109 = vmatmul.mubr.bf16.gmra.mxu0 %v8848
      %v9110 = vpop.f32.mrf.mxu0
      %v9111 = vadd.f32 0.0, %v9110
      %v9112 = vpop.f32.mrf.mxu0
      %v9113 = vpop.f32.mrf.mxu0
      %v9114 = vadd.f32 0.0, %v9113
      %v9115 = vpop.f32.mrf.mxu0
      %9116 = vmatprep.mubr.bf16.mxu0 0
      %9117 = vmatmul.mubr.bf16.gmra.mxu0 %v8851
      %v9118 = vpop.f32.mrf.mxu0
      %v9119 = vadd.f32 0.0, %v9118
      %v9120 = vpop.f32.mrf.mxu0
      %v9121 = vpop.f32.mrf.mxu0
      %v9122 = vadd.f32 0.0, %v9121
      %v9123 = vpop.f32.mrf.mxu0
      %9124 = vmatprep.mubr.bf16.mxu0 0
      %9125 = vmatmul.mubr.bf16.gmra.mxu0 %v8854
      %v9126 = vpop.f32.mrf.mxu0
      %v9127 = vadd.f32 0.0, %v9126
      %v9128 = vpop.f32.mrf.mxu0
      %v9129 = vpop.f32.mrf.mxu0
      %v9130 = vadd.f32 0.0, %v9129
      %v9131 = vpop.f32.mrf.mxu0
      %9132 = vmatprep.mubr.bf16.mxu0 0
      %9133 = vmatmul.mubr.bf16.gmra.mxu0 %v8857
      %v9134 = vpop.f32.mrf.mxu0
      %v9135 = vadd.f32 0.0, %v9134
      %v9136 = vpop.f32.mrf.mxu0
      %v9137 = vpop.f32.mrf.mxu0
      %v9138 = vadd.f32 0.0, %v9137
      %v9139 = vpop.f32.mrf.mxu0
      %9140 = vmatprep.mubr.bf16.mxu0 0
      %9141 = vmatmul.mubr.bf16.gmra.mxu0 %v8860
      %v9142 = vpop.f32.mrf.mxu0
      %v9143 = vadd.f32 0.0, %v9142
      %v9144 = vpop.f32.mrf.mxu0
      %v9145 = vpop.f32.mrf.mxu0
      %v9146 = vadd.f32 0.0, %v9145
      %v9147 = vpop.f32.mrf.mxu0
      %9148 = vmatprep.mubr.bf16.mxu0 0
      %9149 = vmatmul.mubr.bf16.gmra.mxu0 %v8863
      %v9150 = vpop.f32.mrf.mxu0
      %v9151 = vadd.f32 0.0, %v9150
      %v9152 = vpop.f32.mrf.mxu0
      %v9153 = vpop.f32.mrf.mxu0
      %v9154 = vadd.f32 0.0, %v9153
      %v9155 = vpop.f32.mrf.mxu0
      %9156 = vdwg.mxu0
      %v9157 = vadd.f32 %v8672, %v8903
      %v9158 = vadd.f32 %v8673, %v8906
      %v9159 = vadd.f32 %v8674, %v8911
      %v9160 = vadd.f32 %v8675, %v8914
      %v9161 = vadd.f32 %v8676, %v8919
      %v9162 = vadd.f32 %v8677, %v8922
      %v9163 = vadd.f32 %v8678, %v8927
      %v9164 = vadd.f32 %v8679, %v8930
      %v9165 = vadd.f32 %v8680, %v8935
      %v9166 = vadd.f32 %v8681, %v8938
      %v9167 = vadd.f32 %v8682, %v8943
      %v9168 = vadd.f32 %v8683, %v8946
      %v9169 = vadd.f32 %v8684, %v8951
      %v9170 = vadd.f32 %v8685, %v8954
      %v9171 = vadd.f32 %v8686, %v8959
      %v9172 = vadd.f32 %v8687, %v8962
      %v9173 = vadd.f32 %v8688, %v8967
      %v9174 = vadd.f32 %v8689, %v8970
      %v9175 = vadd.f32 %v8690, %v8975
      %v9176 = vadd.f32 %v8691, %v8978
      %v9177 = vadd.f32 %v8692, %v8983
      %v9178 = vadd.f32 %v8693, %v8986
      %v9179 = vadd.f32 %v8694, %v8991
      %v9180 = vadd.f32 %v8695, %v8994
      %v9181 = vadd.f32 %v8696, %v8999
      %v9182 = vadd.f32 %v8697, %v9002
      %v9183 = vadd.f32 %v8698, %v9007
      %v9184 = vadd.f32 %v8699, %v9010
      %v9185 = vadd.f32 %v8700, %v9015
      %v9186 = vadd.f32 %v8701, %v9018
      %v9187 = vadd.f32 %v8702, %v9023
      %v9188 = vadd.f32 %v8703, %v9026
      %v9189 = vadd.f32 %v8704, %v9031
      %v9190 = vadd.f32 %v8705, %v9034
      %v9191 = vadd.f32 %v8706, %v9039
      %v9192 = vadd.f32 %v8707, %v9042
      %v9193 = vadd.f32 %v8708, %v9047
      %v9194 = vadd.f32 %v8709, %v9050
      %v9195 = vadd.f32 %v8710, %v9055
      %v9196 = vadd.f32 %v8711, %v9058
      %v9197 = vadd.f32 %v8712, %v9063
      %v9198 = vadd.f32 %v8713, %v9066
      %v9199 = vadd.f32 %v8714, %v9071
      %v9200 = vadd.f32 %v8715, %v9074
      %v9201 = vadd.f32 %v8716, %v9079
      %v9202 = vadd.f32 %v8717, %v9082
      %v9203 = vadd.f32 %v8718, %v9087
      %v9204 = vadd.f32 %v8719, %v9090
      %v9205 = vadd.f32 %v8720, %v9095
      %v9206 = vadd.f32 %v8721, %v9098
      %v9207 = vadd.f32 %v8722, %v9103
      %v9208 = vadd.f32 %v8723, %v9106
      %v9209 = vadd.f32 %v8724, %v9111
      %v9210 = vadd.f32 %v8725, %v9114
      %v9211 = vadd.f32 %v8726, %v9119
      %v9212 = vadd.f32 %v8727, %v9122
      %v9213 = vadd.f32 %v8728, %v9127
      %v9214 = vadd.f32 %v8729, %v9130
      %v9215 = vadd.f32 %v8730, %v9135
      %v9216 = vadd.f32 %v8731, %v9138
      %v9217 = vadd.f32 %v8732, %v9143
      %v9218 = vadd.f32 %v8733, %v9146
      %v9219 = vadd.f32 %v8734, %v9151
      %v9220 = vadd.f32 %v8735, %v9154
      %9221 = vst.msk [vmem:[#allocation3] sm:$0xff] %vm375, %v9157
      %9222 = vst.msk [vmem:[#allocation3 + $0x8] sm:$0xff] %vm375, %v9158
      %9223 = vst.msk [vmem:[#allocation3 + $0x10] sm:$0xff] %vm375, %v9159
      %9224 = vst.msk [vmem:[#allocation3 + $0x18] sm:$0xff] %vm375, %v9160
      %9225 = vst.msk [vmem:[#allocation3 + $0x20] sm:$0xff] %vm375, %v9161
      %9226 = vst.msk [vmem:[#allocation3 + $0x28] sm:$0xff] %vm375, %v9162
      %9227 = vst.msk [vmem:[#allocation3 + $0x30] sm:$0xff] %vm375, %v9163
      %9228 = vst.msk [vmem:[#allocation3 + $0x38] sm:$0xff] %vm375, %v9164
      %9229 = vst.msk [vmem:[#allocation3 + $0x40] sm:$0xff] %vm375, %v9165
      %9230 = vst.msk [vmem:[#allocation3 + $0x48] sm:$0xff] %vm375, %v9166
      %9231 = vst.msk [vmem:[#allocation3 + $0x50] sm:$0xff] %vm375, %v9167
      %9232 = vst.msk [vmem:[#allocation3 + $0x58] sm:$0xff] %vm375, %v9168
      %9233 = vst.msk [vmem:[#allocation3 + $0x60] sm:$0xff] %vm375, %v9169
      %9234 = vst.msk [vmem:[#allocation3 + $0x68] sm:$0xff] %vm375, %v9170
      %9235 = vst.msk [vmem:[#allocation3 + $0x70] sm:$0xff] %vm375, %v9171
      %9236 = vst.msk [vmem:[#allocation3 + $0x78] sm:$0xff] %vm375, %v9172
      %9237 = vst.msk [vmem:[#allocation3 + $0x80] sm:$0xff] %vm375, %v9173
      %9238 = vst.msk [vmem:[#allocation3 + $0x88] sm:$0xff] %vm375, %v9174
      %9239 = vst.msk [vmem:[#allocation3 + $0x90] sm:$0xff] %vm375, %v9175
      %9240 = vst.msk [vmem:[#allocation3 + $0x98] sm:$0xff] %vm375, %v9176
      %9241 = vst.msk [vmem:[#allocation3 + $0xa0] sm:$0xff] %vm375, %v9177
      %9242 = vst.msk [vmem:[#allocation3 + $0xa8] sm:$0xff] %vm375, %v9178
      %9243 = vst.msk [vmem:[#allocation3 + $0xb0] sm:$0xff] %vm375, %v9179
      %9244 = vst.msk [vmem:[#allocation3 + $0xb8] sm:$0xff] %vm375, %v9180
      %9245 = vst.msk [vmem:[#allocation3 + $0xc0] sm:$0xff] %vm375, %v9181
      %9246 = vst.msk [vmem:[#allocation3 + $0xc8] sm:$0xff] %vm375, %v9182
      %9247 = vst.msk [vmem:[#allocation3 + $0xd0] sm:$0xff] %vm375, %v9183
      %9248 = vst.msk [vmem:[#allocation3 + $0xd8] sm:$0xff] %vm375, %v9184
      %9249 = vst.msk [vmem:[#allocation3 + $0xe0] sm:$0xff] %vm375, %v9185
      %9250 = vst.msk [vmem:[#allocation3 + $0xe8] sm:$0xff] %vm375, %v9186
      %9251 = vst.msk [vmem:[#allocation3 + $0xf0] sm:$0xff] %vm375, %v9187
      %9252 = vst.msk [vmem:[#allocation3 + $0xf8] sm:$0xff] %vm375, %v9188
      %9253 = vst.msk [vmem:[#allocation3 + $0x100] sm:$0xff] %vm375, %v9189
      %9254 = vst.msk [vmem:[#allocation3 + $0x108] sm:$0xff] %vm375, %v9190
      %9255 = vst.msk [vmem:[#allocation3 + $0x110] sm:$0xff] %vm375, %v9191
      %9256 = vst.msk [vmem:[#allocation3 + $0x118] sm:$0xff] %vm375, %v9192
      %9257 = vst.msk [vmem:[#allocation3 + $0x120] sm:$0xff] %vm375, %v9193
      %9258 = vst.msk [vmem:[#allocation3 + $0x128] sm:$0xff] %vm375, %v9194
      %9259 = vst.msk [vmem:[#allocation3 + $0x130] sm:$0xff] %vm375, %v9195
      %9260 = vst.msk [vmem:[#allocation3 + $0x138] sm:$0xff] %vm375, %v9196
      %9261 = vst.msk [vmem:[#allocation3 + $0x140] sm:$0xff] %vm375, %v9197
      %9262 = vst.msk [vmem:[#allocation3 + $0x148] sm:$0xff] %vm375, %v9198
      %9263 = vst.msk [vmem:[#allocation3 + $0x150] sm:$0xff] %vm375, %v9199
      %9264 = vst.msk [vmem:[#allocation3 + $0x158] sm:$0xff] %vm375, %v9200
      %9265 = vst.msk [vmem:[#allocation3 + $0x160] sm:$0xff] %vm375, %v9201
      %9266 = vst.msk [vmem:[#allocation3 + $0x168] sm:$0xff] %vm375, %v9202
      %9267 = vst.msk [vmem:[#allocation3 + $0x170] sm:$0xff] %vm375, %v9203
      %9268 = vst.msk [vmem:[#allocation3 + $0x178] sm:$0xff] %vm375, %v9204
      %9269 = vst.msk [vmem:[#allocation3 + $0x180] sm:$0xff] %vm375, %v9205
      %9270 = vst.msk [vmem:[#allocation3 + $0x188] sm:$0xff] %vm375, %v9206
      %9271 = vst.msk [vmem:[#allocation3 + $0x190] sm:$0xff] %vm375, %v9207
      %9272 = vst.msk [vmem:[#allocation3 + $0x198] sm:$0xff] %vm375, %v9208
      %9273 = vst.msk [vmem:[#allocation3 + $0x1a0] sm:$0xff] %vm375, %v9209
      %9274 = vst.msk [vmem:[#allocation3 + $0x1a8] sm:$0xff] %vm375, %v9210
      %9275 = vst.msk [vmem:[#allocation3 + $0x1b0] sm:$0xff] %vm375, %v9211
      %9276 = vst.msk [vmem:[#allocation3 + $0x1b8] sm:$0xff] %vm375, %v9212
      %9277 = vst.msk [vmem:[#allocation3 + $0x1c0] sm:$0xff] %vm375, %v9213
      %9278 = vst.msk [vmem:[#allocation3 + $0x1c8] sm:$0xff] %vm375, %v9214
      %9279 = vst.msk [vmem:[#allocation3 + $0x1d0] sm:$0xff] %vm375, %v9215
      %9280 = vst.msk [vmem:[#allocation3 + $0x1d8] sm:$0xff] %vm375, %v9216
      %9281 = vst.msk [vmem:[#allocation3 + $0x1e0] sm:$0xff] %vm375, %v9217
      %9282 = vst.msk [vmem:[#allocation3 + $0x1e8] sm:$0xff] %vm375, %v9218
      %9283 = vst.msk [vmem:[#allocation3 + $0x1f0] sm:$0xff] %vm375, %v9219
      %9284 = vst.msk [vmem:[#allocation3 + $0x1f8] sm:$0xff] %vm375, %v9220
      %v9285 = vld [vmem:[#allocation2] sm:$0xf]
      %v9286 = vld [vmem:[#allocation2 + $0x4] sm:$0xf]
      %v9287 = vld [vmem:[#allocation2 + $0x8] sm:$0xf]
      %v9288 = vld [vmem:[#allocation2 + $0xc] sm:$0xf]
      %v9289 = vld [vmem:[#allocation2 + $0x10] sm:$0xf]
      %v9290 = vld [vmem:[#allocation2 + $0x14] sm:$0xf]
      %v9291 = vld [vmem:[#allocation2 + $0x18] sm:$0xf]
      %v9292 = vld [vmem:[#allocation2 + $0x1c] sm:$0xf]
      %v9293 = vld [vmem:[#allocation2 + $0x20] sm:$0xf]
      %v9294 = vld [vmem:[#allocation2 + $0x24] sm:$0xf]
      %v9295 = vld [vmem:[#allocation2 + $0x28] sm:$0xf]
      %v9296 = vld [vmem:[#allocation2 + $0x2c] sm:$0xf]
      %v9297 = vld [vmem:[#allocation2 + $0x30] sm:$0xf]
      %v9298 = vld [vmem:[#allocation2 + $0x34] sm:$0xf]
      %v9299 = vld [vmem:[#allocation2 + $0x38] sm:$0xf]
      %v9300 = vld [vmem:[#allocation2 + $0x3c] sm:$0xf]
      %v9301 = vld [vmem:[#allocation2 + $0x40] sm:$0xf]
      %v9302 = vld [vmem:[#allocation2 + $0x44] sm:$0xf]
      %v9303 = vld [vmem:[#allocation2 + $0x48] sm:$0xf]
      %v9304 = vld [vmem:[#allocation2 + $0x4c] sm:$0xf]
      %v9305 = vld [vmem:[#allocation2 + $0x50] sm:$0xf]
      %v9306 = vld [vmem:[#allocation2 + $0x54] sm:$0xf]
      %v9307 = vld [vmem:[#allocation2 + $0x58] sm:$0xf]
      %v9308 = vld [vmem:[#allocation2 + $0x5c] sm:$0xf]
      %v9309 = vld [vmem:[#allocation2 + $0x60] sm:$0xf]
      %v9310 = vld [vmem:[#allocation2 + $0x64] sm:$0xf]
      %v9311 = vld [vmem:[#allocation2 + $0x68] sm:$0xf]
      %v9312 = vld [vmem:[#allocation2 + $0x6c] sm:$0xf]
      %v9313 = vld [vmem:[#allocation2 + $0x70] sm:$0xf]
      %v9314 = vld [vmem:[#allocation2 + $0x74] sm:$0xf]
      %v9315 = vld [vmem:[#allocation2 + $0x78] sm:$0xf]
      %v9316 = vld [vmem:[#allocation2 + $0x7c] sm:$0xf]
      %v9317 = vld [vmem:[#allocation2 + $0x80] sm:$0xf]
      %v9318 = vld [vmem:[#allocation2 + $0x84] sm:$0xf]
      %v9319 = vld [vmem:[#allocation2 + $0x88] sm:$0xf]
      %v9320 = vld [vmem:[#allocation2 + $0x8c] sm:$0xf]
      %v9321 = vld [vmem:[#allocation2 + $0x90] sm:$0xf]
      %v9322 = vld [vmem:[#allocation2 + $0x94] sm:$0xf]
      %v9323 = vld [vmem:[#allocation2 + $0x98] sm:$0xf]
      %v9324 = vld [vmem:[#allocation2 + $0x9c] sm:$0xf]
      %v9325 = vld [vmem:[#allocation2 + $0xa0] sm:$0xf]
      %v9326 = vld [vmem:[#allocation2 + $0xa4] sm:$0xf]
      %v9327 = vld [vmem:[#allocation2 + $0xa8] sm:$0xf]
      %v9328 = vld [vmem:[#allocation2 + $0xac] sm:$0xf]
      %v9329 = vld [vmem:[#allocation2 + $0xb0] sm:$0xf]
      %v9330 = vld [vmem:[#allocation2 + $0xb4] sm:$0xf]
      %v9331 = vld [vmem:[#allocation2 + $0xb8] sm:$0xf]
      %v9332 = vld [vmem:[#allocation2 + $0xbc] sm:$0xf]
      %v9333 = vld [vmem:[#allocation2 + $0xc0] sm:$0xf]
      %v9334 = vld [vmem:[#allocation2 + $0xc4] sm:$0xf]
      %v9335 = vld [vmem:[#allocation2 + $0xc8] sm:$0xf]
      %v9336 = vld [vmem:[#allocation2 + $0xcc] sm:$0xf]
      %v9337 = vld [vmem:[#allocation2 + $0xd0] sm:$0xf]
      %v9338 = vld [vmem:[#allocation2 + $0xd4] sm:$0xf]
      %v9339 = vld [vmem:[#allocation2 + $0xd8] sm:$0xf]
      %v9340 = vld [vmem:[#allocation2 + $0xdc] sm:$0xf]
      %v9341 = vld [vmem:[#allocation2 + $0xe0] sm:$0xf]
      %v9342 = vld [vmem:[#allocation2 + $0xe4] sm:$0xf]
      %v9343 = vld [vmem:[#allocation2 + $0xe8] sm:$0xf]
      %v9344 = vld [vmem:[#allocation2 + $0xec] sm:$0xf]
      %v9345 = vld [vmem:[#allocation2 + $0xf0] sm:$0xf]
      %v9346 = vld [vmem:[#allocation2 + $0xf4] sm:$0xf]
      %v9347 = vld [vmem:[#allocation2 + $0xf8] sm:$0xf]
      %v9348 = vld [vmem:[#allocation2 + $0xfc] sm:$0xf]
      %v9365 = vunpack.c.l.b16 %v9285
      %v9366 = vunpack.c.l.b16 %v9286
      %v9367 = vunpack.c.l.b16 %v9287
      %v9368 = vunpack.c.l.b16 %v9288
      %v9369 = vunpack.c.l.b16 %v9289
      %v9370 = vunpack.c.l.b16 %v9290
      %v9371 = vunpack.c.l.b16 %v9291
      %v9372 = vunpack.c.l.b16 %v9292
      %v9373 = vunpack.c.l.b16 %v9293
      %v9374 = vunpack.c.l.b16 %v9294
      %v9375 = vunpack.c.l.b16 %v9295
      %v9376 = vunpack.c.l.b16 %v9296
      %v9377 = vunpack.c.l.b16 %v9297
      %v9378 = vunpack.c.l.b16 %v9298
      %v9379 = vunpack.c.l.b16 %v9299
      %v9380 = vunpack.c.l.b16 %v9300
      %v9381 = vpack.c.b16 %v9366, %v9365
      %v9382 = vpack.c.b16 %v9368, %v9367
      %v9383 = vpack.c.b16 %v9370, %v9369
      %v9384 = vpack.c.b16 %v9372, %v9371
      %v9385 = vpack.c.b16 %v9374, %v9373
      %v9386 = vpack.c.b16 %v9376, %v9375
      %v9387 = vpack.c.b16 %v9378, %v9377
      %v9388 = vpack.c.b16 %v9380, %v9379
      %9389 = vrot.lane.b32.xlu0 %v9381, 104
      %v9390 = vpop.permute.xlu0 %9389
      %9391 = vrot.lane.b32.xlu0 %v9382, 104
      %v9392 = vpop.permute.xlu0 %9391
      %9393 = vrot.lane.b32.xlu0 %v9383, 104
      %v9394 = vpop.permute.xlu0 %9393
      %9395 = vrot.lane.b32.xlu0 %v9384, 104
      %v9396 = vpop.permute.xlu0 %9395
      %9397 = vrot.lane.b32.xlu0 %v9385, 104
      %v9398 = vpop.permute.xlu0 %9397
      %9399 = vrot.lane.b32.xlu0 %v9386, 104
      %v9400 = vpop.permute.xlu0 %9399
      %9401 = vrot.lane.b32.xlu0 %v9387, 104
      %v9402 = vpop.permute.xlu0 %9401
      %9403 = vrot.lane.b32.xlu0 %v9388, 104
      %v9404 = vpop.permute.xlu0 %9403
      %9405 = vrot.lane.b32.xlu0 %v9381, 72
      %v9406 = vpop.permute.xlu0 %9405
      %9407 = vrot.lane.b32.xlu0 %v9382, 72
      %v9408 = vpop.permute.xlu0 %9407
      %9409 = vrot.lane.b32.xlu0 %v9383, 72
      %v9410 = vpop.permute.xlu0 %9409
      %9411 = vrot.lane.b32.xlu0 %v9384, 72
      %v9412 = vpop.permute.xlu0 %9411
      %9413 = vrot.lane.b32.xlu0 %v9385, 72
      %v9414 = vpop.permute.xlu0 %9413
      %9415 = vrot.lane.b32.xlu0 %v9386, 72
      %v9416 = vpop.permute.xlu0 %9415
      %9417 = vrot.lane.b32.xlu0 %v9387, 72
      %v9418 = vpop.permute.xlu0 %9417
      %9419 = vrot.lane.b32.xlu0 %v9388, 72
      %v9420 = vpop.permute.xlu0 %9419
      %v9422 = vsel %vm1266, %v9390, 0
      %v9425 = vsel %vm1266, %v9392, 0
      %v9428 = vsel %vm1266, %v9394, 0
      %v9431 = vsel %vm1266, %v9396, 0
      %v9434 = vsel %vm1266, %v9398, 0
      %v9437 = vsel %vm1266, %v9400, 0
      %v9440 = vsel %vm1266, %v9402, 0
      %v9443 = vsel %vm1266, %v9404, 0
      %v9446 = vsel %vm1266, %v9406, 0
      %v9449 = vsel %vm1266, %v9408, 0
      %v9452 = vsel %vm1266, %v9410, 0
      %v9455 = vsel %vm1266, %v9412, 0
      %v9458 = vsel %vm1266, %v9414, 0
      %v9461 = vsel %vm1266, %v9416, 0
      %v9464 = vsel %vm1266, %v9418, 0
      %v9467 = vsel %vm1266, %v9420, 0
      %9469 = vmatprep.subr.bf16.mxu0 0
      %9470 = vmatpush1.bf16.xpose.msra.mxu0 %v9467
      %9471 = vmatprep.subr.bf16.mxu0 0
      %9472 = vmatpush1.bf16.xpose.msra.mxu0 %v9464
      %9473 = vmatprep.subr.bf16.mxu0 0
      %9474 = vmatpush1.bf16.xpose.msra.mxu0 %v9461
      %9475 = vmatprep.subr.bf16.mxu0 0
      %9476 = vmatpush1.bf16.xpose.msra.mxu0 %v9458
      %9477 = vmatprep.subr.bf16.mxu0 0
      %9478 = vmatpush1.bf16.xpose.msra.mxu0 %v9455
      %9479 = vmatprep.subr.bf16.mxu0 0
      %9480 = vmatpush1.bf16.xpose.msra.mxu0 %v9452
      %9481 = vmatprep.subr.bf16.mxu0 0
      %9482 = vmatpush1.bf16.xpose.msra.mxu0 %v9449
      %9483 = vmatprep.subr.bf16.mxu0 0
      %9484 = vmatpush1.bf16.xpose.msra.mxu0 %v9446
      %9485 = vmatprep.subr.bf16.mxu0 0
      %9486 = vmatpush2.bf16.xpose.msra.mxu0 0
      %9487 = vmatprep.subr.bf16.mxu0 0
      %9488 = vmatpush2.bf16.xpose.msra.mxu0 0
      %9489 = vmatprep.subr.bf16.mxu0 0
      %9490 = vmatpush2.bf16.xpose.msra.mxu0 0
      %9491 = vmatprep.subr.bf16.mxu0 0
      %9492 = vmatpush2.bf16.xpose.msra.mxu0 0
      %9493 = vmatprep.subr.bf16.mxu0 0
      %9494 = vmatpush2.bf16.xpose.msra.mxu0 0
      %9495 = vmatprep.subr.bf16.mxu0 0
      %9496 = vmatpush2.bf16.xpose.msra.mxu0 0
      %9497 = vmatprep.subr.bf16.mxu0 0
      %9498 = vmatpush2.bf16.xpose.msra.mxu0 0
      %9499 = vmatprep.subr.bf16.mxu0 0
      %9500 = vmatpush2.bf16.xpose.msra.mxu0 0
      %9501 = vmatprep.mubr.bf16.mxu0 0
      %9502 = vmatmul.mubr.bf16.gmra.mxu0 %v9422
      %v9503 = vpop.f32.mrf.mxu0
      %v9504 = vadd.f32 0.0, %v9503
      %v9505 = vpop.f32.mrf.mxu0
      %v9506 = vpop.f32.mrf.mxu0
      %v9507 = vadd.f32 0.0, %v9506
      %v9508 = vpop.f32.mrf.mxu0
      %9509 = vmatprep.mubr.bf16.mxu0 0
      %9510 = vmatmul.mubr.bf16.gmra.mxu0 %v9425
      %v9511 = vpop.f32.mrf.mxu0
      %v9512 = vadd.f32 0.0, %v9511
      %v9513 = vpop.f32.mrf.mxu0
      %v9514 = vpop.f32.mrf.mxu0
      %v9515 = vadd.f32 0.0, %v9514
      %v9516 = vpop.f32.mrf.mxu0
      %9517 = vmatprep.mubr.bf16.mxu0 0
      %9518 = vmatmul.mubr.bf16.gmra.mxu0 %v9428
      %v9519 = vpop.f32.mrf.mxu0
      %v9520 = vadd.f32 0.0, %v9519
      %v9521 = vpop.f32.mrf.mxu0
      %v9522 = vpop.f32.mrf.mxu0
      %v9523 = vadd.f32 0.0, %v9522
      %v9524 = vpop.f32.mrf.mxu0
      %9525 = vmatprep.mubr.bf16.mxu0 0
      %9526 = vmatmul.mubr.bf16.gmra.mxu0 %v9431
      %v9527 = vpop.f32.mrf.mxu0
      %v9528 = vadd.f32 0.0, %v9527
      %v9529 = vpop.f32.mrf.mxu0
      %v9530 = vpop.f32.mrf.mxu0
      %v9531 = vadd.f32 0.0, %v9530
      %v9532 = vpop.f32.mrf.mxu0
      %9533 = vmatprep.mubr.bf16.mxu0 0
      %9534 = vmatmul.mubr.bf16.gmra.mxu0 %v9434
      %v9535 = vpop.f32.mrf.mxu0
      %v9536 = vadd.f32 0.0, %v9535
      %v9537 = vpop.f32.mrf.mxu0
      %v9538 = vpop.f32.mrf.mxu0
      %v9539 = vadd.f32 0.0, %v9538
      %v9540 = vpop.f32.mrf.mxu0
      %9541 = vmatprep.mubr.bf16.mxu0 0
      %9542 = vmatmul.mubr.bf16.gmra.mxu0 %v9437
      %v9543 = vpop.f32.mrf.mxu0
      %v9544 = vadd.f32 0.0, %v9543
      %v9545 = vpop.f32.mrf.mxu0
      %v9546 = vpop.f32.mrf.mxu0
      %v9547 = vadd.f32 0.0, %v9546
      %v9548 = vpop.f32.mrf.mxu0
      %9549 = vmatprep.mubr.bf16.mxu0 0
      %9550 = vmatmul.mubr.bf16.gmra.mxu0 %v9440
      %v9551 = vpop.f32.mrf.mxu0
      %v9552 = vadd.f32 0.0, %v9551
      %v9553 = vpop.f32.mrf.mxu0
      %v9554 = vpop.f32.mrf.mxu0
      %v9555 = vadd.f32 0.0, %v9554
      %v9556 = vpop.f32.mrf.mxu0
      %9557 = vmatprep.mubr.bf16.mxu0 0
      %9558 = vmatmul.mubr.bf16.gmra.mxu0 %v9443
      %v9559 = vpop.f32.mrf.mxu0
      %v9560 = vadd.f32 0.0, %v9559
      %v9561 = vpop.f32.mrf.mxu0
      %v9562 = vpop.f32.mrf.mxu0
      %v9563 = vadd.f32 0.0, %v9562
      %v9564 = vpop.f32.mrf.mxu0
      %9565 = vdwg.mxu0
      %v9582 = vunpack.c.l.b16 %v9301
      %v9583 = vunpack.c.l.b16 %v9302
      %v9584 = vunpack.c.l.b16 %v9303
      %v9585 = vunpack.c.l.b16 %v9304
      %v9586 = vunpack.c.l.b16 %v9305
      %v9587 = vunpack.c.l.b16 %v9306
      %v9588 = vunpack.c.l.b16 %v9307
      %v9589 = vunpack.c.l.b16 %v9308
      %v9590 = vunpack.c.l.b16 %v9309
      %v9591 = vunpack.c.l.b16 %v9310
      %v9592 = vunpack.c.l.b16 %v9311
      %v9593 = vunpack.c.l.b16 %v9312
      %v9594 = vunpack.c.l.b16 %v9313
      %v9595 = vunpack.c.l.b16 %v9314
      %v9596 = vunpack.c.l.b16 %v9315
      %v9597 = vunpack.c.l.b16 %v9316
      %v9598 = vpack.c.b16 %v9583, %v9582
      %v9599 = vpack.c.b16 %v9585, %v9584
      %v9600 = vpack.c.b16 %v9587, %v9586
      %v9601 = vpack.c.b16 %v9589, %v9588
      %v9602 = vpack.c.b16 %v9591, %v9590
      %v9603 = vpack.c.b16 %v9593, %v9592
      %v9604 = vpack.c.b16 %v9595, %v9594
      %v9605 = vpack.c.b16 %v9597, %v9596
      %9606 = vrot.lane.b32.xlu0 %v9598, 104
      %v9607 = vpop.permute.xlu0 %9606
      %9608 = vrot.lane.b32.xlu0 %v9599, 104
      %v9609 = vpop.permute.xlu0 %9608
      %9610 = vrot.lane.b32.xlu0 %v9600, 104
      %v9611 = vpop.permute.xlu0 %9610
      %9612 = vrot.lane.b32.xlu0 %v9601, 104
      %v9613 = vpop.permute.xlu0 %9612
      %9614 = vrot.lane.b32.xlu0 %v9602, 104
      %v9615 = vpop.permute.xlu0 %9614
      %9616 = vrot.lane.b32.xlu0 %v9603, 104
      %v9617 = vpop.permute.xlu0 %9616
      %9618 = vrot.lane.b32.xlu0 %v9604, 104
      %v9619 = vpop.permute.xlu0 %9618
      %9620 = vrot.lane.b32.xlu0 %v9605, 104
      %v9621 = vpop.permute.xlu0 %9620
      %9622 = vrot.lane.b32.xlu0 %v9598, 72
      %v9623 = vpop.permute.xlu0 %9622
      %9624 = vrot.lane.b32.xlu0 %v9599, 72
      %v9625 = vpop.permute.xlu0 %9624
      %9626 = vrot.lane.b32.xlu0 %v9600, 72
      %v9627 = vpop.permute.xlu0 %9626
      %9628 = vrot.lane.b32.xlu0 %v9601, 72
      %v9629 = vpop.permute.xlu0 %9628
      %9630 = vrot.lane.b32.xlu0 %v9602, 72
      %v9631 = vpop.permute.xlu0 %9630
      %9632 = vrot.lane.b32.xlu0 %v9603, 72
      %v9633 = vpop.permute.xlu0 %9632
      %9634 = vrot.lane.b32.xlu0 %v9604, 72
      %v9635 = vpop.permute.xlu0 %9634
      %9636 = vrot.lane.b32.xlu0 %v9605, 72
      %v9637 = vpop.permute.xlu0 %9636
      %v9639 = vsel %vm1266, %v9607, 0
      %v9642 = vsel %vm1266, %v9609, 0
      %v9645 = vsel %vm1266, %v9611, 0
      %v9648 = vsel %vm1266, %v9613, 0
      %v9651 = vsel %vm1266, %v9615, 0
      %v9654 = vsel %vm1266, %v9617, 0
      %v9657 = vsel %vm1266, %v9619, 0
      %v9660 = vsel %vm1266, %v9621, 0
      %v9663 = vsel %vm1266, %v9623, 0
      %v9666 = vsel %vm1266, %v9625, 0
      %v9669 = vsel %vm1266, %v9627, 0
      %v9672 = vsel %vm1266, %v9629, 0
      %v9675 = vsel %vm1266, %v9631, 0
      %v9678 = vsel %vm1266, %v9633, 0
      %v9681 = vsel %vm1266, %v9635, 0
      %v9684 = vsel %vm1266, %v9637, 0
      %9686 = vmatprep.subr.bf16.mxu0 0
      %9687 = vmatpush1.bf16.xpose.msra.mxu0 %v9684
      %9688 = vmatprep.subr.bf16.mxu0 0
      %9689 = vmatpush1.bf16.xpose.msra.mxu0 %v9681
      %9690 = vmatprep.subr.bf16.mxu0 0
      %9691 = vmatpush1.bf16.xpose.msra.mxu0 %v9678
      %9692 = vmatprep.subr.bf16.mxu0 0
      %9693 = vmatpush1.bf16.xpose.msra.mxu0 %v9675
      %9694 = vmatprep.subr.bf16.mxu0 0
      %9695 = vmatpush1.bf16.xpose.msra.mxu0 %v9672
      %9696 = vmatprep.subr.bf16.mxu0 0
      %9697 = vmatpush1.bf16.xpose.msra.mxu0 %v9669
      %9698 = vmatprep.subr.bf16.mxu0 0
      %9699 = vmatpush1.bf16.xpose.msra.mxu0 %v9666
      %9700 = vmatprep.subr.bf16.mxu0 0
      %9701 = vmatpush1.bf16.xpose.msra.mxu0 %v9663
      %9702 = vmatprep.subr.bf16.mxu0 0
      %9703 = vmatpush2.bf16.xpose.msra.mxu0 0
      %9704 = vmatprep.subr.bf16.mxu0 0
      %9705 = vmatpush2.bf16.xpose.msra.mxu0 0
      %9706 = vmatprep.subr.bf16.mxu0 0
      %9707 = vmatpush2.bf16.xpose.msra.mxu0 0
      %9708 = vmatprep.subr.bf16.mxu0 0
      %9709 = vmatpush2.bf16.xpose.msra.mxu0 0
      %9710 = vmatprep.subr.bf16.mxu0 0
      %9711 = vmatpush2.bf16.xpose.msra.mxu0 0
      %9712 = vmatprep.subr.bf16.mxu0 0
      %9713 = vmatpush2.bf16.xpose.msra.mxu0 0
      %9714 = vmatprep.subr.bf16.mxu0 0
      %9715 = vmatpush2.bf16.xpose.msra.mxu0 0
      %9716 = vmatprep.subr.bf16.mxu0 0
      %9717 = vmatpush2.bf16.xpose.msra.mxu0 0
      %9718 = vmatprep.mubr.bf16.mxu0 0
      %9719 = vmatmul.mubr.bf16.gmra.mxu0 %v9639
      %v9720 = vpop.f32.mrf.mxu0
      %v9721 = vadd.f32 0.0, %v9720
      %v9722 = vpop.f32.mrf.mxu0
      %v9723 = vpop.f32.mrf.mxu0
      %v9724 = vadd.f32 0.0, %v9723
      %v9725 = vpop.f32.mrf.mxu0
      %9726 = vmatprep.mubr.bf16.mxu0 0
      %9727 = vmatmul.mubr.bf16.gmra.mxu0 %v9642
      %v9728 = vpop.f32.mrf.mxu0
      %v9729 = vadd.f32 0.0, %v9728
      %v9730 = vpop.f32.mrf.mxu0
      %v9731 = vpop.f32.mrf.mxu0
      %v9732 = vadd.f32 0.0, %v9731
      %v9733 = vpop.f32.mrf.mxu0
      %9734 = vmatprep.mubr.bf16.mxu0 0
      %9735 = vmatmul.mubr.bf16.gmra.mxu0 %v9645
      %v9736 = vpop.f32.mrf.mxu0
      %v9737 = vadd.f32 0.0, %v9736
      %v9738 = vpop.f32.mrf.mxu0
      %v9739 = vpop.f32.mrf.mxu0
      %v9740 = vadd.f32 0.0, %v9739
      %v9741 = vpop.f32.mrf.mxu0
      %9742 = vmatprep.mubr.bf16.mxu0 0
      %9743 = vmatmul.mubr.bf16.gmra.mxu0 %v9648
      %v9744 = vpop.f32.mrf.mxu0
      %v9745 = vadd.f32 0.0, %v9744
      %v9746 = vpop.f32.mrf.mxu0
      %v9747 = vpop.f32.mrf.mxu0
      %v9748 = vadd.f32 0.0, %v9747
      %v9749 = vpop.f32.mrf.mxu0
      %9750 = vmatprep.mubr.bf16.mxu0 0
      %9751 = vmatmul.mubr.bf16.gmra.mxu0 %v9651
      %v9752 = vpop.f32.mrf.mxu0
      %v9753 = vadd.f32 0.0, %v9752
      %v9754 = vpop.f32.mrf.mxu0
      %v9755 = vpop.f32.mrf.mxu0
      %v9756 = vadd.f32 0.0, %v9755
      %v9757 = vpop.f32.mrf.mxu0
      %9758 = vmatprep.mubr.bf16.mxu0 0
      %9759 = vmatmul.mubr.bf16.gmra.mxu0 %v9654
      %v9760 = vpop.f32.mrf.mxu0
      %v9761 = vadd.f32 0.0, %v9760
      %v9762 = vpop.f32.mrf.mxu0
      %v9763 = vpop.f32.mrf.mxu0
      %v9764 = vadd.f32 0.0, %v9763
      %v9765 = vpop.f32.mrf.mxu0
      %9766 = vmatprep.mubr.bf16.mxu0 0
      %9767 = vmatmul.mubr.bf16.gmra.mxu0 %v9657
      %v9768 = vpop.f32.mrf.mxu0
      %v9769 = vadd.f32 0.0, %v9768
      %v9770 = vpop.f32.mrf.mxu0
      %v9771 = vpop.f32.mrf.mxu0
      %v9772 = vadd.f32 0.0, %v9771
      %v9773 = vpop.f32.mrf.mxu0
      %9774 = vmatprep.mubr.bf16.mxu0 0
      %9775 = vmatmul.mubr.bf16.gmra.mxu0 %v9660
      %v9776 = vpop.f32.mrf.mxu0
      %v9777 = vadd.f32 0.0, %v9776
      %v9778 = vpop.f32.mrf.mxu0
      %v9779 = vpop.f32.mrf.mxu0
      %v9780 = vadd.f32 0.0, %v9779
      %v9781 = vpop.f32.mrf.mxu0
      %9782 = vdwg.mxu0
      %v9799 = vunpack.c.l.b16 %v9317
      %v9800 = vunpack.c.l.b16 %v9318
      %v9801 = vunpack.c.l.b16 %v9319
      %v9802 = vunpack.c.l.b16 %v9320
      %v9803 = vunpack.c.l.b16 %v9321
      %v9804 = vunpack.c.l.b16 %v9322
      %v9805 = vunpack.c.l.b16 %v9323
      %v9806 = vunpack.c.l.b16 %v9324
      %v9807 = vunpack.c.l.b16 %v9325
      %v9808 = vunpack.c.l.b16 %v9326
      %v9809 = vunpack.c.l.b16 %v9327
      %v9810 = vunpack.c.l.b16 %v9328
      %v9811 = vunpack.c.l.b16 %v9329
      %v9812 = vunpack.c.l.b16 %v9330
      %v9813 = vunpack.c.l.b16 %v9331
      %v9814 = vunpack.c.l.b16 %v9332
      %v9815 = vpack.c.b16 %v9800, %v9799
      %v9816 = vpack.c.b16 %v9802, %v9801
      %v9817 = vpack.c.b16 %v9804, %v9803
      %v9818 = vpack.c.b16 %v9806, %v9805
      %v9819 = vpack.c.b16 %v9808, %v9807
      %v9820 = vpack.c.b16 %v9810, %v9809
      %v9821 = vpack.c.b16 %v9812, %v9811
      %v9822 = vpack.c.b16 %v9814, %v9813
      %9823 = vrot.lane.b32.xlu0 %v9815, 104
      %v9824 = vpop.permute.xlu0 %9823
      %9825 = vrot.lane.b32.xlu0 %v9816, 104
      %v9826 = vpop.permute.xlu0 %9825
      %9827 = vrot.lane.b32.xlu0 %v9817, 104
      %v9828 = vpop.permute.xlu0 %9827
      %9829 = vrot.lane.b32.xlu0 %v9818, 104
      %v9830 = vpop.permute.xlu0 %9829
      %9831 = vrot.lane.b32.xlu0 %v9819, 104
      %v9832 = vpop.permute.xlu0 %9831
      %9833 = vrot.lane.b32.xlu0 %v9820, 104
      %v9834 = vpop.permute.xlu0 %9833
      %9835 = vrot.lane.b32.xlu0 %v9821, 104
      %v9836 = vpop.permute.xlu0 %9835
      %9837 = vrot.lane.b32.xlu0 %v9822, 104
      %v9838 = vpop.permute.xlu0 %9837
      %9839 = vrot.lane.b32.xlu0 %v9815, 72
      %v9840 = vpop.permute.xlu0 %9839
      %9841 = vrot.lane.b32.xlu0 %v9816, 72
      %v9842 = vpop.permute.xlu0 %9841
      %9843 = vrot.lane.b32.xlu0 %v9817, 72
      %v9844 = vpop.permute.xlu0 %9843
      %9845 = vrot.lane.b32.xlu0 %v9818, 72
      %v9846 = vpop.permute.xlu0 %9845
      %9847 = vrot.lane.b32.xlu0 %v9819, 72
      %v9848 = vpop.permute.xlu0 %9847
      %9849 = vrot.lane.b32.xlu0 %v9820, 72
      %v9850 = vpop.permute.xlu0 %9849
      %9851 = vrot.lane.b32.xlu0 %v9821, 72
      %v9852 = vpop.permute.xlu0 %9851
      %9853 = vrot.lane.b32.xlu0 %v9822, 72
      %v9854 = vpop.permute.xlu0 %9853
      %v9856 = vsel %vm1266, %v9824, 0
      %v9859 = vsel %vm1266, %v9826, 0
      %v9862 = vsel %vm1266, %v9828, 0
      %v9865 = vsel %vm1266, %v9830, 0
      %v9868 = vsel %vm1266, %v9832, 0
      %v9871 = vsel %vm1266, %v9834, 0
      %v9874 = vsel %vm1266, %v9836, 0
      %v9877 = vsel %vm1266, %v9838, 0
      %v9880 = vsel %vm1266, %v9840, 0
      %v9883 = vsel %vm1266, %v9842, 0
      %v9886 = vsel %vm1266, %v9844, 0
      %v9889 = vsel %vm1266, %v9846, 0
      %v9892 = vsel %vm1266, %v9848, 0
      %v9895 = vsel %vm1266, %v9850, 0
      %v9898 = vsel %vm1266, %v9852, 0
      %v9901 = vsel %vm1266, %v9854, 0
      %9903 = vmatprep.subr.bf16.mxu0 0
      %9904 = vmatpush1.bf16.xpose.msra.mxu0 %v9901
      %9905 = vmatprep.subr.bf16.mxu0 0
      %9906 = vmatpush1.bf16.xpose.msra.mxu0 %v9898
      %9907 = vmatprep.subr.bf16.mxu0 0
      %9908 = vmatpush1.bf16.xpose.msra.mxu0 %v9895
      %9909 = vmatprep.subr.bf16.mxu0 0
      %9910 = vmatpush1.bf16.xpose.msra.mxu0 %v9892
      %9911 = vmatprep.subr.bf16.mxu0 0
      %9912 = vmatpush1.bf16.xpose.msra.mxu0 %v9889
      %9913 = vmatprep.subr.bf16.mxu0 0
      %9914 = vmatpush1.bf16.xpose.msra.mxu0 %v9886
      %9915 = vmatprep.subr.bf16.mxu0 0
      %9916 = vmatpush1.bf16.xpose.msra.mxu0 %v9883
      %9917 = vmatprep.subr.bf16.mxu0 0
      %9918 = vmatpush1.bf16.xpose.msra.mxu0 %v9880
      %9919 = vmatprep.subr.bf16.mxu0 0
      %9920 = vmatpush2.bf16.xpose.msra.mxu0 0
      %9921 = vmatprep.subr.bf16.mxu0 0
      %9922 = vmatpush2.bf16.xpose.msra.mxu0 0
      %9923 = vmatprep.subr.bf16.mxu0 0
      %9924 = vmatpush2.bf16.xpose.msra.mxu0 0
      %9925 = vmatprep.subr.bf16.mxu0 0
      %9926 = vmatpush2.bf16.xpose.msra.mxu0 0
      %9927 = vmatprep.subr.bf16.mxu0 0
      %9928 = vmatpush2.bf16.xpose.msra.mxu0 0
      %9929 = vmatprep.subr.bf16.mxu0 0
      %9930 = vmatpush2.bf16.xpose.msra.mxu0 0
      %9931 = vmatprep.subr.bf16.mxu0 0
      %9932 = vmatpush2.bf16.xpose.msra.mxu0 0
      %9933 = vmatprep.subr.bf16.mxu0 0
      %9934 = vmatpush2.bf16.xpose.msra.mxu0 0
      %9935 = vmatprep.mubr.bf16.mxu0 0
      %9936 = vmatmul.mubr.bf16.gmra.mxu0 %v9856
      %v9937 = vpop.f32.mrf.mxu0
      %v9938 = vadd.f32 0.0, %v9937
      %v9939 = vpop.f32.mrf.mxu0
      %v9940 = vpop.f32.mrf.mxu0
      %v9941 = vadd.f32 0.0, %v9940
      %v9942 = vpop.f32.mrf.mxu0
      %9943 = vmatprep.mubr.bf16.mxu0 0
      %9944 = vmatmul.mubr.bf16.gmra.mxu0 %v9859
      %v9945 = vpop.f32.mrf.mxu0
      %v9946 = vadd.f32 0.0, %v9945
      %v9947 = vpop.f32.mrf.mxu0
      %v9948 = vpop.f32.mrf.mxu0
      %v9949 = vadd.f32 0.0, %v9948
      %v9950 = vpop.f32.mrf.mxu0
      %9951 = vmatprep.mubr.bf16.mxu0 0
      %9952 = vmatmul.mubr.bf16.gmra.mxu0 %v9862
      %v9953 = vpop.f32.mrf.mxu0
      %v9954 = vadd.f32 0.0, %v9953
      %v9955 = vpop.f32.mrf.mxu0
      %v9956 = vpop.f32.mrf.mxu0
      %v9957 = vadd.f32 0.0, %v9956
      %v9958 = vpop.f32.mrf.mxu0
      %9959 = vmatprep.mubr.bf16.mxu0 0
      %9960 = vmatmul.mubr.bf16.gmra.mxu0 %v9865
      %v9961 = vpop.f32.mrf.mxu0
      %v9962 = vadd.f32 0.0, %v9961
      %v9963 = vpop.f32.mrf.mxu0
      %v9964 = vpop.f32.mrf.mxu0
      %v9965 = vadd.f32 0.0, %v9964
      %v9966 = vpop.f32.mrf.mxu0
      %9967 = vmatprep.mubr.bf16.mxu0 0
      %9968 = vmatmul.mubr.bf16.gmra.mxu0 %v9868
      %v9969 = vpop.f32.mrf.mxu0
      %v9970 = vadd.f32 0.0, %v9969
      %v9971 = vpop.f32.mrf.mxu0
      %v9972 = vpop.f32.mrf.mxu0
      %v9973 = vadd.f32 0.0, %v9972
      %v9974 = vpop.f32.mrf.mxu0
      %9975 = vmatprep.mubr.bf16.mxu0 0
      %9976 = vmatmul.mubr.bf16.gmra.mxu0 %v9871
      %v9977 = vpop.f32.mrf.mxu0
      %v9978 = vadd.f32 0.0, %v9977
      %v9979 = vpop.f32.mrf.mxu0
      %v9980 = vpop.f32.mrf.mxu0
      %v9981 = vadd.f32 0.0, %v9980
      %v9982 = vpop.f32.mrf.mxu0
      %9983 = vmatprep.mubr.bf16.mxu0 0
      %9984 = vmatmul.mubr.bf16.gmra.mxu0 %v9874
      %v9985 = vpop.f32.mrf.mxu0
      %v9986 = vadd.f32 0.0, %v9985
      %v9987 = vpop.f32.mrf.mxu0
      %v9988 = vpop.f32.mrf.mxu0
      %v9989 = vadd.f32 0.0, %v9988
      %v9990 = vpop.f32.mrf.mxu0
      %9991 = vmatprep.mubr.bf16.mxu0 0
      %9992 = vmatmul.mubr.bf16.gmra.mxu0 %v9877
      %v9993 = vpop.f32.mrf.mxu0
      %v9994 = vadd.f32 0.0, %v9993
      %v9995 = vpop.f32.mrf.mxu0
      %v9996 = vpop.f32.mrf.mxu0
      %v9997 = vadd.f32 0.0, %v9996
      %v9998 = vpop.f32.mrf.mxu0
      %9999 = vdwg.mxu0
      %v10016 = vunpack.c.l.b16 %v9333
      %v10017 = vunpack.c.l.b16 %v9334
      %v10018 = vunpack.c.l.b16 %v9335
      %v10019 = vunpack.c.l.b16 %v9336
      %v10020 = vunpack.c.l.b16 %v9337
      %v10021 = vunpack.c.l.b16 %v9338
      %v10022 = vunpack.c.l.b16 %v9339
      %v10023 = vunpack.c.l.b16 %v9340
      %v10024 = vunpack.c.l.b16 %v9341
      %v10025 = vunpack.c.l.b16 %v9342
      %v10026 = vunpack.c.l.b16 %v9343
      %v10027 = vunpack.c.l.b16 %v9344
      %v10028 = vunpack.c.l.b16 %v9345
      %v10029 = vunpack.c.l.b16 %v9346
      %v10030 = vunpack.c.l.b16 %v9347
      %v10031 = vunpack.c.l.b16 %v9348
      %v10032 = vpack.c.b16 %v10017, %v10016
      %v10033 = vpack.c.b16 %v10019, %v10018
      %v10034 = vpack.c.b16 %v10021, %v10020
      %v10035 = vpack.c.b16 %v10023, %v10022
      %v10036 = vpack.c.b16 %v10025, %v10024
      %v10037 = vpack.c.b16 %v10027, %v10026
      %v10038 = vpack.c.b16 %v10029, %v10028
      %v10039 = vpack.c.b16 %v10031, %v10030
      %10040 = vrot.lane.b32.xlu0 %v10032, 104
      %v10041 = vpop.permute.xlu0 %10040
      %10042 = vrot.lane.b32.xlu0 %v10033, 104
      %v10043 = vpop.permute.xlu0 %10042
      %10044 = vrot.lane.b32.xlu0 %v10034, 104
      %v10045 = vpop.permute.xlu0 %10044
      %10046 = vrot.lane.b32.xlu0 %v10035, 104
      %v10047 = vpop.permute.xlu0 %10046
      %10048 = vrot.lane.b32.xlu0 %v10036, 104
      %v10049 = vpop.permute.xlu0 %10048
      %10050 = vrot.lane.b32.xlu0 %v10037, 104
      %v10051 = vpop.permute.xlu0 %10050
      %10052 = vrot.lane.b32.xlu0 %v10038, 104
      %v10053 = vpop.permute.xlu0 %10052
      %10054 = vrot.lane.b32.xlu0 %v10039, 104
      %v10055 = vpop.permute.xlu0 %10054
      %10056 = vrot.lane.b32.xlu0 %v10032, 72
      %v10057 = vpop.permute.xlu0 %10056
      %10058 = vrot.lane.b32.xlu0 %v10033, 72
      %v10059 = vpop.permute.xlu0 %10058
      %10060 = vrot.lane.b32.xlu0 %v10034, 72
      %v10061 = vpop.permute.xlu0 %10060
      %10062 = vrot.lane.b32.xlu0 %v10035, 72
      %v10063 = vpop.permute.xlu0 %10062
      %10064 = vrot.lane.b32.xlu0 %v10036, 72
      %v10065 = vpop.permute.xlu0 %10064
      %10066 = vrot.lane.b32.xlu0 %v10037, 72
      %v10067 = vpop.permute.xlu0 %10066
      %10068 = vrot.lane.b32.xlu0 %v10038, 72
      %v10069 = vpop.permute.xlu0 %10068
      %10070 = vrot.lane.b32.xlu0 %v10039, 72
      %v10071 = vpop.permute.xlu0 %10070
      %v10073 = vsel %vm1266, %v10041, 0
      %v10076 = vsel %vm1266, %v10043, 0
      %v10079 = vsel %vm1266, %v10045, 0
      %v10082 = vsel %vm1266, %v10047, 0
      %v10085 = vsel %vm1266, %v10049, 0
      %v10088 = vsel %vm1266, %v10051, 0
      %v10091 = vsel %vm1266, %v10053, 0
      %v10094 = vsel %vm1266, %v10055, 0
      %v10097 = vsel %vm1266, %v10057, 0
      %v10100 = vsel %vm1266, %v10059, 0
      %v10103 = vsel %vm1266, %v10061, 0
      %v10106 = vsel %vm1266, %v10063, 0
      %v10109 = vsel %vm1266, %v10065, 0
      %v10112 = vsel %vm1266, %v10067, 0
      %v10115 = vsel %vm1266, %v10069, 0
      %v10118 = vsel %vm1266, %v10071, 0
      %10120 = vmatprep.subr.bf16.mxu0 0
      %10121 = vmatpush1.bf16.xpose.msra.mxu0 %v10118
      %10122 = vmatprep.subr.bf16.mxu0 0
      %10123 = vmatpush1.bf16.xpose.msra.mxu0 %v10115
      %10124 = vmatprep.subr.bf16.mxu0 0
      %10125 = vmatpush1.bf16.xpose.msra.mxu0 %v10112
      %10126 = vmatprep.subr.bf16.mxu0 0
      %10127 = vmatpush1.bf16.xpose.msra.mxu0 %v10109
      %10128 = vmatprep.subr.bf16.mxu0 0
      %10129 = vmatpush1.bf16.xpose.msra.mxu0 %v10106
      %10130 = vmatprep.subr.bf16.mxu0 0
      %10131 = vmatpush1.bf16.xpose.msra.mxu0 %v10103
      %10132 = vmatprep.subr.bf16.mxu0 0
      %10133 = vmatpush1.bf16.xpose.msra.mxu0 %v10100
      %10134 = vmatprep.subr.bf16.mxu0 0
      %10135 = vmatpush1.bf16.xpose.msra.mxu0 %v10097
      %10136 = vmatprep.subr.bf16.mxu0 0
      %10137 = vmatpush2.bf16.xpose.msra.mxu0 0
      %10138 = vmatprep.subr.bf16.mxu0 0
      %10139 = vmatpush2.bf16.xpose.msra.mxu0 0
      %10140 = vmatprep.subr.bf16.mxu0 0
      %10141 = vmatpush2.bf16.xpose.msra.mxu0 0
      %10142 = vmatprep.subr.bf16.mxu0 0
      %10143 = vmatpush2.bf16.xpose.msra.mxu0 0
      %10144 = vmatprep.subr.bf16.mxu0 0
      %10145 = vmatpush2.bf16.xpose.msra.mxu0 0
      %10146 = vmatprep.subr.bf16.mxu0 0
      %10147 = vmatpush2.bf16.xpose.msra.mxu0 0
      %10148 = vmatprep.subr.bf16.mxu0 0
      %10149 = vmatpush2.bf16.xpose.msra.mxu0 0
      %10150 = vmatprep.subr.bf16.mxu0 0
      %10151 = vmatpush2.bf16.xpose.msra.mxu0 0
      %10152 = vmatprep.mubr.bf16.mxu0 0
      %10153 = vmatmul.mubr.bf16.gmra.mxu0 %v10073
      %v10154 = vpop.f32.mrf.mxu0
      %v10155 = vadd.f32 0.0, %v10154
      %v10156 = vpop.f32.mrf.mxu0
      %v10157 = vpop.f32.mrf.mxu0
      %v10158 = vadd.f32 0.0, %v10157
      %v10159 = vpop.f32.mrf.mxu0
      %10160 = vmatprep.mubr.bf16.mxu0 0
      %10161 = vmatmul.mubr.bf16.gmra.mxu0 %v10076
      %v10162 = vpop.f32.mrf.mxu0
      %v10163 = vadd.f32 0.0, %v10162
      %v10164 = vpop.f32.mrf.mxu0
      %v10165 = vpop.f32.mrf.mxu0
      %v10166 = vadd.f32 0.0, %v10165
      %v10167 = vpop.f32.mrf.mxu0
      %10168 = vmatprep.mubr.bf16.mxu0 0
      %10169 = vmatmul.mubr.bf16.gmra.mxu0 %v10079
      %v10170 = vpop.f32.mrf.mxu0
      %v10171 = vadd.f32 0.0, %v10170
      %v10172 = vpop.f32.mrf.mxu0
      %v10173 = vpop.f32.mrf.mxu0
      %v10174 = vadd.f32 0.0, %v10173
      %v10175 = vpop.f32.mrf.mxu0
      %10176 = vmatprep.mubr.bf16.mxu0 0
      %10177 = vmatmul.mubr.bf16.gmra.mxu0 %v10082
      %v10178 = vpop.f32.mrf.mxu0
      %v10179 = vadd.f32 0.0, %v10178
      %v10180 = vpop.f32.mrf.mxu0
      %v10181 = vpop.f32.mrf.mxu0
      %v10182 = vadd.f32 0.0, %v10181
      %v10183 = vpop.f32.mrf.mxu0
      %10184 = vmatprep.mubr.bf16.mxu0 0
      %10185 = vmatmul.mubr.bf16.gmra.mxu0 %v10085
      %v10186 = vpop.f32.mrf.mxu0
      %v10187 = vadd.f32 0.0, %v10186
      %v10188 = vpop.f32.mrf.mxu0
      %v10189 = vpop.f32.mrf.mxu0
      %v10190 = vadd.f32 0.0, %v10189
      %v10191 = vpop.f32.mrf.mxu0
      %10192 = vmatprep.mubr.bf16.mxu0 0
      %10193 = vmatmul.mubr.bf16.gmra.mxu0 %v10088
      %v10194 = vpop.f32.mrf.mxu0
      %v10195 = vadd.f32 0.0, %v10194
      %v10196 = vpop.f32.mrf.mxu0
      %v10197 = vpop.f32.mrf.mxu0
      %v10198 = vadd.f32 0.0, %v10197
      %v10199 = vpop.f32.mrf.mxu0
      %10200 = vmatprep.mubr.bf16.mxu0 0
      %10201 = vmatmul.mubr.bf16.gmra.mxu0 %v10091
      %v10202 = vpop.f32.mrf.mxu0
      %v10203 = vadd.f32 0.0, %v10202
      %v10204 = vpop.f32.mrf.mxu0
      %v10205 = vpop.f32.mrf.mxu0
      %v10206 = vadd.f32 0.0, %v10205
      %v10207 = vpop.f32.mrf.mxu0
      %10208 = vmatprep.mubr.bf16.mxu0 0
      %10209 = vmatmul.mubr.bf16.gmra.mxu0 %v10094
      %v10210 = vpop.f32.mrf.mxu0
      %v10211 = vadd.f32 0.0, %v10210
      %v10212 = vpop.f32.mrf.mxu0
      %v10213 = vpop.f32.mrf.mxu0
      %v10214 = vadd.f32 0.0, %v10213
      %v10215 = vpop.f32.mrf.mxu0
      %10216 = vdwg.mxu0
      %s10217 = scalar_lea.vmem %s5, 768
      %v10218 = vld [vmem:[%s10217] sm:$0xff]
      %v10219 = vld [vmem:[%s10217 + $0x8] sm:$0xff]
      %v10220 = vld [vmem:[%s10217 + $0x10] sm:$0xff]
      %v10221 = vld [vmem:[%s10217 + $0x18] sm:$0xff]
      %v10222 = vld [vmem:[%s10217 + $0x20] sm:$0xff]
      %v10223 = vld [vmem:[%s10217 + $0x28] sm:$0xff]
      %v10224 = vld [vmem:[%s10217 + $0x30] sm:$0xff]
      %v10225 = vld [vmem:[%s10217 + $0x38] sm:$0xff]
      %v10226 = vld [vmem:[%s10217 + $0x40] sm:$0xff]
      %v10227 = vld [vmem:[%s10217 + $0x48] sm:$0xff]
      %v10228 = vld [vmem:[%s10217 + $0x50] sm:$0xff]
      %v10229 = vld [vmem:[%s10217 + $0x58] sm:$0xff]
      %v10230 = vld [vmem:[%s10217 + $0x60] sm:$0xff]
      %v10231 = vld [vmem:[%s10217 + $0x68] sm:$0xff]
      %v10232 = vld [vmem:[%s10217 + $0x70] sm:$0xff]
      %v10233 = vld [vmem:[%s10217 + $0x78] sm:$0xff]
      %v10234 = vld [vmem:[%s10217 + $0x80] sm:$0xff]
      %v10235 = vld [vmem:[%s10217 + $0x88] sm:$0xff]
      %v10236 = vld [vmem:[%s10217 + $0x90] sm:$0xff]
      %v10237 = vld [vmem:[%s10217 + $0x98] sm:$0xff]
      %v10238 = vld [vmem:[%s10217 + $0xa0] sm:$0xff]
      %v10239 = vld [vmem:[%s10217 + $0xa8] sm:$0xff]
      %v10240 = vld [vmem:[%s10217 + $0xb0] sm:$0xff]
      %v10241 = vld [vmem:[%s10217 + $0xb8] sm:$0xff]
      %v10242 = vld [vmem:[%s10217 + $0xc0] sm:$0xff]
      %v10243 = vld [vmem:[%s10217 + $0xc8] sm:$0xff]
      %v10244 = vld [vmem:[%s10217 + $0xd0] sm:$0xff]
      %v10245 = vld [vmem:[%s10217 + $0xd8] sm:$0xff]
      %v10246 = vld [vmem:[%s10217 + $0xe0] sm:$0xff]
      %v10247 = vld [vmem:[%s10217 + $0xe8] sm:$0xff]
      %v10248 = vld [vmem:[%s10217 + $0xf0] sm:$0xff]
      %v10249 = vld [vmem:[%s10217 + $0xf8] sm:$0xff]
      %v10250 = vadd.f32 %v9504, %v10218
      %v10251 = vadd.f32 %v9507, %v10219
      %v10252 = vadd.f32 %v9512, %v10220
      %v10253 = vadd.f32 %v9515, %v10221
      %v10254 = vadd.f32 %v9520, %v10222
      %v10255 = vadd.f32 %v9523, %v10223
      %v10256 = vadd.f32 %v9528, %v10224
      %v10257 = vadd.f32 %v9531, %v10225
      %v10258 = vadd.f32 %v9536, %v10226
      %v10259 = vadd.f32 %v9539, %v10227
      %v10260 = vadd.f32 %v9544, %v10228
      %v10261 = vadd.f32 %v9547, %v10229
      %v10262 = vadd.f32 %v9552, %v10230
      %v10263 = vadd.f32 %v9555, %v10231
      %v10264 = vadd.f32 %v9560, %v10232
      %v10265 = vadd.f32 %v9563, %v10233
      %v10266 = vadd.f32 %v9721, %v10234
      %v10267 = vadd.f32 %v9724, %v10235
      %v10268 = vadd.f32 %v9729, %v10236
      %v10269 = vadd.f32 %v9732, %v10237
      %v10270 = vadd.f32 %v9737, %v10238
      %v10271 = vadd.f32 %v9740, %v10239
      %v10272 = vadd.f32 %v9745, %v10240
      %v10273 = vadd.f32 %v9748, %v10241
      %v10274 = vadd.f32 %v9753, %v10242
      %v10275 = vadd.f32 %v9756, %v10243
      %v10276 = vadd.f32 %v9761, %v10244
      %v10277 = vadd.f32 %v9764, %v10245
      %v10278 = vadd.f32 %v9769, %v10246
      %v10279 = vadd.f32 %v9772, %v10247
      %v10280 = vadd.f32 %v9777, %v10248
      %v10281 = vadd.f32 %v9780, %v10249
      %v10282 = vadd.f32 %v9938, %v10218
      %v10283 = vadd.f32 %v9941, %v10219
      %v10284 = vadd.f32 %v9946, %v10220
      %v10285 = vadd.f32 %v9949, %v10221
      %v10286 = vadd.f32 %v9954, %v10222
      %v10287 = vadd.f32 %v9957, %v10223
      %v10288 = vadd.f32 %v9962, %v10224
      %v10289 = vadd.f32 %v9965, %v10225
      %v10290 = vadd.f32 %v9970, %v10226
      %v10291 = vadd.f32 %v9973, %v10227
      %v10292 = vadd.f32 %v9978, %v10228
      %v10293 = vadd.f32 %v9981, %v10229
      %v10294 = vadd.f32 %v9986, %v10230
      %v10295 = vadd.f32 %v9989, %v10231
      %v10296 = vadd.f32 %v9994, %v10232
      %v10297 = vadd.f32 %v9997, %v10233
      %v10298 = vadd.f32 %v10155, %v10234
      %v10299 = vadd.f32 %v10158, %v10235
      %v10300 = vadd.f32 %v10163, %v10236
      %v10301 = vadd.f32 %v10166, %v10237
      %v10302 = vadd.f32 %v10171, %v10238
      %v10303 = vadd.f32 %v10174, %v10239
      %v10304 = vadd.f32 %v10179, %v10240
      %v10305 = vadd.f32 %v10182, %v10241
      %v10306 = vadd.f32 %v10187, %v10242
      %v10307 = vadd.f32 %v10190, %v10243
      %v10308 = vadd.f32 %v10195, %v10244
      %v10309 = vadd.f32 %v10198, %v10245
      %v10310 = vadd.f32 %v10203, %v10246
      %v10311 = vadd.f32 %v10206, %v10247
      %v10312 = vadd.f32 %v10211, %v10248
      %v10313 = vadd.f32 %v10214, %v10249
      %10314 = vmax.xlane.f32.xlu0 %v10250
      %v10315 = vpop.xlane.xlu0 %10314
      %10316 = vmax.xlane.f32.xlu0 %v10251
      %v10317 = vpop.xlane.xlu0 %10316
      %10318 = vmax.xlane.f32.xlu0 %v10252
      %v10319 = vpop.xlane.xlu0 %10318
      %10320 = vmax.xlane.f32.xlu0 %v10253
      %v10321 = vpop.xlane.xlu0 %10320
      %10322 = vmax.xlane.f32.xlu0 %v10254
      %v10323 = vpop.xlane.xlu0 %10322
      %10324 = vmax.xlane.f32.xlu0 %v10255
      %v10325 = vpop.xlane.xlu0 %10324
      %10326 = vmax.xlane.f32.xlu0 %v10256
      %v10327 = vpop.xlane.xlu0 %10326
      %10328 = vmax.xlane.f32.xlu0 %v10257
      %v10329 = vpop.xlane.xlu0 %10328
      %10330 = vmax.xlane.f32.xlu0 %v10258
      %v10331 = vpop.xlane.xlu0 %10330
      %10332 = vmax.xlane.f32.xlu0 %v10259
      %v10333 = vpop.xlane.xlu0 %10332
      %10334 = vmax.xlane.f32.xlu0 %v10260
      %v10335 = vpop.xlane.xlu0 %10334
      %10336 = vmax.xlane.f32.xlu0 %v10261
      %v10337 = vpop.xlane.xlu0 %10336
      %10338 = vmax.xlane.f32.xlu0 %v10262
      %v10339 = vpop.xlane.xlu0 %10338
      %10340 = vmax.xlane.f32.xlu0 %v10263
      %v10341 = vpop.xlane.xlu0 %10340
      %10342 = vmax.xlane.f32.xlu0 %v10264
      %v10343 = vpop.xlane.xlu0 %10342
      %10344 = vmax.xlane.f32.xlu0 %v10265
      %v10345 = vpop.xlane.xlu0 %10344
      %10346 = vmax.xlane.f32.xlu0 %v10266
      %v10347 = vpop.xlane.xlu0 %10346
      %10348 = vmax.xlane.f32.xlu0 %v10267
      %v10349 = vpop.xlane.xlu0 %10348
      %10350 = vmax.xlane.f32.xlu0 %v10268
      %v10351 = vpop.xlane.xlu0 %10350
      %10352 = vmax.xlane.f32.xlu0 %v10269
      %v10353 = vpop.xlane.xlu0 %10352
      %10354 = vmax.xlane.f32.xlu0 %v10270
      %v10355 = vpop.xlane.xlu0 %10354
      %10356 = vmax.xlane.f32.xlu0 %v10271
      %v10357 = vpop.xlane.xlu0 %10356
      %10358 = vmax.xlane.f32.xlu0 %v10272
      %v10359 = vpop.xlane.xlu0 %10358
      %10360 = vmax.xlane.f32.xlu0 %v10273
      %v10361 = vpop.xlane.xlu0 %10360
      %10362 = vmax.xlane.f32.xlu0 %v10274
      %v10363 = vpop.xlane.xlu0 %10362
      %10364 = vmax.xlane.f32.xlu0 %v10275
      %v10365 = vpop.xlane.xlu0 %10364
      %10366 = vmax.xlane.f32.xlu0 %v10276
      %v10367 = vpop.xlane.xlu0 %10366
      %10368 = vmax.xlane.f32.xlu0 %v10277
      %v10369 = vpop.xlane.xlu0 %10368
      %10370 = vmax.xlane.f32.xlu0 %v10278
      %v10371 = vpop.xlane.xlu0 %10370
      %10372 = vmax.xlane.f32.xlu0 %v10279
      %v10373 = vpop.xlane.xlu0 %10372
      %10374 = vmax.xlane.f32.xlu0 %v10280
      %v10375 = vpop.xlane.xlu0 %10374
      %10376 = vmax.xlane.f32.xlu0 %v10281
      %v10377 = vpop.xlane.xlu0 %10376
      %10378 = vmax.xlane.f32.xlu0 %v10282
      %v10379 = vpop.xlane.xlu0 %10378
      %10380 = vmax.xlane.f32.xlu0 %v10283
      %v10381 = vpop.xlane.xlu0 %10380
      %10382 = vmax.xlane.f32.xlu0 %v10284
      %v10383 = vpop.xlane.xlu0 %10382
      %10384 = vmax.xlane.f32.xlu0 %v10285
      %v10385 = vpop.xlane.xlu0 %10384
      %10386 = vmax.xlane.f32.xlu0 %v10286
      %v10387 = vpop.xlane.xlu0 %10386
      %10388 = vmax.xlane.f32.xlu0 %v10287
      %v10389 = vpop.xlane.xlu0 %10388
      %10390 = vmax.xlane.f32.xlu0 %v10288
      %v10391 = vpop.xlane.xlu0 %10390
      %10392 = vmax.xlane.f32.xlu0 %v10289
      %v10393 = vpop.xlane.xlu0 %10392
      %10394 = vmax.xlane.f32.xlu0 %v10290
      %v10395 = vpop.xlane.xlu0 %10394
      %10396 = vmax.xlane.f32.xlu0 %v10291
      %v10397 = vpop.xlane.xlu0 %10396
      %10398 = vmax.xlane.f32.xlu0 %v10292
      %v10399 = vpop.xlane.xlu0 %10398
      %10400 = vmax.xlane.f32.xlu0 %v10293
      %v10401 = vpop.xlane.xlu0 %10400
      %10402 = vmax.xlane.f32.xlu0 %v10294
      %v10403 = vpop.xlane.xlu0 %10402
      %10404 = vmax.xlane.f32.xlu0 %v10295
      %v10405 = vpop.xlane.xlu0 %10404
      %10406 = vmax.xlane.f32.xlu0 %v10296
      %v10407 = vpop.xlane.xlu0 %10406
      %10408 = vmax.xlane.f32.xlu0 %v10297
      %v10409 = vpop.xlane.xlu0 %10408
      %10410 = vmax.xlane.f32.xlu0 %v10298
      %v10411 = vpop.xlane.xlu0 %10410
      %10412 = vmax.xlane.f32.xlu0 %v10299
      %v10413 = vpop.xlane.xlu0 %10412
      %10414 = vmax.xlane.f32.xlu0 %v10300
      %v10415 = vpop.xlane.xlu0 %10414
      %10416 = vmax.xlane.f32.xlu0 %v10301
      %v10417 = vpop.xlane.xlu0 %10416
      %10418 = vmax.xlane.f32.xlu0 %v10302
      %v10419 = vpop.xlane.xlu0 %10418
      %10420 = vmax.xlane.f32.xlu0 %v10303
      %v10421 = vpop.xlane.xlu0 %10420
      %10422 = vmax.xlane.f32.xlu0 %v10304
      %v10423 = vpop.xlane.xlu0 %10422
      %10424 = vmax.xlane.f32.xlu0 %v10305
      %v10425 = vpop.xlane.xlu0 %10424
      %10426 = vmax.xlane.f32.xlu0 %v10306
      %v10427 = vpop.xlane.xlu0 %10426
      %10428 = vmax.xlane.f32.xlu0 %v10307
      %v10429 = vpop.xlane.xlu0 %10428
      %10430 = vmax.xlane.f32.xlu0 %v10308
      %v10431 = vpop.xlane.xlu0 %10430
      %10432 = vmax.xlane.f32.xlu0 %v10309
      %v10433 = vpop.xlane.xlu0 %10432
      %10434 = vmax.xlane.f32.xlu0 %v10310
      %v10435 = vpop.xlane.xlu0 %10434
      %10436 = vmax.xlane.f32.xlu0 %v10311
      %v10437 = vpop.xlane.xlu0 %10436
      %10438 = vmax.xlane.f32.xlu0 %v10312
      %v10439 = vpop.xlane.xlu0 %10438
      %10440 = vmax.xlane.f32.xlu0 %v10313
      %v10441 = vpop.xlane.xlu0 %10440
      %v10442 = vsub.f32 %v10250, %v10315
      %v10443 = vsub.f32 %v10251, %v10317
      %v10444 = vsub.f32 %v10252, %v10319
      %v10445 = vsub.f32 %v10253, %v10321
      %v10446 = vsub.f32 %v10254, %v10323
      %v10447 = vsub.f32 %v10255, %v10325
      %v10448 = vsub.f32 %v10256, %v10327
      %v10449 = vsub.f32 %v10257, %v10329
      %v10450 = vsub.f32 %v10258, %v10331
      %v10451 = vsub.f32 %v10259, %v10333
      %v10452 = vsub.f32 %v10260, %v10335
      %v10453 = vsub.f32 %v10261, %v10337
      %v10454 = vsub.f32 %v10262, %v10339
      %v10455 = vsub.f32 %v10263, %v10341
      %v10456 = vsub.f32 %v10264, %v10343
      %v10457 = vsub.f32 %v10265, %v10345
      %v10458 = vsub.f32 %v10266, %v10347
      %v10459 = vsub.f32 %v10267, %v10349
      %v10460 = vsub.f32 %v10268, %v10351
      %v10461 = vsub.f32 %v10269, %v10353
      %v10462 = vsub.f32 %v10270, %v10355
      %v10463 = vsub.f32 %v10271, %v10357
      %v10464 = vsub.f32 %v10272, %v10359
      %v10465 = vsub.f32 %v10273, %v10361
      %v10466 = vsub.f32 %v10274, %v10363
      %v10467 = vsub.f32 %v10275, %v10365
      %v10468 = vsub.f32 %v10276, %v10367
      %v10469 = vsub.f32 %v10277, %v10369
      %v10470 = vsub.f32 %v10278, %v10371
      %v10471 = vsub.f32 %v10279, %v10373
      %v10472 = vsub.f32 %v10280, %v10375
      %v10473 = vsub.f32 %v10281, %v10377
      %v10474 = vsub.f32 %v10282, %v10379
      %v10475 = vsub.f32 %v10283, %v10381
      %v10476 = vsub.f32 %v10284, %v10383
      %v10477 = vsub.f32 %v10285, %v10385
      %v10478 = vsub.f32 %v10286, %v10387
      %v10479 = vsub.f32 %v10287, %v10389
      %v10480 = vsub.f32 %v10288, %v10391
      %v10481 = vsub.f32 %v10289, %v10393
      %v10482 = vsub.f32 %v10290, %v10395
      %v10483 = vsub.f32 %v10291, %v10397
      %v10484 = vsub.f32 %v10292, %v10399
      %v10485 = vsub.f32 %v10293, %v10401
      %v10486 = vsub.f32 %v10294, %v10403
      %v10487 = vsub.f32 %v10295, %v10405
      %v10488 = vsub.f32 %v10296, %v10407
      %v10489 = vsub.f32 %v10297, %v10409
      %v10490 = vsub.f32 %v10298, %v10411
      %v10491 = vsub.f32 %v10299, %v10413
      %v10492 = vsub.f32 %v10300, %v10415
      %v10493 = vsub.f32 %v10301, %v10417
      %v10494 = vsub.f32 %v10302, %v10419
      %v10495 = vsub.f32 %v10303, %v10421
      %v10496 = vsub.f32 %v10304, %v10423
      %v10497 = vsub.f32 %v10305, %v10425
      %v10498 = vsub.f32 %v10306, %v10427
      %v10499 = vsub.f32 %v10307, %v10429
      %v10500 = vsub.f32 %v10308, %v10431
      %v10501 = vsub.f32 %v10309, %v10433
      %v10502 = vsub.f32 %v10310, %v10435
      %v10503 = vsub.f32 %v10311, %v10437
      %v10504 = vsub.f32 %v10312, %v10439
      %v10505 = vsub.f32 %v10313, %v10441
      %v10506 = vmul.f32 %v10442, 1.442695
      %v10507 = vpow.pop %v10506
      %v10508 = vmul.f32 %v10443, 1.442695
      %v10509 = vpow.pop %v10508
      %v10510 = vmul.f32 %v10444, 1.442695
      %v10511 = vpow.pop %v10510
      %v10512 = vmul.f32 %v10445, 1.442695
      %v10513 = vpow.pop %v10512
      %v10514 = vmul.f32 %v10446, 1.442695
      %v10515 = vpow.pop %v10514
      %v10516 = vmul.f32 %v10447, 1.442695
      %v10517 = vpow.pop %v10516
      %v10518 = vmul.f32 %v10448, 1.442695
      %v10519 = vpow.pop %v10518
      %v10520 = vmul.f32 %v10449, 1.442695
      %v10521 = vpow.pop %v10520
      %v10522 = vmul.f32 %v10450, 1.442695
      %v10523 = vpow.pop %v10522
      %v10524 = vmul.f32 %v10451, 1.442695
      %v10525 = vpow.pop %v10524
      %v10526 = vmul.f32 %v10452, 1.442695
      %v10527 = vpow.pop %v10526
      %v10528 = vmul.f32 %v10453, 1.442695
      %v10529 = vpow.pop %v10528
      %v10530 = vmul.f32 %v10454, 1.442695
      %v10531 = vpow.pop %v10530
      %v10532 = vmul.f32 %v10455, 1.442695
      %v10533 = vpow.pop %v10532
      %v10534 = vmul.f32 %v10456, 1.442695
      %v10535 = vpow.pop %v10534
      %v10536 = vmul.f32 %v10457, 1.442695
      %v10537 = vpow.pop %v10536
      %v10538 = vmul.f32 %v10458, 1.442695
      %v10539 = vpow.pop %v10538
      %v10540 = vmul.f32 %v10459, 1.442695
      %v10541 = vpow.pop %v10540
      %v10542 = vmul.f32 %v10460, 1.442695
      %v10543 = vpow.pop %v10542
      %v10544 = vmul.f32 %v10461, 1.442695
      %v10545 = vpow.pop %v10544
      %v10546 = vmul.f32 %v10462, 1.442695
      %v10547 = vpow.pop %v10546
      %v10548 = vmul.f32 %v10463, 1.442695
      %v10549 = vpow.pop %v10548
      %v10550 = vmul.f32 %v10464, 1.442695
      %v10551 = vpow.pop %v10550
      %v10552 = vmul.f32 %v10465, 1.442695
      %v10553 = vpow.pop %v10552
      %v10554 = vmul.f32 %v10466, 1.442695
      %v10555 = vpow.pop %v10554
      %v10556 = vmul.f32 %v10467, 1.442695
      %v10557 = vpow.pop %v10556
      %v10558 = vmul.f32 %v10468, 1.442695
      %v10559 = vpow.pop %v10558
      %v10560 = vmul.f32 %v10469, 1.442695
      %v10561 = vpow.pop %v10560
      %v10562 = vmul.f32 %v10470, 1.442695
      %v10563 = vpow.pop %v10562
      %v10564 = vmul.f32 %v10471, 1.442695
      %v10565 = vpow.pop %v10564
      %v10566 = vmul.f32 %v10472, 1.442695
      %v10567 = vpow.pop %v10566
      %v10568 = vmul.f32 %v10473, 1.442695
      %v10569 = vpow.pop %v10568
      %v10570 = vmul.f32 %v10474, 1.442695
      %v10571 = vpow.pop %v10570
      %v10572 = vmul.f32 %v10475, 1.442695
      %v10573 = vpow.pop %v10572
      %v10574 = vmul.f32 %v10476, 1.442695
      %v10575 = vpow.pop %v10574
      %v10576 = vmul.f32 %v10477, 1.442695
      %v10577 = vpow.pop %v10576
      %v10578 = vmul.f32 %v10478, 1.442695
      %v10579 = vpow.pop %v10578
      %v10580 = vmul.f32 %v10479, 1.442695
      %v10581 = vpow.pop %v10580
      %v10582 = vmul.f32 %v10480, 1.442695
      %v10583 = vpow.pop %v10582
      %v10584 = vmul.f32 %v10481, 1.442695
      %v10585 = vpow.pop %v10584
      %v10586 = vmul.f32 %v10482, 1.442695
      %v10587 = vpow.pop %v10586
      %v10588 = vmul.f32 %v10483, 1.442695
      %v10589 = vpow.pop %v10588
      %v10590 = vmul.f32 %v10484, 1.442695
      %v10591 = vpow.pop %v10590
      %v10592 = vmul.f32 %v10485, 1.442695
      %v10593 = vpow.pop %v10592
      %v10594 = vmul.f32 %v10486, 1.442695
      %v10595 = vpow.pop %v10594
      %v10596 = vmul.f32 %v10487, 1.442695
      %v10597 = vpow.pop %v10596
      %v10598 = vmul.f32 %v10488, 1.442695
      %v10599 = vpow.pop %v10598
      %v10600 = vmul.f32 %v10489, 1.442695
      %v10601 = vpow.pop %v10600
      %v10602 = vmul.f32 %v10490, 1.442695
      %v10603 = vpow.pop %v10602
      %v10604 = vmul.f32 %v10491, 1.442695
      %v10605 = vpow.pop %v10604
      %v10606 = vmul.f32 %v10492, 1.442695
      %v10607 = vpow.pop %v10606
      %v10608 = vmul.f32 %v10493, 1.442695
      %v10609 = vpow.pop %v10608
      %v10610 = vmul.f32 %v10494, 1.442695
      %v10611 = vpow.pop %v10610
      %v10612 = vmul.f32 %v10495, 1.442695
      %v10613 = vpow.pop %v10612
      %v10614 = vmul.f32 %v10496, 1.442695
      %v10615 = vpow.pop %v10614
      %v10616 = vmul.f32 %v10497, 1.442695
      %v10617 = vpow.pop %v10616
      %v10618 = vmul.f32 %v10498, 1.442695
      %v10619 = vpow.pop %v10618
      %v10620 = vmul.f32 %v10499, 1.442695
      %v10621 = vpow.pop %v10620
      %v10622 = vmul.f32 %v10500, 1.442695
      %v10623 = vpow.pop %v10622
      %v10624 = vmul.f32 %v10501, 1.442695
      %v10625 = vpow.pop %v10624
      %v10626 = vmul.f32 %v10502, 1.442695
      %v10627 = vpow.pop %v10626
      %v10628 = vmul.f32 %v10503, 1.442695
      %v10629 = vpow.pop %v10628
      %v10630 = vmul.f32 %v10504, 1.442695
      %v10631 = vpow.pop %v10630
      %v10632 = vmul.f32 %v10505, 1.442695
      %v10633 = vpow.pop %v10632
      %10634 = vadd.xlane.f32.xlu0 %v10507
      %v10635 = vpop.xlane.xlu0 %10634
      %10636 = vadd.xlane.f32.xlu0 %v10509
      %v10637 = vpop.xlane.xlu0 %10636
      %10638 = vadd.xlane.f32.xlu0 %v10511
      %v10639 = vpop.xlane.xlu0 %10638
      %10640 = vadd.xlane.f32.xlu0 %v10513
      %v10641 = vpop.xlane.xlu0 %10640
      %10642 = vadd.xlane.f32.xlu0 %v10515
      %v10643 = vpop.xlane.xlu0 %10642
      %10644 = vadd.xlane.f32.xlu0 %v10517
      %v10645 = vpop.xlane.xlu0 %10644
      %10646 = vadd.xlane.f32.xlu0 %v10519
      %v10647 = vpop.xlane.xlu0 %10646
      %10648 = vadd.xlane.f32.xlu0 %v10521
      %v10649 = vpop.xlane.xlu0 %10648
      %10650 = vadd.xlane.f32.xlu0 %v10523
      %v10651 = vpop.xlane.xlu0 %10650
      %10652 = vadd.xlane.f32.xlu0 %v10525
      %v10653 = vpop.xlane.xlu0 %10652
      %10654 = vadd.xlane.f32.xlu0 %v10527
      %v10655 = vpop.xlane.xlu0 %10654
      %10656 = vadd.xlane.f32.xlu0 %v10529
      %v10657 = vpop.xlane.xlu0 %10656
      %10658 = vadd.xlane.f32.xlu0 %v10531
      %v10659 = vpop.xlane.xlu0 %10658
      %10660 = vadd.xlane.f32.xlu0 %v10533
      %v10661 = vpop.xlane.xlu0 %10660
      %10662 = vadd.xlane.f32.xlu0 %v10535
      %v10663 = vpop.xlane.xlu0 %10662
      %10664 = vadd.xlane.f32.xlu0 %v10537
      %v10665 = vpop.xlane.xlu0 %10664
      %10666 = vadd.xlane.f32.xlu0 %v10539
      %v10667 = vpop.xlane.xlu0 %10666
      %10668 = vadd.xlane.f32.xlu0 %v10541
      %v10669 = vpop.xlane.xlu0 %10668
      %10670 = vadd.xlane.f32.xlu0 %v10543
      %v10671 = vpop.xlane.xlu0 %10670
      %10672 = vadd.xlane.f32.xlu0 %v10545
      %v10673 = vpop.xlane.xlu0 %10672
      %10674 = vadd.xlane.f32.xlu0 %v10547
      %v10675 = vpop.xlane.xlu0 %10674
      %10676 = vadd.xlane.f32.xlu0 %v10549
      %v10677 = vpop.xlane.xlu0 %10676
      %10678 = vadd.xlane.f32.xlu0 %v10551
      %v10679 = vpop.xlane.xlu0 %10678
      %10680 = vadd.xlane.f32.xlu0 %v10553
      %v10681 = vpop.xlane.xlu0 %10680
      %10682 = vadd.xlane.f32.xlu0 %v10555
      %v10683 = vpop.xlane.xlu0 %10682
      %10684 = vadd.xlane.f32.xlu0 %v10557
      %v10685 = vpop.xlane.xlu0 %10684
      %10686 = vadd.xlane.f32.xlu0 %v10559
      %v10687 = vpop.xlane.xlu0 %10686
      %10688 = vadd.xlane.f32.xlu0 %v10561
      %v10689 = vpop.xlane.xlu0 %10688
      %10690 = vadd.xlane.f32.xlu0 %v10563
      %v10691 = vpop.xlane.xlu0 %10690
      %10692 = vadd.xlane.f32.xlu0 %v10565
      %v10693 = vpop.xlane.xlu0 %10692
      %10694 = vadd.xlane.f32.xlu0 %v10567
      %v10695 = vpop.xlane.xlu0 %10694
      %10696 = vadd.xlane.f32.xlu0 %v10569
      %v10697 = vpop.xlane.xlu0 %10696
      %10698 = vadd.xlane.f32.xlu0 %v10571
      %v10699 = vpop.xlane.xlu0 %10698
      %10700 = vadd.xlane.f32.xlu0 %v10573
      %v10701 = vpop.xlane.xlu0 %10700
      %10702 = vadd.xlane.f32.xlu0 %v10575
      %v10703 = vpop.xlane.xlu0 %10702
      %10704 = vadd.xlane.f32.xlu0 %v10577
      %v10705 = vpop.xlane.xlu0 %10704
      %10706 = vadd.xlane.f32.xlu0 %v10579
      %v10707 = vpop.xlane.xlu0 %10706
      %10708 = vadd.xlane.f32.xlu0 %v10581
      %v10709 = vpop.xlane.xlu0 %10708
      %10710 = vadd.xlane.f32.xlu0 %v10583
      %v10711 = vpop.xlane.xlu0 %10710
      %10712 = vadd.xlane.f32.xlu0 %v10585
      %v10713 = vpop.xlane.xlu0 %10712
      %10714 = vadd.xlane.f32.xlu0 %v10587
      %v10715 = vpop.xlane.xlu0 %10714
      %10716 = vadd.xlane.f32.xlu0 %v10589
      %v10717 = vpop.xlane.xlu0 %10716
      %10718 = vadd.xlane.f32.xlu0 %v10591
      %v10719 = vpop.xlane.xlu0 %10718
      %10720 = vadd.xlane.f32.xlu0 %v10593
      %v10721 = vpop.xlane.xlu0 %10720
      %10722 = vadd.xlane.f32.xlu0 %v10595
      %v10723 = vpop.xlane.xlu0 %10722
      %10724 = vadd.xlane.f32.xlu0 %v10597
      %v10725 = vpop.xlane.xlu0 %10724
      %10726 = vadd.xlane.f32.xlu0 %v10599
      %v10727 = vpop.xlane.xlu0 %10726
      %10728 = vadd.xlane.f32.xlu0 %v10601
      %v10729 = vpop.xlane.xlu0 %10728
      %10730 = vadd.xlane.f32.xlu0 %v10603
      %v10731 = vpop.xlane.xlu0 %10730
      %10732 = vadd.xlane.f32.xlu0 %v10605
      %v10733 = vpop.xlane.xlu0 %10732
      %10734 = vadd.xlane.f32.xlu0 %v10607
      %v10735 = vpop.xlane.xlu0 %10734
      %10736 = vadd.xlane.f32.xlu0 %v10609
      %v10737 = vpop.xlane.xlu0 %10736
      %10738 = vadd.xlane.f32.xlu0 %v10611
      %v10739 = vpop.xlane.xlu0 %10738
      %10740 = vadd.xlane.f32.xlu0 %v10613
      %v10741 = vpop.xlane.xlu0 %10740
      %10742 = vadd.xlane.f32.xlu0 %v10615
      %v10743 = vpop.xlane.xlu0 %10742
      %10744 = vadd.xlane.f32.xlu0 %v10617
      %v10745 = vpop.xlane.xlu0 %10744
      %10746 = vadd.xlane.f32.xlu0 %v10619
      %v10747 = vpop.xlane.xlu0 %10746
      %10748 = vadd.xlane.f32.xlu0 %v10621
      %v10749 = vpop.xlane.xlu0 %10748
      %10750 = vadd.xlane.f32.xlu0 %v10623
      %v10751 = vpop.xlane.xlu0 %10750
      %10752 = vadd.xlane.f32.xlu0 %v10625
      %v10753 = vpop.xlane.xlu0 %10752
      %10754 = vadd.xlane.f32.xlu0 %v10627
      %v10755 = vpop.xlane.xlu0 %10754
      %10756 = vadd.xlane.f32.xlu0 %v10629
      %v10757 = vpop.xlane.xlu0 %10756
      %10758 = vadd.xlane.f32.xlu0 %v10631
      %v10759 = vpop.xlane.xlu0 %10758
      %10760 = vadd.xlane.f32.xlu0 %v10633
      %v10761 = vpop.xlane.xlu0 %10760
      %v10762 = vrcp.pop %v10635
      %v10763 = vrcp.pop %v10637
      %v10764 = vrcp.pop %v10639
      %v10765 = vrcp.pop %v10641
      %v10766 = vrcp.pop %v10643
      %v10767 = vrcp.pop %v10645
      %v10768 = vrcp.pop %v10647
      %v10769 = vrcp.pop %v10649
      %v10770 = vrcp.pop %v10651
      %v10771 = vrcp.pop %v10653
      %v10772 = vrcp.pop %v10655
      %v10773 = vrcp.pop %v10657
      %v10774 = vrcp.pop %v10659
      %v10775 = vrcp.pop %v10661
      %v10776 = vrcp.pop %v10663
      %v10777 = vrcp.pop %v10665
      %v10778 = vrcp.pop %v10667
      %v10779 = vrcp.pop %v10669
      %v10780 = vrcp.pop %v10671
      %v10781 = vrcp.pop %v10673
      %v10782 = vrcp.pop %v10675
      %v10783 = vrcp.pop %v10677
      %v10784 = vrcp.pop %v10679
      %v10785 = vrcp.pop %v10681
      %v10786 = vrcp.pop %v10683
      %v10787 = vrcp.pop %v10685
      %v10788 = vrcp.pop %v10687
      %v10789 = vrcp.pop %v10689
      %v10790 = vrcp.pop %v10691
      %v10791 = vrcp.pop %v10693
      %v10792 = vrcp.pop %v10695
      %v10793 = vrcp.pop %v10697
      %v10794 = vrcp.pop %v10699
      %v10795 = vrcp.pop %v10701
      %v10796 = vrcp.pop %v10703
      %v10797 = vrcp.pop %v10705
      %v10798 = vrcp.pop %v10707
      %v10799 = vrcp.pop %v10709
      %v10800 = vrcp.pop %v10711
      %v10801 = vrcp.pop %v10713
      %v10802 = vrcp.pop %v10715
      %v10803 = vrcp.pop %v10717
      %v10804 = vrcp.pop %v10719
      %v10805 = vrcp.pop %v10721
      %v10806 = vrcp.pop %v10723
      %v10807 = vrcp.pop %v10725
      %v10808 = vrcp.pop %v10727
      %v10809 = vrcp.pop %v10729
      %v10810 = vrcp.pop %v10731
      %v10811 = vrcp.pop %v10733
      %v10812 = vrcp.pop %v10735
      %v10813 = vrcp.pop %v10737
      %v10814 = vrcp.pop %v10739
      %v10815 = vrcp.pop %v10741
      %v10816 = vrcp.pop %v10743
      %v10817 = vrcp.pop %v10745
      %v10818 = vrcp.pop %v10747
      %v10819 = vrcp.pop %v10749
      %v10820 = vrcp.pop %v10751
      %v10821 = vrcp.pop %v10753
      %v10822 = vrcp.pop %v10755
      %v10823 = vrcp.pop %v10757
      %v10824 = vrcp.pop %v10759
      %v10825 = vrcp.pop %v10761
      %v10826 = vmul.f32 %v10507, %v10762
      %v10827 = vmul.f32 %v10509, %v10763
      %v10828 = vmul.f32 %v10511, %v10764
      %v10829 = vmul.f32 %v10513, %v10765
      %v10830 = vmul.f32 %v10515, %v10766
      %v10831 = vmul.f32 %v10517, %v10767
      %v10832 = vmul.f32 %v10519, %v10768
      %v10833 = vmul.f32 %v10521, %v10769
      %v10834 = vmul.f32 %v10523, %v10770
      %v10835 = vmul.f32 %v10525, %v10771
      %v10836 = vmul.f32 %v10527, %v10772
      %v10837 = vmul.f32 %v10529, %v10773
      %v10838 = vmul.f32 %v10531, %v10774
      %v10839 = vmul.f32 %v10533, %v10775
      %v10840 = vmul.f32 %v10535, %v10776
      %v10841 = vmul.f32 %v10537, %v10777
      %v10842 = vmul.f32 %v10539, %v10778
      %v10843 = vmul.f32 %v10541, %v10779
      %v10844 = vmul.f32 %v10543, %v10780
      %v10845 = vmul.f32 %v10545, %v10781
      %v10846 = vmul.f32 %v10547, %v10782
      %v10847 = vmul.f32 %v10549, %v10783
      %v10848 = vmul.f32 %v10551, %v10784
      %v10849 = vmul.f32 %v10553, %v10785
      %v10850 = vmul.f32 %v10555, %v10786
      %v10851 = vmul.f32 %v10557, %v10787
      %v10852 = vmul.f32 %v10559, %v10788
      %v10853 = vmul.f32 %v10561, %v10789
      %v10854 = vmul.f32 %v10563, %v10790
      %v10855 = vmul.f32 %v10565, %v10791
      %v10856 = vmul.f32 %v10567, %v10792
      %v10857 = vmul.f32 %v10569, %v10793
      %v10858 = vmul.f32 %v10571, %v10794
      %v10859 = vmul.f32 %v10573, %v10795
      %v10860 = vmul.f32 %v10575, %v10796
      %v10861 = vmul.f32 %v10577, %v10797
      %v10862 = vmul.f32 %v10579, %v10798
      %v10863 = vmul.f32 %v10581, %v10799
      %v10864 = vmul.f32 %v10583, %v10800
      %v10865 = vmul.f32 %v10585, %v10801
      %v10866 = vmul.f32 %v10587, %v10802
      %v10867 = vmul.f32 %v10589, %v10803
      %v10868 = vmul.f32 %v10591, %v10804
      %v10869 = vmul.f32 %v10593, %v10805
      %v10870 = vmul.f32 %v10595, %v10806
      %v10871 = vmul.f32 %v10597, %v10807
      %v10872 = vmul.f32 %v10599, %v10808
      %v10873 = vmul.f32 %v10601, %v10809
      %v10874 = vmul.f32 %v10603, %v10810
      %v10875 = vmul.f32 %v10605, %v10811
      %v10876 = vmul.f32 %v10607, %v10812
      %v10877 = vmul.f32 %v10609, %v10813
      %v10878 = vmul.f32 %v10611, %v10814
      %v10879 = vmul.f32 %v10613, %v10815
      %v10880 = vmul.f32 %v10615, %v10816
      %v10881 = vmul.f32 %v10617, %v10817
      %v10882 = vmul.f32 %v10619, %v10818
      %v10883 = vmul.f32 %v10621, %v10819
      %v10884 = vmul.f32 %v10623, %v10820
      %v10885 = vmul.f32 %v10625, %v10821
      %v10886 = vmul.f32 %v10627, %v10822
      %v10887 = vmul.f32 %v10629, %v10823
      %v10888 = vmul.f32 %v10631, %v10824
      %v10889 = vmul.f32 %v10633, %v10825
      %v10890 = vpack.c.bf16 %v10827, %v10826
      %v10891 = vpack.c.bf16 %v10829, %v10828
      %v10892 = vpack.c.bf16 %v10831, %v10830
      %v10893 = vpack.c.bf16 %v10833, %v10832
      %v10894 = vpack.c.bf16 %v10835, %v10834
      %v10895 = vpack.c.bf16 %v10837, %v10836
      %v10896 = vpack.c.bf16 %v10839, %v10838
      %v10897 = vpack.c.bf16 %v10841, %v10840
      %v10898 = vpack.c.bf16 %v10843, %v10842
      %v10899 = vpack.c.bf16 %v10845, %v10844
      %v10900 = vpack.c.bf16 %v10847, %v10846
      %v10901 = vpack.c.bf16 %v10849, %v10848
      %v10902 = vpack.c.bf16 %v10851, %v10850
      %v10903 = vpack.c.bf16 %v10853, %v10852
      %v10904 = vpack.c.bf16 %v10855, %v10854
      %v10905 = vpack.c.bf16 %v10857, %v10856
      %v10906 = vpack.c.bf16 %v10859, %v10858
      %v10907 = vpack.c.bf16 %v10861, %v10860
      %v10908 = vpack.c.bf16 %v10863, %v10862
      %v10909 = vpack.c.bf16 %v10865, %v10864
      %v10910 = vpack.c.bf16 %v10867, %v10866
      %v10911 = vpack.c.bf16 %v10869, %v10868
      %v10912 = vpack.c.bf16 %v10871, %v10870
      %v10913 = vpack.c.bf16 %v10873, %v10872
      %v10914 = vpack.c.bf16 %v10875, %v10874
      %v10915 = vpack.c.bf16 %v10877, %v10876
      %v10916 = vpack.c.bf16 %v10879, %v10878
      %v10917 = vpack.c.bf16 %v10881, %v10880
      %v10918 = vpack.c.bf16 %v10883, %v10882
      %v10919 = vpack.c.bf16 %v10885, %v10884
      %v10920 = vpack.c.bf16 %v10887, %v10886
      %v10921 = vpack.c.bf16 %v10889, %v10888
      %10922 = vrot.lane.b32.xlu0 %v9381, 40
      %v10923 = vpop.permute.xlu0 %10922
      %10924 = vrot.lane.b32.xlu0 %v9382, 40
      %v10925 = vpop.permute.xlu0 %10924
      %10926 = vrot.lane.b32.xlu0 %v9383, 40
      %v10927 = vpop.permute.xlu0 %10926
      %10928 = vrot.lane.b32.xlu0 %v9384, 40
      %v10929 = vpop.permute.xlu0 %10928
      %10930 = vrot.lane.b32.xlu0 %v9385, 40
      %v10931 = vpop.permute.xlu0 %10930
      %10932 = vrot.lane.b32.xlu0 %v9386, 40
      %v10933 = vpop.permute.xlu0 %10932
      %10934 = vrot.lane.b32.xlu0 %v9387, 40
      %v10935 = vpop.permute.xlu0 %10934
      %10936 = vrot.lane.b32.xlu0 %v9388, 40
      %v10937 = vpop.permute.xlu0 %10936
      %10946 = vmatprep.subr.bf16.mxu0 0
      %10947 = vmatpush1.bf16.msra.mxu0 %v10937
      %10948 = vmatprep.subr.bf16.mxu0 0
      %10949 = vmatpush1.bf16.msra.mxu0 %v10935
      %10950 = vmatprep.subr.bf16.mxu0 0
      %10951 = vmatpush1.bf16.msra.mxu0 %v10933
      %10952 = vmatprep.subr.bf16.mxu0 0
      %10953 = vmatpush1.bf16.msra.mxu0 %v10931
      %10954 = vmatprep.subr.bf16.mxu0 0
      %10955 = vmatpush1.bf16.msra.mxu0 %v10929
      %10956 = vmatprep.subr.bf16.mxu0 0
      %10957 = vmatpush1.bf16.msra.mxu0 %v10927
      %10958 = vmatprep.subr.bf16.mxu0 0
      %10959 = vmatpush1.bf16.msra.mxu0 %v10925
      %10960 = vmatprep.subr.bf16.mxu0 0
      %10961 = vmatpush1.bf16.msra.mxu0 %v10923
      %10962 = vmatprep.subr.bf16.mxu0 0
      %10963 = vmatpush2.bf16.msra.mxu0 0
      %10964 = vmatprep.subr.bf16.mxu0 0
      %10965 = vmatpush2.bf16.msra.mxu0 0
      %10966 = vmatprep.subr.bf16.mxu0 0
      %10967 = vmatpush2.bf16.msra.mxu0 0
      %10968 = vmatprep.subr.bf16.mxu0 0
      %10969 = vmatpush2.bf16.msra.mxu0 0
      %10970 = vmatprep.subr.bf16.mxu0 0
      %10971 = vmatpush2.bf16.msra.mxu0 0
      %10972 = vmatprep.subr.bf16.mxu0 0
      %10973 = vmatpush2.bf16.msra.mxu0 0
      %10974 = vmatprep.subr.bf16.mxu0 0
      %10975 = vmatpush2.bf16.msra.mxu0 0
      %10976 = vmatprep.subr.bf16.mxu0 0
      %10977 = vmatpush2.bf16.msra.mxu0 0
      %10978 = vmatprep.mubr.bf16.mxu0 0
      %10979 = vmatmul.mubr.bf16.gmra.mxu0 %v10890
      %v10980 = vpop.f32.mrf.mxu0
      %v10981 = vadd.f32 0.0, %v10980
      %v10982 = vpop.f32.mrf.mxu0
      %v10983 = vpop.f32.mrf.mxu0
      %v10984 = vadd.f32 0.0, %v10983
      %v10985 = vpop.f32.mrf.mxu0
      %10986 = vmatprep.mubr.bf16.mxu0 0
      %10987 = vmatmul.mubr.bf16.gmra.mxu0 %v10891
      %v10988 = vpop.f32.mrf.mxu0
      %v10989 = vadd.f32 0.0, %v10988
      %v10990 = vpop.f32.mrf.mxu0
      %v10991 = vpop.f32.mrf.mxu0
      %v10992 = vadd.f32 0.0, %v10991
      %v10993 = vpop.f32.mrf.mxu0
      %10994 = vmatprep.mubr.bf16.mxu0 0
      %10995 = vmatmul.mubr.bf16.gmra.mxu0 %v10892
      %v10996 = vpop.f32.mrf.mxu0
      %v10997 = vadd.f32 0.0, %v10996
      %v10998 = vpop.f32.mrf.mxu0
      %v10999 = vpop.f32.mrf.mxu0
      %v11000 = vadd.f32 0.0, %v10999
      %v11001 = vpop.f32.mrf.mxu0
      %11002 = vmatprep.mubr.bf16.mxu0 0
      %11003 = vmatmul.mubr.bf16.gmra.mxu0 %v10893
      %v11004 = vpop.f32.mrf.mxu0
      %v11005 = vadd.f32 0.0, %v11004
      %v11006 = vpop.f32.mrf.mxu0
      %v11007 = vpop.f32.mrf.mxu0
      %v11008 = vadd.f32 0.0, %v11007
      %v11009 = vpop.f32.mrf.mxu0
      %11010 = vmatprep.mubr.bf16.mxu0 0
      %11011 = vmatmul.mubr.bf16.gmra.mxu0 %v10894
      %v11012 = vpop.f32.mrf.mxu0
      %v11013 = vadd.f32 0.0, %v11012
      %v11014 = vpop.f32.mrf.mxu0
      %v11015 = vpop.f32.mrf.mxu0
      %v11016 = vadd.f32 0.0, %v11015
      %v11017 = vpop.f32.mrf.mxu0
      %11018 = vmatprep.mubr.bf16.mxu0 0
      %11019 = vmatmul.mubr.bf16.gmra.mxu0 %v10895
      %v11020 = vpop.f32.mrf.mxu0
      %v11021 = vadd.f32 0.0, %v11020
      %v11022 = vpop.f32.mrf.mxu0
      %v11023 = vpop.f32.mrf.mxu0
      %v11024 = vadd.f32 0.0, %v11023
      %v11025 = vpop.f32.mrf.mxu0
      %11026 = vmatprep.mubr.bf16.mxu0 0
      %11027 = vmatmul.mubr.bf16.gmra.mxu0 %v10896
      %v11028 = vpop.f32.mrf.mxu0
      %v11029 = vadd.f32 0.0, %v11028
      %v11030 = vpop.f32.mrf.mxu0
      %v11031 = vpop.f32.mrf.mxu0
      %v11032 = vadd.f32 0.0, %v11031
      %v11033 = vpop.f32.mrf.mxu0
      %11034 = vmatprep.mubr.bf16.mxu0 0
      %11035 = vmatmul.mubr.bf16.gmra.mxu0 %v10897
      %v11036 = vpop.f32.mrf.mxu0
      %v11037 = vadd.f32 0.0, %v11036
      %v11038 = vpop.f32.mrf.mxu0
      %v11039 = vpop.f32.mrf.mxu0
      %v11040 = vadd.f32 0.0, %v11039
      %v11041 = vpop.f32.mrf.mxu0
      %11042 = vdwg.mxu0
      %11043 = vrot.lane.b32.xlu0 %v9598, 40
      %v11044 = vpop.permute.xlu0 %11043
      %11045 = vrot.lane.b32.xlu0 %v9599, 40
      %v11046 = vpop.permute.xlu0 %11045
      %11047 = vrot.lane.b32.xlu0 %v9600, 40
      %v11048 = vpop.permute.xlu0 %11047
      %11049 = vrot.lane.b32.xlu0 %v9601, 40
      %v11050 = vpop.permute.xlu0 %11049
      %11051 = vrot.lane.b32.xlu0 %v9602, 40
      %v11052 = vpop.permute.xlu0 %11051
      %11053 = vrot.lane.b32.xlu0 %v9603, 40
      %v11054 = vpop.permute.xlu0 %11053
      %11055 = vrot.lane.b32.xlu0 %v9604, 40
      %v11056 = vpop.permute.xlu0 %11055
      %11057 = vrot.lane.b32.xlu0 %v9605, 40
      %v11058 = vpop.permute.xlu0 %11057
      %11067 = vmatprep.subr.bf16.mxu0 0
      %11068 = vmatpush1.bf16.msra.mxu0 %v11058
      %11069 = vmatprep.subr.bf16.mxu0 0
      %11070 = vmatpush1.bf16.msra.mxu0 %v11056
      %11071 = vmatprep.subr.bf16.mxu0 0
      %11072 = vmatpush1.bf16.msra.mxu0 %v11054
      %11073 = vmatprep.subr.bf16.mxu0 0
      %11074 = vmatpush1.bf16.msra.mxu0 %v11052
      %11075 = vmatprep.subr.bf16.mxu0 0
      %11076 = vmatpush1.bf16.msra.mxu0 %v11050
      %11077 = vmatprep.subr.bf16.mxu0 0
      %11078 = vmatpush1.bf16.msra.mxu0 %v11048
      %11079 = vmatprep.subr.bf16.mxu0 0
      %11080 = vmatpush1.bf16.msra.mxu0 %v11046
      %11081 = vmatprep.subr.bf16.mxu0 0
      %11082 = vmatpush1.bf16.msra.mxu0 %v11044
      %11083 = vmatprep.subr.bf16.mxu0 0
      %11084 = vmatpush2.bf16.msra.mxu0 0
      %11085 = vmatprep.subr.bf16.mxu0 0
      %11086 = vmatpush2.bf16.msra.mxu0 0
      %11087 = vmatprep.subr.bf16.mxu0 0
      %11088 = vmatpush2.bf16.msra.mxu0 0
      %11089 = vmatprep.subr.bf16.mxu0 0
      %11090 = vmatpush2.bf16.msra.mxu0 0
      %11091 = vmatprep.subr.bf16.mxu0 0
      %11092 = vmatpush2.bf16.msra.mxu0 0
      %11093 = vmatprep.subr.bf16.mxu0 0
      %11094 = vmatpush2.bf16.msra.mxu0 0
      %11095 = vmatprep.subr.bf16.mxu0 0
      %11096 = vmatpush2.bf16.msra.mxu0 0
      %11097 = vmatprep.subr.bf16.mxu0 0
      %11098 = vmatpush2.bf16.msra.mxu0 0
      %11099 = vmatprep.mubr.bf16.mxu0 0
      %11100 = vmatmul.mubr.bf16.gmra.mxu0 %v10898
      %v11101 = vpop.f32.mrf.mxu0
      %v11102 = vadd.f32 0.0, %v11101
      %v11103 = vpop.f32.mrf.mxu0
      %v11104 = vpop.f32.mrf.mxu0
      %v11105 = vadd.f32 0.0, %v11104
      %v11106 = vpop.f32.mrf.mxu0
      %11107 = vmatprep.mubr.bf16.mxu0 0
      %11108 = vmatmul.mubr.bf16.gmra.mxu0 %v10899
      %v11109 = vpop.f32.mrf.mxu0
      %v11110 = vadd.f32 0.0, %v11109
      %v11111 = vpop.f32.mrf.mxu0
      %v11112 = vpop.f32.mrf.mxu0
      %v11113 = vadd.f32 0.0, %v11112
      %v11114 = vpop.f32.mrf.mxu0
      %11115 = vmatprep.mubr.bf16.mxu0 0
      %11116 = vmatmul.mubr.bf16.gmra.mxu0 %v10900
      %v11117 = vpop.f32.mrf.mxu0
      %v11118 = vadd.f32 0.0, %v11117
      %v11119 = vpop.f32.mrf.mxu0
      %v11120 = vpop.f32.mrf.mxu0
      %v11121 = vadd.f32 0.0, %v11120
      %v11122 = vpop.f32.mrf.mxu0
      %11123 = vmatprep.mubr.bf16.mxu0 0
      %11124 = vmatmul.mubr.bf16.gmra.mxu0 %v10901
      %v11125 = vpop.f32.mrf.mxu0
      %v11126 = vadd.f32 0.0, %v11125
      %v11127 = vpop.f32.mrf.mxu0
      %v11128 = vpop.f32.mrf.mxu0
      %v11129 = vadd.f32 0.0, %v11128
      %v11130 = vpop.f32.mrf.mxu0
      %11131 = vmatprep.mubr.bf16.mxu0 0
      %11132 = vmatmul.mubr.bf16.gmra.mxu0 %v10902
      %v11133 = vpop.f32.mrf.mxu0
      %v11134 = vadd.f32 0.0, %v11133
      %v11135 = vpop.f32.mrf.mxu0
      %v11136 = vpop.f32.mrf.mxu0
      %v11137 = vadd.f32 0.0, %v11136
      %v11138 = vpop.f32.mrf.mxu0
      %11139 = vmatprep.mubr.bf16.mxu0 0
      %11140 = vmatmul.mubr.bf16.gmra.mxu0 %v10903
      %v11141 = vpop.f32.mrf.mxu0
      %v11142 = vadd.f32 0.0, %v11141
      %v11143 = vpop.f32.mrf.mxu0
      %v11144 = vpop.f32.mrf.mxu0
      %v11145 = vadd.f32 0.0, %v11144
      %v11146 = vpop.f32.mrf.mxu0
      %11147 = vmatprep.mubr.bf16.mxu0 0
      %11148 = vmatmul.mubr.bf16.gmra.mxu0 %v10904
      %v11149 = vpop.f32.mrf.mxu0
      %v11150 = vadd.f32 0.0, %v11149
      %v11151 = vpop.f32.mrf.mxu0
      %v11152 = vpop.f32.mrf.mxu0
      %v11153 = vadd.f32 0.0, %v11152
      %v11154 = vpop.f32.mrf.mxu0
      %11155 = vmatprep.mubr.bf16.mxu0 0
      %11156 = vmatmul.mubr.bf16.gmra.mxu0 %v10905
      %v11157 = vpop.f32.mrf.mxu0
      %v11158 = vadd.f32 0.0, %v11157
      %v11159 = vpop.f32.mrf.mxu0
      %v11160 = vpop.f32.mrf.mxu0
      %v11161 = vadd.f32 0.0, %v11160
      %v11162 = vpop.f32.mrf.mxu0
      %11163 = vdwg.mxu0
      %11164 = vrot.lane.b32.xlu0 %v9815, 40
      %v11165 = vpop.permute.xlu0 %11164
      %11166 = vrot.lane.b32.xlu0 %v9816, 40
      %v11167 = vpop.permute.xlu0 %11166
      %11168 = vrot.lane.b32.xlu0 %v9817, 40
      %v11169 = vpop.permute.xlu0 %11168
      %11170 = vrot.lane.b32.xlu0 %v9818, 40
      %v11171 = vpop.permute.xlu0 %11170
      %11172 = vrot.lane.b32.xlu0 %v9819, 40
      %v11173 = vpop.permute.xlu0 %11172
      %11174 = vrot.lane.b32.xlu0 %v9820, 40
      %v11175 = vpop.permute.xlu0 %11174
      %11176 = vrot.lane.b32.xlu0 %v9821, 40
      %v11177 = vpop.permute.xlu0 %11176
      %11178 = vrot.lane.b32.xlu0 %v9822, 40
      %v11179 = vpop.permute.xlu0 %11178
      %11188 = vmatprep.subr.bf16.mxu0 0
      %11189 = vmatpush1.bf16.msra.mxu0 %v11179
      %11190 = vmatprep.subr.bf16.mxu0 0
      %11191 = vmatpush1.bf16.msra.mxu0 %v11177
      %11192 = vmatprep.subr.bf16.mxu0 0
      %11193 = vmatpush1.bf16.msra.mxu0 %v11175
      %11194 = vmatprep.subr.bf16.mxu0 0
      %11195 = vmatpush1.bf16.msra.mxu0 %v11173
      %11196 = vmatprep.subr.bf16.mxu0 0
      %11197 = vmatpush1.bf16.msra.mxu0 %v11171
      %11198 = vmatprep.subr.bf16.mxu0 0
      %11199 = vmatpush1.bf16.msra.mxu0 %v11169
      %11200 = vmatprep.subr.bf16.mxu0 0
      %11201 = vmatpush1.bf16.msra.mxu0 %v11167
      %11202 = vmatprep.subr.bf16.mxu0 0
      %11203 = vmatpush1.bf16.msra.mxu0 %v11165
      %11204 = vmatprep.subr.bf16.mxu0 0
      %11205 = vmatpush2.bf16.msra.mxu0 0
      %11206 = vmatprep.subr.bf16.mxu0 0
      %11207 = vmatpush2.bf16.msra.mxu0 0
      %11208 = vmatprep.subr.bf16.mxu0 0
      %11209 = vmatpush2.bf16.msra.mxu0 0
      %11210 = vmatprep.subr.bf16.mxu0 0
      %11211 = vmatpush2.bf16.msra.mxu0 0
      %11212 = vmatprep.subr.bf16.mxu0 0
      %11213 = vmatpush2.bf16.msra.mxu0 0
      %11214 = vmatprep.subr.bf16.mxu0 0
      %11215 = vmatpush2.bf16.msra.mxu0 0
      %11216 = vmatprep.subr.bf16.mxu0 0
      %11217 = vmatpush2.bf16.msra.mxu0 0
      %11218 = vmatprep.subr.bf16.mxu0 0
      %11219 = vmatpush2.bf16.msra.mxu0 0
      %11220 = vmatprep.mubr.bf16.mxu0 0
      %11221 = vmatmul.mubr.bf16.gmra.mxu0 %v10906
      %v11222 = vpop.f32.mrf.mxu0
      %v11223 = vadd.f32 0.0, %v11222
      %v11224 = vpop.f32.mrf.mxu0
      %v11225 = vpop.f32.mrf.mxu0
      %v11226 = vadd.f32 0.0, %v11225
      %v11227 = vpop.f32.mrf.mxu0
      %11228 = vmatprep.mubr.bf16.mxu0 0
      %11229 = vmatmul.mubr.bf16.gmra.mxu0 %v10907
      %v11230 = vpop.f32.mrf.mxu0
      %v11231 = vadd.f32 0.0, %v11230
      %v11232 = vpop.f32.mrf.mxu0
      %v11233 = vpop.f32.mrf.mxu0
      %v11234 = vadd.f32 0.0, %v11233
      %v11235 = vpop.f32.mrf.mxu0
      %11236 = vmatprep.mubr.bf16.mxu0 0
      %11237 = vmatmul.mubr.bf16.gmra.mxu0 %v10908
      %v11238 = vpop.f32.mrf.mxu0
      %v11239 = vadd.f32 0.0, %v11238
      %v11240 = vpop.f32.mrf.mxu0
      %v11241 = vpop.f32.mrf.mxu0
      %v11242 = vadd.f32 0.0, %v11241
      %v11243 = vpop.f32.mrf.mxu0
      %11244 = vmatprep.mubr.bf16.mxu0 0
      %11245 = vmatmul.mubr.bf16.gmra.mxu0 %v10909
      %v11246 = vpop.f32.mrf.mxu0
      %v11247 = vadd.f32 0.0, %v11246
      %v11248 = vpop.f32.mrf.mxu0
      %v11249 = vpop.f32.mrf.mxu0
      %v11250 = vadd.f32 0.0, %v11249
      %v11251 = vpop.f32.mrf.mxu0
      %11252 = vmatprep.mubr.bf16.mxu0 0
      %11253 = vmatmul.mubr.bf16.gmra.mxu0 %v10910
      %v11254 = vpop.f32.mrf.mxu0
      %v11255 = vadd.f32 0.0, %v11254
      %v11256 = vpop.f32.mrf.mxu0
      %v11257 = vpop.f32.mrf.mxu0
      %v11258 = vadd.f32 0.0, %v11257
      %v11259 = vpop.f32.mrf.mxu0
      %11260 = vmatprep.mubr.bf16.mxu0 0
      %11261 = vmatmul.mubr.bf16.gmra.mxu0 %v10911
      %v11262 = vpop.f32.mrf.mxu0
      %v11263 = vadd.f32 0.0, %v11262
      %v11264 = vpop.f32.mrf.mxu0
      %v11265 = vpop.f32.mrf.mxu0
      %v11266 = vadd.f32 0.0, %v11265
      %v11267 = vpop.f32.mrf.mxu0
      %11268 = vmatprep.mubr.bf16.mxu0 0
      %11269 = vmatmul.mubr.bf16.gmra.mxu0 %v10912
      %v11270 = vpop.f32.mrf.mxu0
      %v11271 = vadd.f32 0.0, %v11270
      %v11272 = vpop.f32.mrf.mxu0
      %v11273 = vpop.f32.mrf.mxu0
      %v11274 = vadd.f32 0.0, %v11273
      %v11275 = vpop.f32.mrf.mxu0
      %11276 = vmatprep.mubr.bf16.mxu0 0
      %11277 = vmatmul.mubr.bf16.gmra.mxu0 %v10913
      %v11278 = vpop.f32.mrf.mxu0
      %v11279 = vadd.f32 0.0, %v11278
      %v11280 = vpop.f32.mrf.mxu0
      %v11281 = vpop.f32.mrf.mxu0
      %v11282 = vadd.f32 0.0, %v11281
      %v11283 = vpop.f32.mrf.mxu0
      %11284 = vdwg.mxu0
      %11285 = vrot.lane.b32.xlu0 %v10032, 40
      %v11286 = vpop.permute.xlu0 %11285
      %11287 = vrot.lane.b32.xlu0 %v10033, 40
      %v11288 = vpop.permute.xlu0 %11287
      %11289 = vrot.lane.b32.xlu0 %v10034, 40
      %v11290 = vpop.permute.xlu0 %11289
      %11291 = vrot.lane.b32.xlu0 %v10035, 40
      %v11292 = vpop.permute.xlu0 %11291
      %11293 = vrot.lane.b32.xlu0 %v10036, 40
      %v11294 = vpop.permute.xlu0 %11293
      %11295 = vrot.lane.b32.xlu0 %v10037, 40
      %v11296 = vpop.permute.xlu0 %11295
      %11297 = vrot.lane.b32.xlu0 %v10038, 40
      %v11298 = vpop.permute.xlu0 %11297
      %11299 = vrot.lane.b32.xlu0 %v10039, 40
      %v11300 = vpop.permute.xlu0 %11299
      %11309 = vmatprep.subr.bf16.mxu0 0
      %11310 = vmatpush1.bf16.msra.mxu0 %v11300
      %11311 = vmatprep.subr.bf16.mxu0 0
      %11312 = vmatpush1.bf16.msra.mxu0 %v11298
      %11313 = vmatprep.subr.bf16.mxu0 0
      %11314 = vmatpush1.bf16.msra.mxu0 %v11296
      %11315 = vmatprep.subr.bf16.mxu0 0
      %11316 = vmatpush1.bf16.msra.mxu0 %v11294
      %11317 = vmatprep.subr.bf16.mxu0 0
      %11318 = vmatpush1.bf16.msra.mxu0 %v11292
      %11319 = vmatprep.subr.bf16.mxu0 0
      %11320 = vmatpush1.bf16.msra.mxu0 %v11290
      %11321 = vmatprep.subr.bf16.mxu0 0
      %11322 = vmatpush1.bf16.msra.mxu0 %v11288
      %11323 = vmatprep.subr.bf16.mxu0 0
      %11324 = vmatpush1.bf16.msra.mxu0 %v11286
      %11325 = vmatprep.subr.bf16.mxu0 0
      %11326 = vmatpush2.bf16.msra.mxu0 0
      %11327 = vmatprep.subr.bf16.mxu0 0
      %11328 = vmatpush2.bf16.msra.mxu0 0
      %11329 = vmatprep.subr.bf16.mxu0 0
      %11330 = vmatpush2.bf16.msra.mxu0 0
      %11331 = vmatprep.subr.bf16.mxu0 0
      %11332 = vmatpush2.bf16.msra.mxu0 0
      %11333 = vmatprep.subr.bf16.mxu0 0
      %11334 = vmatpush2.bf16.msra.mxu0 0
      %11335 = vmatprep.subr.bf16.mxu0 0
      %11336 = vmatpush2.bf16.msra.mxu0 0
      %11337 = vmatprep.subr.bf16.mxu0 0
      %11338 = vmatpush2.bf16.msra.mxu0 0
      %11339 = vmatprep.subr.bf16.mxu0 0
      %11340 = vmatpush2.bf16.msra.mxu0 0
      %11341 = vmatprep.mubr.bf16.mxu0 0
      %11342 = vmatmul.mubr.bf16.gmra.mxu0 %v10914
      %v11343 = vpop.f32.mrf.mxu0
      %v11344 = vadd.f32 0.0, %v11343
      %v11345 = vpop.f32.mrf.mxu0
      %v11346 = vpop.f32.mrf.mxu0
      %v11347 = vadd.f32 0.0, %v11346
      %v11348 = vpop.f32.mrf.mxu0
      %11349 = vmatprep.mubr.bf16.mxu0 0
      %11350 = vmatmul.mubr.bf16.gmra.mxu0 %v10915
      %v11351 = vpop.f32.mrf.mxu0
      %v11352 = vadd.f32 0.0, %v11351
      %v11353 = vpop.f32.mrf.mxu0
      %v11354 = vpop.f32.mrf.mxu0
      %v11355 = vadd.f32 0.0, %v11354
      %v11356 = vpop.f32.mrf.mxu0
      %11357 = vmatprep.mubr.bf16.mxu0 0
      %11358 = vmatmul.mubr.bf16.gmra.mxu0 %v10916
      %v11359 = vpop.f32.mrf.mxu0
      %v11360 = vadd.f32 0.0, %v11359
      %v11361 = vpop.f32.mrf.mxu0
      %v11362 = vpop.f32.mrf.mxu0
      %v11363 = vadd.f32 0.0, %v11362
      %v11364 = vpop.f32.mrf.mxu0
      %11365 = vmatprep.mubr.bf16.mxu0 0
      %11366 = vmatmul.mubr.bf16.gmra.mxu0 %v10917
      %v11367 = vpop.f32.mrf.mxu0
      %v11368 = vadd.f32 0.0, %v11367
      %v11369 = vpop.f32.mrf.mxu0
      %v11370 = vpop.f32.mrf.mxu0
      %v11371 = vadd.f32 0.0, %v11370
      %v11372 = vpop.f32.mrf.mxu0
      %11373 = vmatprep.mubr.bf16.mxu0 0
      %11374 = vmatmul.mubr.bf16.gmra.mxu0 %v10918
      %v11375 = vpop.f32.mrf.mxu0
      %v11376 = vadd.f32 0.0, %v11375
      %v11377 = vpop.f32.mrf.mxu0
      %v11378 = vpop.f32.mrf.mxu0
      %v11379 = vadd.f32 0.0, %v11378
      %v11380 = vpop.f32.mrf.mxu0
      %11381 = vmatprep.mubr.bf16.mxu0 0
      %11382 = vmatmul.mubr.bf16.gmra.mxu0 %v10919
      %v11383 = vpop.f32.mrf.mxu0
      %v11384 = vadd.f32 0.0, %v11383
      %v11385 = vpop.f32.mrf.mxu0
      %v11386 = vpop.f32.mrf.mxu0
      %v11387 = vadd.f32 0.0, %v11386
      %v11388 = vpop.f32.mrf.mxu0
      %11389 = vmatprep.mubr.bf16.mxu0 0
      %11390 = vmatmul.mubr.bf16.gmra.mxu0 %v10920
      %v11391 = vpop.f32.mrf.mxu0
      %v11392 = vadd.f32 0.0, %v11391
      %v11393 = vpop.f32.mrf.mxu0
      %v11394 = vpop.f32.mrf.mxu0
      %v11395 = vadd.f32 0.0, %v11394
      %v11396 = vpop.f32.mrf.mxu0
      %11397 = vmatprep.mubr.bf16.mxu0 0
      %11398 = vmatmul.mubr.bf16.gmra.mxu0 %v10921
      %v11399 = vpop.f32.mrf.mxu0
      %v11400 = vadd.f32 0.0, %v11399
      %v11401 = vpop.f32.mrf.mxu0
      %v11402 = vpop.f32.mrf.mxu0
      %v11403 = vadd.f32 0.0, %v11402
      %v11404 = vpop.f32.mrf.mxu0
      %11405 = vdwg.mxu0
      %v11406 = vld [vmem:[#allocation3] sm:$0xff]
      %v11407 = vld [vmem:[#allocation3 + $0x8] sm:$0xff]
      %v11408 = vld [vmem:[#allocation3 + $0x10] sm:$0xff]
      %v11409 = vld [vmem:[#allocation3 + $0x18] sm:$0xff]
      %v11410 = vld [vmem:[#allocation3 + $0x20] sm:$0xff]
      %v11411 = vld [vmem:[#allocation3 + $0x28] sm:$0xff]
      %v11412 = vld [vmem:[#allocation3 + $0x30] sm:$0xff]
      %v11413 = vld [vmem:[#allocation3 + $0x38] sm:$0xff]
      %v11414 = vld [vmem:[#allocation3 + $0x40] sm:$0xff]
      %v11415 = vld [vmem:[#allocation3 + $0x48] sm:$0xff]
      %v11416 = vld [vmem:[#allocation3 + $0x50] sm:$0xff]
      %v11417 = vld [vmem:[#allocation3 + $0x58] sm:$0xff]
      %v11418 = vld [vmem:[#allocation3 + $0x60] sm:$0xff]
      %v11419 = vld [vmem:[#allocation3 + $0x68] sm:$0xff]
      %v11420 = vld [vmem:[#allocation3 + $0x70] sm:$0xff]
      %v11421 = vld [vmem:[#allocation3 + $0x78] sm:$0xff]
      %v11422 = vld [vmem:[#allocation3 + $0x80] sm:$0xff]
      %v11423 = vld [vmem:[#allocation3 + $0x88] sm:$0xff]
      %v11424 = vld [vmem:[#allocation3 + $0x90] sm:$0xff]
      %v11425 = vld [vmem:[#allocation3 + $0x98] sm:$0xff]
      %v11426 = vld [vmem:[#allocation3 + $0xa0] sm:$0xff]
      %v11427 = vld [vmem:[#allocation3 + $0xa8] sm:$0xff]
      %v11428 = vld [vmem:[#allocation3 + $0xb0] sm:$0xff]
      %v11429 = vld [vmem:[#allocation3 + $0xb8] sm:$0xff]
      %v11430 = vld [vmem:[#allocation3 + $0xc0] sm:$0xff]
      %v11431 = vld [vmem:[#allocation3 + $0xc8] sm:$0xff]
      %v11432 = vld [vmem:[#allocation3 + $0xd0] sm:$0xff]
      %v11433 = vld [vmem:[#allocation3 + $0xd8] sm:$0xff]
      %v11434 = vld [vmem:[#allocation3 + $0xe0] sm:$0xff]
      %v11435 = vld [vmem:[#allocation3 + $0xe8] sm:$0xff]
      %v11436 = vld [vmem:[#allocation3 + $0xf0] sm:$0xff]
      %v11437 = vld [vmem:[#allocation3 + $0xf8] sm:$0xff]
      %v11438 = vld [vmem:[#allocation3 + $0x100] sm:$0xff]
      %v11439 = vld [vmem:[#allocation3 + $0x108] sm:$0xff]
      %v11440 = vld [vmem:[#allocation3 + $0x110] sm:$0xff]
      %v11441 = vld [vmem:[#allocation3 + $0x118] sm:$0xff]
      %v11442 = vld [vmem:[#allocation3 + $0x120] sm:$0xff]
      %v11443 = vld [vmem:[#allocation3 + $0x128] sm:$0xff]
      %v11444 = vld [vmem:[#allocation3 + $0x130] sm:$0xff]
      %v11445 = vld [vmem:[#allocation3 + $0x138] sm:$0xff]
      %v11446 = vld [vmem:[#allocation3 + $0x140] sm:$0xff]
      %v11447 = vld [vmem:[#allocation3 + $0x148] sm:$0xff]
      %v11448 = vld [vmem:[#allocation3 + $0x150] sm:$0xff]
      %v11449 = vld [vmem:[#allocation3 + $0x158] sm:$0xff]
      %v11450 = vld [vmem:[#allocation3 + $0x160] sm:$0xff]
      %v11451 = vld [vmem:[#allocation3 + $0x168] sm:$0xff]
      %v11452 = vld [vmem:[#allocation3 + $0x170] sm:$0xff]
      %v11453 = vld [vmem:[#allocation3 + $0x178] sm:$0xff]
      %v11454 = vld [vmem:[#allocation3 + $0x180] sm:$0xff]
      %v11455 = vld [vmem:[#allocation3 + $0x188] sm:$0xff]
      %v11456 = vld [vmem:[#allocation3 + $0x190] sm:$0xff]
      %v11457 = vld [vmem:[#allocation3 + $0x198] sm:$0xff]
      %v11458 = vld [vmem:[#allocation3 + $0x1a0] sm:$0xff]
      %v11459 = vld [vmem:[#allocation3 + $0x1a8] sm:$0xff]
      %v11460 = vld [vmem:[#allocation3 + $0x1b0] sm:$0xff]
      %v11461 = vld [vmem:[#allocation3 + $0x1b8] sm:$0xff]
      %v11462 = vld [vmem:[#allocation3 + $0x1c0] sm:$0xff]
      %v11463 = vld [vmem:[#allocation3 + $0x1c8] sm:$0xff]
      %v11464 = vld [vmem:[#allocation3 + $0x1d0] sm:$0xff]
      %v11465 = vld [vmem:[#allocation3 + $0x1d8] sm:$0xff]
      %v11466 = vld [vmem:[#allocation3 + $0x1e0] sm:$0xff]
      %v11467 = vld [vmem:[#allocation3 + $0x1e8] sm:$0xff]
      %v11468 = vld [vmem:[#allocation3 + $0x1f0] sm:$0xff]
      %v11469 = vld [vmem:[#allocation3 + $0x1f8] sm:$0xff]
      %v11470 = vpack.c.bf16 %v10984, %v10981
      %v11471 = vpack.c.bf16 %v10992, %v10989
      %v11472 = vpack.c.bf16 %v11000, %v10997
      %v11473 = vpack.c.bf16 %v11008, %v11005
      %v11474 = vpack.c.bf16 %v11016, %v11013
      %v11475 = vpack.c.bf16 %v11024, %v11021
      %v11476 = vpack.c.bf16 %v11032, %v11029
      %v11477 = vpack.c.bf16 %v11040, %v11037
      %v11478 = vpack.c.bf16 %v11105, %v11102
      %v11479 = vpack.c.bf16 %v11113, %v11110
      %v11480 = vpack.c.bf16 %v11121, %v11118
      %v11481 = vpack.c.bf16 %v11129, %v11126
      %v11482 = vpack.c.bf16 %v11137, %v11134
      %v11483 = vpack.c.bf16 %v11145, %v11142
      %v11484 = vpack.c.bf16 %v11153, %v11150
      %v11485 = vpack.c.bf16 %v11161, %v11158
      %v11486 = vpack.c.bf16 %v11226, %v11223
      %v11487 = vpack.c.bf16 %v11234, %v11231
      %v11488 = vpack.c.bf16 %v11242, %v11239
      %v11489 = vpack.c.bf16 %v11250, %v11247
      %v11490 = vpack.c.bf16 %v11258, %v11255
      %v11491 = vpack.c.bf16 %v11266, %v11263
      %v11492 = vpack.c.bf16 %v11274, %v11271
      %v11493 = vpack.c.bf16 %v11282, %v11279
      %v11494 = vpack.c.bf16 %v11347, %v11344
      %v11495 = vpack.c.bf16 %v11355, %v11352
      %v11496 = vpack.c.bf16 %v11363, %v11360
      %v11497 = vpack.c.bf16 %v11371, %v11368
      %v11498 = vpack.c.bf16 %v11379, %v11376
      %v11499 = vpack.c.bf16 %v11387, %v11384
      %v11500 = vpack.c.bf16 %v11395, %v11392
      %v11501 = vpack.c.bf16 %v11403, %v11400
      %v11502 = vld [vmem:[%s3 + $0xc] sm:$0xf]
      %v11504 = vsel %vm1266, %v11470, 0
      %v11507 = vsel %vm1266, %v11471, 0
      %v11510 = vsel %vm1266, %v11472, 0
      %v11513 = vsel %vm1266, %v11473, 0
      %v11516 = vsel %vm1266, %v11474, 0
      %v11519 = vsel %vm1266, %v11475, 0
      %v11522 = vsel %vm1266, %v11476, 0
      %v11525 = vsel %vm1266, %v11477, 0
      %v11528 = vsel %vm1266, %v11478, 0
      %v11531 = vsel %vm1266, %v11479, 0
      %v11534 = vsel %vm1266, %v11480, 0
      %v11537 = vsel %vm1266, %v11481, 0
      %v11540 = vsel %vm1266, %v11482, 0
      %v11543 = vsel %vm1266, %v11483, 0
      %v11546 = vsel %vm1266, %v11484, 0
      %v11549 = vsel %vm1266, %v11485, 0
      %v11552 = vsel %vm1266, %v11486, 0
      %v11555 = vsel %vm1266, %v11487, 0
      %v11558 = vsel %vm1266, %v11488, 0
      %v11561 = vsel %vm1266, %v11489, 0
      %v11564 = vsel %vm1266, %v11490, 0
      %v11567 = vsel %vm1266, %v11491, 0
      %v11570 = vsel %vm1266, %v11492, 0
      %v11573 = vsel %vm1266, %v11493, 0
      %v11576 = vsel %vm1266, %v11494, 0
      %v11579 = vsel %vm1266, %v11495, 0
      %v11582 = vsel %vm1266, %v11496, 0
      %v11585 = vsel %vm1266, %v11497, 0
      %v11588 = vsel %vm1266, %v11498, 0
      %v11591 = vsel %vm1266, %v11499, 0
      %v11594 = vsel %vm1266, %v11500, 0
      %v11597 = vsel %vm1266, %v11501, 0
      %v11600 = vsel %vm3396, %v11502, 0
      %11602 = vmatprep.subr.bf16.mxu0 0
      %11603 = vmatpush1.bf16.msra.mxu0 0
      %11604 = vmatprep.subr.bf16.mxu0 0
      %11605 = vmatpush1.bf16.msra.mxu0 0
      %11606 = vmatprep.subr.bf16.mxu0 0
      %11607 = vmatpush1.bf16.msra.mxu0 0
      %11608 = vmatprep.subr.bf16.mxu0 0
      %11609 = vmatpush1.bf16.msra.mxu0 0
      %11610 = vmatprep.subr.bf16.mxu0 0
      %11611 = vmatpush1.bf16.msra.mxu0 0
      %11612 = vmatprep.subr.bf16.mxu0 0
      %11613 = vmatpush1.bf16.msra.mxu0 0
      %11614 = vmatprep.subr.bf16.mxu0 0
      %11615 = vmatpush1.bf16.msra.mxu0 0
      %11616 = vmatprep.subr.bf16.mxu0 0
      %11617 = vmatpush1.bf16.msra.mxu0 %v11600
      %11618 = vmatprep.subr.bf16.mxu0 0
      %11619 = vmatpush2.bf16.msra.mxu0 0
      %11620 = vmatprep.subr.bf16.mxu0 0
      %11621 = vmatpush2.bf16.msra.mxu0 0
      %11622 = vmatprep.subr.bf16.mxu0 0
      %11623 = vmatpush2.bf16.msra.mxu0 0
      %11624 = vmatprep.subr.bf16.mxu0 0
      %11625 = vmatpush2.bf16.msra.mxu0 0
      %11626 = vmatprep.subr.bf16.mxu0 0
      %11627 = vmatpush2.bf16.msra.mxu0 0
      %11628 = vmatprep.subr.bf16.mxu0 0
      %11629 = vmatpush2.bf16.msra.mxu0 0
      %11630 = vmatprep.subr.bf16.mxu0 0
      %11631 = vmatpush2.bf16.msra.mxu0 0
      %11632 = vmatprep.subr.bf16.mxu0 0
      %11633 = vmatpush2.bf16.msra.mxu0 0
      %11634 = vmatprep.mubr.bf16.mxu0 0
      %11635 = vmatmul.mubr.bf16.gmra.mxu0 %v11504
      %v11636 = vpop.f32.mrf.mxu0
      %v11637 = vadd.f32 0.0, %v11636
      %v11638 = vpop.f32.mrf.mxu0
      %v11639 = vpop.f32.mrf.mxu0
      %v11640 = vadd.f32 0.0, %v11639
      %v11641 = vpop.f32.mrf.mxu0
      %11642 = vmatprep.mubr.bf16.mxu0 0
      %11643 = vmatmul.mubr.bf16.gmra.mxu0 %v11507
      %v11644 = vpop.f32.mrf.mxu0
      %v11645 = vadd.f32 0.0, %v11644
      %v11646 = vpop.f32.mrf.mxu0
      %v11647 = vpop.f32.mrf.mxu0
      %v11648 = vadd.f32 0.0, %v11647
      %v11649 = vpop.f32.mrf.mxu0
      %11650 = vmatprep.mubr.bf16.mxu0 0
      %11651 = vmatmul.mubr.bf16.gmra.mxu0 %v11510
      %v11652 = vpop.f32.mrf.mxu0
      %v11653 = vadd.f32 0.0, %v11652
      %v11654 = vpop.f32.mrf.mxu0
      %v11655 = vpop.f32.mrf.mxu0
      %v11656 = vadd.f32 0.0, %v11655
      %v11657 = vpop.f32.mrf.mxu0
      %11658 = vmatprep.mubr.bf16.mxu0 0
      %11659 = vmatmul.mubr.bf16.gmra.mxu0 %v11513
      %v11660 = vpop.f32.mrf.mxu0
      %v11661 = vadd.f32 0.0, %v11660
      %v11662 = vpop.f32.mrf.mxu0
      %v11663 = vpop.f32.mrf.mxu0
      %v11664 = vadd.f32 0.0, %v11663
      %v11665 = vpop.f32.mrf.mxu0
      %11666 = vmatprep.mubr.bf16.mxu0 0
      %11667 = vmatmul.mubr.bf16.gmra.mxu0 %v11516
      %v11668 = vpop.f32.mrf.mxu0
      %v11669 = vadd.f32 0.0, %v11668
      %v11670 = vpop.f32.mrf.mxu0
      %v11671 = vpop.f32.mrf.mxu0
      %v11672 = vadd.f32 0.0, %v11671
      %v11673 = vpop.f32.mrf.mxu0
      %11674 = vmatprep.mubr.bf16.mxu0 0
      %11675 = vmatmul.mubr.bf16.gmra.mxu0 %v11519
      %v11676 = vpop.f32.mrf.mxu0
      %v11677 = vadd.f32 0.0, %v11676
      %v11678 = vpop.f32.mrf.mxu0
      %v11679 = vpop.f32.mrf.mxu0
      %v11680 = vadd.f32 0.0, %v11679
      %v11681 = vpop.f32.mrf.mxu0
      %11682 = vmatprep.mubr.bf16.mxu0 0
      %11683 = vmatmul.mubr.bf16.gmra.mxu0 %v11522
      %v11684 = vpop.f32.mrf.mxu0
      %v11685 = vadd.f32 0.0, %v11684
      %v11686 = vpop.f32.mrf.mxu0
      %v11687 = vpop.f32.mrf.mxu0
      %v11688 = vadd.f32 0.0, %v11687
      %v11689 = vpop.f32.mrf.mxu0
      %11690 = vmatprep.mubr.bf16.mxu0 0
      %11691 = vmatmul.mubr.bf16.gmra.mxu0 %v11525
      %v11692 = vpop.f32.mrf.mxu0
      %v11693 = vadd.f32 0.0, %v11692
      %v11694 = vpop.f32.mrf.mxu0
      %v11695 = vpop.f32.mrf.mxu0
      %v11696 = vadd.f32 0.0, %v11695
      %v11697 = vpop.f32.mrf.mxu0
      %11698 = vmatprep.mubr.bf16.mxu0 0
      %11699 = vmatmul.mubr.bf16.gmra.mxu0 %v11528
      %v11700 = vpop.f32.mrf.mxu0
      %v11701 = vadd.f32 0.0, %v11700
      %v11702 = vpop.f32.mrf.mxu0
      %v11703 = vpop.f32.mrf.mxu0
      %v11704 = vadd.f32 0.0, %v11703
      %v11705 = vpop.f32.mrf.mxu0
      %11706 = vmatprep.mubr.bf16.mxu0 0
      %11707 = vmatmul.mubr.bf16.gmra.mxu0 %v11531
      %v11708 = vpop.f32.mrf.mxu0
      %v11709 = vadd.f32 0.0, %v11708
      %v11710 = vpop.f32.mrf.mxu0
      %v11711 = vpop.f32.mrf.mxu0
      %v11712 = vadd.f32 0.0, %v11711
      %v11713 = vpop.f32.mrf.mxu0
      %11714 = vmatprep.mubr.bf16.mxu0 0
      %11715 = vmatmul.mubr.bf16.gmra.mxu0 %v11534
      %v11716 = vpop.f32.mrf.mxu0
      %v11717 = vadd.f32 0.0, %v11716
      %v11718 = vpop.f32.mrf.mxu0
      %v11719 = vpop.f32.mrf.mxu0
      %v11720 = vadd.f32 0.0, %v11719
      %v11721 = vpop.f32.mrf.mxu0
      %11722 = vmatprep.mubr.bf16.mxu0 0
      %11723 = vmatmul.mubr.bf16.gmra.mxu0 %v11537
      %v11724 = vpop.f32.mrf.mxu0
      %v11725 = vadd.f32 0.0, %v11724
      %v11726 = vpop.f32.mrf.mxu0
      %v11727 = vpop.f32.mrf.mxu0
      %v11728 = vadd.f32 0.0, %v11727
      %v11729 = vpop.f32.mrf.mxu0
      %11730 = vmatprep.mubr.bf16.mxu0 0
      %11731 = vmatmul.mubr.bf16.gmra.mxu0 %v11540
      %v11732 = vpop.f32.mrf.mxu0
      %v11733 = vadd.f32 0.0, %v11732
      %v11734 = vpop.f32.mrf.mxu0
      %v11735 = vpop.f32.mrf.mxu0
      %v11736 = vadd.f32 0.0, %v11735
      %v11737 = vpop.f32.mrf.mxu0
      %11738 = vmatprep.mubr.bf16.mxu0 0
      %11739 = vmatmul.mubr.bf16.gmra.mxu0 %v11543
      %v11740 = vpop.f32.mrf.mxu0
      %v11741 = vadd.f32 0.0, %v11740
      %v11742 = vpop.f32.mrf.mxu0
      %v11743 = vpop.f32.mrf.mxu0
      %v11744 = vadd.f32 0.0, %v11743
      %v11745 = vpop.f32.mrf.mxu0
      %11746 = vmatprep.mubr.bf16.mxu0 0
      %11747 = vmatmul.mubr.bf16.gmra.mxu0 %v11546
      %v11748 = vpop.f32.mrf.mxu0
      %v11749 = vadd.f32 0.0, %v11748
      %v11750 = vpop.f32.mrf.mxu0
      %v11751 = vpop.f32.mrf.mxu0
      %v11752 = vadd.f32 0.0, %v11751
      %v11753 = vpop.f32.mrf.mxu0
      %11754 = vmatprep.mubr.bf16.mxu0 0
      %11755 = vmatmul.mubr.bf16.gmra.mxu0 %v11549
      %v11756 = vpop.f32.mrf.mxu0
      %v11757 = vadd.f32 0.0, %v11756
      %v11758 = vpop.f32.mrf.mxu0
      %v11759 = vpop.f32.mrf.mxu0
      %v11760 = vadd.f32 0.0, %v11759
      %v11761 = vpop.f32.mrf.mxu0
      %11762 = vmatprep.mubr.bf16.mxu0 0
      %11763 = vmatmul.mubr.bf16.gmra.mxu0 %v11552
      %v11764 = vpop.f32.mrf.mxu0
      %v11765 = vadd.f32 0.0, %v11764
      %v11766 = vpop.f32.mrf.mxu0
      %v11767 = vpop.f32.mrf.mxu0
      %v11768 = vadd.f32 0.0, %v11767
      %v11769 = vpop.f32.mrf.mxu0
      %11770 = vmatprep.mubr.bf16.mxu0 0
      %11771 = vmatmul.mubr.bf16.gmra.mxu0 %v11555
      %v11772 = vpop.f32.mrf.mxu0
      %v11773 = vadd.f32 0.0, %v11772
      %v11774 = vpop.f32.mrf.mxu0
      %v11775 = vpop.f32.mrf.mxu0
      %v11776 = vadd.f32 0.0, %v11775
      %v11777 = vpop.f32.mrf.mxu0
      %11778 = vmatprep.mubr.bf16.mxu0 0
      %11779 = vmatmul.mubr.bf16.gmra.mxu0 %v11558
      %v11780 = vpop.f32.mrf.mxu0
      %v11781 = vadd.f32 0.0, %v11780
      %v11782 = vpop.f32.mrf.mxu0
      %v11783 = vpop.f32.mrf.mxu0
      %v11784 = vadd.f32 0.0, %v11783
      %v11785 = vpop.f32.mrf.mxu0
      %11786 = vmatprep.mubr.bf16.mxu0 0
      %11787 = vmatmul.mubr.bf16.gmra.mxu0 %v11561
      %v11788 = vpop.f32.mrf.mxu0
      %v11789 = vadd.f32 0.0, %v11788
      %v11790 = vpop.f32.mrf.mxu0
      %v11791 = vpop.f32.mrf.mxu0
      %v11792 = vadd.f32 0.0, %v11791
      %v11793 = vpop.f32.mrf.mxu0
      %11794 = vmatprep.mubr.bf16.mxu0 0
      %11795 = vmatmul.mubr.bf16.gmra.mxu0 %v11564
      %v11796 = vpop.f32.mrf.mxu0
      %v11797 = vadd.f32 0.0, %v11796
      %v11798 = vpop.f32.mrf.mxu0
      %v11799 = vpop.f32.mrf.mxu0
      %v11800 = vadd.f32 0.0, %v11799
      %v11801 = vpop.f32.mrf.mxu0
      %11802 = vmatprep.mubr.bf16.mxu0 0
      %11803 = vmatmul.mubr.bf16.gmra.mxu0 %v11567
      %v11804 = vpop.f32.mrf.mxu0
      %v11805 = vadd.f32 0.0, %v11804
      %v11806 = vpop.f32.mrf.mxu0
      %v11807 = vpop.f32.mrf.mxu0
      %v11808 = vadd.f32 0.0, %v11807
      %v11809 = vpop.f32.mrf.mxu0
      %11810 = vmatprep.mubr.bf16.mxu0 0
      %11811 = vmatmul.mubr.bf16.gmra.mxu0 %v11570
      %v11812 = vpop.f32.mrf.mxu0
      %v11813 = vadd.f32 0.0, %v11812
      %v11814 = vpop.f32.mrf.mxu0
      %v11815 = vpop.f32.mrf.mxu0
      %v11816 = vadd.f32 0.0, %v11815
      %v11817 = vpop.f32.mrf.mxu0
      %11818 = vmatprep.mubr.bf16.mxu0 0
      %11819 = vmatmul.mubr.bf16.gmra.mxu0 %v11573
      %v11820 = vpop.f32.mrf.mxu0
      %v11821 = vadd.f32 0.0, %v11820
      %v11822 = vpop.f32.mrf.mxu0
      %v11823 = vpop.f32.mrf.mxu0
      %v11824 = vadd.f32 0.0, %v11823
      %v11825 = vpop.f32.mrf.mxu0
      %11826 = vmatprep.mubr.bf16.mxu0 0
      %11827 = vmatmul.mubr.bf16.gmra.mxu0 %v11576
      %v11828 = vpop.f32.mrf.mxu0
      %v11829 = vadd.f32 0.0, %v11828
      %v11830 = vpop.f32.mrf.mxu0
      %v11831 = vpop.f32.mrf.mxu0
      %v11832 = vadd.f32 0.0, %v11831
      %v11833 = vpop.f32.mrf.mxu0
      %11834 = vmatprep.mubr.bf16.mxu0 0
      %11835 = vmatmul.mubr.bf16.gmra.mxu0 %v11579
      %v11836 = vpop.f32.mrf.mxu0
      %v11837 = vadd.f32 0.0, %v11836
      %v11838 = vpop.f32.mrf.mxu0
      %v11839 = vpop.f32.mrf.mxu0
      %v11840 = vadd.f32 0.0, %v11839
      %v11841 = vpop.f32.mrf.mxu0
      %11842 = vmatprep.mubr.bf16.mxu0 0
      %11843 = vmatmul.mubr.bf16.gmra.mxu0 %v11582
      %v11844 = vpop.f32.mrf.mxu0
      %v11845 = vadd.f32 0.0, %v11844
      %v11846 = vpop.f32.mrf.mxu0
      %v11847 = vpop.f32.mrf.mxu0
      %v11848 = vadd.f32 0.0, %v11847
      %v11849 = vpop.f32.mrf.mxu0
      %11850 = vmatprep.mubr.bf16.mxu0 0
      %11851 = vmatmul.mubr.bf16.gmra.mxu0 %v11585
      %v11852 = vpop.f32.mrf.mxu0
      %v11853 = vadd.f32 0.0, %v11852
      %v11854 = vpop.f32.mrf.mxu0
      %v11855 = vpop.f32.mrf.mxu0
      %v11856 = vadd.f32 0.0, %v11855
      %v11857 = vpop.f32.mrf.mxu0
      %11858 = vmatprep.mubr.bf16.mxu0 0
      %11859 = vmatmul.mubr.bf16.gmra.mxu0 %v11588
      %v11860 = vpop.f32.mrf.mxu0
      %v11861 = vadd.f32 0.0, %v11860
      %v11862 = vpop.f32.mrf.mxu0
      %v11863 = vpop.f32.mrf.mxu0
      %v11864 = vadd.f32 0.0, %v11863
      %v11865 = vpop.f32.mrf.mxu0
      %11866 = vmatprep.mubr.bf16.mxu0 0
      %11867 = vmatmul.mubr.bf16.gmra.mxu0 %v11591
      %v11868 = vpop.f32.mrf.mxu0
      %v11869 = vadd.f32 0.0, %v11868
      %v11870 = vpop.f32.mrf.mxu0
      %v11871 = vpop.f32.mrf.mxu0
      %v11872 = vadd.f32 0.0, %v11871
      %v11873 = vpop.f32.mrf.mxu0
      %11874 = vmatprep.mubr.bf16.mxu0 0
      %11875 = vmatmul.mubr.bf16.gmra.mxu0 %v11594
      %v11876 = vpop.f32.mrf.mxu0
      %v11877 = vadd.f32 0.0, %v11876
      %v11878 = vpop.f32.mrf.mxu0
      %v11879 = vpop.f32.mrf.mxu0
      %v11880 = vadd.f32 0.0, %v11879
      %v11881 = vpop.f32.mrf.mxu0
      %11882 = vmatprep.mubr.bf16.mxu0 0
      %11883 = vmatmul.mubr.bf16.gmra.mxu0 %v11597
      %v11884 = vpop.f32.mrf.mxu0
      %v11885 = vadd.f32 0.0, %v11884
      %v11886 = vpop.f32.mrf.mxu0
      %v11887 = vpop.f32.mrf.mxu0
      %v11888 = vadd.f32 0.0, %v11887
      %v11889 = vpop.f32.mrf.mxu0
      %11890 = vdwg.mxu0
      %v11891 = vadd.f32 %v11406, %v11637
      %v11892 = vadd.f32 %v11407, %v11640
      %v11893 = vadd.f32 %v11408, %v11645
      %v11894 = vadd.f32 %v11409, %v11648
      %v11895 = vadd.f32 %v11410, %v11653
      %v11896 = vadd.f32 %v11411, %v11656
      %v11897 = vadd.f32 %v11412, %v11661
      %v11898 = vadd.f32 %v11413, %v11664
      %v11899 = vadd.f32 %v11414, %v11669
      %v11900 = vadd.f32 %v11415, %v11672
      %v11901 = vadd.f32 %v11416, %v11677
      %v11902 = vadd.f32 %v11417, %v11680
      %v11903 = vadd.f32 %v11418, %v11685
      %v11904 = vadd.f32 %v11419, %v11688
      %v11905 = vadd.f32 %v11420, %v11693
      %v11906 = vadd.f32 %v11421, %v11696
      %v11907 = vadd.f32 %v11422, %v11701
      %v11908 = vadd.f32 %v11423, %v11704
      %v11909 = vadd.f32 %v11424, %v11709
      %v11910 = vadd.f32 %v11425, %v11712
      %v11911 = vadd.f32 %v11426, %v11717
      %v11912 = vadd.f32 %v11427, %v11720
      %v11913 = vadd.f32 %v11428, %v11725
      %v11914 = vadd.f32 %v11429, %v11728
      %v11915 = vadd.f32 %v11430, %v11733
      %v11916 = vadd.f32 %v11431, %v11736
      %v11917 = vadd.f32 %v11432, %v11741
      %v11918 = vadd.f32 %v11433, %v11744
      %v11919 = vadd.f32 %v11434, %v11749
      %v11920 = vadd.f32 %v11435, %v11752
      %v11921 = vadd.f32 %v11436, %v11757
      %v11922 = vadd.f32 %v11437, %v11760
      %v11923 = vadd.f32 %v11438, %v11765
      %v11924 = vadd.f32 %v11439, %v11768
      %v11925 = vadd.f32 %v11440, %v11773
      %v11926 = vadd.f32 %v11441, %v11776
      %v11927 = vadd.f32 %v11442, %v11781
      %v11928 = vadd.f32 %v11443, %v11784
      %v11929 = vadd.f32 %v11444, %v11789
      %v11930 = vadd.f32 %v11445, %v11792
      %v11931 = vadd.f32 %v11446, %v11797
      %v11932 = vadd.f32 %v11447, %v11800
      %v11933 = vadd.f32 %v11448, %v11805
      %v11934 = vadd.f32 %v11449, %v11808
      %v11935 = vadd.f32 %v11450, %v11813
      %v11936 = vadd.f32 %v11451, %v11816
      %v11937 = vadd.f32 %v11452, %v11821
      %v11938 = vadd.f32 %v11453, %v11824
      %v11939 = vadd.f32 %v11454, %v11829
      %v11940 = vadd.f32 %v11455, %v11832
      %v11941 = vadd.f32 %v11456, %v11837
      %v11942 = vadd.f32 %v11457, %v11840
      %v11943 = vadd.f32 %v11458, %v11845
      %v11944 = vadd.f32 %v11459, %v11848
      %v11945 = vadd.f32 %v11460, %v11853
      %v11946 = vadd.f32 %v11461, %v11856
      %v11947 = vadd.f32 %v11462, %v11861
      %v11948 = vadd.f32 %v11463, %v11864
      %v11949 = vadd.f32 %v11464, %v11869
      %v11950 = vadd.f32 %v11465, %v11872
      %v11951 = vadd.f32 %v11466, %v11877
      %v11952 = vadd.f32 %v11467, %v11880
      %v11953 = vadd.f32 %v11468, %v11885
      %v11954 = vadd.f32 %v11469, %v11888
      %11955 = vst.msk [vmem:[#allocation3] sm:$0xff] %vm375, %v11891
      %11956 = vst.msk [vmem:[#allocation3 + $0x8] sm:$0xff] %vm375, %v11892
      %11957 = vst.msk [vmem:[#allocation3 + $0x10] sm:$0xff] %vm375, %v11893
      %11958 = vst.msk [vmem:[#allocation3 + $0x18] sm:$0xff] %vm375, %v11894
      %11959 = vst.msk [vmem:[#allocation3 + $0x20] sm:$0xff] %vm375, %v11895
      %11960 = vst.msk [vmem:[#allocation3 + $0x28] sm:$0xff] %vm375, %v11896
      %11961 = vst.msk [vmem:[#allocation3 + $0x30] sm:$0xff] %vm375, %v11897
      %11962 = vst.msk [vmem:[#allocation3 + $0x38] sm:$0xff] %vm375, %v11898
      %11963 = vst.msk [vmem:[#allocation3 + $0x40] sm:$0xff] %vm375, %v11899
      %11964 = vst.msk [vmem:[#allocation3 + $0x48] sm:$0xff] %vm375, %v11900
      %11965 = vst.msk [vmem:[#allocation3 + $0x50] sm:$0xff] %vm375, %v11901
      %11966 = vst.msk [vmem:[#allocation3 + $0x58] sm:$0xff] %vm375, %v11902
      %11967 = vst.msk [vmem:[#allocation3 + $0x60] sm:$0xff] %vm375, %v11903
      %11968 = vst.msk [vmem:[#allocation3 + $0x68] sm:$0xff] %vm375, %v11904
      %11969 = vst.msk [vmem:[#allocation3 + $0x70] sm:$0xff] %vm375, %v11905
      %11970 = vst.msk [vmem:[#allocation3 + $0x78] sm:$0xff] %vm375, %v11906
      %11971 = vst.msk [vmem:[#allocation3 + $0x80] sm:$0xff] %vm375, %v11907
      %11972 = vst.msk [vmem:[#allocation3 + $0x88] sm:$0xff] %vm375, %v11908
      %11973 = vst.msk [vmem:[#allocation3 + $0x90] sm:$0xff] %vm375, %v11909
      %11974 = vst.msk [vmem:[#allocation3 + $0x98] sm:$0xff] %vm375, %v11910
      %11975 = vst.msk [vmem:[#allocation3 + $0xa0] sm:$0xff] %vm375, %v11911
      %11976 = vst.msk [vmem:[#allocation3 + $0xa8] sm:$0xff] %vm375, %v11912
      %11977 = vst.msk [vmem:[#allocation3 + $0xb0] sm:$0xff] %vm375, %v11913
      %11978 = vst.msk [vmem:[#allocation3 + $0xb8] sm:$0xff] %vm375, %v11914
      %11979 = vst.msk [vmem:[#allocation3 + $0xc0] sm:$0xff] %vm375, %v11915
      %11980 = vst.msk [vmem:[#allocation3 + $0xc8] sm:$0xff] %vm375, %v11916
      %11981 = vst.msk [vmem:[#allocation3 + $0xd0] sm:$0xff] %vm375, %v11917
      %11982 = vst.msk [vmem:[#allocation3 + $0xd8] sm:$0xff] %vm375, %v11918
      %11983 = vst.msk [vmem:[#allocation3 + $0xe0] sm:$0xff] %vm375, %v11919
      %11984 = vst.msk [vmem:[#allocation3 + $0xe8] sm:$0xff] %vm375, %v11920
      %11985 = vst.msk [vmem:[#allocation3 + $0xf0] sm:$0xff] %vm375, %v11921
      %11986 = vst.msk [vmem:[#allocation3 + $0xf8] sm:$0xff] %vm375, %v11922
      %11987 = vst.msk [vmem:[#allocation3 + $0x100] sm:$0xff] %vm375, %v11923
      %11988 = vst.msk [vmem:[#allocation3 + $0x108] sm:$0xff] %vm375, %v11924
      %11989 = vst.msk [vmem:[#allocation3 + $0x110] sm:$0xff] %vm375, %v11925
      %11990 = vst.msk [vmem:[#allocation3 + $0x118] sm:$0xff] %vm375, %v11926
      %11991 = vst.msk [vmem:[#allocation3 + $0x120] sm:$0xff] %vm375, %v11927
      %11992 = vst.msk [vmem:[#allocation3 + $0x128] sm:$0xff] %vm375, %v11928
      %11993 = vst.msk [vmem:[#allocation3 + $0x130] sm:$0xff] %vm375, %v11929
      %11994 = vst.msk [vmem:[#allocation3 + $0x138] sm:$0xff] %vm375, %v11930
      %11995 = vst.msk [vmem:[#allocation3 + $0x140] sm:$0xff] %vm375, %v11931
      %11996 = vst.msk [vmem:[#allocation3 + $0x148] sm:$0xff] %vm375, %v11932
      %11997 = vst.msk [vmem:[#allocation3 + $0x150] sm:$0xff] %vm375, %v11933
      %11998 = vst.msk [vmem:[#allocation3 + $0x158] sm:$0xff] %vm375, %v11934
      %11999 = vst.msk [vmem:[#allocation3 + $0x160] sm:$0xff] %vm375, %v11935
      %12000 = vst.msk [vmem:[#allocation3 + $0x168] sm:$0xff] %vm375, %v11936
      %12001 = vst.msk [vmem:[#allocation3 + $0x170] sm:$0xff] %vm375, %v11937
      %12002 = vst.msk [vmem:[#allocation3 + $0x178] sm:$0xff] %vm375, %v11938
      %12003 = vst.msk [vmem:[#allocation3 + $0x180] sm:$0xff] %vm375, %v11939
      %12004 = vst.msk [vmem:[#allocation3 + $0x188] sm:$0xff] %vm375, %v11940
      %12005 = vst.msk [vmem:[#allocation3 + $0x190] sm:$0xff] %vm375, %v11941
      %12006 = vst.msk [vmem:[#allocation3 + $0x198] sm:$0xff] %vm375, %v11942
      %12007 = vst.msk [vmem:[#allocation3 + $0x1a0] sm:$0xff] %vm375, %v11943
      %12008 = vst.msk [vmem:[#allocation3 + $0x1a8] sm:$0xff] %vm375, %v11944
      %12009 = vst.msk [vmem:[#allocation3 + $0x1b0] sm:$0xff] %vm375, %v11945
      %12010 = vst.msk [vmem:[#allocation3 + $0x1b8] sm:$0xff] %vm375, %v11946
      %12011 = vst.msk [vmem:[#allocation3 + $0x1c0] sm:$0xff] %vm375, %v11947
      %12012 = vst.msk [vmem:[#allocation3 + $0x1c8] sm:$0xff] %vm375, %v11948
      %12013 = vst.msk [vmem:[#allocation3 + $0x1d0] sm:$0xff] %vm375, %v11949
      %12014 = vst.msk [vmem:[#allocation3 + $0x1d8] sm:$0xff] %vm375, %v11950
      %12015 = vst.msk [vmem:[#allocation3 + $0x1e0] sm:$0xff] %vm375, %v11951
      %12016 = vst.msk [vmem:[#allocation3 + $0x1e8] sm:$0xff] %vm375, %v11952
      %12017 = vst.msk [vmem:[#allocation3 + $0x1f0] sm:$0xff] %vm375, %v11953
      %12018 = vst.msk [vmem:[#allocation3 + $0x1f8] sm:$0xff] %vm375, %v11954
      %v12019 = vld [vmem:[#allocation3] sm:$0xff]
      %v12020 = vld [vmem:[#allocation3 + $0x8] sm:$0xff]
      %v12021 = vld [vmem:[#allocation3 + $0x10] sm:$0xff]
      %v12022 = vld [vmem:[#allocation3 + $0x18] sm:$0xff]
      %v12023 = vld [vmem:[#allocation3 + $0x20] sm:$0xff]
      %v12024 = vld [vmem:[#allocation3 + $0x28] sm:$0xff]
      %v12025 = vld [vmem:[#allocation3 + $0x30] sm:$0xff]
      %v12026 = vld [vmem:[#allocation3 + $0x38] sm:$0xff]
      %v12027 = vld [vmem:[#allocation3 + $0x40] sm:$0xff]
      %v12028 = vld [vmem:[#allocation3 + $0x48] sm:$0xff]
      %v12029 = vld [vmem:[#allocation3 + $0x50] sm:$0xff]
      %v12030 = vld [vmem:[#allocation3 + $0x58] sm:$0xff]
      %v12031 = vld [vmem:[#allocation3 + $0x60] sm:$0xff]
      %v12032 = vld [vmem:[#allocation3 + $0x68] sm:$0xff]
      %v12033 = vld [vmem:[#allocation3 + $0x70] sm:$0xff]
      %v12034 = vld [vmem:[#allocation3 + $0x78] sm:$0xff]
      %v12035 = vld [vmem:[#allocation3 + $0x80] sm:$0xff]
      %v12036 = vld [vmem:[#allocation3 + $0x88] sm:$0xff]
      %v12037 = vld [vmem:[#allocation3 + $0x90] sm:$0xff]
      %v12038 = vld [vmem:[#allocation3 + $0x98] sm:$0xff]
      %v12039 = vld [vmem:[#allocation3 + $0xa0] sm:$0xff]
      %v12040 = vld [vmem:[#allocation3 + $0xa8] sm:$0xff]
      %v12041 = vld [vmem:[#allocation3 + $0xb0] sm:$0xff]
      %v12042 = vld [vmem:[#allocation3 + $0xb8] sm:$0xff]
      %v12043 = vld [vmem:[#allocation3 + $0xc0] sm:$0xff]
      %v12044 = vld [vmem:[#allocation3 + $0xc8] sm:$0xff]
      %v12045 = vld [vmem:[#allocation3 + $0xd0] sm:$0xff]
      %v12046 = vld [vmem:[#allocation3 + $0xd8] sm:$0xff]
      %v12047 = vld [vmem:[#allocation3 + $0xe0] sm:$0xff]
      %v12048 = vld [vmem:[#allocation3 + $0xe8] sm:$0xff]
      %v12049 = vld [vmem:[#allocation3 + $0xf0] sm:$0xff]
      %v12050 = vld [vmem:[#allocation3 + $0xf8] sm:$0xff]
      %v12051 = vld [vmem:[#allocation3 + $0x100] sm:$0xff]
      %v12052 = vld [vmem:[#allocation3 + $0x108] sm:$0xff]
      %v12053 = vld [vmem:[#allocation3 + $0x110] sm:$0xff]
      %v12054 = vld [vmem:[#allocation3 + $0x118] sm:$0xff]
      %v12055 = vld [vmem:[#allocation3 + $0x120] sm:$0xff]
      %v12056 = vld [vmem:[#allocation3 + $0x128] sm:$0xff]
      %v12057 = vld [vmem:[#allocation3 + $0x130] sm:$0xff]
      %v12058 = vld [vmem:[#allocation3 + $0x138] sm:$0xff]
      %v12059 = vld [vmem:[#allocation3 + $0x140] sm:$0xff]
      %v12060 = vld [vmem:[#allocation3 + $0x148] sm:$0xff]
      %v12061 = vld [vmem:[#allocation3 + $0x150] sm:$0xff]
      %v12062 = vld [vmem:[#allocation3 + $0x158] sm:$0xff]
      %v12063 = vld [vmem:[#allocation3 + $0x160] sm:$0xff]
      %v12064 = vld [vmem:[#allocation3 + $0x168] sm:$0xff]
      %v12065 = vld [vmem:[#allocation3 + $0x170] sm:$0xff]
      %v12066 = vld [vmem:[#allocation3 + $0x178] sm:$0xff]
      %v12067 = vld [vmem:[#allocation3 + $0x180] sm:$0xff]
      %v12068 = vld [vmem:[#allocation3 + $0x188] sm:$0xff]
      %v12069 = vld [vmem:[#allocation3 + $0x190] sm:$0xff]
      %v12070 = vld [vmem:[#allocation3 + $0x198] sm:$0xff]
      %v12071 = vld [vmem:[#allocation3 + $0x1a0] sm:$0xff]
      %v12072 = vld [vmem:[#allocation3 + $0x1a8] sm:$0xff]
      %v12073 = vld [vmem:[#allocation3 + $0x1b0] sm:$0xff]
      %v12074 = vld [vmem:[#allocation3 + $0x1b8] sm:$0xff]
      %v12075 = vld [vmem:[#allocation3 + $0x1c0] sm:$0xff]
      %v12076 = vld [vmem:[#allocation3 + $0x1c8] sm:$0xff]
      %v12077 = vld [vmem:[#allocation3 + $0x1d0] sm:$0xff]
      %v12078 = vld [vmem:[#allocation3 + $0x1d8] sm:$0xff]
      %v12079 = vld [vmem:[#allocation3 + $0x1e0] sm:$0xff]
      %v12080 = vld [vmem:[#allocation3 + $0x1e8] sm:$0xff]
      %v12081 = vld [vmem:[#allocation3 + $0x1f0] sm:$0xff]
      %v12082 = vld [vmem:[#allocation3 + $0x1f8] sm:$0xff]
      %v12083 = vld [vmem:[%s4] sm:$0x1]
      %v12085 = vlaneseq
      %v12086 = vshrl.u32 %v12085, 7
      %v12087 = vsub.s32 0, %v12086
      %v12088 = vrot.slane %v12083, %v12087
      %v12090 = vadd.f32 %v12019, %v12088
      %v12091 = vadd.f32 %v12020, %v12088
      %v12092 = vadd.f32 %v12021, %v12088
      %v12093 = vadd.f32 %v12022, %v12088
      %v12094 = vadd.f32 %v12023, %v12088
      %v12095 = vadd.f32 %v12024, %v12088
      %v12096 = vadd.f32 %v12025, %v12088
      %v12097 = vadd.f32 %v12026, %v12088
      %v12098 = vadd.f32 %v12027, %v12088
      %v12099 = vadd.f32 %v12028, %v12088
      %v12100 = vadd.f32 %v12029, %v12088
      %v12101 = vadd.f32 %v12030, %v12088
      %v12102 = vadd.f32 %v12031, %v12088
      %v12103 = vadd.f32 %v12032, %v12088
      %v12104 = vadd.f32 %v12033, %v12088
      %v12105 = vadd.f32 %v12034, %v12088
      %v12106 = vadd.f32 %v12035, %v12088
      %v12107 = vadd.f32 %v12036, %v12088
      %v12108 = vadd.f32 %v12037, %v12088
      %v12109 = vadd.f32 %v12038, %v12088
      %v12110 = vadd.f32 %v12039, %v12088
      %v12111 = vadd.f32 %v12040, %v12088
      %v12112 = vadd.f32 %v12041, %v12088
      %v12113 = vadd.f32 %v12042, %v12088
      %v12114 = vadd.f32 %v12043, %v12088
      %v12115 = vadd.f32 %v12044, %v12088
      %v12116 = vadd.f32 %v12045, %v12088
      %v12117 = vadd.f32 %v12046, %v12088
      %v12118 = vadd.f32 %v12047, %v12088
      %v12119 = vadd.f32 %v12048, %v12088
      %v12120 = vadd.f32 %v12049, %v12088
      %v12121 = vadd.f32 %v12050, %v12088
      %v12122 = vadd.f32 %v12051, %v12088
      %v12123 = vadd.f32 %v12052, %v12088
      %v12124 = vadd.f32 %v12053, %v12088
      %v12125 = vadd.f32 %v12054, %v12088
      %v12126 = vadd.f32 %v12055, %v12088
      %v12127 = vadd.f32 %v12056, %v12088
      %v12128 = vadd.f32 %v12057, %v12088
      %v12129 = vadd.f32 %v12058, %v12088
      %v12130 = vadd.f32 %v12059, %v12088
      %v12131 = vadd.f32 %v12060, %v12088
      %v12132 = vadd.f32 %v12061, %v12088
      %v12133 = vadd.f32 %v12062, %v12088
      %v12134 = vadd.f32 %v12063, %v12088
      %v12135 = vadd.f32 %v12064, %v12088
      %v12136 = vadd.f32 %v12065, %v12088
      %v12137 = vadd.f32 %v12066, %v12088
      %v12138 = vadd.f32 %v12067, %v12088
      %v12139 = vadd.f32 %v12068, %v12088
      %v12140 = vadd.f32 %v12069, %v12088
      %v12141 = vadd.f32 %v12070, %v12088
      %v12142 = vadd.f32 %v12071, %v12088
      %v12143 = vadd.f32 %v12072, %v12088
      %v12144 = vadd.f32 %v12073, %v12088
      %v12145 = vadd.f32 %v12074, %v12088
      %v12146 = vadd.f32 %v12075, %v12088
      %v12147 = vadd.f32 %v12076, %v12088
      %v12148 = vadd.f32 %v12077, %v12088
      %v12149 = vadd.f32 %v12078, %v12088
      %v12150 = vadd.f32 %v12079, %v12088
      %v12151 = vadd.f32 %v12080, %v12088
      %v12152 = vadd.f32 %v12081, %v12088
      %v12153 = vadd.f32 %v12082, %v12088
      %12154 = vst.msk [vmem:[%s253] sm:$0xff] %vm375, %v12090
      %12155 = vst.msk [vmem:[%s253 + $0x8] sm:$0xff] %vm375, %v12091
      %12156 = vst.msk [vmem:[%s253 + $0x10] sm:$0xff] %vm375, %v12092
      %12157 = vst.msk [vmem:[%s253 + $0x18] sm:$0xff] %vm375, %v12093
      %12158 = vst.msk [vmem:[%s253 + $0x20] sm:$0xff] %vm375, %v12094
      %12159 = vst.msk [vmem:[%s253 + $0x28] sm:$0xff] %vm375, %v12095
      %12160 = vst.msk [vmem:[%s253 + $0x30] sm:$0xff] %vm375, %v12096
      %12161 = vst.msk [vmem:[%s253 + $0x38] sm:$0xff] %vm375, %v12097
      %12162 = vst.msk [vmem:[%s253 + $0x40] sm:$0xff] %vm375, %v12098
      %12163 = vst.msk [vmem:[%s253 + $0x48] sm:$0xff] %vm375, %v12099
      %12164 = vst.msk [vmem:[%s253 + $0x50] sm:$0xff] %vm375, %v12100
      %12165 = vst.msk [vmem:[%s253 + $0x58] sm:$0xff] %vm375, %v12101
      %12166 = vst.msk [vmem:[%s253 + $0x60] sm:$0xff] %vm375, %v12102
      %12167 = vst.msk [vmem:[%s253 + $0x68] sm:$0xff] %vm375, %v12103
      %12168 = vst.msk [vmem:[%s253 + $0x70] sm:$0xff] %vm375, %v12104
      %12169 = vst.msk [vmem:[%s253 + $0x78] sm:$0xff] %vm375, %v12105
      %12170 = vst.msk [vmem:[%s253 + $0x80] sm:$0xff] %vm375, %v12106
      %12171 = vst.msk [vmem:[%s253 + $0x88] sm:$0xff] %vm375, %v12107
      %12172 = vst.msk [vmem:[%s253 + $0x90] sm:$0xff] %vm375, %v12108
      %12173 = vst.msk [vmem:[%s253 + $0x98] sm:$0xff] %vm375, %v12109
      %12174 = vst.msk [vmem:[%s253 + $0xa0] sm:$0xff] %vm375, %v12110
      %12175 = vst.msk [vmem:[%s253 + $0xa8] sm:$0xff] %vm375, %v12111
      %12176 = vst.msk [vmem:[%s253 + $0xb0] sm:$0xff] %vm375, %v12112
      %12177 = vst.msk [vmem:[%s253 + $0xb8] sm:$0xff] %vm375, %v12113
      %12178 = vst.msk [vmem:[%s253 + $0xc0] sm:$0xff] %vm375, %v12114
      %12179 = vst.msk [vmem:[%s253 + $0xc8] sm:$0xff] %vm375, %v12115
      %12180 = vst.msk [vmem:[%s253 + $0xd0] sm:$0xff] %vm375, %v12116
      %12181 = vst.msk [vmem:[%s253 + $0xd8] sm:$0xff] %vm375, %v12117
      %12182 = vst.msk [vmem:[%s253 + $0xe0] sm:$0xff] %vm375, %v12118
      %12183 = vst.msk [vmem:[%s253 + $0xe8] sm:$0xff] %vm375, %v12119
      %12184 = vst.msk [vmem:[%s253 + $0xf0] sm:$0xff] %vm375, %v12120
      %12185 = vst.msk [vmem:[%s253 + $0xf8] sm:$0xff] %vm375, %v12121
      %12186 = vst.msk [vmem:[%s253 + $0x100] sm:$0xff] %vm375, %v12122
      %12187 = vst.msk [vmem:[%s253 + $0x108] sm:$0xff] %vm375, %v12123
      %12188 = vst.msk [vmem:[%s253 + $0x110] sm:$0xff] %vm375, %v12124
      %12189 = vst.msk [vmem:[%s253 + $0x118] sm:$0xff] %vm375, %v12125
      %12190 = vst.msk [vmem:[%s253 + $0x120] sm:$0xff] %vm375, %v12126
      %12191 = vst.msk [vmem:[%s253 + $0x128] sm:$0xff] %vm375, %v12127
      %12192 = vst.msk [vmem:[%s253 + $0x130] sm:$0xff] %vm375, %v12128
      %12193 = vst.msk [vmem:[%s253 + $0x138] sm:$0xff] %vm375, %v12129
      %12194 = vst.msk [vmem:[%s253 + $0x140] sm:$0xff] %vm375, %v12130
      %12195 = vst.msk [vmem:[%s253 + $0x148] sm:$0xff] %vm375, %v12131
      %12196 = vst.msk [vmem:[%s253 + $0x150] sm:$0xff] %vm375, %v12132
      %12197 = vst.msk [vmem:[%s253 + $0x158] sm:$0xff] %vm375, %v12133
      %12198 = vst.msk [vmem:[%s253 + $0x160] sm:$0xff] %vm375, %v12134
      %12199 = vst.msk [vmem:[%s253 + $0x168] sm:$0xff] %vm375, %v12135
      %12200 = vst.msk [vmem:[%s253 + $0x170] sm:$0xff] %vm375, %v12136
      %12201 = vst.msk [vmem:[%s253 + $0x178] sm:$0xff] %vm375, %v12137
      %12202 = vst.msk [vmem:[%s253 + $0x180] sm:$0xff] %vm375, %v12138
      %12203 = vst.msk [vmem:[%s253 + $0x188] sm:$0xff] %vm375, %v12139
      %12204 = vst.msk [vmem:[%s253 + $0x190] sm:$0xff] %vm375, %v12140
      %12205 = vst.msk [vmem:[%s253 + $0x198] sm:$0xff] %vm375, %v12141
      %12206 = vst.msk [vmem:[%s253 + $0x1a0] sm:$0xff] %vm375, %v12142
      %12207 = vst.msk [vmem:[%s253 + $0x1a8] sm:$0xff] %vm375, %v12143
      %12208 = vst.msk [vmem:[%s253 + $0x1b0] sm:$0xff] %vm375, %v12144
      %12209 = vst.msk [vmem:[%s253 + $0x1b8] sm:$0xff] %vm375, %v12145
      %12210 = vst.msk [vmem:[%s253 + $0x1c0] sm:$0xff] %vm375, %v12146
      %12211 = vst.msk [vmem:[%s253 + $0x1c8] sm:$0xff] %vm375, %v12147
      %12212 = vst.msk [vmem:[%s253 + $0x1d0] sm:$0xff] %vm375, %v12148
      %12213 = vst.msk [vmem:[%s253 + $0x1d8] sm:$0xff] %vm375, %v12149
      %12214 = vst.msk [vmem:[%s253 + $0x1e0] sm:$0xff] %vm375, %v12150
      %12215 = vst.msk [vmem:[%s253 + $0x1e8] sm:$0xff] %vm375, %v12151
      %12216 = vst.msk [vmem:[%s253 + $0x1f0] sm:$0xff] %vm375, %v12152
      %12217 = vst.msk [vmem:[%s253 + $0x1f8] sm:$0xff] %vm375, %v12153
      %s12218 = smul.u32 64, %s17
      %p12219 = scmp.lt.s32.totalorder %s12218, 127
      %s12220 = scalar_select %p12219, %s12218, 127
      %s12221 = smul.addr %s12220, 8
      %s12222 = scalar_lea.vmem %s6, %s12221
      // Predicated region
      $region45: #{tpu_custom_call.1} parent=43 // pred_check
        %p12223 = pneg %p166
      $region46: #{tpu_custom_call.1} parent=43 // pred_check_branch
        %12225 = sbr.rel (%p12223) target = $region48
      $region47: #{tpu_custom_call.1} parent=43 // pred_region
        %s12226 = smul.u32 64, %s17
      $region48: #{tpu_custom_call.1} parent=43 // pred_fallthru
        _
    $region44: #{tpu_custom_call.1} parent=5 // pred_fallthru
      _
    %p12227 = scmp.le.s32.totalorder 2, %s12
    // Predicated region
    $region49: #{tpu_custom_call.1} parent=5 // pred_check
      %p12228 = pneg %p12227
    $region50: #{tpu_custom_call.1} parent=5 // pred_check_branch
      %12230 = sbr.rel (%p12228) target = $region52
    $region51: #{tpu_custom_call.1} parent=5 // pred_region
      %s12231 = ssub.s32 %s12, 2
      // Predicated region
      $region53: #{tpu_custom_call.1} parent=51 // pred_check
        %p12232 = pneg %p172
      $region54: #{tpu_custom_call.1} parent=51 // pred_check_branch
        %12234 = sbr.rel (%p12232) target = $region56
      $region55: #{tpu_custom_call.1} parent=51 // pred_region
        %s12235 = smul.u32 64, %s18
        %p12236 = scmp.lt.s32.totalorder %s12235, 127
        %s12237 = scalar_select %p12236, %s12235, 127
        %s12238 = smul.addr %s12237, 8
        %s12239 = scalar_lea.vmem %s6, %s12238
      $region56: #{tpu_custom_call.1} parent=51 // pred_fallthru
        _
    $region52: #{tpu_custom_call.1} parent=5 // pred_fallthru
      _
  $region6: #{tpu_custom_call.1} parent=0 // loop_footer
    %s16 = sadd.s32 1, %s12
  $region7: #{tpu_custom_call.1} parent=0 // loop_footer_branch
    %11 = sbr.rel target = $region3
  $region8: #{tpu_custom_call.1} parent=0 // loop_exit
    _

</llo_original>
